<compile_context>
chip_gen: v5e
topology: v5e:2x2
jax: 0.10.0
libtpu: 0.0.40
codegen_flags: <defaults>
</compile_context>

<pallas_src>
import functools

import jax
import jax.numpy as jnp
from jax.experimental import pallas as pl
from jax.experimental.pallas import tpu as pltpu


def _round_up(x, m):
    return pl.cdiv(x, m) * m


# ----------------------------------------------------------------------------
# Pallas kernel 1: single-K-step matmul + bias + ReLU (used for all convs).
# Grid: (M_tiles, N_tiles).  K is the full (padded) reduction dim in one shot,
# so no accumulator scratch / phase gating is needed.
# ----------------------------------------------------------------------------
def _matmul_bias_relu_kernel(a_ref, b_ref, bias_ref, o_ref):
    out = jnp.dot(a_ref[...], b_ref[...], preferred_element_type=jnp.float32)
    out = out + bias_ref[...]
    o_ref[...] = jnp.maximum(out, 0.0).astype(o_ref.dtype)


def pallas_matmul_bias_relu(a, b, bias, *, tm=256, tn=128, out_dtype=jnp.float32):
    """relu(a @ b + bias) with bf16 MXU inputs and fp32 accumulate/epilogue.

    a: [M, K], b: [K, N], bias: [N] -> [M, N] (dtype = out_dtype).
    K is padded to a multiple of 16 and consumed as a single block.
    """
    M, K = a.shape
    K2, N = b.shape
    assert K == K2, (K, K2)

    Mp = _round_up(M, tm)
    Np = _round_up(N, tn)
    Kp = _round_up(K, 16)  # bf16 sublane-packing friendly; stays a single block

    a_p = jnp.pad(a, ((0, Mp - M), (0, Kp - K))).astype(jnp.bfloat16)
    b_p = jnp.pad(b, ((0, Kp - K), (0, Np - N))).astype(jnp.bfloat16)
    bias_p = jnp.pad(bias, (0, Np - N)).reshape(1, Np).astype(jnp.float32)

    out = pl.pallas_call(
        _matmul_bias_relu_kernel,
        out_shape=jax.ShapeDtypeStruct((Mp, Np), out_dtype),
        grid_spec=pltpu.PrefetchScalarGridSpec(
            num_scalar_prefetch=0,
            grid=(Mp // tm, Np // tn),
            in_specs=[
                pl.BlockSpec((tm, Kp), lambda i, j: (i, 0)),
                pl.BlockSpec((Kp, tn), lambda i, j: (0, j)),
                pl.BlockSpec((1, tn), lambda i, j: (0, j)),
            ],
            out_specs=pl.BlockSpec((tm, tn), lambda i, j: (i, j)),
        ),
        compiler_params=pltpu.CompilerParams(
            dimension_semantics=("parallel", "parallel"),
        ),
    )(a_p, b_p, bias_p)

    return out[:M, :N]


# ----------------------------------------------------------------------------
# Pallas kernel 2: fused FC1 (+bias,+ReLU) and FC2 (+bias).
# Grid: (K_steps,) over FC1's reduction dim; the tiny FC2 GEMM runs in the
# last-step epilogue on the fp32 hidden activations.
# ----------------------------------------------------------------------------
def _fc_fused_kernel(a_ref, w1_ref, b1_ref, w2_ref, b2_ref, o_ref, acc_ref):
    k = pl.program_id(0)

    @pl.when(k == 0)
    def _():
        acc_ref[...] = jnp.zeros_like(acc_ref)

    acc_ref[...] += jnp.dot(
        a_ref[...], w1_ref[...], preferred_element_type=jnp.float32
    )

    @pl.when(k == pl.num_programs(0) - 1)
    def _():
        h = jnp.maximum(acc_ref[...] + b1_ref[...], 0.0)           # FC1 + ReLU
        out = jnp.dot(h, w2_ref[...], preferred_element_type=jnp.float32)
        o_ref[...] = (out + b2_ref[...]).astype(o_ref.dtype)        # FC2 + bias


def pallas_fc1_relu_fc2(x, w1, b1, w2, b2, *, tk=4096):
    """Computes (relu(x @ w1 + b1)) @ w2 + b2 in a single Pallas kernel.

    x: [M, K], w1: [K, N1], w2: [N1, N2].  M is padded only to 8 rows.
    """
    M, K = x.shape
    K1, N1 = w1.shape
    N1b, N2 = w2.shape
    assert K == K1 and N1 == N1b

    tm = 8                      # tiny batch: do not pad M to 128
    Mp = _round_up(M, tm)
    Kp = _round_up(K, tk)
    N1p = _round_up(N1, 128)
    N2p = _round_up(N2, 128)

    x_p = jnp.pad(x, ((0, Mp - M), (0, Kp - K))).astype(jnp.bfloat16)
    w1_p = jnp.pad(w1, ((0, Kp - K), (0, N1p - N1))).astype(jnp.bfloat16)
    b1_p = jnp.pad(b1, (0, N1p - N1)).reshape(1, N1p).astype(jnp.float32)
    w2_p = jnp.pad(w2, ((0, N1p - N1), (0, N2p - N2))).astype(jnp.float32)
    b2_p = jnp.pad(b2, (0, N2p - N2)).reshape(1, N2p).astype(jnp.float32)

    nk = Kp // tk

    out = pl.pallas_call(
        _fc_fused_kernel,
        out_shape=jax.ShapeDtypeStruct((Mp, N2p), jnp.float32),
        grid_spec=pltpu.PrefetchScalarGridSpec(
            num_scalar_prefetch=0,
            grid=(nk,),
            in_specs=[
                pl.BlockSpec((Mp, tk), lambda k: (0, k)),
                pl.BlockSpec((tk, N1p), lambda k: (k, 0)),
                pl.BlockSpec((1, N1p), lambda k: (0, 0)),
                pl.BlockSpec((N1p, N2p), lambda k: (0, 0)),
                pl.BlockSpec((1, N2p), lambda k: (0, 0)),
            ],
            out_specs=pl.BlockSpec((Mp, N2p), lambda k: (0, 0)),
            scratch_shapes=[pltpu.VMEM((Mp, N1p), jnp.float32)],
        ),
        compiler_params=pltpu.CompilerParams(
            dimension_semantics=("arbitrary",),
        ),
    )(x_p, w1_p, b1_p, w2_p, b2_p)

    return out[:M, :N2]


# ----------------------------------------------------------------------------
# NHWC im2col glue (plain JAX, stays fused under jit).
# Patch features are ordered (kh, kw, Cin); weights are flattened to match.
# ----------------------------------------------------------------------------
def _im2col_nhwc(x, kh, kw):
    B, H, W, C = x.shape
    Ho, Wo = H - kh + 1, W - kw + 1
    patches = []
    for dh in range(kh):
        for dw in range(kw):
            patches.append(x[:, dh : dh + Ho, dw : dw + Wo, :])  # [B,Ho,Wo,C]
    p = jnp.concatenate(patches, axis=-1)            # (dh, dw) major, C minor
    return p.reshape(B * Ho * Wo, kh * kw * C), Ho, Wo


def conv2d_relu_nhwc(x, w, b):
    """Valid conv, stride 1, fused bias+ReLU.  x: [B,H,W,Cin] (NHWC),
    w: [Cout,Cin,kh,kw] (PyTorch layout), b: [Cout] -> [B,Ho,Wo,Cout] (bf16)."""
    B = x.shape[0]
    cout, cin, kh, kw = w.shape
    patches, Ho, Wo = _im2col_nhwc(x, kh, kw)               # [B*Ho*Wo, kh*kw*Cin]
    # Reorder weight flattening to (kh, kw, Cin) to match the NHWC patches.
    w_mat = w.transpose(0, 2, 3, 1).reshape(cout, kh * kw * cin).T
    # bf16 activations between layers: the next GEMM consumes bf16 anyway, so
    # this halves inter-layer / im2col HBM traffic with no extra rounding.
    y = pallas_matmul_bias_relu(patches, w_mat, b, out_dtype=jnp.bfloat16)
    return y.reshape(B, Ho, Wo, cout)


# ----------------------------------------------------------------------------
# Parameter init (deterministic, synthetic) and forward pass
# ----------------------------------------------------------------------------
def init_params(key):
    keys = jax.random.split(key, 12)

    def conv_w(k, cout, cin, ksz):
        scale = 1.0 / jnp.sqrt(cin * ksz * ksz)
        return jax.random.uniform(
            k, (cout, cin, ksz, ksz), jnp.float32, -scale, scale
        )

    def lin_w(k, fout, fin):
        scale = 1.0 / jnp.sqrt(fin)
        return jax.random.uniform(k, (fin, fout), jnp.float32, -scale, scale)

    def bias(k, n, fan_in):
        scale = 1.0 / jnp.sqrt(fan_in)
        return jax.random.uniform(k, (n,), jnp.float32, -scale, scale)

    return {
        "conv1_w": conv_w(keys[0], 16, 3, 3),
        "conv1_b": bias(keys[1], 16, 3 * 3 * 3),
        "conv2_w": conv_w(keys[2], 32, 16, 3),
        "conv2_b": bias(keys[3], 32, 16 * 3 * 3),
        "conv3_w": conv_w(keys[4], 64, 32, 5),
        "conv3_b": bias(keys[5], 64, 32 * 5 * 5),
        "conv4_w": conv_w(keys[6], 64, 64, 5),
        "conv4_b": bias(keys[7], 64, 64 * 5 * 5),
        "fc1_w": lin_w(keys[8], 128, 64 * 16 * 16),   # [in, out]
        "fc1_b": bias(keys[9], 128, 64 * 16 * 16),
        "fc2_w": lin_w(keys[10], 10, 128),            # [in, out]
        "fc2_b": bias(keys[11], 10, 128),
    }


def reseau_neurone_forward(params, x):
    # x: [B, 3, 28, 28] NCHW at the module boundary (PyTorch convention);
    # spatial 28 is forced by fc1 expecting 64*16*16 features.
    B = x.shape[0]
    x = x.transpose(0, 2, 3, 1)                                    # NHWC once
    x = conv2d_relu_nhwc(x, params["conv1_w"], params["conv1_b"])  # [B,26,26,16]
    x = conv2d_relu_nhwc(x, params["conv2_w"], params["conv2_b"])  # [B,24,24,32]
    x = conv2d_relu_nhwc(x, params["conv3_w"], params["conv3_b"])  # [B,20,20,64]
    x = conv2d_relu_nhwc(x, params["conv4_w"], params["conv4_b"])  # [B,16,16,64]
    # Back to NCHW once so the flatten order matches torch.nn.Flatten.
    x = x.transpose(0, 3, 1, 2).reshape(B, -1)                     # [B, 64*16*16]
    # Fused FC1 + ReLU + FC2 Pallas kernel (fp32 logits out).
    out = pallas_fc1_relu_fc2(
        x, params["fc1_w"], params["fc1_b"], params["fc2_w"], params["fc2_b"]
    )                                                              # [B, 10]
    return out


reseau_neurone_forward_jit = jax.jit(reseau_neurone_forward)


if __name__ == "__main__":
    key = jax.random.PRNGKey(0)
    pkey, xkey = jax.random.split(key)
    params = init_params(pkey)

    # Batch=2, 3 input channels, 28x28 spatial (required so flatten yields 64*16*16).
    x = jax.random.normal(xkey, (2, 3, 28, 28), dtype=jnp.float32)

    out = reseau_neurone_forward_jit(params, x)
    out = jax.block_until_ready(out)
    assert out.shape == (2, 10), out.shape
    print("KERNEL_OK")
</pallas_src>

<mosaic_0001>
module attributes {stable_mosaic.version = 11 : i64} {
  func.func @_matmul_bias_relu_kernel(%arg0: i32, %arg1: i32, %arg2: memref<256x32xbf16, #tpu.memory_space<vmem>>, %arg3: memref<32x128xbf16, #tpu.memory_space<vmem>>, %arg4: memref<1x128xf32, #tpu.memory_space<vmem>>, %arg5: memref<256x128xbf16, #tpu.memory_space<vmem>>) attributes {dimension_semantics = [#tpu.dimension_semantics<parallel>, #tpu.dimension_semantics<parallel>], iteration_bounds = array<i64: 6, 1>, scalar_prefetch = 0 : i64, scratch_operands = 0 : i64, tpu.core_type = #tpu.core_type<tc>, window_params = [{transform_indices = @transform_0, window_bounds = array<i64: 256, 32>}, {transform_indices = @transform_1, window_bounds = array<i64: 32, 128>}, {transform_indices = @transform_2, window_bounds = array<i64: 1, 128>}, {transform_indices = @transform_3, window_bounds = array<i64: 256, 128>}]} {
    %c0 = arith.constant 0 : index
    %c0_0 = arith.constant 0 : index
    %0 = vector.load %arg2[%c0, %c0_0] : memref<256x32xbf16, #tpu.memory_space<vmem>>, vector<256x32xbf16>
    %c0_1 = arith.constant 0 : index
    %c0_2 = arith.constant 0 : index
    %1 = vector.load %arg3[%c0_1, %c0_2] : memref<32x128xbf16, #tpu.memory_space<vmem>>, vector<32x128xbf16>
    %cst = arith.constant dense<0.000000e+00> : vector<256x128xf32>
    %2 = tpu.matmul %0, %1, %cst {dimension_numbers = #tpu.dot_dimension_numbers<[1], [0], [0], [1], [0, 0, 1, 1], [], []>} : vector<256x32xbf16>, vector<32x128xbf16>, vector<256x128xf32> -> vector<256x128xf32>
    %c0_3 = arith.constant 0 : index
    %c0_4 = arith.constant 0 : index
    %3 = vector.load %arg4[%c0_3, %c0_4] : memref<1x128xf32, #tpu.memory_space<vmem>>, vector<1x128xf32>
    %4 = vector.broadcast %3 : vector<1x128xf32> to vector<256x128xf32>
    %5 = arith.addf %2, %4 : vector<256x128xf32>
    %cst_5 = arith.constant 0.000000e+00 : f32
    %6 = vector.broadcast %cst_5 : f32 to vector<256x128xf32>
    %7 = arith.maximumf %5, %6 : vector<256x128xf32>
    %8 = arith.truncf %7 : vector<256x128xf32> to vector<256x128xbf16>
    %c0_6 = arith.constant 0 : index
    %c0_7 = arith.constant 0 : index
    %9 = vector.load %arg5[%c0_6, %c0_7] : memref<256x128xbf16, #tpu.memory_space<vmem>>, vector<256x128xbf16>
    tpu.vector_store %arg5[%c0_6, %c0_7], %8 {strides = array<i32>} : memref<256x128xbf16, #tpu.memory_space<vmem>>, vector<256x128xbf16>,
    return
  }
  func.func @transform_0(%arg0: i32, %arg1: i32) -> (i32, i32) {
    %c0_i32 = arith.constant 0 : i32
    %c0_i32_0 = arith.constant 0 : i32
    return %arg0, %c0_i32 : i32, i32
  }
  func.func @transform_1(%arg0: i32, %arg1: i32) -> (i32, i32) {
    %c0_i32 = arith.constant 0 : i32
    %c0_i32_0 = arith.constant 0 : i32
    return %c0_i32, %arg1 : i32, i32
  }
  func.func @transform_2(%arg0: i32, %arg1: i32) -> (i32, i32) {
    %c0_i32 = arith.constant 0 : i32
    %c0_i32_0 = arith.constant 0 : i32
    return %c0_i32, %arg1 : i32, i32
  }
  func.func @transform_3(%arg0: i32, %arg1: i32) -> (i32, i32) {
    %c0_i32 = arith.constant 0 : i32
    return %arg0, %arg1 : i32, i32
  }
}

module attributes {stable_mosaic.version = 11 : i64} {
  func.func @_matmul_bias_relu_kernel(%arg0: i32, %arg1: i32, %arg2: memref<256x144xbf16, #tpu.memory_space<vmem>>, %arg3: memref<144x128xbf16, #tpu.memory_space<vmem>>, %arg4: memref<1x128xf32, #tpu.memory_space<vmem>>, %arg5: memref<256x128xbf16, #tpu.memory_space<vmem>>) attributes {dimension_semantics = [#tpu.dimension_semantics<parallel>, #tpu.dimension_semantics<parallel>], iteration_bounds = array<i64: 5, 1>, scalar_prefetch = 0 : i64, scratch_operands = 0 : i64, tpu.core_type = #tpu.core_type<tc>, window_params = [{transform_indices = @transform_0, window_bounds = array<i64: 256, 144>}, {transform_indices = @transform_1, window_bounds = array<i64: 144, 128>}, {transform_indices = @transform_2, window_bounds = array<i64: 1, 128>}, {transform_indices = @transform_3, window_bounds = array<i64: 256, 128>}]} {
    %c0 = arith.constant 0 : index
    %c0_0 = arith.constant 0 : index
    %0 = vector.load %arg2[%c0, %c0_0] : memref<256x144xbf16, #tpu.memory_space<vmem>>, vector<256x144xbf16>
    %c0_1 = arith.constant 0 : index
    %c0_2 = arith.constant 0 : index
    %1 = vector.load %arg3[%c0_1, %c0_2] : memref<144x128xbf16, #tpu.memory_space<vmem>>, vector<144x128xbf16>
    %cst = arith.constant dense<0.000000e+00> : vector<256x128xf32>
    %2 = tpu.matmul %0, %1, %cst {dimension_numbers = #tpu.dot_dimension_numbers<[1], [0], [0], [1], [0, 0, 1, 1], [], []>} : vector<256x144xbf16>, vector<144x128xbf16>, vector<256x128xf32> -> vector<256x128xf32>
    %c0_3 = arith.constant 0 : index
    %c0_4 = arith.constant 0 : index
    %3 = vector.load %arg4[%c0_3, %c0_4] : memref<1x128xf32, #tpu.memory_space<vmem>>, vector<1x128xf32>
    %4 = vector.broadcast %3 : vector<1x128xf32> to vector<256x128xf32>
    %5 = arith.addf %2, %4 : vector<256x128xf32>
    %cst_5 = arith.constant 0.000000e+00 : f32
    %6 = vector.broadcast %cst_5 : f32 to vector<256x128xf32>
    %7 = arith.maximumf %5, %6 : vector<256x128xf32>
    %8 = arith.truncf %7 : vector<256x128xf32> to vector<256x128xbf16>
    %c0_6 = arith.constant 0 : index
    %c0_7 = arith.constant 0 : index
    %9 = vector.load %arg5[%c0_6, %c0_7] : memref<256x128xbf16, #tpu.memory_space<vmem>>, vector<256x128xbf16>
    tpu.vector_store %arg5[%c0_6, %c0_7], %8 {strides = array<i32>} : memref<256x128xbf16, #tpu.memory_space<vmem>>, vector<256x128xbf16>,
    return
  }
  func.func @transform_0(%arg0: i32, %arg1: i32) -> (i32, i32) {
    %c0_i32 = arith.constant 0 : i32
    %c0_i32_0 = arith.constant 0 : i32
    return %arg0, %c0_i32 : i32, i32
  }
  func.func @transform_1(%arg0: i32, %arg1: i32) -> (i32, i32) {
    %c0_i32 = arith.constant 0 : i32
    %c0_i32_0 = arith.constant 0 : i32
    return %c0_i32, %arg1 : i32, i32
  }
  func.func @transform_2(%arg0: i32, %arg1: i32) -> (i32, i32) {
    %c0_i32 = arith.constant 0 : i32
    %c0_i32_0 = arith.constant 0 : i32
    return %c0_i32, %arg1 : i32, i32
  }
  func.func @transform_3(%arg0: i32, %arg1: i32) -> (i32, i32) {
    %c0_i32 = arith.constant 0 : i32
    return %arg0, %arg1 : i32, i32
  }
}

module attributes {stable_mosaic.version = 11 : i64} {
  func.func @_matmul_bias_relu_kernel(%arg0: i32, %arg1: i32, %arg2: memref<256x800xbf16, #tpu.memory_space<vmem>>, %arg3: memref<800x128xbf16, #tpu.memory_space<vmem>>, %arg4: memref<1x128xf32, #tpu.memory_space<vmem>>, %arg5: memref<256x128xbf16, #tpu.memory_space<vmem>>) attributes {dimension_semantics = [#tpu.dimension_semantics<parallel>, #tpu.dimension_semantics<parallel>], iteration_bounds = array<i64: 4, 1>, scalar_prefetch = 0 : i64, scratch_operands = 0 : i64, tpu.core_type = #tpu.core_type<tc>, window_params = [{transform_indices = @transform_0, window_bounds = array<i64: 256, 800>}, {transform_indices = @transform_1, window_bounds = array<i64: 800, 128>}, {transform_indices = @transform_2, window_bounds = array<i64: 1, 128>}, {transform_indices = @transform_3, window_bounds = array<i64: 256, 128>}]} {
    %c0 = arith.constant 0 : index
    %c0_0 = arith.constant 0 : index
    %0 = vector.load %arg2[%c0, %c0_0] : memref<256x800xbf16, #tpu.memory_space<vmem>>, vector<256x800xbf16>
    %c0_1 = arith.constant 0 : index
    %c0_2 = arith.constant 0 : index
    %1 = vector.load %arg3[%c0_1, %c0_2] : memref<800x128xbf16, #tpu.memory_space<vmem>>, vector<800x128xbf16>
    %cst = arith.constant dense<0.000000e+00> : vector<256x128xf32>
    %2 = tpu.matmul %0, %1, %cst {dimension_numbers = #tpu.dot_dimension_numbers<[1], [0], [0], [1], [0, 0, 1, 1], [], []>} : vector<256x800xbf16>, vector<800x128xbf16>, vector<256x128xf32> -> vector<256x128xf32>
    %c0_3 = arith.constant 0 : index
    %c0_4 = arith.constant 0 : index
    %3 = vector.load %arg4[%c0_3, %c0_4] : memref<1x128xf32, #tpu.memory_space<vmem>>, vector<1x128xf32>
    %4 = vector.broadcast %3 : vector<1x128xf32> to vector<256x128xf32>
    %5 = arith.addf %2, %4 : vector<256x128xf32>
    %cst_5 = arith.constant 0.000000e+00 : f32
    %6 = vector.broadcast %cst_5 : f32 to vector<256x128xf32>
    %7 = arith.maximumf %5, %6 : vector<256x128xf32>
    %8 = arith.truncf %7 : vector<256x128xf32> to vector<256x128xbf16>
    %c0_6 = arith.constant 0 : index
    %c0_7 = arith.constant 0 : index
    %9 = vector.load %arg5[%c0_6, %c0_7] : memref<256x128xbf16, #tpu.memory_space<vmem>>, vector<256x128xbf16>
    tpu.vector_store %arg5[%c0_6, %c0_7], %8 {strides = array<i32>} : memref<256x128xbf16, #tpu.memory_space<vmem>>, vector<256x128xbf16>,
    return
  }
  func.func @transform_0(%arg0: i32, %arg1: i32) -> (i32, i32) {
    %c0_i32 = arith.constant 0 : i32
    %c0_i32_0 = arith.constant 0 : i32
    return %arg0, %c0_i32 : i32, i32
  }
  func.func @transform_1(%arg0: i32, %arg1: i32) -> (i32, i32) {
    %c0_i32 = arith.constant 0 : i32
    %c0_i32_0 = arith.constant 0 : i32
    return %c0_i32, %arg1 : i32, i32
  }
  func.func @transform_2(%arg0: i32, %arg1: i32) -> (i32, i32) {
    %c0_i32 = arith.constant 0 : i32
    %c0_i32_0 = arith.constant 0 : i32
    return %c0_i32, %arg1 : i32, i32
  }
  func.func @transform_3(%arg0: i32, %arg1: i32) -> (i32, i32) {
    %c0_i32 = arith.constant 0 : i32
    return %arg0, %arg1 : i32, i32
  }
}

module attributes {stable_mosaic.version = 11 : i64} {
  func.func @_matmul_bias_relu_kernel(%arg0: i32, %arg1: i32, %arg2: memref<256x1600xbf16, #tpu.memory_space<vmem>>, %arg3: memref<1600x128xbf16, #tpu.memory_space<vmem>>, %arg4: memref<1x128xf32, #tpu.memory_space<vmem>>, %arg5: memref<256x128xbf16, #tpu.memory_space<vmem>>) attributes {dimension_semantics = [#tpu.dimension_semantics<parallel>, #tpu.dimension_semantics<parallel>], iteration_bounds = array<i64: 2, 1>, scalar_prefetch = 0 : i64, scratch_operands = 0 : i64, tpu.core_type = #tpu.core_type<tc>, window_params = [{transform_indices = @transform_0, window_bounds = array<i64: 256, 1600>}, {transform_indices = @transform_1, window_bounds = array<i64: 1600, 128>}, {transform_indices = @transform_2, window_bounds = array<i64: 1, 128>}, {transform_indices = @transform_3, window_bounds = array<i64: 256, 128>}]} {
    %c0 = arith.constant 0 : index
    %c0_0 = arith.constant 0 : index
    %0 = vector.load %arg2[%c0, %c0_0] : memref<256x1600xbf16, #tpu.memory_space<vmem>>, vector<256x1600xbf16>
    %c0_1 = arith.constant 0 : index
    %c0_2 = arith.constant 0 : index
    %1 = vector.load %arg3[%c0_1, %c0_2] : memref<1600x128xbf16, #tpu.memory_space<vmem>>, vector<1600x128xbf16>
    %cst = arith.constant dense<0.000000e+00> : vector<256x128xf32>
    %2 = tpu.matmul %0, %1, %cst {dimension_numbers = #tpu.dot_dimension_numbers<[1], [0], [0], [1], [0, 0, 1, 1], [], []>} : vector<256x1600xbf16>, vector<1600x128xbf16>, vector<256x128xf32> -> vector<256x128xf32>
    %c0_3 = arith.constant 0 : index
    %c0_4 = arith.constant 0 : index
    %3 = vector.load %arg4[%c0_3, %c0_4] : memref<1x128xf32, #tpu.memory_space<vmem>>, vector<1x128xf32>
    %4 = vector.broadcast %3 : vector<1x128xf32> to vector<256x128xf32>
    %5 = arith.addf %2, %4 : vector<256x128xf32>
    %cst_5 = arith.constant 0.000000e+00 : f32
    %6 = vector.broadcast %cst_5 : f32 to vector<256x128xf32>
    %7 = arith.maximumf %5, %6 : vector<256x128xf32>
    %8 = arith.truncf %7 : vector<256x128xf32> to vector<256x128xbf16>
    %c0_6 = arith.constant 0 : index
    %c0_7 = arith.constant 0 : index
    %9 = vector.load %arg5[%c0_6, %c0_7] : memref<256x128xbf16, #tpu.memory_space<vmem>>, vector<256x128xbf16>
    tpu.vector_store %arg5[%c0_6, %c0_7], %8 {strides = array<i32>} : memref<256x128xbf16, #tpu.memory_space<vmem>>, vector<256x128xbf16>,
    return
  }
  func.func @transform_0(%arg0: i32, %arg1: i32) -> (i32, i32) {
    %c0_i32 = arith.constant 0 : i32
    %c0_i32_0 = arith.constant 0 : i32
    return %arg0, %c0_i32 : i32, i32
  }
  func.func @transform_1(%arg0: i32, %arg1: i32) -> (i32, i32) {
    %c0_i32 = arith.constant 0 : i32
    %c0_i32_0 = arith.constant 0 : i32
    return %c0_i32, %arg1 : i32, i32
  }
  func.func @transform_2(%arg0: i32, %arg1: i32) -> (i32, i32) {
    %c0_i32 = arith.constant 0 : i32
    %c0_i32_0 = arith.constant 0 : i32
    return %c0_i32, %arg1 : i32, i32
  }
  func.func @transform_3(%arg0: i32, %arg1: i32) -> (i32, i32) {
    %c0_i32 = arith.constant 0 : i32
    return %arg0, %arg1 : i32, i32
  }
}

module attributes {stable_mosaic.version = 11 : i64} {
  func.func @_fc_fused_kernel(%arg0: i32, %arg1: memref<8x4096xbf16, #tpu.memory_space<vmem>>, %arg2: memref<4096x128xbf16, #tpu.memory_space<vmem>>, %arg3: memref<1x128xf32, #tpu.memory_space<vmem>>, %arg4: memref<128x128xf32, #tpu.memory_space<vmem>>, %arg5: memref<1x128xf32, #tpu.memory_space<vmem>>, %arg6: memref<8x128xf32, #tpu.memory_space<vmem>>, %arg7: memref<8x128xf32, #tpu.memory_space<vmem>>) attributes {dimension_semantics = [#tpu.dimension_semantics<arbitrary>], iteration_bounds = array<i64: 4>, scalar_prefetch = 0 : i64, scratch_operands = 1 : i64, tpu.core_type = #tpu.core_type<tc>, window_params = [{transform_indices = @transform_0, window_bounds = array<i64: 8, 4096>}, {transform_indices = @transform_1, window_bounds = array<i64: 4096, 128>}, {pipeline_mode = #tpu.pipeline_mode<synchronous>, transform_indices = @transform_2, window_bounds = array<i64: 1, 128>}, {pipeline_mode = #tpu.pipeline_mode<synchronous>, transform_indices = @transform_3, window_bounds = array<i64: 128, 128>}, {pipeline_mode = #tpu.pipeline_mode<synchronous>, transform_indices = @transform_4, window_bounds = array<i64: 1, 128>}, {pipeline_mode = #tpu.pipeline_mode<synchronous>, transform_indices = @transform_5, window_bounds = array<i64: 8, 128>}]} {
    %c0_i32 = arith.constant 0 : i32
    %0 = arith.cmpi eq, %arg0, %c0_i32 : i32
    %1 = arith.extui %0 : i1 to i32
    %c0_i32_0 = arith.constant 0 : i32
    %2 = arith.cmpi ne, %1, %c0_i32_0 : i32
    scf.if %2 {
      %cst_9 = arith.constant 0.000000e+00 : f32
      %12 = vector.broadcast %cst_9 : f32 to vector<8x128xf32>
      %c0_10 = arith.constant 0 : index
      %c0_11 = arith.constant 0 : index
      %13 = vector.load %arg7[%c0_10, %c0_11] : memref<8x128xf32, #tpu.memory_space<vmem>>, vector<8x128xf32>
      tpu.vector_store %arg7[%c0_10, %c0_11], %12 {strides = array<i32>} : memref<8x128xf32, #tpu.memory_space<vmem>>, vector<8x128xf32>,
    } else {
    }
    %c0 = arith.constant 0 : index
    %c0_1 = arith.constant 0 : index
    %3 = vector.load %arg7[%c0, %c0_1] : memref<8x128xf32, #tpu.memory_space<vmem>>, vector<8x128xf32>
    %c0_2 = arith.constant 0 : index
    %c0_3 = arith.constant 0 : index
    %4 = vector.load %arg1[%c0_2, %c0_3] : memref<8x4096xbf16, #tpu.memory_space<vmem>>, vector<8x4096xbf16>
    %c0_4 = arith.constant 0 : index
    %c0_5 = arith.constant 0 : index
    %5 = vector.load %arg2[%c0_4, %c0_5] : memref<4096x128xbf16, #tpu.memory_space<vmem>>, vector<4096x128xbf16>
    %cst = arith.constant dense<0.000000e+00> : vector<8x128xf32>
    %6 = tpu.matmul %4, %5, %cst {dimension_numbers = #tpu.dot_dimension_numbers<[1], [0], [0], [1], [0, 0, 1, 1], [], []>} : vector<8x4096xbf16>, vector<4096x128xbf16>, vector<8x128xf32> -> vector<8x128xf32>
    %7 = arith.addf %3, %6 : vector<8x128xf32>
    %c0_6 = arith.constant 0 : index
    %c0_7 = arith.constant 0 : index
    %8 = vector.load %arg7[%c0_6, %c0_7] : memref<8x128xf32, #tpu.memory_space<vmem>>, vector<8x128xf32>
    tpu.vector_store %arg7[%c0_6, %c0_7], %7 {strides = array<i32>} : memref<8x128xf32, #tpu.memory_space<vmem>>, vector<8x128xf32>,
    %c3_i32 = arith.constant 3 : i32
    %9 = arith.cmpi eq, %arg0, %c3_i32 : i32
    %10 = arith.extui %9 : i1 to i32
    %c0_i32_8 = arith.constant 0 : i32
    %11 = arith.cmpi ne, %10, %c0_i32_8 : i32
    scf.if %11 {
      %c0_9 = arith.constant 0 : index
      %c0_10 = arith.constant 0 : index
      %12 = vector.load %arg7[%c0_9, %c0_10] : memref<8x128xf32, #tpu.memory_space<vmem>>, vector<8x128xf32>
      %c0_11 = arith.constant 0 : index
      %c0_12 = arith.constant 0 : index
      %13 = vector.load %arg3[%c0_11, %c0_12] : memref<1x128xf32, #tpu.memory_space<vmem>>, vector<1x128xf32>
      %14 = vector.broadcast %13 : vector<1x128xf32> to vector<8x128xf32>
      %15 = arith.addf %12, %14 : vector<8x128xf32>
      %cst_13 = arith.constant 0.000000e+00 : f32
      %16 = vector.broadcast %cst_13 : f32 to vector<8x128xf32>
      %17 = arith.maximumf %15, %16 : vector<8x128xf32>
      %c0_14 = arith.constant 0 : index
      %c0_15 = arith.constant 0 : index
      %18 = vector.load %arg4[%c0_14, %c0_15] : memref<128x128xf32, #tpu.memory_space<vmem>>, vector<128x128xf32>
      %cst_16 = arith.constant dense<0.000000e+00> : vector<8x128xf32>
      %19 = tpu.matmul %17, %18, %cst_16 {dimension_numbers = #tpu.dot_dimension_numbers<[1], [0], [0], [1], [0, 0, 1, 1], [], []>} : vector<8x128xf32>, vector<128x128xf32>, vector<8x128xf32> -> vector<8x128xf32>
      %c0_17 = arith.constant 0 : index
      %c0_18 = arith.constant 0 : index
      %20 = vector.load %arg5[%c0_17, %c0_18] : memref<1x128xf32, #tpu.memory_space<vmem>>, vector<1x128xf32>
      %21 = vector.broadcast %20 : vector<1x128xf32> to vector<8x128xf32>
      %22 = arith.addf %19, %21 : vector<8x128xf32>
      %c0_19 = arith.constant 0 : index
      %c0_20 = arith.constant 0 : index
      %23 = vector.load %arg6[%c0_19, %c0_20] : memref<8x128xf32, #tpu.memory_space<vmem>>, vector<8x128xf32>
      tpu.vector_store %arg6[%c0_19, %c0_20], %22 {strides = array<i32>} : memref<8x128xf32, #tpu.memory_space<vmem>>, vector<8x128xf32>,
    } else {
    }
    return
  }
  func.func @transform_0(%arg0: i32) -> (i32, i32) {
    %c0_i32 = arith.constant 0 : i32
    %c0_i32_0 = arith.constant 0 : i32
    return %c0_i32, %arg0 : i32, i32
  }
  func.func @transform_1(%arg0: i32) -> (i32, i32) {
    %c0_i32 = arith.constant 0 : i32
    %c0_i32_0 = arith.constant 0 : i32
    return %arg0, %c0_i32 : i32, i32
  }
  func.func @transform_2(%arg0: i32) -> (i32, i32) {
    %c0_i32 = arith.constant 0 : i32
    %c0_i32_0 = arith.constant 0 : i32
    %c0_i32_1 = arith.constant 0 : i32
    return %c0_i32, %c0_i32_0 : i32, i32
  }
  func.func @transform_3(%arg0: i32) -> (i32, i32) {
    %c0_i32 = arith.constant 0 : i32
    %c0_i32_0 = arith.constant 0 : i32
    %c0_i32_1 = arith.constant 0 : i32
    return %c0_i32, %c0_i32_0 : i32, i32
  }
  func.func @transform_4(%arg0: i32) -> (i32, i32) {
    %c0_i32 = arith.constant 0 : i32
    %c0_i32_0 = arith.constant 0 : i32
    %c0_i32_1 = arith.constant 0 : i32
    return %c0_i32, %c0_i32_0 : i32, i32
  }
  func.func @transform_5(%arg0: i32) -> (i32, i32) {
    %c0_i32 = arith.constant 0 : i32
    %c0_i32_0 = arith.constant 0 : i32
    %c0_i32_1 = arith.constant 0 : i32
    return %c0_i32, %c0_i32_0 : i32, i32
  }
}

</mosaic_0001>

<llo_original>
// kernel: reseau_neurone_forward.5
$region0: #{reseau_neurone_forward.5}
  #allocation0 [shape = 'u32[]', space=smem, size = 0x4, offset = 0x4, fixed_abs, tag = 'smem constant byte address 0x4 - core index']
  #allocation1 [shape = 'u32[72,128]{1,0:T(1,128)}', space=vmem, size = 0x9000, scoped, tag = 'internal scratch']
  %s0 = inlined_call_operand.vmem [shape: bf16[1536,32], index: 0, kind: input, shape index: {}]
  %s1 = inlined_call_operand.vmem [shape: bf16[32,128], index: 1, kind: input, shape index: {}]
  %s2 = inlined_call_operand.vmem [shape: f32[1,128], index: 2, kind: input, shape index: {}]
  %s3 = inlined_call_operand.vmem [shape: bf16[1536,128], index: 3, kind: output, shape index: {}]
  %s4 = sld [smem:[#allocation0]]
  $region45: #{reseau_neurone_forward.5} parent=0
    _
  %s6 = ssub.s32 1, %s4
  %s7 = scalar_select 0, %s6, %s4
  loop: start=0, step=1, limit=8
  $region2: #{reseau_neurone_forward.5} parent=0 // loop_pre_header
    _
  $region3: #{reseau_neurone_forward.5} parent=0 // loop_header
    %s9 = sphi 0, %s13
    %p10 = scmp.ge.s32.totalorder %s9, 8
    %s16 = sphi 0, %s28
    %s17 = sphi 0, %s24
    %s18 = sphi 0, %s16
    %s19 = sphi 0, %s17
    %s20 = sphi 0, %s18
    %s21 = sphi 0, %s19
    %s31 = sphi 0, %s33
    %s34 = sphi 0, %s31
    %s35 = sphi 0, %s34
    %s51 = sphi 0, %s35
    %s57 = sphi 0, %s59
    %s60 = sphi 0, %s57
    %s61 = sphi 0, %s60
    %s77 = sphi 0, %s61
    %s83 = sphi 0, %s85
    %s86 = sphi 0, %s83
    %s87 = sphi 0, %s86
    %s103 = sphi 0, %s87
    %s111 = sphi 0, %s113
    %s114 = sphi 0, %s111
    %s115 = sphi 0, %s114
    %s131 = sphi 0, %s115
  $region4: #{reseau_neurone_forward.5} parent=0 // loop_header_branch
    %12 = sbr.rel (%p10) target = $region8
  $region5: #{reseau_neurone_forward.5} parent=0 // loop_body
    %s14 = ssub.s32 %s9, 1
    %s15 = ssub.s32 %s9, 2
    %s22 = sadd.s32 1, %s17
    %p23 = scmp.ge.s32.totalorder %s22, 1
    %s24 = scalar_select %p23, 0, %s22
    %s25 = sadd.s32 1, %s16
    %s26 = scalar_select %p23, %s25, %s16
    %p27 = scmp.ge.s32.totalorder %s26, 6
    %s28 = scalar_select %p27, 0, %s26
    %s29 = ssub.s32 %s16, %s28
    %p30 = scmp.eq.s32.totalorder %s29, 0
    %s32 = sadd.s32 %s31, 1
    %s33 = scalar_select %p30, %s31, %s32
    %p36 = pneg %p30
    %p37 = scmp.eq.s32.totalorder %s9, 5
    %p38 = por %p36, %p37
    %p39 = scmp.ne.s32.totalorder %s31, %s34
    %p40 = scmp.eq.s32.totalorder %s9, 0
    %p41 = por %p39, %p40
    %p42 = scmp.ne.s32.totalorder %s31, %s34
    %p43 = scmp.eq.s32.totalorder %s14, 5
    %p44 = por %p42, %p43
    %p45 = scmp.ne.s32.totalorder %s34, %s35
    %p46 = scmp.eq.s32.totalorder %s14, 0
    %p47 = por %p45, %p46
    %p48 = scmp.ne.s32.totalorder %s34, %s35
    %p49 = scmp.eq.s32.totalorder %s15, 5
    %p50 = por %p48, %p49
    %p52 = scmp.ne.s32.totalorder %s35, %s51
    %p53 = scmp.eq.s32.totalorder %s15, 0
    %p54 = por %p52, %p53
    %s55 = ssub.s32 %s17, %s24
    %p56 = scmp.eq.s32.totalorder %s55, 0
    %s58 = sadd.s32 %s57, 1
    %s59 = scalar_select %p56, %s57, %s58
    %p62 = pneg %p56
    %p63 = scmp.eq.s32.totalorder %s9, 5
    %p64 = por %p62, %p63
    %p65 = scmp.ne.s32.totalorder %s57, %s60
    %p66 = scmp.eq.s32.totalorder %s9, 0
    %p67 = por %p65, %p66
    %p68 = scmp.ne.s32.totalorder %s57, %s60
    %p69 = scmp.eq.s32.totalorder %s14, 5
    %p70 = por %p68, %p69
    %p71 = scmp.ne.s32.totalorder %s60, %s61
    %p72 = scmp.eq.s32.totalorder %s14, 0
    %p73 = por %p71, %p72
    %p74 = scmp.ne.s32.totalorder %s60, %s61
    %p75 = scmp.eq.s32.totalorder %s15, 5
    %p76 = por %p74, %p75
    %p78 = scmp.ne.s32.totalorder %s61, %s77
    %p79 = scmp.eq.s32.totalorder %s15, 0
    %p80 = por %p78, %p79
    %s81 = ssub.s32 %s17, %s24
    %p82 = scmp.eq.s32.totalorder %s81, 0
    %s84 = sadd.s32 %s83, 1
    %s85 = scalar_select %p82, %s83, %s84
    %p88 = pneg %p82
    %p89 = scmp.eq.s32.totalorder %s9, 5
    %p90 = por %p88, %p89
    %p91 = scmp.ne.s32.totalorder %s83, %s86
    %p92 = scmp.eq.s32.totalorder %s9, 0
    %p93 = por %p91, %p92
    %p94 = scmp.ne.s32.totalorder %s83, %s86
    %p95 = scmp.eq.s32.totalorder %s14, 5
    %p96 = por %p94, %p95
    %p97 = scmp.ne.s32.totalorder %s86, %s87
    %p98 = scmp.eq.s32.totalorder %s14, 0
    %p99 = por %p97, %p98
    %p100 = scmp.ne.s32.totalorder %s86, %s87
    %p101 = scmp.eq.s32.totalorder %s15, 5
    %p102 = por %p100, %p101
    %p104 = scmp.ne.s32.totalorder %s87, %s103
    %p105 = scmp.eq.s32.totalorder %s15, 0
    %p106 = por %p104, %p105
    %s107 = ssub.s32 %s16, %s28
    %s108 = ssub.s32 %s17, %s24
    %s109 = sor.u32 %s107, %s108
    %p110 = scmp.eq.s32.totalorder %s109, 0
    %s112 = sadd.s32 %s111, 1
    %s113 = scalar_select %p110, %s111, %s112
    %p116 = pneg %p110
    %p117 = scmp.eq.s32.totalorder %s9, 5
    %p118 = por %p116, %p117
    %p119 = scmp.ne.s32.totalorder %s111, %s114
    %p120 = scmp.eq.s32.totalorder %s9, 0
    %p121 = por %p119, %p120
    %p122 = scmp.ne.s32.totalorder %s111, %s114
    %p123 = scmp.eq.s32.totalorder %s14, 5
    %p124 = por %p122, %p123
    %p125 = scmp.ne.s32.totalorder %s114, %s115
    %p126 = scmp.eq.s32.totalorder %s14, 0
    %p127 = por %p125, %p126
    %p128 = scmp.ne.s32.totalorder %s114, %s115
    %p129 = scmp.eq.s32.totalorder %s15, 5
    %p130 = por %p128, %p129
    %p132 = scmp.ne.s32.totalorder %s115, %s131
    %p133 = scmp.eq.s32.totalorder %s15, 0
    %p134 = por %p132, %p133
    %p135 = scmp.le.s32.totalorder 1, %s9
    %p136 = scmp.lt.s32.totalorder %s9, 7
    %p137 = pnand %p135, %p136
    %p138 = pneg %p137
    // Predicated region
    $region9: #{reseau_neurone_forward.5} parent=5 // pred_check
      _
    $region10: #{reseau_neurone_forward.5} parent=5 // pred_check_branch
      %140 = sbr.rel (%p137) target = $region12
    $region11: #{reseau_neurone_forward.5} parent=5 // pred_region
      %s141 = ssub.s32 %s9, 1
      // Predicated region
      $region13: #{reseau_neurone_forward.5} parent=11 // pred_check
        %p142 = pneg %p73
      $region14: #{reseau_neurone_forward.5} parent=11 // pred_check_branch
        %144 = sbr.rel (%p142) target = $region16
      $region15: #{reseau_neurone_forward.5} parent=11 // pred_region
        %p145 = scmp.lt.s32.totalorder %s19, 0
        %s146 = scalar_select %p145, %s19, 0
        %s147 = smul.addr %s146, 4
        %s148 = scalar_lea.vmem %s1, %s147
      $region16: #{reseau_neurone_forward.5} parent=11 // pred_fallthru
        _
      // Predicated region
      $region17: #{reseau_neurone_forward.5} parent=11 // pred_check
        %p149 = pneg %p99
      $region18: #{reseau_neurone_forward.5} parent=11 // pred_check_branch
        %151 = sbr.rel (%p149) target = $region20
      $region19: #{reseau_neurone_forward.5} parent=11 // pred_region
        %p152 = scmp.lt.s32.totalorder %s19, 0
        %s153 = scalar_select %p152, %s19, 0
        %s154 = scalar_lea.vmem %s2, %s153
      $region20: #{reseau_neurone_forward.5} parent=11 // pred_fallthru
        _
    $region12: #{reseau_neurone_forward.5} parent=5 // pred_fallthru
      _
    %p155 = scmp.lt.s32.totalorder %s9, 6
    // Predicated region
    $region21: #{reseau_neurone_forward.5} parent=5 // pred_check
      %p156 = pneg %p155
    $region22: #{reseau_neurone_forward.5} parent=5 // pred_check_branch
      %158 = sbr.rel (%p156) target = $region24
    $region23: #{reseau_neurone_forward.5} parent=5 // pred_region
      // Predicated region
      $region25: #{reseau_neurone_forward.5} parent=23 // pred_check
        %p159 = pneg %p41
      $region26: #{reseau_neurone_forward.5} parent=23 // pred_check_branch
        %161 = sbr.rel (%p159) target = $region28
      $region27: #{reseau_neurone_forward.5} parent=23 // pred_region
        %s162 = smul.u32 32, %s16
        %p163 = scmp.lt.s32.totalorder %s162, 191
        %s164 = scalar_select %p163, %s162, 191
        %s165 = smul.addr %s164, 4
        %s166 = scalar_lea.vmem %s0, %s165
        %s167 = smul.u32 32, %s16
      $region28: #{reseau_neurone_forward.5} parent=23 // pred_fallthru
        _
    $region24: #{reseau_neurone_forward.5} parent=5 // pred_fallthru
      _
    %p168 = scmp.le.s32.totalorder 1, %s9
    %p169 = scmp.lt.s32.totalorder %s9, 7
    %p170 = pnand %p168, %p169
    %p171 = pneg %p170
    // Predicated region
    $region29: #{reseau_neurone_forward.5} parent=5 // pred_check
      _
    $region30: #{reseau_neurone_forward.5} parent=5 // pred_check_branch
      %173 = sbr.rel (%p170) target = $region32
    $region31: #{reseau_neurone_forward.5} parent=5 // pred_region
      %s174 = ssub.s32 %s9, 1
      %s175 = smul.u32 32, %s18
      %p176 = scmp.lt.s32.totalorder %s175, 191
      %s177 = scalar_select %p176, %s175, 191
      %s178 = smul.addr %s177, 4
      %s179 = scalar_lea.vmem %s0, %s178
      %p180 = pneg %p47
      %p181 = pneg %p44
      %p182 = scmp.lt.s32.totalorder %s19, 0
      %s183 = scalar_select %p182, %s19, 0
      %s184 = smul.addr %s183, 4
      %s185 = scalar_lea.vmem %s1, %s184
      %p186 = pneg %p73
      %p187 = pneg %p70
      %p188 = scmp.lt.s32.totalorder %s19, 0
      %s189 = scalar_select %p188, %s19, 0
      %s190 = scalar_lea.vmem %s2, %s189
      %p191 = pneg %p99
      %p192 = pneg %p96
      %p193 = pneg %p127
      %p194 = pneg %p124
      %s195 = smul.u32 32, %s18
      %p196 = scmp.lt.s32.totalorder %s195, 191
      %s197 = scalar_select %p196, %s195, 191
      %p198 = scmp.lt.s32.totalorder %s19, 0
      %s199 = scalar_select %p198, %s19, 0
      %s200 = sadd.s32 %s199, %s197
      %s201 = smul.addr %s200, 4
      %s202 = scalar_lea.vmem %s3, %s201
      %s203 = smul.u32 32, %s18
      %p204 = scmp.lt.s32.totalorder %s203, 191
      %s205 = scalar_select %p204, %s203, 191
      %s206 = smul.addr %s205, 4
      %s207 = scalar_lea.vmem %s0, %s206
      %s208 = smul.u32 32, %s18
      %p209 = scmp.lt.s32.totalorder %s19, 0
      %s210 = scalar_select %p209, %s19, 0
      %s211 = smul.addr %s210, 4
      %s212 = scalar_lea.vmem %s1, %s211
      %p213 = scmp.lt.s32.totalorder %s19, 0
      %s214 = scalar_select %p213, %s19, 0
      %s215 = scalar_lea.vmem %s2, %s214
      %s216 = smul.u32 32, %s18
      %p217 = scmp.lt.s32.totalorder %s216, 191
      %s218 = scalar_select %p217, %s216, 191
      %p219 = scmp.lt.s32.totalorder %s19, 0
      %s220 = scalar_select %p219, %s19, 0
      %s221 = sadd.s32 %s220, %s218
      %s222 = smul.addr %s221, 4
      %s223 = scalar_lea.vmem %s3, %s222
      %s224 = smul.u32 32, %s18
      %v226 = vld [vmem:[%s207] sm:$0xf]
      %v227 = vld [vmem:[%s207 + $0x4] sm:$0xf]
      %v228 = vld [vmem:[%s207 + $0x8] sm:$0xf]
      %v229 = vld [vmem:[%s207 + $0xc] sm:$0xf]
      %v230 = vld [vmem:[%s207 + $0x10] sm:$0xf]
      %v231 = vld [vmem:[%s207 + $0x14] sm:$0xf]
      %v232 = vld [vmem:[%s207 + $0x18] sm:$0xf]
      %v233 = vld [vmem:[%s207 + $0x1c] sm:$0xf]
      %v234 = vld [vmem:[%s207 + $0x20] sm:$0xf]
      %v235 = vld [vmem:[%s207 + $0x24] sm:$0xf]
      %v236 = vld [vmem:[%s207 + $0x28] sm:$0xf]
      %v237 = vld [vmem:[%s207 + $0x2c] sm:$0xf]
      %v238 = vld [vmem:[%s207 + $0x30] sm:$0xf]
      %v239 = vld [vmem:[%s207 + $0x34] sm:$0xf]
      %v240 = vld [vmem:[%s207 + $0x38] sm:$0xf]
      %v241 = vld [vmem:[%s207 + $0x3c] sm:$0xf]
      %v242 = vld [vmem:[%s207 + $0x40] sm:$0xf]
      %v243 = vld [vmem:[%s207 + $0x44] sm:$0xf]
      %v244 = vld [vmem:[%s207 + $0x48] sm:$0xf]
      %v245 = vld [vmem:[%s207 + $0x4c] sm:$0xf]
      %v246 = vld [vmem:[%s207 + $0x50] sm:$0xf]
      %v247 = vld [vmem:[%s207 + $0x54] sm:$0xf]
      %v248 = vld [vmem:[%s207 + $0x58] sm:$0xf]
      %v249 = vld [vmem:[%s207 + $0x5c] sm:$0xf]
      %v250 = vld [vmem:[%s207 + $0x60] sm:$0xf]
      %v251 = vld [vmem:[%s207 + $0x64] sm:$0xf]
      %v252 = vld [vmem:[%s207 + $0x68] sm:$0xf]
      %v253 = vld [vmem:[%s207 + $0x6c] sm:$0xf]
      %v254 = vld [vmem:[%s207 + $0x70] sm:$0xf]
      %v255 = vld [vmem:[%s207 + $0x74] sm:$0xf]
      %v256 = vld [vmem:[%s207 + $0x78] sm:$0xf]
      %v257 = vld [vmem:[%s207 + $0x7c] sm:$0xf]
      %v258 = vld [vmem:[%s212] sm:$0xf]
      %v259 = vld [vmem:[%s212 + $0x4] sm:$0xf]
      %v260 = vld [vmem:[%s212 + $0x8] sm:$0xf]
      %v261 = vld [vmem:[%s212 + $0xc] sm:$0xf]
      %v262 = vld [vmem:[%s215] sm:$0x1]
      %v264 = vperm.slane %v262, 0
      %v298 = vunpack.c.l.b16 %v226
      %v299 = vunpack.c.l.b16 %v227
      %v300 = vunpack.c.l.b16 %v228
      %v301 = vunpack.c.l.b16 %v229
      %v302 = vunpack.c.l.b16 %v230
      %v303 = vunpack.c.l.b16 %v231
      %v304 = vunpack.c.l.b16 %v232
      %v305 = vunpack.c.l.b16 %v233
      %v306 = vunpack.c.l.b16 %v234
      %v307 = vunpack.c.l.b16 %v235
      %v308 = vunpack.c.l.b16 %v236
      %v309 = vunpack.c.l.b16 %v237
      %v310 = vunpack.c.l.b16 %v238
      %v311 = vunpack.c.l.b16 %v239
      %v312 = vunpack.c.l.b16 %v240
      %v313 = vunpack.c.l.b16 %v241
      %v314 = vunpack.c.l.b16 %v242
      %v315 = vunpack.c.l.b16 %v243
      %v316 = vunpack.c.l.b16 %v244
      %v317 = vunpack.c.l.b16 %v245
      %v318 = vunpack.c.l.b16 %v246
      %v319 = vunpack.c.l.b16 %v247
      %v320 = vunpack.c.l.b16 %v248
      %v321 = vunpack.c.l.b16 %v249
      %v322 = vunpack.c.l.b16 %v250
      %v323 = vunpack.c.l.b16 %v251
      %v324 = vunpack.c.l.b16 %v252
      %v325 = vunpack.c.l.b16 %v253
      %v326 = vunpack.c.l.b16 %v254
      %v327 = vunpack.c.l.b16 %v255
      %v328 = vunpack.c.l.b16 %v256
      %v329 = vunpack.c.l.b16 %v257
      %v330 = vpack.c.b16 %v299, %v298
      %v331 = vpack.c.b16 %v301, %v300
      %v332 = vpack.c.b16 %v303, %v302
      %v333 = vpack.c.b16 %v305, %v304
      %v334 = vpack.c.b16 %v307, %v306
      %v335 = vpack.c.b16 %v309, %v308
      %v336 = vpack.c.b16 %v311, %v310
      %v337 = vpack.c.b16 %v313, %v312
      %v338 = vpack.c.b16 %v315, %v314
      %v339 = vpack.c.b16 %v317, %v316
      %v340 = vpack.c.b16 %v319, %v318
      %v341 = vpack.c.b16 %v321, %v320
      %v342 = vpack.c.b16 %v323, %v322
      %v343 = vpack.c.b16 %v325, %v324
      %v344 = vpack.c.b16 %v327, %v326
      %v345 = vpack.c.b16 %v329, %v328
      %v350 = vunpack.c.l.b16 %v258
      %v351 = vunpack.c.l.b16 %v259
      %v352 = vunpack.c.l.b16 %v260
      %v353 = vunpack.c.l.b16 %v261
      %v354 = vpack.c.b16 %v351, %v350
      %v355 = vpack.c.b16 %v353, %v352
      %vm358 = vcmask 261120
      %v360 = vsel %vm358, %v330, 0
      %v363 = vsel %vm358, %v331, 0
      %v366 = vsel %vm358, %v332, 0
      %v369 = vsel %vm358, %v333, 0
      %v372 = vsel %vm358, %v334, 0
      %v375 = vsel %vm358, %v335, 0
      %v378 = vsel %vm358, %v336, 0
      %v381 = vsel %vm358, %v337, 0
      %v384 = vsel %vm358, %v338, 0
      %v387 = vsel %vm358, %v339, 0
      %v390 = vsel %vm358, %v340, 0
      %v393 = vsel %vm358, %v341, 0
      %v396 = vsel %vm358, %v342, 0
      %v399 = vsel %vm358, %v343, 0
      %v402 = vsel %vm358, %v344, 0
      %v405 = vsel %vm358, %v345, 0
      %407 = vmatpush.bf16.msra.mxu0 0
      %408 = vmatpush.bf16.msra.mxu0 0
      %409 = vmatpush.bf16.msra.mxu0 0
      %410 = vmatpush.bf16.msra.mxu0 0
      %411 = vmatpush.bf16.msra.mxu0 0
      %412 = vmatpush.bf16.msra.mxu0 0
      %413 = vmatpush.bf16.msra.mxu0 %v355
      %414 = vmatpush.bf16.msra.mxu0 %v354
      %415 = vmatmul.bf16.gmra.mxu0 %v360
      %v416 = vpop.f32.mrf.mxu0
      %v417 = vadd.f32 %v264, %v416
      %v418 = vpop.f32.mrf.mxu0
      %v419 = vadd.f32 %v264, %v418
      %420 = vmatmul.bf16.gmra.mxu0 %v363
      %v421 = vpop.f32.mrf.mxu0
      %v422 = vadd.f32 %v264, %v421
      %v423 = vpop.f32.mrf.mxu0
      %v424 = vadd.f32 %v264, %v423
      %425 = vmatmul.bf16.gmra.mxu0 %v366
      %v426 = vpop.f32.mrf.mxu0
      %v427 = vadd.f32 %v264, %v426
      %v428 = vpop.f32.mrf.mxu0
      %v429 = vadd.f32 %v264, %v428
      %430 = vmatmul.bf16.gmra.mxu0 %v369
      %v431 = vpop.f32.mrf.mxu0
      %v432 = vadd.f32 %v264, %v431
      %v433 = vpop.f32.mrf.mxu0
      %v434 = vadd.f32 %v264, %v433
      %435 = vmatmul.bf16.gmra.mxu0 %v372
      %v436 = vpop.f32.mrf.mxu0
      %v437 = vadd.f32 %v264, %v436
      %v438 = vpop.f32.mrf.mxu0
      %v439 = vadd.f32 %v264, %v438
      %440 = vmatmul.bf16.gmra.mxu0 %v375
      %v441 = vpop.f32.mrf.mxu0
      %v442 = vadd.f32 %v264, %v441
      %v443 = vpop.f32.mrf.mxu0
      %v444 = vadd.f32 %v264, %v443
      %445 = vmatmul.bf16.gmra.mxu0 %v378
      %v446 = vpop.f32.mrf.mxu0
      %v447 = vadd.f32 %v264, %v446
      %v448 = vpop.f32.mrf.mxu0
      %v449 = vadd.f32 %v264, %v448
      %450 = vmatmul.bf16.gmra.mxu0 %v381
      %v451 = vpop.f32.mrf.mxu0
      %v452 = vadd.f32 %v264, %v451
      %v453 = vpop.f32.mrf.mxu0
      %v454 = vadd.f32 %v264, %v453
      %455 = vmatmul.bf16.gmra.mxu0 %v384
      %v456 = vpop.f32.mrf.mxu0
      %v457 = vadd.f32 %v264, %v456
      %v458 = vpop.f32.mrf.mxu0
      %v459 = vadd.f32 %v264, %v458
      %460 = vmatmul.bf16.gmra.mxu0 %v387
      %v461 = vpop.f32.mrf.mxu0
      %v462 = vadd.f32 %v264, %v461
      %v463 = vpop.f32.mrf.mxu0
      %v464 = vadd.f32 %v264, %v463
      %465 = vmatmul.bf16.gmra.mxu0 %v390
      %v466 = vpop.f32.mrf.mxu0
      %v467 = vadd.f32 %v264, %v466
      %v468 = vpop.f32.mrf.mxu0
      %v469 = vadd.f32 %v264, %v468
      %470 = vmatmul.bf16.gmra.mxu0 %v393
      %v471 = vpop.f32.mrf.mxu0
      %v472 = vadd.f32 %v264, %v471
      %v473 = vpop.f32.mrf.mxu0
      %v474 = vadd.f32 %v264, %v473
      %475 = vmatmul.bf16.gmra.mxu0 %v396
      %v476 = vpop.f32.mrf.mxu0
      %v477 = vadd.f32 %v264, %v476
      %v478 = vpop.f32.mrf.mxu0
      %v479 = vadd.f32 %v264, %v478
      %480 = vmatmul.bf16.gmra.mxu0 %v399
      %v481 = vpop.f32.mrf.mxu0
      %v482 = vadd.f32 %v264, %v481
      %v483 = vpop.f32.mrf.mxu0
      %v484 = vadd.f32 %v264, %v483
      %485 = vmatmul.bf16.gmra.mxu0 %v402
      %v486 = vpop.f32.mrf.mxu0
      %v487 = vadd.f32 %v264, %v486
      %v488 = vpop.f32.mrf.mxu0
      %v489 = vadd.f32 %v264, %v488
      %490 = vmatmul.bf16.gmra.mxu0 %v405
      %v491 = vpop.f32.mrf.mxu0
      %v492 = vadd.f32 %v264, %v491
      %v493 = vpop.f32.mrf.mxu0
      %v494 = vadd.f32 %v264, %v493
      %495 = vdwg.mxu0
      %v496 = vmax.f32 %v417, 0.0
      %v497 = vmax.f32 %v419, 0.0
      %v498 = vmax.f32 %v422, 0.0
      %v499 = vmax.f32 %v424, 0.0
      %v500 = vmax.f32 %v427, 0.0
      %v501 = vmax.f32 %v429, 0.0
      %v502 = vmax.f32 %v432, 0.0
      %v503 = vmax.f32 %v434, 0.0
      %v504 = vmax.f32 %v437, 0.0
      %v505 = vmax.f32 %v439, 0.0
      %v506 = vmax.f32 %v442, 0.0
      %v507 = vmax.f32 %v444, 0.0
      %v508 = vmax.f32 %v447, 0.0
      %v509 = vmax.f32 %v449, 0.0
      %v510 = vmax.f32 %v452, 0.0
      %v511 = vmax.f32 %v454, 0.0
      %v512 = vmax.f32 %v457, 0.0
      %v513 = vmax.f32 %v459, 0.0
      %v514 = vmax.f32 %v462, 0.0
      %v515 = vmax.f32 %v464, 0.0
      %v516 = vmax.f32 %v467, 0.0
      %v517 = vmax.f32 %v469, 0.0
      %v518 = vmax.f32 %v472, 0.0
      %v519 = vmax.f32 %v474, 0.0
      %v520 = vmax.f32 %v477, 0.0
      %v521 = vmax.f32 %v479, 0.0
      %v522 = vmax.f32 %v482, 0.0
      %v523 = vmax.f32 %v484, 0.0
      %v524 = vmax.f32 %v487, 0.0
      %v525 = vmax.f32 %v489, 0.0
      %v526 = vmax.f32 %v492, 0.0
      %v527 = vmax.f32 %v494, 0.0
      %v528 = vpack.c.bf16 %v496, %v496
      %v529 = vpack.c.bf16 %v497, %v497
      %v530 = vpack.c.bf16 %v498, %v498
      %v531 = vpack.c.bf16 %v499, %v499
      %v532 = vpack.c.bf16 %v500, %v500
      %v533 = vpack.c.bf16 %v501, %v501
      %v534 = vpack.c.bf16 %v502, %v502
      %v535 = vpack.c.bf16 %v503, %v503
      %v536 = vpack.c.bf16 %v504, %v504
      %v537 = vpack.c.bf16 %v505, %v505
      %v538 = vpack.c.bf16 %v506, %v506
      %v539 = vpack.c.bf16 %v507, %v507
      %v540 = vpack.c.bf16 %v508, %v508
      %v541 = vpack.c.bf16 %v509, %v509
      %v542 = vpack.c.bf16 %v510, %v510
      %v543 = vpack.c.bf16 %v511, %v511
      %v544 = vpack.c.bf16 %v512, %v512
      %v545 = vpack.c.bf16 %v513, %v513
      %v546 = vpack.c.bf16 %v514, %v514
      %v547 = vpack.c.bf16 %v515, %v515
      %v548 = vpack.c.bf16 %v516, %v516
      %v549 = vpack.c.bf16 %v517, %v517
      %v550 = vpack.c.bf16 %v518, %v518
      %v551 = vpack.c.bf16 %v519, %v519
      %v552 = vpack.c.bf16 %v520, %v520
      %v553 = vpack.c.bf16 %v521, %v521
      %v554 = vpack.c.bf16 %v522, %v522
      %v555 = vpack.c.bf16 %v523, %v523
      %v556 = vpack.c.bf16 %v524, %v524
      %v557 = vpack.c.bf16 %v525, %v525
      %v558 = vpack.c.bf16 %v526, %v526
      %v559 = vpack.c.bf16 %v527, %v527
      %560 = vst [vmem:[%s223] sm:$0xf] %v528
      %561 = vst [vmem:[%s223 + $0x4] sm:$0xf] %v529
      %562 = vst [vmem:[%s223 + $0x8] sm:$0xf] %v530
      %563 = vst [vmem:[%s223 + $0xc] sm:$0xf] %v531
      %564 = vst [vmem:[%s223 + $0x10] sm:$0xf] %v532
      %565 = vst [vmem:[%s223 + $0x14] sm:$0xf] %v533
      %566 = vst [vmem:[%s223 + $0x18] sm:$0xf] %v534
      %567 = vst [vmem:[%s223 + $0x1c] sm:$0xf] %v535
      %568 = vst [vmem:[%s223 + $0x20] sm:$0xf] %v536
      %569 = vst [vmem:[%s223 + $0x24] sm:$0xf] %v537
      %570 = vst [vmem:[%s223 + $0x28] sm:$0xf] %v538
      %571 = vst [vmem:[%s223 + $0x2c] sm:$0xf] %v539
      %572 = vst [vmem:[%s223 + $0x30] sm:$0xf] %v540
      %573 = vst [vmem:[%s223 + $0x34] sm:$0xf] %v541
      %574 = vst [vmem:[%s223 + $0x38] sm:$0xf] %v542
      %575 = vst [vmem:[%s223 + $0x3c] sm:$0xf] %v543
      %576 = vst [vmem:[%s223 + $0x40] sm:$0xf] %v544
      %577 = vst [vmem:[%s223 + $0x44] sm:$0xf] %v545
      %578 = vst [vmem:[%s223 + $0x48] sm:$0xf] %v546
      %579 = vst [vmem:[%s223 + $0x4c] sm:$0xf] %v547
      %580 = vst [vmem:[%s223 + $0x50] sm:$0xf] %v548
      %581 = vst [vmem:[%s223 + $0x54] sm:$0xf] %v549
      %582 = vst [vmem:[%s223 + $0x58] sm:$0xf] %v550
      %583 = vst [vmem:[%s223 + $0x5c] sm:$0xf] %v551
      %584 = vst [vmem:[%s223 + $0x60] sm:$0xf] %v552
      %585 = vst [vmem:[%s223 + $0x64] sm:$0xf] %v553
      %586 = vst [vmem:[%s223 + $0x68] sm:$0xf] %v554
      %587 = vst [vmem:[%s223 + $0x6c] sm:$0xf] %v555
      %588 = vst [vmem:[%s223 + $0x70] sm:$0xf] %v556
      %589 = vst [vmem:[%s223 + $0x74] sm:$0xf] %v557
      %590 = vst [vmem:[%s223 + $0x78] sm:$0xf] %v558
      %591 = vst [vmem:[%s223 + $0x7c] sm:$0xf] %v559
      %s592 = smul.u32 32, %s18
      %p593 = scmp.lt.s32.totalorder %s592, 191
      %s594 = scalar_select %p593, %s592, 191
      %p595 = scmp.lt.s32.totalorder %s19, 0
      %s596 = scalar_select %p595, %s19, 0
      %s597 = sadd.s32 %s596, %s594
      %s598 = smul.addr %s597, 4
      %s599 = scalar_lea.vmem %s3, %s598
      // Predicated region
      $region33: #{reseau_neurone_forward.5} parent=31 // pred_check
        %p600 = pneg %p124
      $region34: #{reseau_neurone_forward.5} parent=31 // pred_check_branch
        %602 = sbr.rel (%p600) target = $region36
      $region35: #{reseau_neurone_forward.5} parent=31 // pred_region
        %s603 = smul.u32 32, %s18
      $region36: #{reseau_neurone_forward.5} parent=31 // pred_fallthru
        _
    $region32: #{reseau_neurone_forward.5} parent=5 // pred_fallthru
      _
    %p604 = scmp.le.s32.totalorder 2, %s9
    // Predicated region
    $region37: #{reseau_neurone_forward.5} parent=5 // pred_check
      %p605 = pneg %p604
    $region38: #{reseau_neurone_forward.5} parent=5 // pred_check_branch
      %607 = sbr.rel (%p605) target = $region40
    $region39: #{reseau_neurone_forward.5} parent=5 // pred_region
      %s608 = ssub.s32 %s9, 2
      // Predicated region
      $region41: #{reseau_neurone_forward.5} parent=39 // pred_check
        %p609 = pneg %p130
      $region42: #{reseau_neurone_forward.5} parent=39 // pred_check_branch
        %611 = sbr.rel (%p609) target = $region44
      $region43: #{reseau_neurone_forward.5} parent=39 // pred_region
        %s612 = smul.u32 32, %s20
        %p613 = scmp.lt.s32.totalorder %s612, 191
        %s614 = scalar_select %p613, %s612, 191
        %p615 = scmp.lt.s32.totalorder %s21, 0
        %s616 = scalar_select %p615, %s21, 0
        %s617 = sadd.s32 %s616, %s614
        %s618 = smul.addr %s617, 4
        %s619 = scalar_lea.vmem %s3, %s618
      $region44: #{reseau_neurone_forward.5} parent=39 // pred_fallthru
        _
    $region40: #{reseau_neurone_forward.5} parent=5 // pred_fallthru
      _
  $region6: #{reseau_neurone_forward.5} parent=0 // loop_footer
    %s13 = sadd.s32 1, %s9
  $region7: #{reseau_neurone_forward.5} parent=0 // loop_footer_branch
    %8 = sbr.rel target = $region3
  $region8: #{reseau_neurone_forward.5} parent=0 // loop_exit
    _

// kernel: reseau_neurone_forward.6
$region0: #{reseau_neurone_forward.6}
  #allocation0 [shape = 'u32[]', space=smem, size = 0x4, offset = 0x4, fixed_abs, tag = 'smem constant byte address 0x4 - core index']
  #allocation1 [shape = 'u32[72,128]{1,0:T(1,128)}', space=vmem, size = 0x9000, scoped, tag = 'internal scratch']
  %s0 = inlined_call_operand.vmem [shape: bf16[1280,144], index: 0, kind: input, shape index: {}]
  %s1 = inlined_call_operand.vmem [shape: bf16[144,128], index: 1, kind: input, shape index: {}]
  %s2 = inlined_call_operand.vmem [shape: f32[1,128], index: 2, kind: input, shape index: {}]
  %s3 = inlined_call_operand.vmem [shape: bf16[1280,128], index: 3, kind: output, shape index: {}]
  %s4 = sld [smem:[#allocation0]]
  $region45: #{reseau_neurone_forward.6} parent=0
    _
  %s6 = ssub.s32 1, %s4
  %s7 = scalar_select 0, %s6, %s4
  loop: start=0, step=1, limit=7
  $region2: #{reseau_neurone_forward.6} parent=0 // loop_pre_header
    _
  $region3: #{reseau_neurone_forward.6} parent=0 // loop_header
    %s9 = sphi 0, %s13
    %p10 = scmp.ge.s32.totalorder %s9, 7
    %s16 = sphi 0, %s28
    %s17 = sphi 0, %s24
    %s18 = sphi 0, %s16
    %s19 = sphi 0, %s17
    %s20 = sphi 0, %s18
    %s21 = sphi 0, %s19
    %s31 = sphi 0, %s33
    %s34 = sphi 0, %s31
    %s35 = sphi 0, %s34
    %s51 = sphi 0, %s35
    %s57 = sphi 0, %s59
    %s60 = sphi 0, %s57
    %s61 = sphi 0, %s60
    %s77 = sphi 0, %s61
    %s83 = sphi 0, %s85
    %s86 = sphi 0, %s83
    %s87 = sphi 0, %s86
    %s103 = sphi 0, %s87
    %s111 = sphi 0, %s113
    %s114 = sphi 0, %s111
    %s115 = sphi 0, %s114
    %s131 = sphi 0, %s115
  $region4: #{reseau_neurone_forward.6} parent=0 // loop_header_branch
    %12 = sbr.rel (%p10) target = $region8
  $region5: #{reseau_neurone_forward.6} parent=0 // loop_body
    %s14 = ssub.s32 %s9, 1
    %s15 = ssub.s32 %s9, 2
    %s22 = sadd.s32 1, %s17
    %p23 = scmp.ge.s32.totalorder %s22, 1
    %s24 = scalar_select %p23, 0, %s22
    %s25 = sadd.s32 1, %s16
    %s26 = scalar_select %p23, %s25, %s16
    %p27 = scmp.ge.s32.totalorder %s26, 5
    %s28 = scalar_select %p27, 0, %s26
    %s29 = ssub.s32 %s16, %s28
    %p30 = scmp.eq.s32.totalorder %s29, 0
    %s32 = sadd.s32 %s31, 1
    %s33 = scalar_select %p30, %s31, %s32
    %p36 = pneg %p30
    %p37 = scmp.eq.s32.totalorder %s9, 4
    %p38 = por %p36, %p37
    %p39 = scmp.ne.s32.totalorder %s31, %s34
    %p40 = scmp.eq.s32.totalorder %s9, 0
    %p41 = por %p39, %p40
    %p42 = scmp.ne.s32.totalorder %s31, %s34
    %p43 = scmp.eq.s32.totalorder %s14, 4
    %p44 = por %p42, %p43
    %p45 = scmp.ne.s32.totalorder %s34, %s35
    %p46 = scmp.eq.s32.totalorder %s14, 0
    %p47 = por %p45, %p46
    %p48 = scmp.ne.s32.totalorder %s34, %s35
    %p49 = scmp.eq.s32.totalorder %s15, 4
    %p50 = por %p48, %p49
    %p52 = scmp.ne.s32.totalorder %s35, %s51
    %p53 = scmp.eq.s32.totalorder %s15, 0
    %p54 = por %p52, %p53
    %s55 = ssub.s32 %s17, %s24
    %p56 = scmp.eq.s32.totalorder %s55, 0
    %s58 = sadd.s32 %s57, 1
    %s59 = scalar_select %p56, %s57, %s58
    %p62 = pneg %p56
    %p63 = scmp.eq.s32.totalorder %s9, 4
    %p64 = por %p62, %p63
    %p65 = scmp.ne.s32.totalorder %s57, %s60
    %p66 = scmp.eq.s32.totalorder %s9, 0
    %p67 = por %p65, %p66
    %p68 = scmp.ne.s32.totalorder %s57, %s60
    %p69 = scmp.eq.s32.totalorder %s14, 4
    %p70 = por %p68, %p69
    %p71 = scmp.ne.s32.totalorder %s60, %s61
    %p72 = scmp.eq.s32.totalorder %s14, 0
    %p73 = por %p71, %p72
    %p74 = scmp.ne.s32.totalorder %s60, %s61
    %p75 = scmp.eq.s32.totalorder %s15, 4
    %p76 = por %p74, %p75
    %p78 = scmp.ne.s32.totalorder %s61, %s77
    %p79 = scmp.eq.s32.totalorder %s15, 0
    %p80 = por %p78, %p79
    %s81 = ssub.s32 %s17, %s24
    %p82 = scmp.eq.s32.totalorder %s81, 0
    %s84 = sadd.s32 %s83, 1
    %s85 = scalar_select %p82, %s83, %s84
    %p88 = pneg %p82
    %p89 = scmp.eq.s32.totalorder %s9, 4
    %p90 = por %p88, %p89
    %p91 = scmp.ne.s32.totalorder %s83, %s86
    %p92 = scmp.eq.s32.totalorder %s9, 0
    %p93 = por %p91, %p92
    %p94 = scmp.ne.s32.totalorder %s83, %s86
    %p95 = scmp.eq.s32.totalorder %s14, 4
    %p96 = por %p94, %p95
    %p97 = scmp.ne.s32.totalorder %s86, %s87
    %p98 = scmp.eq.s32.totalorder %s14, 0
    %p99 = por %p97, %p98
    %p100 = scmp.ne.s32.totalorder %s86, %s87
    %p101 = scmp.eq.s32.totalorder %s15, 4
    %p102 = por %p100, %p101
    %p104 = scmp.ne.s32.totalorder %s87, %s103
    %p105 = scmp.eq.s32.totalorder %s15, 0
    %p106 = por %p104, %p105
    %s107 = ssub.s32 %s16, %s28
    %s108 = ssub.s32 %s17, %s24
    %s109 = sor.u32 %s107, %s108
    %p110 = scmp.eq.s32.totalorder %s109, 0
    %s112 = sadd.s32 %s111, 1
    %s113 = scalar_select %p110, %s111, %s112
    %p116 = pneg %p110
    %p117 = scmp.eq.s32.totalorder %s9, 4
    %p118 = por %p116, %p117
    %p119 = scmp.ne.s32.totalorder %s111, %s114
    %p120 = scmp.eq.s32.totalorder %s9, 0
    %p121 = por %p119, %p120
    %p122 = scmp.ne.s32.totalorder %s111, %s114
    %p123 = scmp.eq.s32.totalorder %s14, 4
    %p124 = por %p122, %p123
    %p125 = scmp.ne.s32.totalorder %s114, %s115
    %p126 = scmp.eq.s32.totalorder %s14, 0
    %p127 = por %p125, %p126
    %p128 = scmp.ne.s32.totalorder %s114, %s115
    %p129 = scmp.eq.s32.totalorder %s15, 4
    %p130 = por %p128, %p129
    %p132 = scmp.ne.s32.totalorder %s115, %s131
    %p133 = scmp.eq.s32.totalorder %s15, 0
    %p134 = por %p132, %p133
    %p135 = scmp.le.s32.totalorder 1, %s9
    %p136 = scmp.lt.s32.totalorder %s9, 6
    %p137 = pnand %p135, %p136
    %p138 = pneg %p137
    // Predicated region
    $region9: #{reseau_neurone_forward.6} parent=5 // pred_check
      _
    $region10: #{reseau_neurone_forward.6} parent=5 // pred_check_branch
      %140 = sbr.rel (%p137) target = $region12
    $region11: #{reseau_neurone_forward.6} parent=5 // pred_region
      %s141 = ssub.s32 %s9, 1
      // Predicated region
      $region13: #{reseau_neurone_forward.6} parent=11 // pred_check
        %p142 = pneg %p73
      $region14: #{reseau_neurone_forward.6} parent=11 // pred_check_branch
        %144 = sbr.rel (%p142) target = $region16
      $region15: #{reseau_neurone_forward.6} parent=11 // pred_region
        %p145 = scmp.lt.s32.totalorder %s19, 0
        %s146 = scalar_select %p145, %s19, 0
        %s147 = smul.addr %s146, 4
        %s148 = scalar_lea.vmem %s1, %s147
      $region16: #{reseau_neurone_forward.6} parent=11 // pred_fallthru
        _
      // Predicated region
      $region17: #{reseau_neurone_forward.6} parent=11 // pred_check
        %p149 = pneg %p99
      $region18: #{reseau_neurone_forward.6} parent=11 // pred_check_branch
        %151 = sbr.rel (%p149) target = $region20
      $region19: #{reseau_neurone_forward.6} parent=11 // pred_region
        %p152 = scmp.lt.s32.totalorder %s19, 0
        %s153 = scalar_select %p152, %s19, 0
        %s154 = scalar_lea.vmem %s2, %s153
      $region20: #{reseau_neurone_forward.6} parent=11 // pred_fallthru
        _
    $region12: #{reseau_neurone_forward.6} parent=5 // pred_fallthru
      _
    %p155 = scmp.lt.s32.totalorder %s9, 5
    // Predicated region
    $region21: #{reseau_neurone_forward.6} parent=5 // pred_check
      %p156 = pneg %p155
    $region22: #{reseau_neurone_forward.6} parent=5 // pred_check_branch
      %158 = sbr.rel (%p156) target = $region24
    $region23: #{reseau_neurone_forward.6} parent=5 // pred_region
      // Predicated region
      $region25: #{reseau_neurone_forward.6} parent=23 // pred_check
        %p159 = pneg %p41
      $region26: #{reseau_neurone_forward.6} parent=23 // pred_check_branch
        %161 = sbr.rel (%p159) target = $region28
      $region27: #{reseau_neurone_forward.6} parent=23 // pred_region
        %s162 = smul.u32 32, %s16
        %p163 = scmp.lt.s32.totalorder %s162, 159
        %s164 = scalar_select %p163, %s162, 159
        %s165 = smul.addr %s164, 2
        %s166 = smul.addr %s165, 4
        %s167 = scalar_lea.vmem %s0, %s166
        %s168 = smul.u32 32, %s16
      $region28: #{reseau_neurone_forward.6} parent=23 // pred_fallthru
        _
    $region24: #{reseau_neurone_forward.6} parent=5 // pred_fallthru
      _
    %p169 = scmp.le.s32.totalorder 1, %s9
    %p170 = scmp.lt.s32.totalorder %s9, 6
    %p171 = pnand %p169, %p170
    %p172 = pneg %p171
    // Predicated region
    $region29: #{reseau_neurone_forward.6} parent=5 // pred_check
      _
    $region30: #{reseau_neurone_forward.6} parent=5 // pred_check_branch
      %174 = sbr.rel (%p171) target = $region32
    $region31: #{reseau_neurone_forward.6} parent=5 // pred_region
      %s175 = ssub.s32 %s9, 1
      %s176 = smul.u32 32, %s18
      %p177 = scmp.lt.s32.totalorder %s176, 159
      %s178 = scalar_select %p177, %s176, 159
      %s179 = smul.addr %s178, 2
      %s180 = smul.addr %s179, 4
      %s181 = scalar_lea.vmem %s0, %s180
      %p182 = pneg %p47
      %p183 = pneg %p44
      %p184 = scmp.lt.s32.totalorder %s19, 0
      %s185 = scalar_select %p184, %s19, 0
      %s186 = smul.addr %s185, 4
      %s187 = scalar_lea.vmem %s1, %s186
      %p188 = pneg %p73
      %p189 = pneg %p70
      %p190 = scmp.lt.s32.totalorder %s19, 0
      %s191 = scalar_select %p190, %s19, 0
      %s192 = scalar_lea.vmem %s2, %s191
      %p193 = pneg %p99
      %p194 = pneg %p96
      %p195 = pneg %p127
      %p196 = pneg %p124
      %s197 = smul.u32 32, %s18
      %p198 = scmp.lt.s32.totalorder %s197, 159
      %s199 = scalar_select %p198, %s197, 159
      %p200 = scmp.lt.s32.totalorder %s19, 0
      %s201 = scalar_select %p200, %s19, 0
      %s202 = sadd.s32 %s201, %s199
      %s203 = smul.addr %s202, 4
      %s204 = scalar_lea.vmem %s3, %s203
      %s205 = smul.u32 32, %s18
      %p206 = scmp.lt.s32.totalorder %s205, 159
      %s207 = scalar_select %p206, %s205, 159
      %s208 = smul.addr %s207, 2
      %s209 = smul.addr %s208, 4
      %s210 = scalar_lea.vmem %s0, %s209
      %s211 = smul.u32 32, %s18
      %p212 = scmp.lt.s32.totalorder %s19, 0
      %s213 = scalar_select %p212, %s19, 0
      %s214 = smul.addr %s213, 4
      %s215 = scalar_lea.vmem %s1, %s214
      %p216 = scmp.lt.s32.totalorder %s19, 0
      %s217 = scalar_select %p216, %s19, 0
      %s218 = scalar_lea.vmem %s2, %s217
      %s219 = smul.u32 32, %s18
      %p220 = scmp.lt.s32.totalorder %s219, 159
      %s221 = scalar_select %p220, %s219, 159
      %p222 = scmp.lt.s32.totalorder %s19, 0
      %s223 = scalar_select %p222, %s19, 0
      %s224 = sadd.s32 %s223, %s221
      %s225 = smul.addr %s224, 4
      %s226 = scalar_lea.vmem %s3, %s225
      %s227 = smul.u32 32, %s18
      %v229 = vld [vmem:[%s210] sm:$0xff]
      %v230 = vld [vmem:[%s210 + $0x8] sm:$0xff]
      %v231 = vld [vmem:[%s210 + $0x10] sm:$0xff]
      %v232 = vld [vmem:[%s210 + $0x18] sm:$0xff]
      %v233 = vld [vmem:[%s210 + $0x20] sm:$0xff]
      %v234 = vld [vmem:[%s210 + $0x28] sm:$0xff]
      %v235 = vld [vmem:[%s210 + $0x30] sm:$0xff]
      %v236 = vld [vmem:[%s210 + $0x38] sm:$0xff]
      %v237 = vld [vmem:[%s210 + $0x40] sm:$0xff]
      %v238 = vld [vmem:[%s210 + $0x48] sm:$0xff]
      %v239 = vld [vmem:[%s210 + $0x50] sm:$0xff]
      %v240 = vld [vmem:[%s210 + $0x58] sm:$0xff]
      %v241 = vld [vmem:[%s210 + $0x60] sm:$0xff]
      %v242 = vld [vmem:[%s210 + $0x68] sm:$0xff]
      %v243 = vld [vmem:[%s210 + $0x70] sm:$0xff]
      %v244 = vld [vmem:[%s210 + $0x78] sm:$0xff]
      %v245 = vld [vmem:[%s210 + $0x80] sm:$0xff]
      %v246 = vld [vmem:[%s210 + $0x88] sm:$0xff]
      %v247 = vld [vmem:[%s210 + $0x90] sm:$0xff]
      %v248 = vld [vmem:[%s210 + $0x98] sm:$0xff]
      %v249 = vld [vmem:[%s210 + $0xa0] sm:$0xff]
      %v250 = vld [vmem:[%s210 + $0xa8] sm:$0xff]
      %v251 = vld [vmem:[%s210 + $0xb0] sm:$0xff]
      %v252 = vld [vmem:[%s210 + $0xb8] sm:$0xff]
      %v253 = vld [vmem:[%s210 + $0xc0] sm:$0xff]
      %v254 = vld [vmem:[%s210 + $0xc8] sm:$0xff]
      %v255 = vld [vmem:[%s210 + $0xd0] sm:$0xff]
      %v256 = vld [vmem:[%s210 + $0xd8] sm:$0xff]
      %v257 = vld [vmem:[%s210 + $0xe0] sm:$0xff]
      %v258 = vld [vmem:[%s210 + $0xe8] sm:$0xff]
      %v259 = vld [vmem:[%s210 + $0xf0] sm:$0xff]
      %v260 = vld [vmem:[%s210 + $0xf8] sm:$0xff]
      %v261 = vld [vmem:[%s215] sm:$0xf]
      %v262 = vld [vmem:[%s215 + $0x4] sm:$0xf]
      %v263 = vld [vmem:[%s215 + $0x8] sm:$0xf]
      %v264 = vld [vmem:[%s215 + $0xc] sm:$0xf]
      %v265 = vld [vmem:[%s215 + $0x10] sm:$0xf]
      %v266 = vld [vmem:[%s215 + $0x14] sm:$0xf]
      %v267 = vld [vmem:[%s215 + $0x18] sm:$0xf]
      %v268 = vld [vmem:[%s215 + $0x1c] sm:$0xf]
      %v269 = vld [vmem:[%s215 + $0x20] sm:$0xf]
      %v270 = vld [vmem:[%s215 + $0x24] sm:$0xf]
      %v271 = vld [vmem:[%s215 + $0x28] sm:$0xf]
      %v272 = vld [vmem:[%s215 + $0x2c] sm:$0xf]
      %v273 = vld [vmem:[%s215 + $0x30] sm:$0xf]
      %v274 = vld [vmem:[%s215 + $0x34] sm:$0xf]
      %v275 = vld [vmem:[%s215 + $0x38] sm:$0xf]
      %v276 = vld [vmem:[%s215 + $0x3c] sm:$0xf]
      %v277 = vld [vmem:[%s215 + $0x40] sm:$0xf]
      %v278 = vld [vmem:[%s215 + $0x44] sm:$0xf]
      %v279 = vld [vmem:[%s218] sm:$0x1]
      %v281 = vperm.slane %v279, 0
      %v315 = vunpack.c.l.b16 %v229
      %v316 = vunpack.c.h.b16 %v229
      %v317 = vunpack.c.l.b16 %v230
      %v318 = vunpack.c.h.b16 %v230
      %v319 = vunpack.c.l.b16 %v231
      %v320 = vunpack.c.h.b16 %v231
      %v321 = vunpack.c.l.b16 %v232
      %v322 = vunpack.c.h.b16 %v232
      %v323 = vunpack.c.l.b16 %v233
      %v324 = vunpack.c.h.b16 %v233
      %v325 = vunpack.c.l.b16 %v234
      %v326 = vunpack.c.h.b16 %v234
      %v327 = vunpack.c.l.b16 %v235
      %v328 = vunpack.c.h.b16 %v235
      %v329 = vunpack.c.l.b16 %v236
      %v330 = vunpack.c.h.b16 %v236
      %v331 = vunpack.c.l.b16 %v237
      %v332 = vunpack.c.h.b16 %v237
      %v333 = vunpack.c.l.b16 %v238
      %v334 = vunpack.c.h.b16 %v238
      %v335 = vunpack.c.l.b16 %v239
      %v336 = vunpack.c.h.b16 %v239
      %v337 = vunpack.c.l.b16 %v240
      %v338 = vunpack.c.h.b16 %v240
      %v339 = vunpack.c.l.b16 %v241
      %v340 = vunpack.c.h.b16 %v241
      %v341 = vunpack.c.l.b16 %v242
      %v342 = vunpack.c.h.b16 %v242
      %v343 = vunpack.c.l.b16 %v243
      %v344 = vunpack.c.h.b16 %v243
      %v345 = vunpack.c.l.b16 %v244
      %v346 = vunpack.c.h.b16 %v244
      %v347 = vunpack.c.l.b16 %v245
      %v348 = vunpack.c.h.b16 %v245
      %v349 = vunpack.c.l.b16 %v246
      %v350 = vunpack.c.h.b16 %v246
      %v351 = vunpack.c.l.b16 %v247
      %v352 = vunpack.c.h.b16 %v247
      %v353 = vunpack.c.l.b16 %v248
      %v354 = vunpack.c.h.b16 %v248
      %v355 = vunpack.c.l.b16 %v249
      %v356 = vunpack.c.h.b16 %v249
      %v357 = vunpack.c.l.b16 %v250
      %v358 = vunpack.c.h.b16 %v250
      %v359 = vunpack.c.l.b16 %v251
      %v360 = vunpack.c.h.b16 %v251
      %v361 = vunpack.c.l.b16 %v252
      %v362 = vunpack.c.h.b16 %v252
      %v363 = vunpack.c.l.b16 %v253
      %v364 = vunpack.c.h.b16 %v253
      %v365 = vunpack.c.l.b16 %v254
      %v366 = vunpack.c.h.b16 %v254
      %v367 = vunpack.c.l.b16 %v255
      %v368 = vunpack.c.h.b16 %v255
      %v369 = vunpack.c.l.b16 %v256
      %v370 = vunpack.c.h.b16 %v256
      %v371 = vunpack.c.l.b16 %v257
      %v372 = vunpack.c.h.b16 %v257
      %v373 = vunpack.c.l.b16 %v258
      %v374 = vunpack.c.h.b16 %v258
      %v375 = vunpack.c.l.b16 %v259
      %v376 = vunpack.c.h.b16 %v259
      %v377 = vunpack.c.l.b16 %v260
      %v378 = vunpack.c.h.b16 %v260
      %v379 = vpack.c.b16 %v317, %v315
      %v380 = vpack.c.b16 %v318, %v316
      %v381 = vpack.c.b16 %v321, %v319
      %v382 = vpack.c.b16 %v322, %v320
      %v383 = vpack.c.b16 %v325, %v323
      %v384 = vpack.c.b16 %v326, %v324
      %v385 = vpack.c.b16 %v329, %v327
      %v386 = vpack.c.b16 %v330, %v328
      %v387 = vpack.c.b16 %v333, %v331
      %v388 = vpack.c.b16 %v334, %v332
      %v389 = vpack.c.b16 %v337, %v335
      %v390 = vpack.c.b16 %v338, %v336
      %v391 = vpack.c.b16 %v341, %v339
      %v392 = vpack.c.b16 %v342, %v340
      %v393 = vpack.c.b16 %v345, %v343
      %v394 = vpack.c.b16 %v346, %v344
      %v395 = vpack.c.b16 %v349, %v347
      %v396 = vpack.c.b16 %v350, %v348
      %v397 = vpack.c.b16 %v353, %v351
      %v398 = vpack.c.b16 %v354, %v352
      %v399 = vpack.c.b16 %v357, %v355
      %v400 = vpack.c.b16 %v358, %v356
      %v401 = vpack.c.b16 %v361, %v359
      %v402 = vpack.c.b16 %v362, %v360
      %v403 = vpack.c.b16 %v365, %v363
      %v404 = vpack.c.b16 %v366, %v364
      %v405 = vpack.c.b16 %v369, %v367
      %v406 = vpack.c.b16 %v370, %v368
      %v407 = vpack.c.b16 %v373, %v371
      %v408 = vpack.c.b16 %v374, %v372
      %v409 = vpack.c.b16 %v377, %v375
      %v410 = vpack.c.b16 %v378, %v376
      %v445 = vunpack.c.l.b16 %v261
      %v446 = vunpack.c.l.b16 %v262
      %v447 = vunpack.c.l.b16 %v263
      %v448 = vunpack.c.l.b16 %v264
      %v449 = vunpack.c.l.b16 %v265
      %v450 = vunpack.c.l.b16 %v266
      %v451 = vunpack.c.l.b16 %v267
      %v452 = vunpack.c.l.b16 %v268
      %v453 = vunpack.c.l.b16 %v269
      %v454 = vunpack.c.l.b16 %v270
      %v455 = vunpack.c.l.b16 %v271
      %v456 = vunpack.c.l.b16 %v272
      %v457 = vunpack.c.l.b16 %v273
      %v458 = vunpack.c.l.b16 %v274
      %v459 = vunpack.c.l.b16 %v275
      %v460 = vunpack.c.l.b16 %v276
      %v461 = vunpack.c.l.b16 %v277
      %v462 = vunpack.c.l.b16 %v278
      %v463 = vpack.c.b16 %v446, %v445
      %v464 = vpack.c.b16 %v448, %v447
      %v465 = vpack.c.b16 %v450, %v449
      %v466 = vpack.c.b16 %v452, %v451
      %v467 = vpack.c.b16 %v454, %v453
      %v468 = vpack.c.b16 %v456, %v455
      %v469 = vpack.c.b16 %v458, %v457
      %v470 = vpack.c.b16 %v460, %v459
      %v471 = vpack.c.b16 %v462, %v461
      %vm481 = vcmask 130048
      %v483 = vsel %vm481, %v380, 0
      %v486 = vsel %vm481, %v382, 0
      %v489 = vsel %vm481, %v384, 0
      %v492 = vsel %vm481, %v386, 0
      %v495 = vsel %vm481, %v388, 0
      %v498 = vsel %vm481, %v390, 0
      %v501 = vsel %vm481, %v392, 0
      %v504 = vsel %vm481, %v394, 0
      %v507 = vsel %vm481, %v396, 0
      %v510 = vsel %vm481, %v398, 0
      %v513 = vsel %vm481, %v400, 0
      %v516 = vsel %vm481, %v402, 0
      %v519 = vsel %vm481, %v404, 0
      %v522 = vsel %vm481, %v406, 0
      %v525 = vsel %vm481, %v408, 0
      %v528 = vsel %vm481, %v410, 0
      %530 = vmatpush.bf16.msra.mxu0 %v470
      %531 = vmatpush.bf16.msra.mxu0 %v469
      %532 = vmatpush.bf16.msra.mxu0 %v468
      %533 = vmatpush.bf16.msra.mxu0 %v467
      %534 = vmatpush.bf16.msra.mxu0 %v466
      %535 = vmatpush.bf16.msra.mxu0 %v465
      %536 = vmatpush.bf16.msra.mxu0 %v464
      %537 = vmatpush.bf16.msra.mxu0 %v463
      %538 = vmatmul.bf16.gmra.mxu0 %v379
      %v539 = vpop.f32.mrf.mxu0
      %v540 = vadd.f32 %v281, %v539
      %v541 = vpop.f32.mrf.mxu0
      %v542 = vadd.f32 %v281, %v541
      %543 = vmatmul.bf16.gmra.mxu0 %v381
      %v544 = vpop.f32.mrf.mxu0
      %v545 = vadd.f32 %v281, %v544
      %v546 = vpop.f32.mrf.mxu0
      %v547 = vadd.f32 %v281, %v546
      %548 = vmatmul.bf16.gmra.mxu0 %v383
      %v549 = vpop.f32.mrf.mxu0
      %v550 = vadd.f32 %v281, %v549
      %v551 = vpop.f32.mrf.mxu0
      %v552 = vadd.f32 %v281, %v551
      %553 = vmatmul.bf16.gmra.mxu0 %v385
      %v554 = vpop.f32.mrf.mxu0
      %v555 = vadd.f32 %v281, %v554
      %v556 = vpop.f32.mrf.mxu0
      %v557 = vadd.f32 %v281, %v556
      %558 = vmatmul.bf16.gmra.mxu0 %v387
      %v559 = vpop.f32.mrf.mxu0
      %v560 = vadd.f32 %v281, %v559
      %v561 = vpop.f32.mrf.mxu0
      %v562 = vadd.f32 %v281, %v561
      %563 = vmatmul.bf16.gmra.mxu0 %v389
      %v564 = vpop.f32.mrf.mxu0
      %v565 = vadd.f32 %v281, %v564
      %v566 = vpop.f32.mrf.mxu0
      %v567 = vadd.f32 %v281, %v566
      %568 = vmatmul.bf16.gmra.mxu0 %v391
      %v569 = vpop.f32.mrf.mxu0
      %v570 = vadd.f32 %v281, %v569
      %v571 = vpop.f32.mrf.mxu0
      %v572 = vadd.f32 %v281, %v571
      %573 = vmatmul.bf16.gmra.mxu0 %v393
      %v574 = vpop.f32.mrf.mxu0
      %v575 = vadd.f32 %v281, %v574
      %v576 = vpop.f32.mrf.mxu0
      %v577 = vadd.f32 %v281, %v576
      %578 = vmatmul.bf16.gmra.mxu0 %v395
      %v579 = vpop.f32.mrf.mxu0
      %v580 = vadd.f32 %v281, %v579
      %v581 = vpop.f32.mrf.mxu0
      %v582 = vadd.f32 %v281, %v581
      %583 = vmatmul.bf16.gmra.mxu0 %v397
      %v584 = vpop.f32.mrf.mxu0
      %v585 = vadd.f32 %v281, %v584
      %v586 = vpop.f32.mrf.mxu0
      %v587 = vadd.f32 %v281, %v586
      %588 = vmatmul.bf16.gmra.mxu0 %v399
      %v589 = vpop.f32.mrf.mxu0
      %v590 = vadd.f32 %v281, %v589
      %v591 = vpop.f32.mrf.mxu0
      %v592 = vadd.f32 %v281, %v591
      %593 = vmatmul.bf16.gmra.mxu0 %v401
      %v594 = vpop.f32.mrf.mxu0
      %v595 = vadd.f32 %v281, %v594
      %v596 = vpop.f32.mrf.mxu0
      %v597 = vadd.f32 %v281, %v596
      %598 = vmatmul.bf16.gmra.mxu0 %v403
      %v599 = vpop.f32.mrf.mxu0
      %v600 = vadd.f32 %v281, %v599
      %v601 = vpop.f32.mrf.mxu0
      %v602 = vadd.f32 %v281, %v601
      %603 = vmatmul.bf16.gmra.mxu0 %v405
      %v604 = vpop.f32.mrf.mxu0
      %v605 = vadd.f32 %v281, %v604
      %v606 = vpop.f32.mrf.mxu0
      %v607 = vadd.f32 %v281, %v606
      %608 = vmatmul.bf16.gmra.mxu0 %v407
      %v609 = vpop.f32.mrf.mxu0
      %v610 = vadd.f32 %v281, %v609
      %v611 = vpop.f32.mrf.mxu0
      %v612 = vadd.f32 %v281, %v611
      %613 = vmatmul.bf16.gmra.mxu0 %v409
      %v614 = vpop.f32.mrf.mxu0
      %v615 = vadd.f32 %v281, %v614
      %v616 = vpop.f32.mrf.mxu0
      %v617 = vadd.f32 %v281, %v616
      %618 = vdwg.mxu0
      %619 = vmatpush.bf16.msra.mxu0 0
      %620 = vmatpush.bf16.msra.mxu0 0
      %621 = vmatpush.bf16.msra.mxu0 0
      %622 = vmatpush.bf16.msra.mxu0 0
      %623 = vmatpush.bf16.msra.mxu0 0
      %624 = vmatpush.bf16.msra.mxu0 0
      %625 = vmatpush.bf16.msra.mxu0 0
      %626 = vmatpush.bf16.msra.mxu0 %v471
      %627 = vmatmul.bf16.gmra.mxu0 %v483
      %v628 = vpop.f32.mrf.mxu0
      %v629 = vadd.f32 %v540, %v628
      %v630 = vpop.f32.mrf.mxu0
      %v631 = vadd.f32 %v542, %v630
      %632 = vmatmul.bf16.gmra.mxu0 %v486
      %v633 = vpop.f32.mrf.mxu0
      %v634 = vadd.f32 %v545, %v633
      %v635 = vpop.f32.mrf.mxu0
      %v636 = vadd.f32 %v547, %v635
      %637 = vmatmul.bf16.gmra.mxu0 %v489
      %v638 = vpop.f32.mrf.mxu0
      %v639 = vadd.f32 %v550, %v638
      %v640 = vpop.f32.mrf.mxu0
      %v641 = vadd.f32 %v552, %v640
      %642 = vmatmul.bf16.gmra.mxu0 %v492
      %v643 = vpop.f32.mrf.mxu0
      %v644 = vadd.f32 %v555, %v643
      %v645 = vpop.f32.mrf.mxu0
      %v646 = vadd.f32 %v557, %v645
      %647 = vmatmul.bf16.gmra.mxu0 %v495
      %v648 = vpop.f32.mrf.mxu0
      %v649 = vadd.f32 %v560, %v648
      %v650 = vpop.f32.mrf.mxu0
      %v651 = vadd.f32 %v562, %v650
      %652 = vmatmul.bf16.gmra.mxu0 %v498
      %v653 = vpop.f32.mrf.mxu0
      %v654 = vadd.f32 %v565, %v653
      %v655 = vpop.f32.mrf.mxu0
      %v656 = vadd.f32 %v567, %v655
      %657 = vmatmul.bf16.gmra.mxu0 %v501
      %v658 = vpop.f32.mrf.mxu0
      %v659 = vadd.f32 %v570, %v658
      %v660 = vpop.f32.mrf.mxu0
      %v661 = vadd.f32 %v572, %v660
      %662 = vmatmul.bf16.gmra.mxu0 %v504
      %v663 = vpop.f32.mrf.mxu0
      %v664 = vadd.f32 %v575, %v663
      %v665 = vpop.f32.mrf.mxu0
      %v666 = vadd.f32 %v577, %v665
      %667 = vmatmul.bf16.gmra.mxu0 %v507
      %v668 = vpop.f32.mrf.mxu0
      %v669 = vadd.f32 %v580, %v668
      %v670 = vpop.f32.mrf.mxu0
      %v671 = vadd.f32 %v582, %v670
      %672 = vmatmul.bf16.gmra.mxu0 %v510
      %v673 = vpop.f32.mrf.mxu0
      %v674 = vadd.f32 %v585, %v673
      %v675 = vpop.f32.mrf.mxu0
      %v676 = vadd.f32 %v587, %v675
      %677 = vmatmul.bf16.gmra.mxu0 %v513
      %v678 = vpop.f32.mrf.mxu0
      %v679 = vadd.f32 %v590, %v678
      %v680 = vpop.f32.mrf.mxu0
      %v681 = vadd.f32 %v592, %v680
      %682 = vmatmul.bf16.gmra.mxu0 %v516
      %v683 = vpop.f32.mrf.mxu0
      %v684 = vadd.f32 %v595, %v683
      %v685 = vpop.f32.mrf.mxu0
      %v686 = vadd.f32 %v597, %v685
      %687 = vmatmul.bf16.gmra.mxu0 %v519
      %v688 = vpop.f32.mrf.mxu0
      %v689 = vadd.f32 %v600, %v688
      %v690 = vpop.f32.mrf.mxu0
      %v691 = vadd.f32 %v602, %v690
      %692 = vmatmul.bf16.gmra.mxu0 %v522
      %v693 = vpop.f32.mrf.mxu0
      %v694 = vadd.f32 %v605, %v693
      %v695 = vpop.f32.mrf.mxu0
      %v696 = vadd.f32 %v607, %v695
      %697 = vmatmul.bf16.gmra.mxu0 %v525
      %v698 = vpop.f32.mrf.mxu0
      %v699 = vadd.f32 %v610, %v698
      %v700 = vpop.f32.mrf.mxu0
      %v701 = vadd.f32 %v612, %v700
      %702 = vmatmul.bf16.gmra.mxu0 %v528
      %v703 = vpop.f32.mrf.mxu0
      %v704 = vadd.f32 %v615, %v703
      %v705 = vpop.f32.mrf.mxu0
      %v706 = vadd.f32 %v617, %v705
      %707 = vdwg.mxu0
      %v708 = vmax.f32 %v629, 0.0
      %v709 = vmax.f32 %v631, 0.0
      %v710 = vmax.f32 %v634, 0.0
      %v711 = vmax.f32 %v636, 0.0
      %v712 = vmax.f32 %v639, 0.0
      %v713 = vmax.f32 %v641, 0.0
      %v714 = vmax.f32 %v644, 0.0
      %v715 = vmax.f32 %v646, 0.0
      %v716 = vmax.f32 %v649, 0.0
      %v717 = vmax.f32 %v651, 0.0
      %v718 = vmax.f32 %v654, 0.0
      %v719 = vmax.f32 %v656, 0.0
      %v720 = vmax.f32 %v659, 0.0
      %v721 = vmax.f32 %v661, 0.0
      %v722 = vmax.f32 %v664, 0.0
      %v723 = vmax.f32 %v666, 0.0
      %v724 = vmax.f32 %v669, 0.0
      %v725 = vmax.f32 %v671, 0.0
      %v726 = vmax.f32 %v674, 0.0
      %v727 = vmax.f32 %v676, 0.0
      %v728 = vmax.f32 %v679, 0.0
      %v729 = vmax.f32 %v681, 0.0
      %v730 = vmax.f32 %v684, 0.0
      %v731 = vmax.f32 %v686, 0.0
      %v732 = vmax.f32 %v689, 0.0
      %v733 = vmax.f32 %v691, 0.0
      %v734 = vmax.f32 %v694, 0.0
      %v735 = vmax.f32 %v696, 0.0
      %v736 = vmax.f32 %v699, 0.0
      %v737 = vmax.f32 %v701, 0.0
      %v738 = vmax.f32 %v704, 0.0
      %v739 = vmax.f32 %v706, 0.0
      %v740 = vpack.c.bf16 %v708, %v708
      %v741 = vpack.c.bf16 %v709, %v709
      %v742 = vpack.c.bf16 %v710, %v710
      %v743 = vpack.c.bf16 %v711, %v711
      %v744 = vpack.c.bf16 %v712, %v712
      %v745 = vpack.c.bf16 %v713, %v713
      %v746 = vpack.c.bf16 %v714, %v714
      %v747 = vpack.c.bf16 %v715, %v715
      %v748 = vpack.c.bf16 %v716, %v716
      %v749 = vpack.c.bf16 %v717, %v717
      %v750 = vpack.c.bf16 %v718, %v718
      %v751 = vpack.c.bf16 %v719, %v719
      %v752 = vpack.c.bf16 %v720, %v720
      %v753 = vpack.c.bf16 %v721, %v721
      %v754 = vpack.c.bf16 %v722, %v722
      %v755 = vpack.c.bf16 %v723, %v723
      %v756 = vpack.c.bf16 %v724, %v724
      %v757 = vpack.c.bf16 %v725, %v725
      %v758 = vpack.c.bf16 %v726, %v726
      %v759 = vpack.c.bf16 %v727, %v727
      %v760 = vpack.c.bf16 %v728, %v728
      %v761 = vpack.c.bf16 %v729, %v729
      %v762 = vpack.c.bf16 %v730, %v730
      %v763 = vpack.c.bf16 %v731, %v731
      %v764 = vpack.c.bf16 %v732, %v732
      %v765 = vpack.c.bf16 %v733, %v733
      %v766 = vpack.c.bf16 %v734, %v734
      %v767 = vpack.c.bf16 %v735, %v735
      %v768 = vpack.c.bf16 %v736, %v736
      %v769 = vpack.c.bf16 %v737, %v737
      %v770 = vpack.c.bf16 %v738, %v738
      %v771 = vpack.c.bf16 %v739, %v739
      %772 = vst [vmem:[%s226] sm:$0xf] %v740
      %773 = vst [vmem:[%s226 + $0x4] sm:$0xf] %v741
      %774 = vst [vmem:[%s226 + $0x8] sm:$0xf] %v742
      %775 = vst [vmem:[%s226 + $0xc] sm:$0xf] %v743
      %776 = vst [vmem:[%s226 + $0x10] sm:$0xf] %v744
      %777 = vst [vmem:[%s226 + $0x14] sm:$0xf] %v745
      %778 = vst [vmem:[%s226 + $0x18] sm:$0xf] %v746
      %779 = vst [vmem:[%s226 + $0x1c] sm:$0xf] %v747
      %780 = vst [vmem:[%s226 + $0x20] sm:$0xf] %v748
      %781 = vst [vmem:[%s226 + $0x24] sm:$0xf] %v749
      %782 = vst [vmem:[%s226 + $0x28] sm:$0xf] %v750
      %783 = vst [vmem:[%s226 + $0x2c] sm:$0xf] %v751
      %784 = vst [vmem:[%s226 + $0x30] sm:$0xf] %v752
      %785 = vst [vmem:[%s226 + $0x34] sm:$0xf] %v753
      %786 = vst [vmem:[%s226 + $0x38] sm:$0xf] %v754
      %787 = vst [vmem:[%s226 + $0x3c] sm:$0xf] %v755
      %788 = vst [vmem:[%s226 + $0x40] sm:$0xf] %v756
      %789 = vst [vmem:[%s226 + $0x44] sm:$0xf] %v757
      %790 = vst [vmem:[%s226 + $0x48] sm:$0xf] %v758
      %791 = vst [vmem:[%s226 + $0x4c] sm:$0xf] %v759
      %792 = vst [vmem:[%s226 + $0x50] sm:$0xf] %v760
      %793 = vst [vmem:[%s226 + $0x54] sm:$0xf] %v761
      %794 = vst [vmem:[%s226 + $0x58] sm:$0xf] %v762
      %795 = vst [vmem:[%s226 + $0x5c] sm:$0xf] %v763
      %796 = vst [vmem:[%s226 + $0x60] sm:$0xf] %v764
      %797 = vst [vmem:[%s226 + $0x64] sm:$0xf] %v765
      %798 = vst [vmem:[%s226 + $0x68] sm:$0xf] %v766
      %799 = vst [vmem:[%s226 + $0x6c] sm:$0xf] %v767
      %800 = vst [vmem:[%s226 + $0x70] sm:$0xf] %v768
      %801 = vst [vmem:[%s226 + $0x74] sm:$0xf] %v769
      %802 = vst [vmem:[%s226 + $0x78] sm:$0xf] %v770
      %803 = vst [vmem:[%s226 + $0x7c] sm:$0xf] %v771
      %s804 = smul.u32 32, %s18
      %p805 = scmp.lt.s32.totalorder %s804, 159
      %s806 = scalar_select %p805, %s804, 159
      %p807 = scmp.lt.s32.totalorder %s19, 0
      %s808 = scalar_select %p807, %s19, 0
      %s809 = sadd.s32 %s808, %s806
      %s810 = smul.addr %s809, 4
      %s811 = scalar_lea.vmem %s3, %s810
      // Predicated region
      $region33: #{reseau_neurone_forward.6} parent=31 // pred_check
        %p812 = pneg %p124
      $region34: #{reseau_neurone_forward.6} parent=31 // pred_check_branch
        %814 = sbr.rel (%p812) target = $region36
      $region35: #{reseau_neurone_forward.6} parent=31 // pred_region
        %s815 = smul.u32 32, %s18
      $region36: #{reseau_neurone_forward.6} parent=31 // pred_fallthru
        _
    $region32: #{reseau_neurone_forward.6} parent=5 // pred_fallthru
      _
    %p816 = scmp.le.s32.totalorder 2, %s9
    // Predicated region
    $region37: #{reseau_neurone_forward.6} parent=5 // pred_check
      %p817 = pneg %p816
    $region38: #{reseau_neurone_forward.6} parent=5 // pred_check_branch
      %819 = sbr.rel (%p817) target = $region40
    $region39: #{reseau_neurone_forward.6} parent=5 // pred_region
      %s820 = ssub.s32 %s9, 2
      // Predicated region
      $region41: #{reseau_neurone_forward.6} parent=39 // pred_check
        %p821 = pneg %p130
      $region42: #{reseau_neurone_forward.6} parent=39 // pred_check_branch
        %823 = sbr.rel (%p821) target = $region44
      $region43: #{reseau_neurone_forward.6} parent=39 // pred_region
        %s824 = smul.u32 32, %s20
        %p825 = scmp.lt.s32.totalorder %s824, 159
        %s826 = scalar_select %p825, %s824, 159
        %p827 = scmp.lt.s32.totalorder %s21, 0
        %s828 = scalar_select %p827, %s21, 0
        %s829 = sadd.s32 %s828, %s826
        %s830 = smul.addr %s829, 4
        %s831 = scalar_lea.vmem %s3, %s830
      $region44: #{reseau_neurone_forward.6} parent=39 // pred_fallthru
        _
    $region40: #{reseau_neurone_forward.6} parent=5 // pred_fallthru
      _
  $region6: #{reseau_neurone_forward.6} parent=0 // loop_footer
    %s13 = sadd.s32 1, %s9
  $region7: #{reseau_neurone_forward.6} parent=0 // loop_footer_branch
    %8 = sbr.rel target = $region3
  $region8: #{reseau_neurone_forward.6} parent=0 // loop_exit
    _

// kernel: reseau_neurone_forward.7
$region0: #{reseau_neurone_forward.7}
  #allocation0 [shape = 'u32[]', space=smem, size = 0x4, offset = 0x4, fixed_abs, tag = 'smem constant byte address 0x4 - core index']
  #allocation1 [shape = 'u32[72,128]{1,0:T(1,128)}', space=vmem, size = 0x9000, scoped, tag = 'internal scratch']
  %s0 = inlined_call_operand.vmem [shape: bf16[1024,800], index: 0, kind: input, shape index: {}]
  %s1 = inlined_call_operand.vmem [shape: bf16[800,128], index: 1, kind: input, shape index: {}]
  %s2 = inlined_call_operand.vmem [shape: f32[1,128], index: 2, kind: input, shape index: {}]
  %s3 = inlined_call_operand.vmem [shape: bf16[1024,128], index: 3, kind: output, shape index: {}]
  %s4 = sld [smem:[#allocation0]]
  $region45: #{reseau_neurone_forward.7} parent=0
    _
  %s6 = ssub.s32 1, %s4
  %s7 = scalar_select 0, %s6, %s4
  loop: start=0, step=1, limit=6
  $region2: #{reseau_neurone_forward.7} parent=0 // loop_pre_header
    _
  $region3: #{reseau_neurone_forward.7} parent=0 // loop_header
    %s9 = sphi 0, %s13
    %p10 = scmp.ge.s32.totalorder %s9, 6
    %s16 = sphi 0, %s28
    %s17 = sphi 0, %s24
    %s18 = sphi 0, %s16
    %s19 = sphi 0, %s17
    %s20 = sphi 0, %s18
    %s21 = sphi 0, %s19
    %s31 = sphi 0, %s33
    %s34 = sphi 0, %s31
    %s35 = sphi 0, %s34
    %s51 = sphi 0, %s35
    %s57 = sphi 0, %s59
    %s60 = sphi 0, %s57
    %s61 = sphi 0, %s60
    %s77 = sphi 0, %s61
    %s83 = sphi 0, %s85
    %s86 = sphi 0, %s83
    %s87 = sphi 0, %s86
    %s103 = sphi 0, %s87
    %s111 = sphi 0, %s113
    %s114 = sphi 0, %s111
    %s115 = sphi 0, %s114
    %s131 = sphi 0, %s115
  $region4: #{reseau_neurone_forward.7} parent=0 // loop_header_branch
    %12 = sbr.rel (%p10) target = $region8
  $region5: #{reseau_neurone_forward.7} parent=0 // loop_body
    %s14 = ssub.s32 %s9, 1
    %s15 = ssub.s32 %s9, 2
    %s22 = sadd.s32 1, %s17
    %p23 = scmp.ge.s32.totalorder %s22, 1
    %s24 = scalar_select %p23, 0, %s22
    %s25 = sadd.s32 1, %s16
    %s26 = scalar_select %p23, %s25, %s16
    %p27 = scmp.ge.s32.totalorder %s26, 4
    %s28 = scalar_select %p27, 0, %s26
    %s29 = ssub.s32 %s16, %s28
    %p30 = scmp.eq.s32.totalorder %s29, 0
    %s32 = sadd.s32 %s31, 1
    %s33 = scalar_select %p30, %s31, %s32
    %p36 = pneg %p30
    %p37 = scmp.eq.s32.totalorder %s9, 3
    %p38 = por %p36, %p37
    %p39 = scmp.ne.s32.totalorder %s31, %s34
    %p40 = scmp.eq.s32.totalorder %s9, 0
    %p41 = por %p39, %p40
    %p42 = scmp.ne.s32.totalorder %s31, %s34
    %p43 = scmp.eq.s32.totalorder %s14, 3
    %p44 = por %p42, %p43
    %p45 = scmp.ne.s32.totalorder %s34, %s35
    %p46 = scmp.eq.s32.totalorder %s14, 0
    %p47 = por %p45, %p46
    %p48 = scmp.ne.s32.totalorder %s34, %s35
    %p49 = scmp.eq.s32.totalorder %s15, 3
    %p50 = por %p48, %p49
    %p52 = scmp.ne.s32.totalorder %s35, %s51
    %p53 = scmp.eq.s32.totalorder %s15, 0
    %p54 = por %p52, %p53
    %s55 = ssub.s32 %s17, %s24
    %p56 = scmp.eq.s32.totalorder %s55, 0
    %s58 = sadd.s32 %s57, 1
    %s59 = scalar_select %p56, %s57, %s58
    %p62 = pneg %p56
    %p63 = scmp.eq.s32.totalorder %s9, 3
    %p64 = por %p62, %p63
    %p65 = scmp.ne.s32.totalorder %s57, %s60
    %p66 = scmp.eq.s32.totalorder %s9, 0
    %p67 = por %p65, %p66
    %p68 = scmp.ne.s32.totalorder %s57, %s60
    %p69 = scmp.eq.s32.totalorder %s14, 3
    %p70 = por %p68, %p69
    %p71 = scmp.ne.s32.totalorder %s60, %s61
    %p72 = scmp.eq.s32.totalorder %s14, 0
    %p73 = por %p71, %p72
    %p74 = scmp.ne.s32.totalorder %s60, %s61
    %p75 = scmp.eq.s32.totalorder %s15, 3
    %p76 = por %p74, %p75
    %p78 = scmp.ne.s32.totalorder %s61, %s77
    %p79 = scmp.eq.s32.totalorder %s15, 0
    %p80 = por %p78, %p79
    %s81 = ssub.s32 %s17, %s24
    %p82 = scmp.eq.s32.totalorder %s81, 0
    %s84 = sadd.s32 %s83, 1
    %s85 = scalar_select %p82, %s83, %s84
    %p88 = pneg %p82
    %p89 = scmp.eq.s32.totalorder %s9, 3
    %p90 = por %p88, %p89
    %p91 = scmp.ne.s32.totalorder %s83, %s86
    %p92 = scmp.eq.s32.totalorder %s9, 0
    %p93 = por %p91, %p92
    %p94 = scmp.ne.s32.totalorder %s83, %s86
    %p95 = scmp.eq.s32.totalorder %s14, 3
    %p96 = por %p94, %p95
    %p97 = scmp.ne.s32.totalorder %s86, %s87
    %p98 = scmp.eq.s32.totalorder %s14, 0
    %p99 = por %p97, %p98
    %p100 = scmp.ne.s32.totalorder %s86, %s87
    %p101 = scmp.eq.s32.totalorder %s15, 3
    %p102 = por %p100, %p101
    %p104 = scmp.ne.s32.totalorder %s87, %s103
    %p105 = scmp.eq.s32.totalorder %s15, 0
    %p106 = por %p104, %p105
    %s107 = ssub.s32 %s16, %s28
    %s108 = ssub.s32 %s17, %s24
    %s109 = sor.u32 %s107, %s108
    %p110 = scmp.eq.s32.totalorder %s109, 0
    %s112 = sadd.s32 %s111, 1
    %s113 = scalar_select %p110, %s111, %s112
    %p116 = pneg %p110
    %p117 = scmp.eq.s32.totalorder %s9, 3
    %p118 = por %p116, %p117
    %p119 = scmp.ne.s32.totalorder %s111, %s114
    %p120 = scmp.eq.s32.totalorder %s9, 0
    %p121 = por %p119, %p120
    %p122 = scmp.ne.s32.totalorder %s111, %s114
    %p123 = scmp.eq.s32.totalorder %s14, 3
    %p124 = por %p122, %p123
    %p125 = scmp.ne.s32.totalorder %s114, %s115
    %p126 = scmp.eq.s32.totalorder %s14, 0
    %p127 = por %p125, %p126
    %p128 = scmp.ne.s32.totalorder %s114, %s115
    %p129 = scmp.eq.s32.totalorder %s15, 3
    %p130 = por %p128, %p129
    %p132 = scmp.ne.s32.totalorder %s115, %s131
    %p133 = scmp.eq.s32.totalorder %s15, 0
    %p134 = por %p132, %p133
    %p135 = scmp.le.s32.totalorder 1, %s9
    %p136 = scmp.lt.s32.totalorder %s9, 5
    %p137 = pnand %p135, %p136
    %p138 = pneg %p137
    // Predicated region
    $region9: #{reseau_neurone_forward.7} parent=5 // pred_check
      _
    $region10: #{reseau_neurone_forward.7} parent=5 // pred_check_branch
      %140 = sbr.rel (%p137) target = $region12
    $region11: #{reseau_neurone_forward.7} parent=5 // pred_region
      %s141 = ssub.s32 %s9, 1
      // Predicated region
      $region13: #{reseau_neurone_forward.7} parent=11 // pred_check
        %p142 = pneg %p73
      $region14: #{reseau_neurone_forward.7} parent=11 // pred_check_branch
        %144 = sbr.rel (%p142) target = $region16
      $region15: #{reseau_neurone_forward.7} parent=11 // pred_region
        %p145 = scmp.lt.s32.totalorder %s19, 0
        %s146 = scalar_select %p145, %s19, 0
        %s147 = smul.addr %s146, 4
        %s148 = scalar_lea.vmem %s1, %s147
      $region16: #{reseau_neurone_forward.7} parent=11 // pred_fallthru
        _
      // Predicated region
      $region17: #{reseau_neurone_forward.7} parent=11 // pred_check
        %p149 = pneg %p99
      $region18: #{reseau_neurone_forward.7} parent=11 // pred_check_branch
        %151 = sbr.rel (%p149) target = $region20
      $region19: #{reseau_neurone_forward.7} parent=11 // pred_region
        %p152 = scmp.lt.s32.totalorder %s19, 0
        %s153 = scalar_select %p152, %s19, 0
        %s154 = scalar_lea.vmem %s2, %s153
      $region20: #{reseau_neurone_forward.7} parent=11 // pred_fallthru
        _
    $region12: #{reseau_neurone_forward.7} parent=5 // pred_fallthru
      _
    %p155 = scmp.lt.s32.totalorder %s9, 4
    // Predicated region
    $region21: #{reseau_neurone_forward.7} parent=5 // pred_check
      %p156 = pneg %p155
    $region22: #{reseau_neurone_forward.7} parent=5 // pred_check_branch
      %158 = sbr.rel (%p156) target = $region24
    $region23: #{reseau_neurone_forward.7} parent=5 // pred_region
      // Predicated region
      $region25: #{reseau_neurone_forward.7} parent=23 // pred_check
        %p159 = pneg %p41
      $region26: #{reseau_neurone_forward.7} parent=23 // pred_check_branch
        %161 = sbr.rel (%p159) target = $region28
      $region27: #{reseau_neurone_forward.7} parent=23 // pred_region
        %s162 = smul.u32 32, %s16
        %p163 = scmp.lt.s32.totalorder %s162, 127
        %s164 = scalar_select %p163, %s162, 127
        %s165 = smul.addr %s164, 7
        %s166 = smul.addr %s165, 4
        %s167 = scalar_lea.vmem %s0, %s166
        %s168 = smul.u32 32, %s16
      $region28: #{reseau_neurone_forward.7} parent=23 // pred_fallthru
        _
    $region24: #{reseau_neurone_forward.7} parent=5 // pred_fallthru
      _
    %p169 = scmp.le.s32.totalorder 1, %s9
    %p170 = scmp.lt.s32.totalorder %s9, 5
    %p171 = pnand %p169, %p170
    %p172 = pneg %p171
    // Predicated region
    $region29: #{reseau_neurone_forward.7} parent=5 // pred_check
      _
    $region30: #{reseau_neurone_forward.7} parent=5 // pred_check_branch
      %174 = sbr.rel (%p171) target = $region32
    $region31: #{reseau_neurone_forward.7} parent=5 // pred_region
      %s175 = ssub.s32 %s9, 1
      %s176 = smul.u32 32, %s18
      %p177 = scmp.lt.s32.totalorder %s176, 127
      %s178 = scalar_select %p177, %s176, 127
      %s179 = smul.addr %s178, 7
      %s180 = smul.addr %s179, 4
      %s181 = scalar_lea.vmem %s0, %s180
      %p182 = pneg %p47
      %p183 = pneg %p44
      %p184 = scmp.lt.s32.totalorder %s19, 0
      %s185 = scalar_select %p184, %s19, 0
      %s186 = smul.addr %s185, 4
      %s187 = scalar_lea.vmem %s1, %s186
      %p188 = pneg %p73
      %p189 = pneg %p70
      %p190 = scmp.lt.s32.totalorder %s19, 0
      %s191 = scalar_select %p190, %s19, 0
      %s192 = scalar_lea.vmem %s2, %s191
      %p193 = pneg %p99
      %p194 = pneg %p96
      %p195 = pneg %p127
      %p196 = pneg %p124
      %s197 = smul.u32 32, %s18
      %p198 = scmp.lt.s32.totalorder %s197, 127
      %s199 = scalar_select %p198, %s197, 127
      %p200 = scmp.lt.s32.totalorder %s19, 0
      %s201 = scalar_select %p200, %s19, 0
      %s202 = sadd.s32 %s201, %s199
      %s203 = smul.addr %s202, 4
      %s204 = scalar_lea.vmem %s3, %s203
      %s205 = smul.u32 32, %s18
      %p206 = scmp.lt.s32.totalorder %s205, 127
      %s207 = scalar_select %p206, %s205, 127
      %s208 = smul.addr %s207, 7
      %s209 = smul.addr %s208, 4
      %s210 = scalar_lea.vmem %s0, %s209
      %s211 = smul.u32 32, %s18
      %p212 = scmp.lt.s32.totalorder %s19, 0
      %s213 = scalar_select %p212, %s19, 0
      %s214 = smul.addr %s213, 4
      %s215 = scalar_lea.vmem %s1, %s214
      %p216 = scmp.lt.s32.totalorder %s19, 0
      %s217 = scalar_select %p216, %s19, 0
      %s218 = scalar_lea.vmem %s2, %s217
      %s219 = smul.u32 32, %s18
      %p220 = scmp.lt.s32.totalorder %s219, 127
      %s221 = scalar_select %p220, %s219, 127
      %p222 = scmp.lt.s32.totalorder %s19, 0
      %s223 = scalar_select %p222, %s19, 0
      %s224 = sadd.s32 %s223, %s221
      %s225 = smul.addr %s224, 4
      %s226 = scalar_lea.vmem %s3, %s225
      %s227 = smul.u32 32, %s18
      %v229 = vld [vmem:[%s210] sm:$0xff]
      %v230 = vld [vmem:[%s210 + $0x8] sm:$0xff]
      %v231 = vld [vmem:[%s210 + $0x10] sm:$0xff]
      %v232 = vld [vmem:[%s210 + $0x18] sm:$0xf]
      %v233 = vld [vmem:[%s210 + $0x1c] sm:$0xff]
      %v234 = vld [vmem:[%s210 + $0x24] sm:$0xff]
      %v235 = vld [vmem:[%s210 + $0x2c] sm:$0xff]
      %v236 = vld [vmem:[%s210 + $0x34] sm:$0xf]
      %v237 = vld [vmem:[%s210 + $0x38] sm:$0xff]
      %v238 = vld [vmem:[%s210 + $0x40] sm:$0xff]
      %v239 = vld [vmem:[%s210 + $0x48] sm:$0xff]
      %v240 = vld [vmem:[%s210 + $0x50] sm:$0xf]
      %v241 = vld [vmem:[%s210 + $0x54] sm:$0xff]
      %v242 = vld [vmem:[%s210 + $0x5c] sm:$0xff]
      %v243 = vld [vmem:[%s210 + $0x64] sm:$0xff]
      %v244 = vld [vmem:[%s210 + $0x6c] sm:$0xf]
      %v245 = vld [vmem:[%s210 + $0x70] sm:$0xff]
      %v246 = vld [vmem:[%s210 + $0x78] sm:$0xff]
      %v247 = vld [vmem:[%s210 + $0x80] sm:$0xff]
      %v248 = vld [vmem:[%s210 + $0x88] sm:$0xf]
      %v249 = vld [vmem:[%s210 + $0x8c] sm:$0xff]
      %v250 = vld [vmem:[%s210 + $0x94] sm:$0xff]
      %v251 = vld [vmem:[%s210 + $0x9c] sm:$0xff]
      %v252 = vld [vmem:[%s210 + $0xa4] sm:$0xf]
      %v253 = vld [vmem:[%s210 + $0xa8] sm:$0xff]
      %v254 = vld [vmem:[%s210 + $0xb0] sm:$0xff]
      %v255 = vld [vmem:[%s210 + $0xb8] sm:$0xff]
      %v256 = vld [vmem:[%s210 + $0xc0] sm:$0xf]
      %v257 = vld [vmem:[%s210 + $0xc4] sm:$0xff]
      %v258 = vld [vmem:[%s210 + $0xcc] sm:$0xff]
      %v259 = vld [vmem:[%s210 + $0xd4] sm:$0xff]
      %v260 = vld [vmem:[%s210 + $0xdc] sm:$0xf]
      %v261 = vld [vmem:[%s210 + $0xe0] sm:$0xff]
      %v262 = vld [vmem:[%s210 + $0xe8] sm:$0xff]
      %v263 = vld [vmem:[%s210 + $0xf0] sm:$0xff]
      %v264 = vld [vmem:[%s210 + $0xf8] sm:$0xf]
      %v265 = vld [vmem:[%s210 + $0xfc] sm:$0xff]
      %v266 = vld [vmem:[%s210 + $0x104] sm:$0xff]
      %v267 = vld [vmem:[%s210 + $0x10c] sm:$0xff]
      %v268 = vld [vmem:[%s210 + $0x114] sm:$0xf]
      %v269 = vld [vmem:[%s210 + $0x118] sm:$0xff]
      %v270 = vld [vmem:[%s210 + $0x120] sm:$0xff]
      %v271 = vld [vmem:[%s210 + $0x128] sm:$0xff]
      %v272 = vld [vmem:[%s210 + $0x130] sm:$0xf]
      %v273 = vld [vmem:[%s210 + $0x134] sm:$0xff]
      %v274 = vld [vmem:[%s210 + $0x13c] sm:$0xff]
      %v275 = vld [vmem:[%s210 + $0x144] sm:$0xff]
      %v276 = vld [vmem:[%s210 + $0x14c] sm:$0xf]
      %v277 = vld [vmem:[%s210 + $0x150] sm:$0xff]
      %v278 = vld [vmem:[%s210 + $0x158] sm:$0xff]
      %v279 = vld [vmem:[%s210 + $0x160] sm:$0xff]
      %v280 = vld [vmem:[%s210 + $0x168] sm:$0xf]
      %v281 = vld [vmem:[%s210 + $0x16c] sm:$0xff]
      %v282 = vld [vmem:[%s210 + $0x174] sm:$0xff]
      %v283 = vld [vmem:[%s210 + $0x17c] sm:$0xff]
      %v284 = vld [vmem:[%s210 + $0x184] sm:$0xf]
      %v285 = vld [vmem:[%s210 + $0x188] sm:$0xff]
      %v286 = vld [vmem:[%s210 + $0x190] sm:$0xff]
      %v287 = vld [vmem:[%s210 + $0x198] sm:$0xff]
      %v288 = vld [vmem:[%s210 + $0x1a0] sm:$0xf]
      %v289 = vld [vmem:[%s210 + $0x1a4] sm:$0xff]
      %v290 = vld [vmem:[%s210 + $0x1ac] sm:$0xff]
      %v291 = vld [vmem:[%s210 + $0x1b4] sm:$0xff]
      %v292 = vld [vmem:[%s210 + $0x1bc] sm:$0xf]
      %v293 = vld [vmem:[%s210 + $0x1c0] sm:$0xff]
      %v294 = vld [vmem:[%s210 + $0x1c8] sm:$0xff]
      %v295 = vld [vmem:[%s210 + $0x1d0] sm:$0xff]
      %v296 = vld [vmem:[%s210 + $0x1d8] sm:$0xf]
      %v297 = vld [vmem:[%s210 + $0x1dc] sm:$0xff]
      %v298 = vld [vmem:[%s210 + $0x1e4] sm:$0xff]
      %v299 = vld [vmem:[%s210 + $0x1ec] sm:$0xff]
      %v300 = vld [vmem:[%s210 + $0x1f4] sm:$0xf]
      %v301 = vld [vmem:[%s210 + $0x1f8] sm:$0xff]
      %v302 = vld [vmem:[%s210 + $0x200] sm:$0xff]
      %v303 = vld [vmem:[%s210 + $0x208] sm:$0xff]
      %v304 = vld [vmem:[%s210 + $0x210] sm:$0xf]
      %v305 = vld [vmem:[%s210 + $0x214] sm:$0xff]
      %v306 = vld [vmem:[%s210 + $0x21c] sm:$0xff]
      %v307 = vld [vmem:[%s210 + $0x224] sm:$0xff]
      %v308 = vld [vmem:[%s210 + $0x22c] sm:$0xf]
      %v309 = vld [vmem:[%s210 + $0x230] sm:$0xff]
      %v310 = vld [vmem:[%s210 + $0x238] sm:$0xff]
      %v311 = vld [vmem:[%s210 + $0x240] sm:$0xff]
      %v312 = vld [vmem:[%s210 + $0x248] sm:$0xf]
      %v313 = vld [vmem:[%s210 + $0x24c] sm:$0xff]
      %v314 = vld [vmem:[%s210 + $0x254] sm:$0xff]
      %v315 = vld [vmem:[%s210 + $0x25c] sm:$0xff]
      %v316 = vld [vmem:[%s210 + $0x264] sm:$0xf]
      %v317 = vld [vmem:[%s210 + $0x268] sm:$0xff]
      %v318 = vld [vmem:[%s210 + $0x270] sm:$0xff]
      %v319 = vld [vmem:[%s210 + $0x278] sm:$0xff]
      %v320 = vld [vmem:[%s210 + $0x280] sm:$0xf]
      %v321 = vld [vmem:[%s210 + $0x284] sm:$0xff]
      %v322 = vld [vmem:[%s210 + $0x28c] sm:$0xff]
      %v323 = vld [vmem:[%s210 + $0x294] sm:$0xff]
      %v324 = vld [vmem:[%s210 + $0x29c] sm:$0xf]
      %v325 = vld [vmem:[%s210 + $0x2a0] sm:$0xff]
      %v326 = vld [vmem:[%s210 + $0x2a8] sm:$0xff]
      %v327 = vld [vmem:[%s210 + $0x2b0] sm:$0xff]
      %v328 = vld [vmem:[%s210 + $0x2b8] sm:$0xf]
      %v329 = vld [vmem:[%s210 + $0x2bc] sm:$0xff]
      %v330 = vld [vmem:[%s210 + $0x2c4] sm:$0xff]
      %v331 = vld [vmem:[%s210 + $0x2cc] sm:$0xff]
      %v332 = vld [vmem:[%s210 + $0x2d4] sm:$0xf]
      %v333 = vld [vmem:[%s210 + $0x2d8] sm:$0xff]
      %v334 = vld [vmem:[%s210 + $0x2e0] sm:$0xff]
      %v335 = vld [vmem:[%s210 + $0x2e8] sm:$0xff]
      %v336 = vld [vmem:[%s210 + $0x2f0] sm:$0xf]
      %v337 = vld [vmem:[%s210 + $0x2f4] sm:$0xff]
      %v338 = vld [vmem:[%s210 + $0x2fc] sm:$0xff]
      %v339 = vld [vmem:[%s210 + $0x304] sm:$0xff]
      %v340 = vld [vmem:[%s210 + $0x30c] sm:$0xf]
      %v341 = vld [vmem:[%s210 + $0x310] sm:$0xff]
      %v342 = vld [vmem:[%s210 + $0x318] sm:$0xff]
      %v343 = vld [vmem:[%s210 + $0x320] sm:$0xff]
      %v344 = vld [vmem:[%s210 + $0x328] sm:$0xf]
      %v345 = vld [vmem:[%s210 + $0x32c] sm:$0xff]
      %v346 = vld [vmem:[%s210 + $0x334] sm:$0xff]
      %v347 = vld [vmem:[%s210 + $0x33c] sm:$0xff]
      %v348 = vld [vmem:[%s210 + $0x344] sm:$0xf]
      %v349 = vld [vmem:[%s210 + $0x348] sm:$0xff]
      %v350 = vld [vmem:[%s210 + $0x350] sm:$0xff]
      %v351 = vld [vmem:[%s210 + $0x358] sm:$0xff]
      %v352 = vld [vmem:[%s210 + $0x360] sm:$0xf]
      %v353 = vld [vmem:[%s210 + $0x364] sm:$0xff]
      %v354 = vld [vmem:[%s210 + $0x36c] sm:$0xff]
      %v355 = vld [vmem:[%s210 + $0x374] sm:$0xff]
      %v356 = vld [vmem:[%s210 + $0x37c] sm:$0xf]
      %v357 = vld [vmem:[%s215] sm:$0xf]
      %v358 = vld [vmem:[%s215 + $0x4] sm:$0xf]
      %v359 = vld [vmem:[%s215 + $0x8] sm:$0xf]
      %v360 = vld [vmem:[%s215 + $0xc] sm:$0xf]
      %v361 = vld [vmem:[%s215 + $0x10] sm:$0xf]
      %v362 = vld [vmem:[%s215 + $0x14] sm:$0xf]
      %v363 = vld [vmem:[%s215 + $0x18] sm:$0xf]
      %v364 = vld [vmem:[%s215 + $0x1c] sm:$0xf]
      %v365 = vld [vmem:[%s215 + $0x20] sm:$0xf]
      %v366 = vld [vmem:[%s215 + $0x24] sm:$0xf]
      %v367 = vld [vmem:[%s215 + $0x28] sm:$0xf]
      %v368 = vld [vmem:[%s215 + $0x2c] sm:$0xf]
      %v369 = vld [vmem:[%s215 + $0x30] sm:$0xf]
      %v370 = vld [vmem:[%s215 + $0x34] sm:$0xf]
      %v371 = vld [vmem:[%s215 + $0x38] sm:$0xf]
      %v372 = vld [vmem:[%s215 + $0x3c] sm:$0xf]
      %v373 = vld [vmem:[%s215 + $0x40] sm:$0xf]
      %v374 = vld [vmem:[%s215 + $0x44] sm:$0xf]
      %v375 = vld [vmem:[%s215 + $0x48] sm:$0xf]
      %v376 = vld [vmem:[%s215 + $0x4c] sm:$0xf]
      %v377 = vld [vmem:[%s215 + $0x50] sm:$0xf]
      %v378 = vld [vmem:[%s215 + $0x54] sm:$0xf]
      %v379 = vld [vmem:[%s215 + $0x58] sm:$0xf]
      %v380 = vld [vmem:[%s215 + $0x5c] sm:$0xf]
      %v381 = vld [vmem:[%s215 + $0x60] sm:$0xf]
      %v382 = vld [vmem:[%s215 + $0x64] sm:$0xf]
      %v383 = vld [vmem:[%s215 + $0x68] sm:$0xf]
      %v384 = vld [vmem:[%s215 + $0x6c] sm:$0xf]
      %v385 = vld [vmem:[%s215 + $0x70] sm:$0xf]
      %v386 = vld [vmem:[%s215 + $0x74] sm:$0xf]
      %v387 = vld [vmem:[%s215 + $0x78] sm:$0xf]
      %v388 = vld [vmem:[%s215 + $0x7c] sm:$0xf]
      %v389 = vld [vmem:[%s215 + $0x80] sm:$0xf]
      %v390 = vld [vmem:[%s215 + $0x84] sm:$0xf]
      %v391 = vld [vmem:[%s215 + $0x88] sm:$0xf]
      %v392 = vld [vmem:[%s215 + $0x8c] sm:$0xf]
      %v393 = vld [vmem:[%s215 + $0x90] sm:$0xf]
      %v394 = vld [vmem:[%s215 + $0x94] sm:$0xf]
      %v395 = vld [vmem:[%s215 + $0x98] sm:$0xf]
      %v396 = vld [vmem:[%s215 + $0x9c] sm:$0xf]
      %v397 = vld [vmem:[%s215 + $0xa0] sm:$0xf]
      %v398 = vld [vmem:[%s215 + $0xa4] sm:$0xf]
      %v399 = vld [vmem:[%s215 + $0xa8] sm:$0xf]
      %v400 = vld [vmem:[%s215 + $0xac] sm:$0xf]
      %v401 = vld [vmem:[%s215 + $0xb0] sm:$0xf]
      %v402 = vld [vmem:[%s215 + $0xb4] sm:$0xf]
      %v403 = vld [vmem:[%s215 + $0xb8] sm:$0xf]
      %v404 = vld [vmem:[%s215 + $0xbc] sm:$0xf]
      %v405 = vld [vmem:[%s215 + $0xc0] sm:$0xf]
      %v406 = vld [vmem:[%s215 + $0xc4] sm:$0xf]
      %v407 = vld [vmem:[%s215 + $0xc8] sm:$0xf]
      %v408 = vld [vmem:[%s215 + $0xcc] sm:$0xf]
      %v409 = vld [vmem:[%s215 + $0xd0] sm:$0xf]
      %v410 = vld [vmem:[%s215 + $0xd4] sm:$0xf]
      %v411 = vld [vmem:[%s215 + $0xd8] sm:$0xf]
      %v412 = vld [vmem:[%s215 + $0xdc] sm:$0xf]
      %v413 = vld [vmem:[%s215 + $0xe0] sm:$0xf]
      %v414 = vld [vmem:[%s215 + $0xe4] sm:$0xf]
      %v415 = vld [vmem:[%s215 + $0xe8] sm:$0xf]
      %v416 = vld [vmem:[%s215 + $0xec] sm:$0xf]
      %v417 = vld [vmem:[%s215 + $0xf0] sm:$0xf]
      %v418 = vld [vmem:[%s215 + $0xf4] sm:$0xf]
      %v419 = vld [vmem:[%s215 + $0xf8] sm:$0xf]
      %v420 = vld [vmem:[%s215 + $0xfc] sm:$0xf]
      %v421 = vld [vmem:[%s215 + $0x100] sm:$0xf]
      %v422 = vld [vmem:[%s215 + $0x104] sm:$0xf]
      %v423 = vld [vmem:[%s215 + $0x108] sm:$0xf]
      %v424 = vld [vmem:[%s215 + $0x10c] sm:$0xf]
      %v425 = vld [vmem:[%s215 + $0x110] sm:$0xf]
      %v426 = vld [vmem:[%s215 + $0x114] sm:$0xf]
      %v427 = vld [vmem:[%s215 + $0x118] sm:$0xf]
      %v428 = vld [vmem:[%s215 + $0x11c] sm:$0xf]
      %v429 = vld [vmem:[%s215 + $0x120] sm:$0xf]
      %v430 = vld [vmem:[%s215 + $0x124] sm:$0xf]
      %v431 = vld [vmem:[%s215 + $0x128] sm:$0xf]
      %v432 = vld [vmem:[%s215 + $0x12c] sm:$0xf]
      %v433 = vld [vmem:[%s215 + $0x130] sm:$0xf]
      %v434 = vld [vmem:[%s215 + $0x134] sm:$0xf]
      %v435 = vld [vmem:[%s215 + $0x138] sm:$0xf]
      %v436 = vld [vmem:[%s215 + $0x13c] sm:$0xf]
      %v437 = vld [vmem:[%s215 + $0x140] sm:$0xf]
      %v438 = vld [vmem:[%s215 + $0x144] sm:$0xf]
      %v439 = vld [vmem:[%s215 + $0x148] sm:$0xf]
      %v440 = vld [vmem:[%s215 + $0x14c] sm:$0xf]
      %v441 = vld [vmem:[%s215 + $0x150] sm:$0xf]
      %v442 = vld [vmem:[%s215 + $0x154] sm:$0xf]
      %v443 = vld [vmem:[%s215 + $0x158] sm:$0xf]
      %v444 = vld [vmem:[%s215 + $0x15c] sm:$0xf]
      %v445 = vld [vmem:[%s215 + $0x160] sm:$0xf]
      %v446 = vld [vmem:[%s215 + $0x164] sm:$0xf]
      %v447 = vld [vmem:[%s215 + $0x168] sm:$0xf]
      %v448 = vld [vmem:[%s215 + $0x16c] sm:$0xf]
      %v449 = vld [vmem:[%s215 + $0x170] sm:$0xf]
      %v450 = vld [vmem:[%s215 + $0x174] sm:$0xf]
      %v451 = vld [vmem:[%s215 + $0x178] sm:$0xf]
      %v452 = vld [vmem:[%s215 + $0x17c] sm:$0xf]
      %v453 = vld [vmem:[%s215 + $0x180] sm:$0xf]
      %v454 = vld [vmem:[%s215 + $0x184] sm:$0xf]
      %v455 = vld [vmem:[%s215 + $0x188] sm:$0xf]
      %v456 = vld [vmem:[%s215 + $0x18c] sm:$0xf]
      %v457 = vld [vmem:[%s218] sm:$0x1]
      %v459 = vperm.slane %v457, 0
      %v589 = vunpack.c.l.b16 %v229
      %v590 = vunpack.c.h.b16 %v229
      %v591 = vunpack.c.l.b16 %v230
      %v592 = vunpack.c.h.b16 %v230
      %v593 = vunpack.c.l.b16 %v231
      %v594 = vunpack.c.h.b16 %v231
      %v595 = vunpack.c.l.b16 %v232
      %v596 = vunpack.c.l.b16 %v233
      %v597 = vunpack.c.h.b16 %v233
      %v598 = vunpack.c.l.b16 %v234
      %v599 = vunpack.c.h.b16 %v234
      %v600 = vunpack.c.l.b16 %v235
      %v601 = vunpack.c.h.b16 %v235
      %v602 = vunpack.c.l.b16 %v236
      %v603 = vunpack.c.l.b16 %v237
      %v604 = vunpack.c.h.b16 %v237
      %v605 = vunpack.c.l.b16 %v238
      %v606 = vunpack.c.h.b16 %v238
      %v607 = vunpack.c.l.b16 %v239
      %v608 = vunpack.c.h.b16 %v239
      %v609 = vunpack.c.l.b16 %v240
      %v610 = vunpack.c.l.b16 %v241
      %v611 = vunpack.c.h.b16 %v241
      %v612 = vunpack.c.l.b16 %v242
      %v613 = vunpack.c.h.b16 %v242
      %v614 = vunpack.c.l.b16 %v243
      %v615 = vunpack.c.h.b16 %v243
      %v616 = vunpack.c.l.b16 %v244
      %v617 = vunpack.c.l.b16 %v245
      %v618 = vunpack.c.h.b16 %v245
      %v619 = vunpack.c.l.b16 %v246
      %v620 = vunpack.c.h.b16 %v246
      %v621 = vunpack.c.l.b16 %v247
      %v622 = vunpack.c.h.b16 %v247
      %v623 = vunpack.c.l.b16 %v248
      %v624 = vunpack.c.l.b16 %v249
      %v625 = vunpack.c.h.b16 %v249
      %v626 = vunpack.c.l.b16 %v250
      %v627 = vunpack.c.h.b16 %v250
      %v628 = vunpack.c.l.b16 %v251
      %v629 = vunpack.c.h.b16 %v251
      %v630 = vunpack.c.l.b16 %v252
      %v631 = vunpack.c.l.b16 %v253
      %v632 = vunpack.c.h.b16 %v253
      %v633 = vunpack.c.l.b16 %v254
      %v634 = vunpack.c.h.b16 %v254
      %v635 = vunpack.c.l.b16 %v255
      %v636 = vunpack.c.h.b16 %v255
      %v637 = vunpack.c.l.b16 %v256
      %v638 = vunpack.c.l.b16 %v257
      %v639 = vunpack.c.h.b16 %v257
      %v640 = vunpack.c.l.b16 %v258
      %v641 = vunpack.c.h.b16 %v258
      %v642 = vunpack.c.l.b16 %v259
      %v643 = vunpack.c.h.b16 %v259
      %v644 = vunpack.c.l.b16 %v260
      %v645 = vunpack.c.l.b16 %v261
      %v646 = vunpack.c.h.b16 %v261
      %v647 = vunpack.c.l.b16 %v262
      %v648 = vunpack.c.h.b16 %v262
      %v649 = vunpack.c.l.b16 %v263
      %v650 = vunpack.c.h.b16 %v263
      %v651 = vunpack.c.l.b16 %v264
      %v652 = vunpack.c.l.b16 %v265
      %v653 = vunpack.c.h.b16 %v265
      %v654 = vunpack.c.l.b16 %v266
      %v655 = vunpack.c.h.b16 %v266
      %v656 = vunpack.c.l.b16 %v267
      %v657 = vunpack.c.h.b16 %v267
      %v658 = vunpack.c.l.b16 %v268
      %v659 = vunpack.c.l.b16 %v269
      %v660 = vunpack.c.h.b16 %v269
      %v661 = vunpack.c.l.b16 %v270
      %v662 = vunpack.c.h.b16 %v270
      %v663 = vunpack.c.l.b16 %v271
      %v664 = vunpack.c.h.b16 %v271
      %v665 = vunpack.c.l.b16 %v272
      %v666 = vunpack.c.l.b16 %v273
      %v667 = vunpack.c.h.b16 %v273
      %v668 = vunpack.c.l.b16 %v274
      %v669 = vunpack.c.h.b16 %v274
      %v670 = vunpack.c.l.b16 %v275
      %v671 = vunpack.c.h.b16 %v275
      %v672 = vunpack.c.l.b16 %v276
      %v673 = vunpack.c.l.b16 %v277
      %v674 = vunpack.c.h.b16 %v277
      %v675 = vunpack.c.l.b16 %v278
      %v676 = vunpack.c.h.b16 %v278
      %v677 = vunpack.c.l.b16 %v279
      %v678 = vunpack.c.h.b16 %v279
      %v679 = vunpack.c.l.b16 %v280
      %v680 = vunpack.c.l.b16 %v281
      %v681 = vunpack.c.h.b16 %v281
      %v682 = vunpack.c.l.b16 %v282
      %v683 = vunpack.c.h.b16 %v282
      %v684 = vunpack.c.l.b16 %v283
      %v685 = vunpack.c.h.b16 %v283
      %v686 = vunpack.c.l.b16 %v284
      %v687 = vunpack.c.l.b16 %v285
      %v688 = vunpack.c.h.b16 %v285
      %v689 = vunpack.c.l.b16 %v286
      %v690 = vunpack.c.h.b16 %v286
      %v691 = vunpack.c.l.b16 %v287
      %v692 = vunpack.c.h.b16 %v287
      %v693 = vunpack.c.l.b16 %v288
      %v694 = vunpack.c.l.b16 %v289
      %v695 = vunpack.c.h.b16 %v289
      %v696 = vunpack.c.l.b16 %v290
      %v697 = vunpack.c.h.b16 %v290
      %v698 = vunpack.c.l.b16 %v291
      %v699 = vunpack.c.h.b16 %v291
      %v700 = vunpack.c.l.b16 %v292
      %v701 = vunpack.c.l.b16 %v293
      %v702 = vunpack.c.h.b16 %v293
      %v703 = vunpack.c.l.b16 %v294
      %v704 = vunpack.c.h.b16 %v294
      %v705 = vunpack.c.l.b16 %v295
      %v706 = vunpack.c.h.b16 %v295
      %v707 = vunpack.c.l.b16 %v296
      %v708 = vunpack.c.l.b16 %v297
      %v709 = vunpack.c.h.b16 %v297
      %v710 = vunpack.c.l.b16 %v298
      %v711 = vunpack.c.h.b16 %v298
      %v712 = vunpack.c.l.b16 %v299
      %v713 = vunpack.c.h.b16 %v299
      %v714 = vunpack.c.l.b16 %v300
      %v715 = vunpack.c.l.b16 %v301
      %v716 = vunpack.c.h.b16 %v301
      %v717 = vunpack.c.l.b16 %v302
      %v718 = vunpack.c.h.b16 %v302
      %v719 = vunpack.c.l.b16 %v303
      %v720 = vunpack.c.h.b16 %v303
      %v721 = vunpack.c.l.b16 %v304
      %v722 = vunpack.c.l.b16 %v305
      %v723 = vunpack.c.h.b16 %v305
      %v724 = vunpack.c.l.b16 %v306
      %v725 = vunpack.c.h.b16 %v306
      %v726 = vunpack.c.l.b16 %v307
      %v727 = vunpack.c.h.b16 %v307
      %v728 = vunpack.c.l.b16 %v308
      %v729 = vunpack.c.l.b16 %v309
      %v730 = vunpack.c.h.b16 %v309
      %v731 = vunpack.c.l.b16 %v310
      %v732 = vunpack.c.h.b16 %v310
      %v733 = vunpack.c.l.b16 %v311
      %v734 = vunpack.c.h.b16 %v311
      %v735 = vunpack.c.l.b16 %v312
      %v736 = vunpack.c.l.b16 %v313
      %v737 = vunpack.c.h.b16 %v313
      %v738 = vunpack.c.l.b16 %v314
      %v739 = vunpack.c.h.b16 %v314
      %v740 = vunpack.c.l.b16 %v315
      %v741 = vunpack.c.h.b16 %v315
      %v742 = vunpack.c.l.b16 %v316
      %v743 = vunpack.c.l.b16 %v317
      %v744 = vunpack.c.h.b16 %v317
      %v745 = vunpack.c.l.b16 %v318
      %v746 = vunpack.c.h.b16 %v318
      %v747 = vunpack.c.l.b16 %v319
      %v748 = vunpack.c.h.b16 %v319
      %v749 = vunpack.c.l.b16 %v320
      %v750 = vunpack.c.l.b16 %v321
      %v751 = vunpack.c.h.b16 %v321
      %v752 = vunpack.c.l.b16 %v322
      %v753 = vunpack.c.h.b16 %v322
      %v754 = vunpack.c.l.b16 %v323
      %v755 = vunpack.c.h.b16 %v323
      %v756 = vunpack.c.l.b16 %v324
      %v757 = vunpack.c.l.b16 %v325
      %v758 = vunpack.c.h.b16 %v325
      %v759 = vunpack.c.l.b16 %v326
      %v760 = vunpack.c.h.b16 %v326
      %v761 = vunpack.c.l.b16 %v327
      %v762 = vunpack.c.h.b16 %v327
      %v763 = vunpack.c.l.b16 %v328
      %v764 = vunpack.c.l.b16 %v329
      %v765 = vunpack.c.h.b16 %v329
      %v766 = vunpack.c.l.b16 %v330
      %v767 = vunpack.c.h.b16 %v330
      %v768 = vunpack.c.l.b16 %v331
      %v769 = vunpack.c.h.b16 %v331
      %v770 = vunpack.c.l.b16 %v332
      %v771 = vunpack.c.l.b16 %v333
      %v772 = vunpack.c.h.b16 %v333
      %v773 = vunpack.c.l.b16 %v334
      %v774 = vunpack.c.h.b16 %v334
      %v775 = vunpack.c.l.b16 %v335
      %v776 = vunpack.c.h.b16 %v335
      %v777 = vunpack.c.l.b16 %v336
      %v778 = vunpack.c.l.b16 %v337
      %v779 = vunpack.c.h.b16 %v337
      %v780 = vunpack.c.l.b16 %v338
      %v781 = vunpack.c.h.b16 %v338
      %v782 = vunpack.c.l.b16 %v339
      %v783 = vunpack.c.h.b16 %v339
      %v784 = vunpack.c.l.b16 %v340
      %v785 = vunpack.c.l.b16 %v341
      %v786 = vunpack.c.h.b16 %v341
      %v787 = vunpack.c.l.b16 %v342
      %v788 = vunpack.c.h.b16 %v342
      %v789 = vunpack.c.l.b16 %v343
      %v790 = vunpack.c.h.b16 %v343
      %v791 = vunpack.c.l.b16 %v344
      %v792 = vunpack.c.l.b16 %v345
      %v793 = vunpack.c.h.b16 %v345
      %v794 = vunpack.c.l.b16 %v346
      %v795 = vunpack.c.h.b16 %v346
      %v796 = vunpack.c.l.b16 %v347
      %v797 = vunpack.c.h.b16 %v347
      %v798 = vunpack.c.l.b16 %v348
      %v799 = vunpack.c.l.b16 %v349
      %v800 = vunpack.c.h.b16 %v349
      %v801 = vunpack.c.l.b16 %v350
      %v802 = vunpack.c.h.b16 %v350
      %v803 = vunpack.c.l.b16 %v351
      %v804 = vunpack.c.h.b16 %v351
      %v805 = vunpack.c.l.b16 %v352
      %v806 = vunpack.c.l.b16 %v353
      %v807 = vunpack.c.h.b16 %v353
      %v808 = vunpack.c.l.b16 %v354
      %v809 = vunpack.c.h.b16 %v354
      %v810 = vunpack.c.l.b16 %v355
      %v811 = vunpack.c.h.b16 %v355
      %v812 = vunpack.c.l.b16 %v356
      %v813 = vpack.c.b16 %v596, %v589
      %v814 = vpack.c.b16 %v597, %v590
      %v815 = vpack.c.b16 %v598, %v591
      %v816 = vpack.c.b16 %v599, %v592
      %v817 = vpack.c.b16 %v600, %v593
      %v818 = vpack.c.b16 %v601, %v594
      %v819 = vpack.c.b16 %v602, %v595
      %v820 = vpack.c.b16 %v610, %v603
      %v821 = vpack.c.b16 %v611, %v604
      %v822 = vpack.c.b16 %v612, %v605
      %v823 = vpack.c.b16 %v613, %v606
      %v824 = vpack.c.b16 %v614, %v607
      %v825 = vpack.c.b16 %v615, %v608
      %v826 = vpack.c.b16 %v616, %v609
      %v827 = vpack.c.b16 %v624, %v617
      %v828 = vpack.c.b16 %v625, %v618
      %v829 = vpack.c.b16 %v626, %v619
      %v830 = vpack.c.b16 %v627, %v620
      %v831 = vpack.c.b16 %v628, %v621
      %v832 = vpack.c.b16 %v629, %v622
      %v833 = vpack.c.b16 %v630, %v623
      %v834 = vpack.c.b16 %v638, %v631
      %v835 = vpack.c.b16 %v639, %v632
      %v836 = vpack.c.b16 %v640, %v633
      %v837 = vpack.c.b16 %v641, %v634
      %v838 = vpack.c.b16 %v642, %v635
      %v839 = vpack.c.b16 %v643, %v636
      %v840 = vpack.c.b16 %v644, %v637
      %v841 = vpack.c.b16 %v652, %v645
      %v842 = vpack.c.b16 %v653, %v646
      %v843 = vpack.c.b16 %v654, %v647
      %v844 = vpack.c.b16 %v655, %v648
      %v845 = vpack.c.b16 %v656, %v649
      %v846 = vpack.c.b16 %v657, %v650
      %v847 = vpack.c.b16 %v658, %v651
      %v848 = vpack.c.b16 %v666, %v659
      %v849 = vpack.c.b16 %v667, %v660
      %v850 = vpack.c.b16 %v668, %v661
      %v851 = vpack.c.b16 %v669, %v662
      %v852 = vpack.c.b16 %v670, %v663
      %v853 = vpack.c.b16 %v671, %v664
      %v854 = vpack.c.b16 %v672, %v665
      %v855 = vpack.c.b16 %v680, %v673
      %v856 = vpack.c.b16 %v681, %v674
      %v857 = vpack.c.b16 %v682, %v675
      %v858 = vpack.c.b16 %v683, %v676
      %v859 = vpack.c.b16 %v684, %v677
      %v860 = vpack.c.b16 %v685, %v678
      %v861 = vpack.c.b16 %v686, %v679
      %v862 = vpack.c.b16 %v694, %v687
      %v863 = vpack.c.b16 %v695, %v688
      %v864 = vpack.c.b16 %v696, %v689
      %v865 = vpack.c.b16 %v697, %v690
      %v866 = vpack.c.b16 %v698, %v691
      %v867 = vpack.c.b16 %v699, %v692
      %v868 = vpack.c.b16 %v700, %v693
      %v869 = vpack.c.b16 %v708, %v701
      %v870 = vpack.c.b16 %v709, %v702
      %v871 = vpack.c.b16 %v710, %v703
      %v872 = vpack.c.b16 %v711, %v704
      %v873 = vpack.c.b16 %v712, %v705
      %v874 = vpack.c.b16 %v713, %v706
      %v875 = vpack.c.b16 %v714, %v707
      %v876 = vpack.c.b16 %v722, %v715
      %v877 = vpack.c.b16 %v723, %v716
      %v878 = vpack.c.b16 %v724, %v717
      %v879 = vpack.c.b16 %v725, %v718
      %v880 = vpack.c.b16 %v726, %v719
      %v881 = vpack.c.b16 %v727, %v720
      %v882 = vpack.c.b16 %v728, %v721
      %v883 = vpack.c.b16 %v736, %v729
      %v884 = vpack.c.b16 %v737, %v730
      %v885 = vpack.c.b16 %v738, %v731
      %v886 = vpack.c.b16 %v739, %v732
      %v887 = vpack.c.b16 %v740, %v733
      %v888 = vpack.c.b16 %v741, %v734
      %v889 = vpack.c.b16 %v742, %v735
      %v890 = vpack.c.b16 %v750, %v743
      %v891 = vpack.c.b16 %v751, %v744
      %v892 = vpack.c.b16 %v752, %v745
      %v893 = vpack.c.b16 %v753, %v746
      %v894 = vpack.c.b16 %v754, %v747
      %v895 = vpack.c.b16 %v755, %v748
      %v896 = vpack.c.b16 %v756, %v749
      %v897 = vpack.c.b16 %v764, %v757
      %v898 = vpack.c.b16 %v765, %v758
      %v899 = vpack.c.b16 %v766, %v759
      %v900 = vpack.c.b16 %v767, %v760
      %v901 = vpack.c.b16 %v768, %v761
      %v902 = vpack.c.b16 %v769, %v762
      %v903 = vpack.c.b16 %v770, %v763
      %v904 = vpack.c.b16 %v778, %v771
      %v905 = vpack.c.b16 %v779, %v772
      %v906 = vpack.c.b16 %v780, %v773
      %v907 = vpack.c.b16 %v781, %v774
      %v908 = vpack.c.b16 %v782, %v775
      %v909 = vpack.c.b16 %v783, %v776
      %v910 = vpack.c.b16 %v784, %v777
      %v911 = vpack.c.b16 %v792, %v785
      %v912 = vpack.c.b16 %v793, %v786
      %v913 = vpack.c.b16 %v794, %v787
      %v914 = vpack.c.b16 %v795, %v788
      %v915 = vpack.c.b16 %v796, %v789
      %v916 = vpack.c.b16 %v797, %v790
      %v917 = vpack.c.b16 %v798, %v791
      %v918 = vpack.c.b16 %v806, %v799
      %v919 = vpack.c.b16 %v807, %v800
      %v920 = vpack.c.b16 %v808, %v801
      %v921 = vpack.c.b16 %v809, %v802
      %v922 = vpack.c.b16 %v810, %v803
      %v923 = vpack.c.b16 %v811, %v804
      %v924 = vpack.c.b16 %v812, %v805
      %v1121 = vunpack.c.l.b16 %v357
      %v1122 = vunpack.c.l.b16 %v358
      %v1123 = vunpack.c.l.b16 %v359
      %v1124 = vunpack.c.l.b16 %v360
      %v1125 = vunpack.c.l.b16 %v361
      %v1126 = vunpack.c.l.b16 %v362
      %v1127 = vunpack.c.l.b16 %v363
      %v1128 = vunpack.c.l.b16 %v364
      %v1129 = vunpack.c.l.b16 %v365
      %v1130 = vunpack.c.l.b16 %v366
      %v1131 = vunpack.c.l.b16 %v367
      %v1132 = vunpack.c.l.b16 %v368
      %v1133 = vunpack.c.l.b16 %v369
      %v1134 = vunpack.c.l.b16 %v370
      %v1135 = vunpack.c.l.b16 %v371
      %v1136 = vunpack.c.l.b16 %v372
      %v1137 = vunpack.c.l.b16 %v373
      %v1138 = vunpack.c.l.b16 %v374
      %v1139 = vunpack.c.l.b16 %v375
      %v1140 = vunpack.c.l.b16 %v376
      %v1141 = vunpack.c.l.b16 %v377
      %v1142 = vunpack.c.l.b16 %v378
      %v1143 = vunpack.c.l.b16 %v379
      %v1144 = vunpack.c.l.b16 %v380
      %v1145 = vunpack.c.l.b16 %v381
      %v1146 = vunpack.c.l.b16 %v382
      %v1147 = vunpack.c.l.b16 %v383
      %v1148 = vunpack.c.l.b16 %v384
      %v1149 = vunpack.c.l.b16 %v385
      %v1150 = vunpack.c.l.b16 %v386
      %v1151 = vunpack.c.l.b16 %v387
      %v1152 = vunpack.c.l.b16 %v388
      %v1153 = vunpack.c.l.b16 %v389
      %v1154 = vunpack.c.l.b16 %v390
      %v1155 = vunpack.c.l.b16 %v391
      %v1156 = vunpack.c.l.b16 %v392
      %v1157 = vunpack.c.l.b16 %v393
      %v1158 = vunpack.c.l.b16 %v394
      %v1159 = vunpack.c.l.b16 %v395
      %v1160 = vunpack.c.l.b16 %v396
      %v1161 = vunpack.c.l.b16 %v397
      %v1162 = vunpack.c.l.b16 %v398
      %v1163 = vunpack.c.l.b16 %v399
      %v1164 = vunpack.c.l.b16 %v400
      %v1165 = vunpack.c.l.b16 %v401
      %v1166 = vunpack.c.l.b16 %v402
      %v1167 = vunpack.c.l.b16 %v403
      %v1168 = vunpack.c.l.b16 %v404
      %v1169 = vunpack.c.l.b16 %v405
      %v1170 = vunpack.c.l.b16 %v406
      %v1171 = vunpack.c.l.b16 %v407
      %v1172 = vunpack.c.l.b16 %v408
      %v1173 = vunpack.c.l.b16 %v409
      %v1174 = vunpack.c.l.b16 %v410
      %v1175 = vunpack.c.l.b16 %v411
      %v1176 = vunpack.c.l.b16 %v412
      %v1177 = vunpack.c.l.b16 %v413
      %v1178 = vunpack.c.l.b16 %v414
      %v1179 = vunpack.c.l.b16 %v415
      %v1180 = vunpack.c.l.b16 %v416
      %v1181 = vunpack.c.l.b16 %v417
      %v1182 = vunpack.c.l.b16 %v418
      %v1183 = vunpack.c.l.b16 %v419
      %v1184 = vunpack.c.l.b16 %v420
      %v1185 = vunpack.c.l.b16 %v421
      %v1186 = vunpack.c.l.b16 %v422
      %v1187 = vunpack.c.l.b16 %v423
      %v1188 = vunpack.c.l.b16 %v424
      %v1189 = vunpack.c.l.b16 %v425
      %v1190 = vunpack.c.l.b16 %v426
      %v1191 = vunpack.c.l.b16 %v427
      %v1192 = vunpack.c.l.b16 %v428
      %v1193 = vunpack.c.l.b16 %v429
      %v1194 = vunpack.c.l.b16 %v430
      %v1195 = vunpack.c.l.b16 %v431
      %v1196 = vunpack.c.l.b16 %v432
      %v1197 = vunpack.c.l.b16 %v433
      %v1198 = vunpack.c.l.b16 %v434
      %v1199 = vunpack.c.l.b16 %v435
      %v1200 = vunpack.c.l.b16 %v436
      %v1201 = vunpack.c.l.b16 %v437
      %v1202 = vunpack.c.l.b16 %v438
      %v1203 = vunpack.c.l.b16 %v439
      %v1204 = vunpack.c.l.b16 %v440
      %v1205 = vunpack.c.l.b16 %v441
      %v1206 = vunpack.c.l.b16 %v442
      %v1207 = vunpack.c.l.b16 %v443
      %v1208 = vunpack.c.l.b16 %v444
      %v1209 = vunpack.c.l.b16 %v445
      %v1210 = vunpack.c.l.b16 %v446
      %v1211 = vunpack.c.l.b16 %v447
      %v1212 = vunpack.c.l.b16 %v448
      %v1213 = vunpack.c.l.b16 %v449
      %v1214 = vunpack.c.l.b16 %v450
      %v1215 = vunpack.c.l.b16 %v451
      %v1216 = vunpack.c.l.b16 %v452
      %v1217 = vunpack.c.l.b16 %v453
      %v1218 = vunpack.c.l.b16 %v454
      %v1219 = vunpack.c.l.b16 %v455
      %v1220 = vunpack.c.l.b16 %v456
      %v1221 = vpack.c.b16 %v1122, %v1121
      %v1222 = vpack.c.b16 %v1124, %v1123
      %v1223 = vpack.c.b16 %v1126, %v1125
      %v1224 = vpack.c.b16 %v1128, %v1127
      %v1225 = vpack.c.b16 %v1130, %v1129
      %v1226 = vpack.c.b16 %v1132, %v1131
      %v1227 = vpack.c.b16 %v1134, %v1133
      %v1228 = vpack.c.b16 %v1136, %v1135
      %v1229 = vpack.c.b16 %v1138, %v1137
      %v1230 = vpack.c.b16 %v1140, %v1139
      %v1231 = vpack.c.b16 %v1142, %v1141
      %v1232 = vpack.c.b16 %v1144, %v1143
      %v1233 = vpack.c.b16 %v1146, %v1145
      %v1234 = vpack.c.b16 %v1148, %v1147
      %v1235 = vpack.c.b16 %v1150, %v1149
      %v1236 = vpack.c.b16 %v1152, %v1151
      %v1237 = vpack.c.b16 %v1154, %v1153
      %v1238 = vpack.c.b16 %v1156, %v1155
      %v1239 = vpack.c.b16 %v1158, %v1157
      %v1240 = vpack.c.b16 %v1160, %v1159
      %v1241 = vpack.c.b16 %v1162, %v1161
      %v1242 = vpack.c.b16 %v1164, %v1163
      %v1243 = vpack.c.b16 %v1166, %v1165
      %v1244 = vpack.c.b16 %v1168, %v1167
      %v1245 = vpack.c.b16 %v1170, %v1169
      %v1246 = vpack.c.b16 %v1172, %v1171
      %v1247 = vpack.c.b16 %v1174, %v1173
      %v1248 = vpack.c.b16 %v1176, %v1175
      %v1249 = vpack.c.b16 %v1178, %v1177
      %v1250 = vpack.c.b16 %v1180, %v1179
      %v1251 = vpack.c.b16 %v1182, %v1181
      %v1252 = vpack.c.b16 %v1184, %v1183
      %v1253 = vpack.c.b16 %v1186, %v1185
      %v1254 = vpack.c.b16 %v1188, %v1187
      %v1255 = vpack.c.b16 %v1190, %v1189
      %v1256 = vpack.c.b16 %v1192, %v1191
      %v1257 = vpack.c.b16 %v1194, %v1193
      %v1258 = vpack.c.b16 %v1196, %v1195
      %v1259 = vpack.c.b16 %v1198, %v1197
      %v1260 = vpack.c.b16 %v1200, %v1199
      %v1261 = vpack.c.b16 %v1202, %v1201
      %v1262 = vpack.c.b16 %v1204, %v1203
      %v1263 = vpack.c.b16 %v1206, %v1205
      %v1264 = vpack.c.b16 %v1208, %v1207
      %v1265 = vpack.c.b16 %v1210, %v1209
      %v1266 = vpack.c.b16 %v1212, %v1211
      %v1267 = vpack.c.b16 %v1214, %v1213
      %v1268 = vpack.c.b16 %v1216, %v1215
      %v1269 = vpack.c.b16 %v1218, %v1217
      %v1270 = vpack.c.b16 %v1220, %v1219
      %vm1321 = vcmask 261120
      %v1323 = vsel %vm1321, %v819, 0
      %v1326 = vsel %vm1321, %v826, 0
      %v1329 = vsel %vm1321, %v833, 0
      %v1332 = vsel %vm1321, %v840, 0
      %v1335 = vsel %vm1321, %v847, 0
      %v1338 = vsel %vm1321, %v854, 0
      %v1341 = vsel %vm1321, %v861, 0
      %v1344 = vsel %vm1321, %v868, 0
      %v1347 = vsel %vm1321, %v875, 0
      %v1350 = vsel %vm1321, %v882, 0
      %v1353 = vsel %vm1321, %v889, 0
      %v1356 = vsel %vm1321, %v896, 0
      %v1359 = vsel %vm1321, %v903, 0
      %v1362 = vsel %vm1321, %v910, 0
      %v1365 = vsel %vm1321, %v917, 0
      %v1368 = vsel %vm1321, %v924, 0
      %1370 = vmatpush.bf16.msra.mxu0 %v1228
      %1371 = vmatpush.bf16.msra.mxu0 %v1227
      %1372 = vmatpush.bf16.msra.mxu0 %v1226
      %1373 = vmatpush.bf16.msra.mxu0 %v1225
      %1374 = vmatpush.bf16.msra.mxu0 %v1224
      %1375 = vmatpush.bf16.msra.mxu0 %v1223
      %1376 = vmatpush.bf16.msra.mxu0 %v1222
      %1377 = vmatpush.bf16.msra.mxu0 %v1221
      %1378 = vmatmul.bf16.gmra.mxu0 %v813
      %v1379 = vpop.f32.mrf.mxu0
      %v1380 = vadd.f32 %v459, %v1379
      %v1381 = vpop.f32.mrf.mxu0
      %v1382 = vadd.f32 %v459, %v1381
      %1383 = vmatmul.bf16.gmra.mxu0 %v820
      %v1384 = vpop.f32.mrf.mxu0
      %v1385 = vadd.f32 %v459, %v1384
      %v1386 = vpop.f32.mrf.mxu0
      %v1387 = vadd.f32 %v459, %v1386
      %1388 = vmatmul.bf16.gmra.mxu0 %v827
      %v1389 = vpop.f32.mrf.mxu0
      %v1390 = vadd.f32 %v459, %v1389
      %v1391 = vpop.f32.mrf.mxu0
      %v1392 = vadd.f32 %v459, %v1391
      %1393 = vmatmul.bf16.gmra.mxu0 %v834
      %v1394 = vpop.f32.mrf.mxu0
      %v1395 = vadd.f32 %v459, %v1394
      %v1396 = vpop.f32.mrf.mxu0
      %v1397 = vadd.f32 %v459, %v1396
      %1398 = vmatmul.bf16.gmra.mxu0 %v841
      %v1399 = vpop.f32.mrf.mxu0
      %v1400 = vadd.f32 %v459, %v1399
      %v1401 = vpop.f32.mrf.mxu0
      %v1402 = vadd.f32 %v459, %v1401
      %1403 = vmatmul.bf16.gmra.mxu0 %v848
      %v1404 = vpop.f32.mrf.mxu0
      %v1405 = vadd.f32 %v459, %v1404
      %v1406 = vpop.f32.mrf.mxu0
      %v1407 = vadd.f32 %v459, %v1406
      %1408 = vmatmul.bf16.gmra.mxu0 %v855
      %v1409 = vpop.f32.mrf.mxu0
      %v1410 = vadd.f32 %v459, %v1409
      %v1411 = vpop.f32.mrf.mxu0
      %v1412 = vadd.f32 %v459, %v1411
      %1413 = vmatmul.bf16.gmra.mxu0 %v862
      %v1414 = vpop.f32.mrf.mxu0
      %v1415 = vadd.f32 %v459, %v1414
      %v1416 = vpop.f32.mrf.mxu0
      %v1417 = vadd.f32 %v459, %v1416
      %1418 = vmatmul.bf16.gmra.mxu0 %v869
      %v1419 = vpop.f32.mrf.mxu0
      %v1420 = vadd.f32 %v459, %v1419
      %v1421 = vpop.f32.mrf.mxu0
      %v1422 = vadd.f32 %v459, %v1421
      %1423 = vmatmul.bf16.gmra.mxu0 %v876
      %v1424 = vpop.f32.mrf.mxu0
      %v1425 = vadd.f32 %v459, %v1424
      %v1426 = vpop.f32.mrf.mxu0
      %v1427 = vadd.f32 %v459, %v1426
      %1428 = vmatmul.bf16.gmra.mxu0 %v883
      %v1429 = vpop.f32.mrf.mxu0
      %v1430 = vadd.f32 %v459, %v1429
      %v1431 = vpop.f32.mrf.mxu0
      %v1432 = vadd.f32 %v459, %v1431
      %1433 = vmatmul.bf16.gmra.mxu0 %v890
      %v1434 = vpop.f32.mrf.mxu0
      %v1435 = vadd.f32 %v459, %v1434
      %v1436 = vpop.f32.mrf.mxu0
      %v1437 = vadd.f32 %v459, %v1436
      %1438 = vmatmul.bf16.gmra.mxu0 %v897
      %v1439 = vpop.f32.mrf.mxu0
      %v1440 = vadd.f32 %v459, %v1439
      %v1441 = vpop.f32.mrf.mxu0
      %v1442 = vadd.f32 %v459, %v1441
      %1443 = vmatmul.bf16.gmra.mxu0 %v904
      %v1444 = vpop.f32.mrf.mxu0
      %v1445 = vadd.f32 %v459, %v1444
      %v1446 = vpop.f32.mrf.mxu0
      %v1447 = vadd.f32 %v459, %v1446
      %1448 = vmatmul.bf16.gmra.mxu0 %v911
      %v1449 = vpop.f32.mrf.mxu0
      %v1450 = vadd.f32 %v459, %v1449
      %v1451 = vpop.f32.mrf.mxu0
      %v1452 = vadd.f32 %v459, %v1451
      %1453 = vmatmul.bf16.gmra.mxu0 %v918
      %v1454 = vpop.f32.mrf.mxu0
      %v1455 = vadd.f32 %v459, %v1454
      %v1456 = vpop.f32.mrf.mxu0
      %v1457 = vadd.f32 %v459, %v1456
      %1458 = vdwg.mxu0
      %1459 = vmatpush.bf16.msra.mxu0 %v1236
      %1460 = vmatpush.bf16.msra.mxu0 %v1235
      %1461 = vmatpush.bf16.msra.mxu0 %v1234
      %1462 = vmatpush.bf16.msra.mxu0 %v1233
      %1463 = vmatpush.bf16.msra.mxu0 %v1232
      %1464 = vmatpush.bf16.msra.mxu0 %v1231
      %1465 = vmatpush.bf16.msra.mxu0 %v1230
      %1466 = vmatpush.bf16.msra.mxu0 %v1229
      %1467 = vmatmul.bf16.gmra.mxu0 %v814
      %v1468 = vpop.f32.mrf.mxu0
      %v1469 = vadd.f32 %v1380, %v1468
      %v1470 = vpop.f32.mrf.mxu0
      %v1471 = vadd.f32 %v1382, %v1470
      %1472 = vmatmul.bf16.gmra.mxu0 %v821
      %v1473 = vpop.f32.mrf.mxu0
      %v1474 = vadd.f32 %v1385, %v1473
      %v1475 = vpop.f32.mrf.mxu0
      %v1476 = vadd.f32 %v1387, %v1475
      %1477 = vmatmul.bf16.gmra.mxu0 %v828
      %v1478 = vpop.f32.mrf.mxu0
      %v1479 = vadd.f32 %v1390, %v1478
      %v1480 = vpop.f32.mrf.mxu0
      %v1481 = vadd.f32 %v1392, %v1480
      %1482 = vmatmul.bf16.gmra.mxu0 %v835
      %v1483 = vpop.f32.mrf.mxu0
      %v1484 = vadd.f32 %v1395, %v1483
      %v1485 = vpop.f32.mrf.mxu0
      %v1486 = vadd.f32 %v1397, %v1485
      %1487 = vmatmul.bf16.gmra.mxu0 %v842
      %v1488 = vpop.f32.mrf.mxu0
      %v1489 = vadd.f32 %v1400, %v1488
      %v1490 = vpop.f32.mrf.mxu0
      %v1491 = vadd.f32 %v1402, %v1490
      %1492 = vmatmul.bf16.gmra.mxu0 %v849
      %v1493 = vpop.f32.mrf.mxu0
      %v1494 = vadd.f32 %v1405, %v1493
      %v1495 = vpop.f32.mrf.mxu0
      %v1496 = vadd.f32 %v1407, %v1495
      %1497 = vmatmul.bf16.gmra.mxu0 %v856
      %v1498 = vpop.f32.mrf.mxu0
      %v1499 = vadd.f32 %v1410, %v1498
      %v1500 = vpop.f32.mrf.mxu0
      %v1501 = vadd.f32 %v1412, %v1500
      %1502 = vmatmul.bf16.gmra.mxu0 %v863
      %v1503 = vpop.f32.mrf.mxu0
      %v1504 = vadd.f32 %v1415, %v1503
      %v1505 = vpop.f32.mrf.mxu0
      %v1506 = vadd.f32 %v1417, %v1505
      %1507 = vmatmul.bf16.gmra.mxu0 %v870
      %v1508 = vpop.f32.mrf.mxu0
      %v1509 = vadd.f32 %v1420, %v1508
      %v1510 = vpop.f32.mrf.mxu0
      %v1511 = vadd.f32 %v1422, %v1510
      %1512 = vmatmul.bf16.gmra.mxu0 %v877
      %v1513 = vpop.f32.mrf.mxu0
      %v1514 = vadd.f32 %v1425, %v1513
      %v1515 = vpop.f32.mrf.mxu0
      %v1516 = vadd.f32 %v1427, %v1515
      %1517 = vmatmul.bf16.gmra.mxu0 %v884
      %v1518 = vpop.f32.mrf.mxu0
      %v1519 = vadd.f32 %v1430, %v1518
      %v1520 = vpop.f32.mrf.mxu0
      %v1521 = vadd.f32 %v1432, %v1520
      %1522 = vmatmul.bf16.gmra.mxu0 %v891
      %v1523 = vpop.f32.mrf.mxu0
      %v1524 = vadd.f32 %v1435, %v1523
      %v1525 = vpop.f32.mrf.mxu0
      %v1526 = vadd.f32 %v1437, %v1525
      %1527 = vmatmul.bf16.gmra.mxu0 %v898
      %v1528 = vpop.f32.mrf.mxu0
      %v1529 = vadd.f32 %v1440, %v1528
      %v1530 = vpop.f32.mrf.mxu0
      %v1531 = vadd.f32 %v1442, %v1530
      %1532 = vmatmul.bf16.gmra.mxu0 %v905
      %v1533 = vpop.f32.mrf.mxu0
      %v1534 = vadd.f32 %v1445, %v1533
      %v1535 = vpop.f32.mrf.mxu0
      %v1536 = vadd.f32 %v1447, %v1535
      %1537 = vmatmul.bf16.gmra.mxu0 %v912
      %v1538 = vpop.f32.mrf.mxu0
      %v1539 = vadd.f32 %v1450, %v1538
      %v1540 = vpop.f32.mrf.mxu0
      %v1541 = vadd.f32 %v1452, %v1540
      %1542 = vmatmul.bf16.gmra.mxu0 %v919
      %v1543 = vpop.f32.mrf.mxu0
      %v1544 = vadd.f32 %v1455, %v1543
      %v1545 = vpop.f32.mrf.mxu0
      %v1546 = vadd.f32 %v1457, %v1545
      %1547 = vdwg.mxu0
      %1548 = vmatpush.bf16.msra.mxu0 %v1244
      %1549 = vmatpush.bf16.msra.mxu0 %v1243
      %1550 = vmatpush.bf16.msra.mxu0 %v1242
      %1551 = vmatpush.bf16.msra.mxu0 %v1241
      %1552 = vmatpush.bf16.msra.mxu0 %v1240
      %1553 = vmatpush.bf16.msra.mxu0 %v1239
      %1554 = vmatpush.bf16.msra.mxu0 %v1238
      %1555 = vmatpush.bf16.msra.mxu0 %v1237
      %1556 = vmatmul.bf16.gmra.mxu0 %v815
      %v1557 = vpop.f32.mrf.mxu0
      %v1558 = vadd.f32 %v1469, %v1557
      %v1559 = vpop.f32.mrf.mxu0
      %v1560 = vadd.f32 %v1471, %v1559
      %1561 = vmatmul.bf16.gmra.mxu0 %v822
      %v1562 = vpop.f32.mrf.mxu0
      %v1563 = vadd.f32 %v1474, %v1562
      %v1564 = vpop.f32.mrf.mxu0
      %v1565 = vadd.f32 %v1476, %v1564
      %1566 = vmatmul.bf16.gmra.mxu0 %v829
      %v1567 = vpop.f32.mrf.mxu0
      %v1568 = vadd.f32 %v1479, %v1567
      %v1569 = vpop.f32.mrf.mxu0
      %v1570 = vadd.f32 %v1481, %v1569
      %1571 = vmatmul.bf16.gmra.mxu0 %v836
      %v1572 = vpop.f32.mrf.mxu0
      %v1573 = vadd.f32 %v1484, %v1572
      %v1574 = vpop.f32.mrf.mxu0
      %v1575 = vadd.f32 %v1486, %v1574
      %1576 = vmatmul.bf16.gmra.mxu0 %v843
      %v1577 = vpop.f32.mrf.mxu0
      %v1578 = vadd.f32 %v1489, %v1577
      %v1579 = vpop.f32.mrf.mxu0
      %v1580 = vadd.f32 %v1491, %v1579
      %1581 = vmatmul.bf16.gmra.mxu0 %v850
      %v1582 = vpop.f32.mrf.mxu0
      %v1583 = vadd.f32 %v1494, %v1582
      %v1584 = vpop.f32.mrf.mxu0
      %v1585 = vadd.f32 %v1496, %v1584
      %1586 = vmatmul.bf16.gmra.mxu0 %v857
      %v1587 = vpop.f32.mrf.mxu0
      %v1588 = vadd.f32 %v1499, %v1587
      %v1589 = vpop.f32.mrf.mxu0
      %v1590 = vadd.f32 %v1501, %v1589
      %1591 = vmatmul.bf16.gmra.mxu0 %v864
      %v1592 = vpop.f32.mrf.mxu0
      %v1593 = vadd.f32 %v1504, %v1592
      %v1594 = vpop.f32.mrf.mxu0
      %v1595 = vadd.f32 %v1506, %v1594
      %1596 = vmatmul.bf16.gmra.mxu0 %v871
      %v1597 = vpop.f32.mrf.mxu0
      %v1598 = vadd.f32 %v1509, %v1597
      %v1599 = vpop.f32.mrf.mxu0
      %v1600 = vadd.f32 %v1511, %v1599
      %1601 = vmatmul.bf16.gmra.mxu0 %v878
      %v1602 = vpop.f32.mrf.mxu0
      %v1603 = vadd.f32 %v1514, %v1602
      %v1604 = vpop.f32.mrf.mxu0
      %v1605 = vadd.f32 %v1516, %v1604
      %1606 = vmatmul.bf16.gmra.mxu0 %v885
      %v1607 = vpop.f32.mrf.mxu0
      %v1608 = vadd.f32 %v1519, %v1607
      %v1609 = vpop.f32.mrf.mxu0
      %v1610 = vadd.f32 %v1521, %v1609
      %1611 = vmatmul.bf16.gmra.mxu0 %v892
      %v1612 = vpop.f32.mrf.mxu0
      %v1613 = vadd.f32 %v1524, %v1612
      %v1614 = vpop.f32.mrf.mxu0
      %v1615 = vadd.f32 %v1526, %v1614
      %1616 = vmatmul.bf16.gmra.mxu0 %v899
      %v1617 = vpop.f32.mrf.mxu0
      %v1618 = vadd.f32 %v1529, %v1617
      %v1619 = vpop.f32.mrf.mxu0
      %v1620 = vadd.f32 %v1531, %v1619
      %1621 = vmatmul.bf16.gmra.mxu0 %v906
      %v1622 = vpop.f32.mrf.mxu0
      %v1623 = vadd.f32 %v1534, %v1622
      %v1624 = vpop.f32.mrf.mxu0
      %v1625 = vadd.f32 %v1536, %v1624
      %1626 = vmatmul.bf16.gmra.mxu0 %v913
      %v1627 = vpop.f32.mrf.mxu0
      %v1628 = vadd.f32 %v1539, %v1627
      %v1629 = vpop.f32.mrf.mxu0
      %v1630 = vadd.f32 %v1541, %v1629
      %1631 = vmatmul.bf16.gmra.mxu0 %v920
      %v1632 = vpop.f32.mrf.mxu0
      %v1633 = vadd.f32 %v1544, %v1632
      %v1634 = vpop.f32.mrf.mxu0
      %v1635 = vadd.f32 %v1546, %v1634
      %1636 = vdwg.mxu0
      %1637 = vmatpush.bf16.msra.mxu0 %v1252
      %1638 = vmatpush.bf16.msra.mxu0 %v1251
      %1639 = vmatpush.bf16.msra.mxu0 %v1250
      %1640 = vmatpush.bf16.msra.mxu0 %v1249
      %1641 = vmatpush.bf16.msra.mxu0 %v1248
      %1642 = vmatpush.bf16.msra.mxu0 %v1247
      %1643 = vmatpush.bf16.msra.mxu0 %v1246
      %1644 = vmatpush.bf16.msra.mxu0 %v1245
      %1645 = vmatmul.bf16.gmra.mxu0 %v816
      %v1646 = vpop.f32.mrf.mxu0
      %v1647 = vadd.f32 %v1558, %v1646
      %v1648 = vpop.f32.mrf.mxu0
      %v1649 = vadd.f32 %v1560, %v1648
      %1650 = vmatmul.bf16.gmra.mxu0 %v823
      %v1651 = vpop.f32.mrf.mxu0
      %v1652 = vadd.f32 %v1563, %v1651
      %v1653 = vpop.f32.mrf.mxu0
      %v1654 = vadd.f32 %v1565, %v1653
      %1655 = vmatmul.bf16.gmra.mxu0 %v830
      %v1656 = vpop.f32.mrf.mxu0
      %v1657 = vadd.f32 %v1568, %v1656
      %v1658 = vpop.f32.mrf.mxu0
      %v1659 = vadd.f32 %v1570, %v1658
      %1660 = vmatmul.bf16.gmra.mxu0 %v837
      %v1661 = vpop.f32.mrf.mxu0
      %v1662 = vadd.f32 %v1573, %v1661
      %v1663 = vpop.f32.mrf.mxu0
      %v1664 = vadd.f32 %v1575, %v1663
      %1665 = vmatmul.bf16.gmra.mxu0 %v844
      %v1666 = vpop.f32.mrf.mxu0
      %v1667 = vadd.f32 %v1578, %v1666
      %v1668 = vpop.f32.mrf.mxu0
      %v1669 = vadd.f32 %v1580, %v1668
      %1670 = vmatmul.bf16.gmra.mxu0 %v851
      %v1671 = vpop.f32.mrf.mxu0
      %v1672 = vadd.f32 %v1583, %v1671
      %v1673 = vpop.f32.mrf.mxu0
      %v1674 = vadd.f32 %v1585, %v1673
      %1675 = vmatmul.bf16.gmra.mxu0 %v858
      %v1676 = vpop.f32.mrf.mxu0
      %v1677 = vadd.f32 %v1588, %v1676
      %v1678 = vpop.f32.mrf.mxu0
      %v1679 = vadd.f32 %v1590, %v1678
      %1680 = vmatmul.bf16.gmra.mxu0 %v865
      %v1681 = vpop.f32.mrf.mxu0
      %v1682 = vadd.f32 %v1593, %v1681
      %v1683 = vpop.f32.mrf.mxu0
      %v1684 = vadd.f32 %v1595, %v1683
      %1685 = vmatmul.bf16.gmra.mxu0 %v872
      %v1686 = vpop.f32.mrf.mxu0
      %v1687 = vadd.f32 %v1598, %v1686
      %v1688 = vpop.f32.mrf.mxu0
      %v1689 = vadd.f32 %v1600, %v1688
      %1690 = vmatmul.bf16.gmra.mxu0 %v879
      %v1691 = vpop.f32.mrf.mxu0
      %v1692 = vadd.f32 %v1603, %v1691
      %v1693 = vpop.f32.mrf.mxu0
      %v1694 = vadd.f32 %v1605, %v1693
      %1695 = vmatmul.bf16.gmra.mxu0 %v886
      %v1696 = vpop.f32.mrf.mxu0
      %v1697 = vadd.f32 %v1608, %v1696
      %v1698 = vpop.f32.mrf.mxu0
      %v1699 = vadd.f32 %v1610, %v1698
      %1700 = vmatmul.bf16.gmra.mxu0 %v893
      %v1701 = vpop.f32.mrf.mxu0
      %v1702 = vadd.f32 %v1613, %v1701
      %v1703 = vpop.f32.mrf.mxu0
      %v1704 = vadd.f32 %v1615, %v1703
      %1705 = vmatmul.bf16.gmra.mxu0 %v900
      %v1706 = vpop.f32.mrf.mxu0
      %v1707 = vadd.f32 %v1618, %v1706
      %v1708 = vpop.f32.mrf.mxu0
      %v1709 = vadd.f32 %v1620, %v1708
      %1710 = vmatmul.bf16.gmra.mxu0 %v907
      %v1711 = vpop.f32.mrf.mxu0
      %v1712 = vadd.f32 %v1623, %v1711
      %v1713 = vpop.f32.mrf.mxu0
      %v1714 = vadd.f32 %v1625, %v1713
      %1715 = vmatmul.bf16.gmra.mxu0 %v914
      %v1716 = vpop.f32.mrf.mxu0
      %v1717 = vadd.f32 %v1628, %v1716
      %v1718 = vpop.f32.mrf.mxu0
      %v1719 = vadd.f32 %v1630, %v1718
      %1720 = vmatmul.bf16.gmra.mxu0 %v921
      %v1721 = vpop.f32.mrf.mxu0
      %v1722 = vadd.f32 %v1633, %v1721
      %v1723 = vpop.f32.mrf.mxu0
      %v1724 = vadd.f32 %v1635, %v1723
      %1725 = vdwg.mxu0
      %1726 = vmatpush.bf16.msra.mxu0 %v1260
      %1727 = vmatpush.bf16.msra.mxu0 %v1259
      %1728 = vmatpush.bf16.msra.mxu0 %v1258
      %1729 = vmatpush.bf16.msra.mxu0 %v1257
      %1730 = vmatpush.bf16.msra.mxu0 %v1256
      %1731 = vmatpush.bf16.msra.mxu0 %v1255
      %1732 = vmatpush.bf16.msra.mxu0 %v1254
      %1733 = vmatpush.bf16.msra.mxu0 %v1253
      %1734 = vmatmul.bf16.gmra.mxu0 %v817
      %v1735 = vpop.f32.mrf.mxu0
      %v1736 = vadd.f32 %v1647, %v1735
      %v1737 = vpop.f32.mrf.mxu0
      %v1738 = vadd.f32 %v1649, %v1737
      %1739 = vmatmul.bf16.gmra.mxu0 %v824
      %v1740 = vpop.f32.mrf.mxu0
      %v1741 = vadd.f32 %v1652, %v1740
      %v1742 = vpop.f32.mrf.mxu0
      %v1743 = vadd.f32 %v1654, %v1742
      %1744 = vmatmul.bf16.gmra.mxu0 %v831
      %v1745 = vpop.f32.mrf.mxu0
      %v1746 = vadd.f32 %v1657, %v1745
      %v1747 = vpop.f32.mrf.mxu0
      %v1748 = vadd.f32 %v1659, %v1747
      %1749 = vmatmul.bf16.gmra.mxu0 %v838
      %v1750 = vpop.f32.mrf.mxu0
      %v1751 = vadd.f32 %v1662, %v1750
      %v1752 = vpop.f32.mrf.mxu0
      %v1753 = vadd.f32 %v1664, %v1752
      %1754 = vmatmul.bf16.gmra.mxu0 %v845
      %v1755 = vpop.f32.mrf.mxu0
      %v1756 = vadd.f32 %v1667, %v1755
      %v1757 = vpop.f32.mrf.mxu0
      %v1758 = vadd.f32 %v1669, %v1757
      %1759 = vmatmul.bf16.gmra.mxu0 %v852
      %v1760 = vpop.f32.mrf.mxu0
      %v1761 = vadd.f32 %v1672, %v1760
      %v1762 = vpop.f32.mrf.mxu0
      %v1763 = vadd.f32 %v1674, %v1762
      %1764 = vmatmul.bf16.gmra.mxu0 %v859
      %v1765 = vpop.f32.mrf.mxu0
      %v1766 = vadd.f32 %v1677, %v1765
      %v1767 = vpop.f32.mrf.mxu0
      %v1768 = vadd.f32 %v1679, %v1767
      %1769 = vmatmul.bf16.gmra.mxu0 %v866
      %v1770 = vpop.f32.mrf.mxu0
      %v1771 = vadd.f32 %v1682, %v1770
      %v1772 = vpop.f32.mrf.mxu0
      %v1773 = vadd.f32 %v1684, %v1772
      %1774 = vmatmul.bf16.gmra.mxu0 %v873
      %v1775 = vpop.f32.mrf.mxu0
      %v1776 = vadd.f32 %v1687, %v1775
      %v1777 = vpop.f32.mrf.mxu0
      %v1778 = vadd.f32 %v1689, %v1777
      %1779 = vmatmul.bf16.gmra.mxu0 %v880
      %v1780 = vpop.f32.mrf.mxu0
      %v1781 = vadd.f32 %v1692, %v1780
      %v1782 = vpop.f32.mrf.mxu0
      %v1783 = vadd.f32 %v1694, %v1782
      %1784 = vmatmul.bf16.gmra.mxu0 %v887
      %v1785 = vpop.f32.mrf.mxu0
      %v1786 = vadd.f32 %v1697, %v1785
      %v1787 = vpop.f32.mrf.mxu0
      %v1788 = vadd.f32 %v1699, %v1787
      %1789 = vmatmul.bf16.gmra.mxu0 %v894
      %v1790 = vpop.f32.mrf.mxu0
      %v1791 = vadd.f32 %v1702, %v1790
      %v1792 = vpop.f32.mrf.mxu0
      %v1793 = vadd.f32 %v1704, %v1792
      %1794 = vmatmul.bf16.gmra.mxu0 %v901
      %v1795 = vpop.f32.mrf.mxu0
      %v1796 = vadd.f32 %v1707, %v1795
      %v1797 = vpop.f32.mrf.mxu0
      %v1798 = vadd.f32 %v1709, %v1797
      %1799 = vmatmul.bf16.gmra.mxu0 %v908
      %v1800 = vpop.f32.mrf.mxu0
      %v1801 = vadd.f32 %v1712, %v1800
      %v1802 = vpop.f32.mrf.mxu0
      %v1803 = vadd.f32 %v1714, %v1802
      %1804 = vmatmul.bf16.gmra.mxu0 %v915
      %v1805 = vpop.f32.mrf.mxu0
      %v1806 = vadd.f32 %v1717, %v1805
      %v1807 = vpop.f32.mrf.mxu0
      %v1808 = vadd.f32 %v1719, %v1807
      %1809 = vmatmul.bf16.gmra.mxu0 %v922
      %v1810 = vpop.f32.mrf.mxu0
      %v1811 = vadd.f32 %v1722, %v1810
      %v1812 = vpop.f32.mrf.mxu0
      %v1813 = vadd.f32 %v1724, %v1812
      %1814 = vdwg.mxu0
      %1815 = vmatpush.bf16.msra.mxu0 %v1268
      %1816 = vmatpush.bf16.msra.mxu0 %v1267
      %1817 = vmatpush.bf16.msra.mxu0 %v1266
      %1818 = vmatpush.bf16.msra.mxu0 %v1265
      %1819 = vmatpush.bf16.msra.mxu0 %v1264
      %1820 = vmatpush.bf16.msra.mxu0 %v1263
      %1821 = vmatpush.bf16.msra.mxu0 %v1262
      %1822 = vmatpush.bf16.msra.mxu0 %v1261
      %1823 = vmatmul.bf16.gmra.mxu0 %v818
      %v1824 = vpop.f32.mrf.mxu0
      %v1825 = vadd.f32 %v1736, %v1824
      %v1826 = vpop.f32.mrf.mxu0
      %v1827 = vadd.f32 %v1738, %v1826
      %1828 = vmatmul.bf16.gmra.mxu0 %v825
      %v1829 = vpop.f32.mrf.mxu0
      %v1830 = vadd.f32 %v1741, %v1829
      %v1831 = vpop.f32.mrf.mxu0
      %v1832 = vadd.f32 %v1743, %v1831
      %1833 = vmatmul.bf16.gmra.mxu0 %v832
      %v1834 = vpop.f32.mrf.mxu0
      %v1835 = vadd.f32 %v1746, %v1834
      %v1836 = vpop.f32.mrf.mxu0
      %v1837 = vadd.f32 %v1748, %v1836
      %1838 = vmatmul.bf16.gmra.mxu0 %v839
      %v1839 = vpop.f32.mrf.mxu0
      %v1840 = vadd.f32 %v1751, %v1839
      %v1841 = vpop.f32.mrf.mxu0
      %v1842 = vadd.f32 %v1753, %v1841
      %1843 = vmatmul.bf16.gmra.mxu0 %v846
      %v1844 = vpop.f32.mrf.mxu0
      %v1845 = vadd.f32 %v1756, %v1844
      %v1846 = vpop.f32.mrf.mxu0
      %v1847 = vadd.f32 %v1758, %v1846
      %1848 = vmatmul.bf16.gmra.mxu0 %v853
      %v1849 = vpop.f32.mrf.mxu0
      %v1850 = vadd.f32 %v1761, %v1849
      %v1851 = vpop.f32.mrf.mxu0
      %v1852 = vadd.f32 %v1763, %v1851
      %1853 = vmatmul.bf16.gmra.mxu0 %v860
      %v1854 = vpop.f32.mrf.mxu0
      %v1855 = vadd.f32 %v1766, %v1854
      %v1856 = vpop.f32.mrf.mxu0
      %v1857 = vadd.f32 %v1768, %v1856
      %1858 = vmatmul.bf16.gmra.mxu0 %v867
      %v1859 = vpop.f32.mrf.mxu0
      %v1860 = vadd.f32 %v1771, %v1859
      %v1861 = vpop.f32.mrf.mxu0
      %v1862 = vadd.f32 %v1773, %v1861
      %1863 = vmatmul.bf16.gmra.mxu0 %v874
      %v1864 = vpop.f32.mrf.mxu0
      %v1865 = vadd.f32 %v1776, %v1864
      %v1866 = vpop.f32.mrf.mxu0
      %v1867 = vadd.f32 %v1778, %v1866
      %1868 = vmatmul.bf16.gmra.mxu0 %v881
      %v1869 = vpop.f32.mrf.mxu0
      %v1870 = vadd.f32 %v1781, %v1869
      %v1871 = vpop.f32.mrf.mxu0
      %v1872 = vadd.f32 %v1783, %v1871
      %1873 = vmatmul.bf16.gmra.mxu0 %v888
      %v1874 = vpop.f32.mrf.mxu0
      %v1875 = vadd.f32 %v1786, %v1874
      %v1876 = vpop.f32.mrf.mxu0
      %v1877 = vadd.f32 %v1788, %v1876
      %1878 = vmatmul.bf16.gmra.mxu0 %v895
      %v1879 = vpop.f32.mrf.mxu0
      %v1880 = vadd.f32 %v1791, %v1879
      %v1881 = vpop.f32.mrf.mxu0
      %v1882 = vadd.f32 %v1793, %v1881
      %1883 = vmatmul.bf16.gmra.mxu0 %v902
      %v1884 = vpop.f32.mrf.mxu0
      %v1885 = vadd.f32 %v1796, %v1884
      %v1886 = vpop.f32.mrf.mxu0
      %v1887 = vadd.f32 %v1798, %v1886
      %1888 = vmatmul.bf16.gmra.mxu0 %v909
      %v1889 = vpop.f32.mrf.mxu0
      %v1890 = vadd.f32 %v1801, %v1889
      %v1891 = vpop.f32.mrf.mxu0
      %v1892 = vadd.f32 %v1803, %v1891
      %1893 = vmatmul.bf16.gmra.mxu0 %v916
      %v1894 = vpop.f32.mrf.mxu0
      %v1895 = vadd.f32 %v1806, %v1894
      %v1896 = vpop.f32.mrf.mxu0
      %v1897 = vadd.f32 %v1808, %v1896
      %1898 = vmatmul.bf16.gmra.mxu0 %v923
      %v1899 = vpop.f32.mrf.mxu0
      %v1900 = vadd.f32 %v1811, %v1899
      %v1901 = vpop.f32.mrf.mxu0
      %v1902 = vadd.f32 %v1813, %v1901
      %1903 = vdwg.mxu0
      %1904 = vmatpush.bf16.msra.mxu0 0
      %1905 = vmatpush.bf16.msra.mxu0 0
      %1906 = vmatpush.bf16.msra.mxu0 0
      %1907 = vmatpush.bf16.msra.mxu0 0
      %1908 = vmatpush.bf16.msra.mxu0 0
      %1909 = vmatpush.bf16.msra.mxu0 0
      %1910 = vmatpush.bf16.msra.mxu0 %v1270
      %1911 = vmatpush.bf16.msra.mxu0 %v1269
      %1912 = vmatmul.bf16.gmra.mxu0 %v1323
      %v1913 = vpop.f32.mrf.mxu0
      %v1914 = vadd.f32 %v1825, %v1913
      %v1915 = vpop.f32.mrf.mxu0
      %v1916 = vadd.f32 %v1827, %v1915
      %1917 = vmatmul.bf16.gmra.mxu0 %v1326
      %v1918 = vpop.f32.mrf.mxu0
      %v1919 = vadd.f32 %v1830, %v1918
      %v1920 = vpop.f32.mrf.mxu0
      %v1921 = vadd.f32 %v1832, %v1920
      %1922 = vmatmul.bf16.gmra.mxu0 %v1329
      %v1923 = vpop.f32.mrf.mxu0
      %v1924 = vadd.f32 %v1835, %v1923
      %v1925 = vpop.f32.mrf.mxu0
      %v1926 = vadd.f32 %v1837, %v1925
      %1927 = vmatmul.bf16.gmra.mxu0 %v1332
      %v1928 = vpop.f32.mrf.mxu0
      %v1929 = vadd.f32 %v1840, %v1928
      %v1930 = vpop.f32.mrf.mxu0
      %v1931 = vadd.f32 %v1842, %v1930
      %1932 = vmatmul.bf16.gmra.mxu0 %v1335
      %v1933 = vpop.f32.mrf.mxu0
      %v1934 = vadd.f32 %v1845, %v1933
      %v1935 = vpop.f32.mrf.mxu0
      %v1936 = vadd.f32 %v1847, %v1935
      %1937 = vmatmul.bf16.gmra.mxu0 %v1338
      %v1938 = vpop.f32.mrf.mxu0
      %v1939 = vadd.f32 %v1850, %v1938
      %v1940 = vpop.f32.mrf.mxu0
      %v1941 = vadd.f32 %v1852, %v1940
      %1942 = vmatmul.bf16.gmra.mxu0 %v1341
      %v1943 = vpop.f32.mrf.mxu0
      %v1944 = vadd.f32 %v1855, %v1943
      %v1945 = vpop.f32.mrf.mxu0
      %v1946 = vadd.f32 %v1857, %v1945
      %1947 = vmatmul.bf16.gmra.mxu0 %v1344
      %v1948 = vpop.f32.mrf.mxu0
      %v1949 = vadd.f32 %v1860, %v1948
      %v1950 = vpop.f32.mrf.mxu0
      %v1951 = vadd.f32 %v1862, %v1950
      %1952 = vmatmul.bf16.gmra.mxu0 %v1347
      %v1953 = vpop.f32.mrf.mxu0
      %v1954 = vadd.f32 %v1865, %v1953
      %v1955 = vpop.f32.mrf.mxu0
      %v1956 = vadd.f32 %v1867, %v1955
      %1957 = vmatmul.bf16.gmra.mxu0 %v1350
      %v1958 = vpop.f32.mrf.mxu0
      %v1959 = vadd.f32 %v1870, %v1958
      %v1960 = vpop.f32.mrf.mxu0
      %v1961 = vadd.f32 %v1872, %v1960
      %1962 = vmatmul.bf16.gmra.mxu0 %v1353
      %v1963 = vpop.f32.mrf.mxu0
      %v1964 = vadd.f32 %v1875, %v1963
      %v1965 = vpop.f32.mrf.mxu0
      %v1966 = vadd.f32 %v1877, %v1965
      %1967 = vmatmul.bf16.gmra.mxu0 %v1356
      %v1968 = vpop.f32.mrf.mxu0
      %v1969 = vadd.f32 %v1880, %v1968
      %v1970 = vpop.f32.mrf.mxu0
      %v1971 = vadd.f32 %v1882, %v1970
      %1972 = vmatmul.bf16.gmra.mxu0 %v1359
      %v1973 = vpop.f32.mrf.mxu0
      %v1974 = vadd.f32 %v1885, %v1973
      %v1975 = vpop.f32.mrf.mxu0
      %v1976 = vadd.f32 %v1887, %v1975
      %1977 = vmatmul.bf16.gmra.mxu0 %v1362
      %v1978 = vpop.f32.mrf.mxu0
      %v1979 = vadd.f32 %v1890, %v1978
      %v1980 = vpop.f32.mrf.mxu0
      %v1981 = vadd.f32 %v1892, %v1980
      %1982 = vmatmul.bf16.gmra.mxu0 %v1365
      %v1983 = vpop.f32.mrf.mxu0
      %v1984 = vadd.f32 %v1895, %v1983
      %v1985 = vpop.f32.mrf.mxu0
      %v1986 = vadd.f32 %v1897, %v1985
      %1987 = vmatmul.bf16.gmra.mxu0 %v1368
      %v1988 = vpop.f32.mrf.mxu0
      %v1989 = vadd.f32 %v1900, %v1988
      %v1990 = vpop.f32.mrf.mxu0
      %v1991 = vadd.f32 %v1902, %v1990
      %1992 = vdwg.mxu0
      %v1993 = vmax.f32 %v1914, 0.0
      %v1994 = vmax.f32 %v1916, 0.0
      %v1995 = vmax.f32 %v1919, 0.0
      %v1996 = vmax.f32 %v1921, 0.0
      %v1997 = vmax.f32 %v1924, 0.0
      %v1998 = vmax.f32 %v1926, 0.0
      %v1999 = vmax.f32 %v1929, 0.0
      %v2000 = vmax.f32 %v1931, 0.0
      %v2001 = vmax.f32 %v1934, 0.0
      %v2002 = vmax.f32 %v1936, 0.0
      %v2003 = vmax.f32 %v1939, 0.0
      %v2004 = vmax.f32 %v1941, 0.0
      %v2005 = vmax.f32 %v1944, 0.0
      %v2006 = vmax.f32 %v1946, 0.0
      %v2007 = vmax.f32 %v1949, 0.0
      %v2008 = vmax.f32 %v1951, 0.0
      %v2009 = vmax.f32 %v1954, 0.0
      %v2010 = vmax.f32 %v1956, 0.0
      %v2011 = vmax.f32 %v1959, 0.0
      %v2012 = vmax.f32 %v1961, 0.0
      %v2013 = vmax.f32 %v1964, 0.0
      %v2014 = vmax.f32 %v1966, 0.0
      %v2015 = vmax.f32 %v1969, 0.0
      %v2016 = vmax.f32 %v1971, 0.0
      %v2017 = vmax.f32 %v1974, 0.0
      %v2018 = vmax.f32 %v1976, 0.0
      %v2019 = vmax.f32 %v1979, 0.0
      %v2020 = vmax.f32 %v1981, 0.0
      %v2021 = vmax.f32 %v1984, 0.0
      %v2022 = vmax.f32 %v1986, 0.0
      %v2023 = vmax.f32 %v1989, 0.0
      %v2024 = vmax.f32 %v1991, 0.0
      %v2025 = vpack.c.bf16 %v1993, %v1993
      %v2026 = vpack.c.bf16 %v1994, %v1994
      %v2027 = vpack.c.bf16 %v1995, %v1995
      %v2028 = vpack.c.bf16 %v1996, %v1996
      %v2029 = vpack.c.bf16 %v1997, %v1997
      %v2030 = vpack.c.bf16 %v1998, %v1998
      %v2031 = vpack.c.bf16 %v1999, %v1999
      %v2032 = vpack.c.bf16 %v2000, %v2000
      %v2033 = vpack.c.bf16 %v2001, %v2001
      %v2034 = vpack.c.bf16 %v2002, %v2002
      %v2035 = vpack.c.bf16 %v2003, %v2003
      %v2036 = vpack.c.bf16 %v2004, %v2004
      %v2037 = vpack.c.bf16 %v2005, %v2005
      %v2038 = vpack.c.bf16 %v2006, %v2006
      %v2039 = vpack.c.bf16 %v2007, %v2007
      %v2040 = vpack.c.bf16 %v2008, %v2008
      %v2041 = vpack.c.bf16 %v2009, %v2009
      %v2042 = vpack.c.bf16 %v2010, %v2010
      %v2043 = vpack.c.bf16 %v2011, %v2011
      %v2044 = vpack.c.bf16 %v2012, %v2012
      %v2045 = vpack.c.bf16 %v2013, %v2013
      %v2046 = vpack.c.bf16 %v2014, %v2014
      %v2047 = vpack.c.bf16 %v2015, %v2015
      %v2048 = vpack.c.bf16 %v2016, %v2016
      %v2049 = vpack.c.bf16 %v2017, %v2017
      %v2050 = vpack.c.bf16 %v2018, %v2018
      %v2051 = vpack.c.bf16 %v2019, %v2019
      %v2052 = vpack.c.bf16 %v2020, %v2020
      %v2053 = vpack.c.bf16 %v2021, %v2021
      %v2054 = vpack.c.bf16 %v2022, %v2022
      %v2055 = vpack.c.bf16 %v2023, %v2023
      %v2056 = vpack.c.bf16 %v2024, %v2024
      %2057 = vst [vmem:[%s226] sm:$0xf] %v2025
      %2058 = vst [vmem:[%s226 + $0x4] sm:$0xf] %v2026
      %2059 = vst [vmem:[%s226 + $0x8] sm:$0xf] %v2027
      %2060 = vst [vmem:[%s226 + $0xc] sm:$0xf] %v2028
      %2061 = vst [vmem:[%s226 + $0x10] sm:$0xf] %v2029
      %2062 = vst [vmem:[%s226 + $0x14] sm:$0xf] %v2030
      %2063 = vst [vmem:[%s226 + $0x18] sm:$0xf] %v2031
      %2064 = vst [vmem:[%s226 + $0x1c] sm:$0xf] %v2032
      %2065 = vst [vmem:[%s226 + $0x20] sm:$0xf] %v2033
      %2066 = vst [vmem:[%s226 + $0x24] sm:$0xf] %v2034
      %2067 = vst [vmem:[%s226 + $0x28] sm:$0xf] %v2035
      %2068 = vst [vmem:[%s226 + $0x2c] sm:$0xf] %v2036
      %2069 = vst [vmem:[%s226 + $0x30] sm:$0xf] %v2037
      %2070 = vst [vmem:[%s226 + $0x34] sm:$0xf] %v2038
      %2071 = vst [vmem:[%s226 + $0x38] sm:$0xf] %v2039
      %2072 = vst [vmem:[%s226 + $0x3c] sm:$0xf] %v2040
      %2073 = vst [vmem:[%s226 + $0x40] sm:$0xf] %v2041
      %2074 = vst [vmem:[%s226 + $0x44] sm:$0xf] %v2042
      %2075 = vst [vmem:[%s226 + $0x48] sm:$0xf] %v2043
      %2076 = vst [vmem:[%s226 + $0x4c] sm:$0xf] %v2044
      %2077 = vst [vmem:[%s226 + $0x50] sm:$0xf] %v2045
      %2078 = vst [vmem:[%s226 + $0x54] sm:$0xf] %v2046
      %2079 = vst [vmem:[%s226 + $0x58] sm:$0xf] %v2047
      %2080 = vst [vmem:[%s226 + $0x5c] sm:$0xf] %v2048
      %2081 = vst [vmem:[%s226 + $0x60] sm:$0xf] %v2049
      %2082 = vst [vmem:[%s226 + $0x64] sm:$0xf] %v2050
      %2083 = vst [vmem:[%s226 + $0x68] sm:$0xf] %v2051
      %2084 = vst [vmem:[%s226 + $0x6c] sm:$0xf] %v2052
      %2085 = vst [vmem:[%s226 + $0x70] sm:$0xf] %v2053
      %2086 = vst [vmem:[%s226 + $0x74] sm:$0xf] %v2054
      %2087 = vst [vmem:[%s226 + $0x78] sm:$0xf] %v2055
      %2088 = vst [vmem:[%s226 + $0x7c] sm:$0xf] %v2056
      %s2089 = smul.u32 32, %s18
      %p2090 = scmp.lt.s32.totalorder %s2089, 127
      %s2091 = scalar_select %p2090, %s2089, 127
      %p2092 = scmp.lt.s32.totalorder %s19, 0
      %s2093 = scalar_select %p2092, %s19, 0
      %s2094 = sadd.s32 %s2093, %s2091
      %s2095 = smul.addr %s2094, 4
      %s2096 = scalar_lea.vmem %s3, %s2095
      // Predicated region
      $region33: #{reseau_neurone_forward.7} parent=31 // pred_check
        %p2097 = pneg %p124
      $region34: #{reseau_neurone_forward.7} parent=31 // pred_check_branch
        %2099 = sbr.rel (%p2097) target = $region36
      $region35: #{reseau_neurone_forward.7} parent=31 // pred_region
        %s2100 = smul.u32 32, %s18
      $region36: #{reseau_neurone_forward.7} parent=31 // pred_fallthru
        _
    $region32: #{reseau_neurone_forward.7} parent=5 // pred_fallthru
      _
    %p2101 = scmp.le.s32.totalorder 2, %s9
    // Predicated region
    $region37: #{reseau_neurone_forward.7} parent=5 // pred_check
      %p2102 = pneg %p2101
    $region38: #{reseau_neurone_forward.7} parent=5 // pred_check_branch
      %2104 = sbr.rel (%p2102) target = $region40
    $region39: #{reseau_neurone_forward.7} parent=5 // pred_region
      %s2105 = ssub.s32 %s9, 2
      // Predicated region
      $region41: #{reseau_neurone_forward.7} parent=39 // pred_check
        %p2106 = pneg %p130
      $region42: #{reseau_neurone_forward.7} parent=39 // pred_check_branch
        %2108 = sbr.rel (%p2106) target = $region44
      $region43: #{reseau_neurone_forward.7} parent=39 // pred_region
        %s2109 = smul.u32 32, %s20
        %p2110 = scmp.lt.s32.totalorder %s2109, 127
        %s2111 = scalar_select %p2110, %s2109, 127
        %p2112 = scmp.lt.s32.totalorder %s21, 0
        %s2113 = scalar_select %p2112, %s21, 0
        %s2114 = sadd.s32 %s2113, %s2111
        %s2115 = smul.addr %s2114, 4
        %s2116 = scalar_lea.vmem %s3, %s2115
      $region44: #{reseau_neurone_forward.7} parent=39 // pred_fallthru
        _
    $region40: #{reseau_neurone_forward.7} parent=5 // pred_fallthru
      _
  $region6: #{reseau_neurone_forward.7} parent=0 // loop_footer
    %s13 = sadd.s32 1, %s9
  $region7: #{reseau_neurone_forward.7} parent=0 // loop_footer_branch
    %8 = sbr.rel target = $region3
  $region8: #{reseau_neurone_forward.7} parent=0 // loop_exit
    _

// kernel: reseau_neurone_forward.8
$region0: #{reseau_neurone_forward.8}
  #allocation0 [shape = 'u32[]', space=smem, size = 0x4, offset = 0x4, fixed_abs, tag = 'smem constant byte address 0x4 - core index']
  #allocation1 [shape = 'u32[72,128]{1,0:T(1,128)}', space=vmem, size = 0x9000, scoped, tag = 'internal scratch']
  %s0 = inlined_call_operand.vmem [shape: bf16[512,1600], index: 0, kind: input, shape index: {}]
  %s1 = inlined_call_operand.vmem [shape: bf16[1600,128], index: 1, kind: input, shape index: {}]
  %s2 = inlined_call_operand.vmem [shape: f32[1,128], index: 2, kind: input, shape index: {}]
  %s3 = inlined_call_operand.vmem [shape: bf16[512,128], index: 3, kind: output, shape index: {}]
  %s4 = sld [smem:[#allocation0]]
  $region45: #{reseau_neurone_forward.8} parent=0
    _
  %s6 = ssub.s32 1, %s4
  %s7 = scalar_select 0, %s6, %s4
  loop: start=0, step=1, limit=4
  $region2: #{reseau_neurone_forward.8} parent=0 // loop_pre_header
    _
  $region3: #{reseau_neurone_forward.8} parent=0 // loop_header
    %s9 = sphi 0, %s13
    %p10 = scmp.ge.s32.totalorder %s9, 4
    %s16 = sphi 0, %s28
    %s17 = sphi 0, %s24
    %s18 = sphi 0, %s16
    %s19 = sphi 0, %s17
    %s20 = sphi 0, %s18
    %s21 = sphi 0, %s19
    %s31 = sphi 0, %s33
    %s34 = sphi 0, %s31
    %s35 = sphi 0, %s34
    %s51 = sphi 0, %s35
    %s57 = sphi 0, %s59
    %s60 = sphi 0, %s57
    %s61 = sphi 0, %s60
    %s77 = sphi 0, %s61
    %s83 = sphi 0, %s85
    %s86 = sphi 0, %s83
    %s87 = sphi 0, %s86
    %s103 = sphi 0, %s87
    %s111 = sphi 0, %s113
    %s114 = sphi 0, %s111
    %s115 = sphi 0, %s114
    %s131 = sphi 0, %s115
  $region4: #{reseau_neurone_forward.8} parent=0 // loop_header_branch
    %12 = sbr.rel (%p10) target = $region8
  $region5: #{reseau_neurone_forward.8} parent=0 // loop_body
    %s14 = ssub.s32 %s9, 1
    %s15 = ssub.s32 %s9, 2
    %s22 = sadd.s32 1, %s17
    %p23 = scmp.ge.s32.totalorder %s22, 1
    %s24 = scalar_select %p23, 0, %s22
    %s25 = sadd.s32 1, %s16
    %s26 = scalar_select %p23, %s25, %s16
    %p27 = scmp.ge.s32.totalorder %s26, 2
    %s28 = scalar_select %p27, 0, %s26
    %s29 = ssub.s32 %s16, %s28
    %p30 = scmp.eq.s32.totalorder %s29, 0
    %s32 = sadd.s32 %s31, 1
    %s33 = scalar_select %p30, %s31, %s32
    %p36 = pneg %p30
    %p37 = scmp.eq.s32.totalorder %s9, 1
    %p38 = por %p36, %p37
    %p39 = scmp.ne.s32.totalorder %s31, %s34
    %p40 = scmp.eq.s32.totalorder %s9, 0
    %p41 = por %p39, %p40
    %p42 = scmp.ne.s32.totalorder %s31, %s34
    %p43 = scmp.eq.s32.totalorder %s14, 1
    %p44 = por %p42, %p43
    %p45 = scmp.ne.s32.totalorder %s34, %s35
    %p46 = scmp.eq.s32.totalorder %s14, 0
    %p47 = por %p45, %p46
    %p48 = scmp.ne.s32.totalorder %s34, %s35
    %p49 = scmp.eq.s32.totalorder %s15, 1
    %p50 = por %p48, %p49
    %p52 = scmp.ne.s32.totalorder %s35, %s51
    %p53 = scmp.eq.s32.totalorder %s15, 0
    %p54 = por %p52, %p53
    %s55 = ssub.s32 %s17, %s24
    %p56 = scmp.eq.s32.totalorder %s55, 0
    %s58 = sadd.s32 %s57, 1
    %s59 = scalar_select %p56, %s57, %s58
    %p62 = pneg %p56
    %p63 = scmp.eq.s32.totalorder %s9, 1
    %p64 = por %p62, %p63
    %p65 = scmp.ne.s32.totalorder %s57, %s60
    %p66 = scmp.eq.s32.totalorder %s9, 0
    %p67 = por %p65, %p66
    %p68 = scmp.ne.s32.totalorder %s57, %s60
    %p69 = scmp.eq.s32.totalorder %s14, 1
    %p70 = por %p68, %p69
    %p71 = scmp.ne.s32.totalorder %s60, %s61
    %p72 = scmp.eq.s32.totalorder %s14, 0
    %p73 = por %p71, %p72
    %p74 = scmp.ne.s32.totalorder %s60, %s61
    %p75 = scmp.eq.s32.totalorder %s15, 1
    %p76 = por %p74, %p75
    %p78 = scmp.ne.s32.totalorder %s61, %s77
    %p79 = scmp.eq.s32.totalorder %s15, 0
    %p80 = por %p78, %p79
    %s81 = ssub.s32 %s17, %s24
    %p82 = scmp.eq.s32.totalorder %s81, 0
    %s84 = sadd.s32 %s83, 1
    %s85 = scalar_select %p82, %s83, %s84
    %p88 = pneg %p82
    %p89 = scmp.eq.s32.totalorder %s9, 1
    %p90 = por %p88, %p89
    %p91 = scmp.ne.s32.totalorder %s83, %s86
    %p92 = scmp.eq.s32.totalorder %s9, 0
    %p93 = por %p91, %p92
    %p94 = scmp.ne.s32.totalorder %s83, %s86
    %p95 = scmp.eq.s32.totalorder %s14, 1
    %p96 = por %p94, %p95
    %p97 = scmp.ne.s32.totalorder %s86, %s87
    %p98 = scmp.eq.s32.totalorder %s14, 0
    %p99 = por %p97, %p98
    %p100 = scmp.ne.s32.totalorder %s86, %s87
    %p101 = scmp.eq.s32.totalorder %s15, 1
    %p102 = por %p100, %p101
    %p104 = scmp.ne.s32.totalorder %s87, %s103
    %p105 = scmp.eq.s32.totalorder %s15, 0
    %p106 = por %p104, %p105
    %s107 = ssub.s32 %s16, %s28
    %s108 = ssub.s32 %s17, %s24
    %s109 = sor.u32 %s107, %s108
    %p110 = scmp.eq.s32.totalorder %s109, 0
    %s112 = sadd.s32 %s111, 1
    %s113 = scalar_select %p110, %s111, %s112
    %p116 = pneg %p110
    %p117 = scmp.eq.s32.totalorder %s9, 1
    %p118 = por %p116, %p117
    %p119 = scmp.ne.s32.totalorder %s111, %s114
    %p120 = scmp.eq.s32.totalorder %s9, 0
    %p121 = por %p119, %p120
    %p122 = scmp.ne.s32.totalorder %s111, %s114
    %p123 = scmp.eq.s32.totalorder %s14, 1
    %p124 = por %p122, %p123
    %p125 = scmp.ne.s32.totalorder %s114, %s115
    %p126 = scmp.eq.s32.totalorder %s14, 0
    %p127 = por %p125, %p126
    %p128 = scmp.ne.s32.totalorder %s114, %s115
    %p129 = scmp.eq.s32.totalorder %s15, 1
    %p130 = por %p128, %p129
    %p132 = scmp.ne.s32.totalorder %s115, %s131
    %p133 = scmp.eq.s32.totalorder %s15, 0
    %p134 = por %p132, %p133
    %p135 = scmp.le.s32.totalorder 1, %s9
    %p136 = scmp.lt.s32.totalorder %s9, 3
    %p137 = pnand %p135, %p136
    %p138 = pneg %p137
    // Predicated region
    $region9: #{reseau_neurone_forward.8} parent=5 // pred_check
      _
    $region10: #{reseau_neurone_forward.8} parent=5 // pred_check_branch
      %140 = sbr.rel (%p137) target = $region12
    $region11: #{reseau_neurone_forward.8} parent=5 // pred_region
      %s141 = ssub.s32 %s9, 1
      // Predicated region
      $region13: #{reseau_neurone_forward.8} parent=11 // pred_check
        %p142 = pneg %p73
      $region14: #{reseau_neurone_forward.8} parent=11 // pred_check_branch
        %144 = sbr.rel (%p142) target = $region16
      $region15: #{reseau_neurone_forward.8} parent=11 // pred_region
        %p145 = scmp.lt.s32.totalorder %s19, 0
        %s146 = scalar_select %p145, %s19, 0
        %s147 = smul.addr %s146, 4
        %s148 = scalar_lea.vmem %s1, %s147
      $region16: #{reseau_neurone_forward.8} parent=11 // pred_fallthru
        _
      // Predicated region
      $region17: #{reseau_neurone_forward.8} parent=11 // pred_check
        %p149 = pneg %p99
      $region18: #{reseau_neurone_forward.8} parent=11 // pred_check_branch
        %151 = sbr.rel (%p149) target = $region20
      $region19: #{reseau_neurone_forward.8} parent=11 // pred_region
        %p152 = scmp.lt.s32.totalorder %s19, 0
        %s153 = scalar_select %p152, %s19, 0
        %s154 = scalar_lea.vmem %s2, %s153
      $region20: #{reseau_neurone_forward.8} parent=11 // pred_fallthru
        _
    $region12: #{reseau_neurone_forward.8} parent=5 // pred_fallthru
      _
    %p155 = scmp.lt.s32.totalorder %s9, 2
    // Predicated region
    $region21: #{reseau_neurone_forward.8} parent=5 // pred_check
      %p156 = pneg %p155
    $region22: #{reseau_neurone_forward.8} parent=5 // pred_check_branch
      %158 = sbr.rel (%p156) target = $region24
    $region23: #{reseau_neurone_forward.8} parent=5 // pred_region
      // Predicated region
      $region25: #{reseau_neurone_forward.8} parent=23 // pred_check
        %p159 = pneg %p41
      $region26: #{reseau_neurone_forward.8} parent=23 // pred_check_branch
        %161 = sbr.rel (%p159) target = $region28
      $region27: #{reseau_neurone_forward.8} parent=23 // pred_region
        %s162 = smul.u32 32, %s16
        %p163 = scmp.lt.s32.totalorder %s162, 63
        %s164 = scalar_select %p163, %s162, 63
        %s165 = smul.addr %s164, 13
        %s166 = smul.addr %s165, 4
        %s167 = scalar_lea.vmem %s0, %s166
        %s168 = smul.u32 32, %s16
      $region28: #{reseau_neurone_forward.8} parent=23 // pred_fallthru
        _
    $region24: #{reseau_neurone_forward.8} parent=5 // pred_fallthru
      _
    %p169 = scmp.le.s32.totalorder 1, %s9
    %p170 = scmp.lt.s32.totalorder %s9, 3
    %p171 = pnand %p169, %p170
    %p172 = pneg %p171
    // Predicated region
    $region29: #{reseau_neurone_forward.8} parent=5 // pred_check
      _
    $region30: #{reseau_neurone_forward.8} parent=5 // pred_check_branch
      %174 = sbr.rel (%p171) target = $region32
    $region31: #{reseau_neurone_forward.8} parent=5 // pred_region
      %s175 = ssub.s32 %s9, 1
      %s176 = smul.u32 32, %s18
      %p177 = scmp.lt.s32.totalorder %s176, 63
      %s178 = scalar_select %p177, %s176, 63
      %s179 = smul.addr %s178, 13
      %s180 = smul.addr %s179, 4
      %s181 = scalar_lea.vmem %s0, %s180
      %p182 = pneg %p47
      %p183 = pneg %p44
      %p184 = scmp.lt.s32.totalorder %s19, 0
      %s185 = scalar_select %p184, %s19, 0
      %s186 = smul.addr %s185, 4
      %s187 = scalar_lea.vmem %s1, %s186
      %p188 = pneg %p73
      %p189 = pneg %p70
      %p190 = scmp.lt.s32.totalorder %s19, 0
      %s191 = scalar_select %p190, %s19, 0
      %s192 = scalar_lea.vmem %s2, %s191
      %p193 = pneg %p99
      %p194 = pneg %p96
      %p195 = pneg %p127
      %p196 = pneg %p124
      %s197 = smul.u32 32, %s18
      %p198 = scmp.lt.s32.totalorder %s197, 63
      %s199 = scalar_select %p198, %s197, 63
      %p200 = scmp.lt.s32.totalorder %s19, 0
      %s201 = scalar_select %p200, %s19, 0
      %s202 = sadd.s32 %s201, %s199
      %s203 = smul.addr %s202, 4
      %s204 = scalar_lea.vmem %s3, %s203
      %s205 = smul.u32 32, %s18
      %p206 = scmp.lt.s32.totalorder %s205, 63
      %s207 = scalar_select %p206, %s205, 63
      %s208 = smul.addr %s207, 13
      %s209 = smul.addr %s208, 4
      %s210 = scalar_lea.vmem %s0, %s209
      %s211 = smul.u32 32, %s18
      %p212 = scmp.lt.s32.totalorder %s19, 0
      %s213 = scalar_select %p212, %s19, 0
      %s214 = smul.addr %s213, 4
      %s215 = scalar_lea.vmem %s1, %s214
      %p216 = scmp.lt.s32.totalorder %s19, 0
      %s217 = scalar_select %p216, %s19, 0
      %s218 = scalar_lea.vmem %s2, %s217
      %s219 = smul.u32 32, %s18
      %p220 = scmp.lt.s32.totalorder %s219, 63
      %s221 = scalar_select %p220, %s219, 63
      %p222 = scmp.lt.s32.totalorder %s19, 0
      %s223 = scalar_select %p222, %s19, 0
      %s224 = sadd.s32 %s223, %s221
      %s225 = smul.addr %s224, 4
      %s226 = scalar_lea.vmem %s3, %s225
      %s227 = smul.u32 32, %s18
      %v229 = vld [vmem:[%s210] sm:$0xff]
      %v230 = vld [vmem:[%s210 + $0x8] sm:$0xff]
      %v231 = vld [vmem:[%s210 + $0x10] sm:$0xff]
      %v232 = vld [vmem:[%s210 + $0x18] sm:$0xff]
      %v233 = vld [vmem:[%s210 + $0x20] sm:$0xff]
      %v234 = vld [vmem:[%s210 + $0x28] sm:$0xff]
      %v235 = vld [vmem:[%s210 + $0x30] sm:$0xf]
      %v236 = vld [vmem:[%s210 + $0x34] sm:$0xff]
      %v237 = vld [vmem:[%s210 + $0x3c] sm:$0xff]
      %v238 = vld [vmem:[%s210 + $0x44] sm:$0xff]
      %v239 = vld [vmem:[%s210 + $0x4c] sm:$0xff]
      %v240 = vld [vmem:[%s210 + $0x54] sm:$0xff]
      %v241 = vld [vmem:[%s210 + $0x5c] sm:$0xff]
      %v242 = vld [vmem:[%s210 + $0x64] sm:$0xf]
      %v243 = vld [vmem:[%s210 + $0x68] sm:$0xff]
      %v244 = vld [vmem:[%s210 + $0x70] sm:$0xff]
      %v245 = vld [vmem:[%s210 + $0x78] sm:$0xff]
      %v246 = vld [vmem:[%s210 + $0x80] sm:$0xff]
      %v247 = vld [vmem:[%s210 + $0x88] sm:$0xff]
      %v248 = vld [vmem:[%s210 + $0x90] sm:$0xff]
      %v249 = vld [vmem:[%s210 + $0x98] sm:$0xf]
      %v250 = vld [vmem:[%s210 + $0x9c] sm:$0xff]
      %v251 = vld [vmem:[%s210 + $0xa4] sm:$0xff]
      %v252 = vld [vmem:[%s210 + $0xac] sm:$0xff]
      %v253 = vld [vmem:[%s210 + $0xb4] sm:$0xff]
      %v254 = vld [vmem:[%s210 + $0xbc] sm:$0xff]
      %v255 = vld [vmem:[%s210 + $0xc4] sm:$0xff]
      %v256 = vld [vmem:[%s210 + $0xcc] sm:$0xf]
      %v257 = vld [vmem:[%s210 + $0xd0] sm:$0xff]
      %v258 = vld [vmem:[%s210 + $0xd8] sm:$0xff]
      %v259 = vld [vmem:[%s210 + $0xe0] sm:$0xff]
      %v260 = vld [vmem:[%s210 + $0xe8] sm:$0xff]
      %v261 = vld [vmem:[%s210 + $0xf0] sm:$0xff]
      %v262 = vld [vmem:[%s210 + $0xf8] sm:$0xff]
      %v263 = vld [vmem:[%s210 + $0x100] sm:$0xf]
      %v264 = vld [vmem:[%s210 + $0x104] sm:$0xff]
      %v265 = vld [vmem:[%s210 + $0x10c] sm:$0xff]
      %v266 = vld [vmem:[%s210 + $0x114] sm:$0xff]
      %v267 = vld [vmem:[%s210 + $0x11c] sm:$0xff]
      %v268 = vld [vmem:[%s210 + $0x124] sm:$0xff]
      %v269 = vld [vmem:[%s210 + $0x12c] sm:$0xff]
      %v270 = vld [vmem:[%s210 + $0x134] sm:$0xf]
      %v271 = vld [vmem:[%s210 + $0x138] sm:$0xff]
      %v272 = vld [vmem:[%s210 + $0x140] sm:$0xff]
      %v273 = vld [vmem:[%s210 + $0x148] sm:$0xff]
      %v274 = vld [vmem:[%s210 + $0x150] sm:$0xff]
      %v275 = vld [vmem:[%s210 + $0x158] sm:$0xff]
      %v276 = vld [vmem:[%s210 + $0x160] sm:$0xff]
      %v277 = vld [vmem:[%s210 + $0x168] sm:$0xf]
      %v278 = vld [vmem:[%s210 + $0x16c] sm:$0xff]
      %v279 = vld [vmem:[%s210 + $0x174] sm:$0xff]
      %v280 = vld [vmem:[%s210 + $0x17c] sm:$0xff]
      %v281 = vld [vmem:[%s210 + $0x184] sm:$0xff]
      %v282 = vld [vmem:[%s210 + $0x18c] sm:$0xff]
      %v283 = vld [vmem:[%s210 + $0x194] sm:$0xff]
      %v284 = vld [vmem:[%s210 + $0x19c] sm:$0xf]
      %v285 = vld [vmem:[%s210 + $0x1a0] sm:$0xff]
      %v286 = vld [vmem:[%s210 + $0x1a8] sm:$0xff]
      %v287 = vld [vmem:[%s210 + $0x1b0] sm:$0xff]
      %v288 = vld [vmem:[%s210 + $0x1b8] sm:$0xff]
      %v289 = vld [vmem:[%s210 + $0x1c0] sm:$0xff]
      %v290 = vld [vmem:[%s210 + $0x1c8] sm:$0xff]
      %v291 = vld [vmem:[%s210 + $0x1d0] sm:$0xf]
      %v292 = vld [vmem:[%s210 + $0x1d4] sm:$0xff]
      %v293 = vld [vmem:[%s210 + $0x1dc] sm:$0xff]
      %v294 = vld [vmem:[%s210 + $0x1e4] sm:$0xff]
      %v295 = vld [vmem:[%s210 + $0x1ec] sm:$0xff]
      %v296 = vld [vmem:[%s210 + $0x1f4] sm:$0xff]
      %v297 = vld [vmem:[%s210 + $0x1fc] sm:$0xff]
      %v298 = vld [vmem:[%s210 + $0x204] sm:$0xf]
      %v299 = vld [vmem:[%s210 + $0x208] sm:$0xff]
      %v300 = vld [vmem:[%s210 + $0x210] sm:$0xff]
      %v301 = vld [vmem:[%s210 + $0x218] sm:$0xff]
      %v302 = vld [vmem:[%s210 + $0x220] sm:$0xff]
      %v303 = vld [vmem:[%s210 + $0x228] sm:$0xff]
      %v304 = vld [vmem:[%s210 + $0x230] sm:$0xff]
      %v305 = vld [vmem:[%s210 + $0x238] sm:$0xf]
      %v306 = vld [vmem:[%s210 + $0x23c] sm:$0xff]
      %v307 = vld [vmem:[%s210 + $0x244] sm:$0xff]
      %v308 = vld [vmem:[%s210 + $0x24c] sm:$0xff]
      %v309 = vld [vmem:[%s210 + $0x254] sm:$0xff]
      %v310 = vld [vmem:[%s210 + $0x25c] sm:$0xff]
      %v311 = vld [vmem:[%s210 + $0x264] sm:$0xff]
      %v312 = vld [vmem:[%s210 + $0x26c] sm:$0xf]
      %v313 = vld [vmem:[%s210 + $0x270] sm:$0xff]
      %v314 = vld [vmem:[%s210 + $0x278] sm:$0xff]
      %v315 = vld [vmem:[%s210 + $0x280] sm:$0xff]
      %v316 = vld [vmem:[%s210 + $0x288] sm:$0xff]
      %v317 = vld [vmem:[%s210 + $0x290] sm:$0xff]
      %v318 = vld [vmem:[%s210 + $0x298] sm:$0xff]
      %v319 = vld [vmem:[%s210 + $0x2a0] sm:$0xf]
      %v320 = vld [vmem:[%s210 + $0x2a4] sm:$0xff]
      %v321 = vld [vmem:[%s210 + $0x2ac] sm:$0xff]
      %v322 = vld [vmem:[%s210 + $0x2b4] sm:$0xff]
      %v323 = vld [vmem:[%s210 + $0x2bc] sm:$0xff]
      %v324 = vld [vmem:[%s210 + $0x2c4] sm:$0xff]
      %v325 = vld [vmem:[%s210 + $0x2cc] sm:$0xff]
      %v326 = vld [vmem:[%s210 + $0x2d4] sm:$0xf]
      %v327 = vld [vmem:[%s210 + $0x2d8] sm:$0xff]
      %v328 = vld [vmem:[%s210 + $0x2e0] sm:$0xff]
      %v329 = vld [vmem:[%s210 + $0x2e8] sm:$0xff]
      %v330 = vld [vmem:[%s210 + $0x2f0] sm:$0xff]
      %v331 = vld [vmem:[%s210 + $0x2f8] sm:$0xff]
      %v332 = vld [vmem:[%s210 + $0x300] sm:$0xff]
      %v333 = vld [vmem:[%s210 + $0x308] sm:$0xf]
      %v334 = vld [vmem:[%s210 + $0x30c] sm:$0xff]
      %v335 = vld [vmem:[%s210 + $0x314] sm:$0xff]
      %v336 = vld [vmem:[%s210 + $0x31c] sm:$0xff]
      %v337 = vld [vmem:[%s210 + $0x324] sm:$0xff]
      %v338 = vld [vmem:[%s210 + $0x32c] sm:$0xff]
      %v339 = vld [vmem:[%s210 + $0x334] sm:$0xff]
      %v340 = vld [vmem:[%s210 + $0x33c] sm:$0xf]
      %v341 = vld [vmem:[%s210 + $0x340] sm:$0xff]
      %v342 = vld [vmem:[%s210 + $0x348] sm:$0xff]
      %v343 = vld [vmem:[%s210 + $0x350] sm:$0xff]
      %v344 = vld [vmem:[%s210 + $0x358] sm:$0xff]
      %v345 = vld [vmem:[%s210 + $0x360] sm:$0xff]
      %v346 = vld [vmem:[%s210 + $0x368] sm:$0xff]
      %v347 = vld [vmem:[%s210 + $0x370] sm:$0xf]
      %v348 = vld [vmem:[%s210 + $0x374] sm:$0xff]
      %v349 = vld [vmem:[%s210 + $0x37c] sm:$0xff]
      %v350 = vld [vmem:[%s210 + $0x384] sm:$0xff]
      %v351 = vld [vmem:[%s210 + $0x38c] sm:$0xff]
      %v352 = vld [vmem:[%s210 + $0x394] sm:$0xff]
      %v353 = vld [vmem:[%s210 + $0x39c] sm:$0xff]
      %v354 = vld [vmem:[%s210 + $0x3a4] sm:$0xf]
      %v355 = vld [vmem:[%s210 + $0x3a8] sm:$0xff]
      %v356 = vld [vmem:[%s210 + $0x3b0] sm:$0xff]
      %v357 = vld [vmem:[%s210 + $0x3b8] sm:$0xff]
      %v358 = vld [vmem:[%s210 + $0x3c0] sm:$0xff]
      %v359 = vld [vmem:[%s210 + $0x3c8] sm:$0xff]
      %v360 = vld [vmem:[%s210 + $0x3d0] sm:$0xff]
      %v361 = vld [vmem:[%s210 + $0x3d8] sm:$0xf]
      %v362 = vld [vmem:[%s210 + $0x3dc] sm:$0xff]
      %v363 = vld [vmem:[%s210 + $0x3e4] sm:$0xff]
      %v364 = vld [vmem:[%s210 + $0x3ec] sm:$0xff]
      %v365 = vld [vmem:[%s210 + $0x3f4] sm:$0xff]
      %v366 = vld [vmem:[%s210 + $0x3fc] sm:$0xff]
      %v367 = vld [vmem:[%s210 + $0x404] sm:$0xff]
      %v368 = vld [vmem:[%s210 + $0x40c] sm:$0xf]
      %v369 = vld [vmem:[%s210 + $0x410] sm:$0xff]
      %v370 = vld [vmem:[%s210 + $0x418] sm:$0xff]
      %v371 = vld [vmem:[%s210 + $0x420] sm:$0xff]
      %v372 = vld [vmem:[%s210 + $0x428] sm:$0xff]
      %v373 = vld [vmem:[%s210 + $0x430] sm:$0xff]
      %v374 = vld [vmem:[%s210 + $0x438] sm:$0xff]
      %v375 = vld [vmem:[%s210 + $0x440] sm:$0xf]
      %v376 = vld [vmem:[%s210 + $0x444] sm:$0xff]
      %v377 = vld [vmem:[%s210 + $0x44c] sm:$0xff]
      %v378 = vld [vmem:[%s210 + $0x454] sm:$0xff]
      %v379 = vld [vmem:[%s210 + $0x45c] sm:$0xff]
      %v380 = vld [vmem:[%s210 + $0x464] sm:$0xff]
      %v381 = vld [vmem:[%s210 + $0x46c] sm:$0xff]
      %v382 = vld [vmem:[%s210 + $0x474] sm:$0xf]
      %v383 = vld [vmem:[%s210 + $0x478] sm:$0xff]
      %v384 = vld [vmem:[%s210 + $0x480] sm:$0xff]
      %v385 = vld [vmem:[%s210 + $0x488] sm:$0xff]
      %v386 = vld [vmem:[%s210 + $0x490] sm:$0xff]
      %v387 = vld [vmem:[%s210 + $0x498] sm:$0xff]
      %v388 = vld [vmem:[%s210 + $0x4a0] sm:$0xff]
      %v389 = vld [vmem:[%s210 + $0x4a8] sm:$0xf]
      %v390 = vld [vmem:[%s210 + $0x4ac] sm:$0xff]
      %v391 = vld [vmem:[%s210 + $0x4b4] sm:$0xff]
      %v392 = vld [vmem:[%s210 + $0x4bc] sm:$0xff]
      %v393 = vld [vmem:[%s210 + $0x4c4] sm:$0xff]
      %v394 = vld [vmem:[%s210 + $0x4cc] sm:$0xff]
      %v395 = vld [vmem:[%s210 + $0x4d4] sm:$0xff]
      %v396 = vld [vmem:[%s210 + $0x4dc] sm:$0xf]
      %v397 = vld [vmem:[%s210 + $0x4e0] sm:$0xff]
      %v398 = vld [vmem:[%s210 + $0x4e8] sm:$0xff]
      %v399 = vld [vmem:[%s210 + $0x4f0] sm:$0xff]
      %v400 = vld [vmem:[%s210 + $0x4f8] sm:$0xff]
      %v401 = vld [vmem:[%s210 + $0x500] sm:$0xff]
      %v402 = vld [vmem:[%s210 + $0x508] sm:$0xff]
      %v403 = vld [vmem:[%s210 + $0x510] sm:$0xf]
      %v404 = vld [vmem:[%s210 + $0x514] sm:$0xff]
      %v405 = vld [vmem:[%s210 + $0x51c] sm:$0xff]
      %v406 = vld [vmem:[%s210 + $0x524] sm:$0xff]
      %v407 = vld [vmem:[%s210 + $0x52c] sm:$0xff]
      %v408 = vld [vmem:[%s210 + $0x534] sm:$0xff]
      %v409 = vld [vmem:[%s210 + $0x53c] sm:$0xff]
      %v410 = vld [vmem:[%s210 + $0x544] sm:$0xf]
      %v411 = vld [vmem:[%s210 + $0x548] sm:$0xff]
      %v412 = vld [vmem:[%s210 + $0x550] sm:$0xff]
      %v413 = vld [vmem:[%s210 + $0x558] sm:$0xff]
      %v414 = vld [vmem:[%s210 + $0x560] sm:$0xff]
      %v415 = vld [vmem:[%s210 + $0x568] sm:$0xff]
      %v416 = vld [vmem:[%s210 + $0x570] sm:$0xff]
      %v417 = vld [vmem:[%s210 + $0x578] sm:$0xf]
      %v418 = vld [vmem:[%s210 + $0x57c] sm:$0xff]
      %v419 = vld [vmem:[%s210 + $0x584] sm:$0xff]
      %v420 = vld [vmem:[%s210 + $0x58c] sm:$0xff]
      %v421 = vld [vmem:[%s210 + $0x594] sm:$0xff]
      %v422 = vld [vmem:[%s210 + $0x59c] sm:$0xff]
      %v423 = vld [vmem:[%s210 + $0x5a4] sm:$0xff]
      %v424 = vld [vmem:[%s210 + $0x5ac] sm:$0xf]
      %v425 = vld [vmem:[%s210 + $0x5b0] sm:$0xff]
      %v426 = vld [vmem:[%s210 + $0x5b8] sm:$0xff]
      %v427 = vld [vmem:[%s210 + $0x5c0] sm:$0xff]
      %v428 = vld [vmem:[%s210 + $0x5c8] sm:$0xff]
      %v429 = vld [vmem:[%s210 + $0x5d0] sm:$0xff]
      %v430 = vld [vmem:[%s210 + $0x5d8] sm:$0xff]
      %v431 = vld [vmem:[%s210 + $0x5e0] sm:$0xf]
      %v432 = vld [vmem:[%s210 + $0x5e4] sm:$0xff]
      %v433 = vld [vmem:[%s210 + $0x5ec] sm:$0xff]
      %v434 = vld [vmem:[%s210 + $0x5f4] sm:$0xff]
      %v435 = vld [vmem:[%s210 + $0x5fc] sm:$0xff]
      %v436 = vld [vmem:[%s210 + $0x604] sm:$0xff]
      %v437 = vld [vmem:[%s210 + $0x60c] sm:$0xff]
      %v438 = vld [vmem:[%s210 + $0x614] sm:$0xf]
      %v439 = vld [vmem:[%s210 + $0x618] sm:$0xff]
      %v440 = vld [vmem:[%s210 + $0x620] sm:$0xff]
      %v441 = vld [vmem:[%s210 + $0x628] sm:$0xff]
      %v442 = vld [vmem:[%s210 + $0x630] sm:$0xff]
      %v443 = vld [vmem:[%s210 + $0x638] sm:$0xff]
      %v444 = vld [vmem:[%s210 + $0x640] sm:$0xff]
      %v445 = vld [vmem:[%s210 + $0x648] sm:$0xf]
      %v446 = vld [vmem:[%s210 + $0x64c] sm:$0xff]
      %v447 = vld [vmem:[%s210 + $0x654] sm:$0xff]
      %v448 = vld [vmem:[%s210 + $0x65c] sm:$0xff]
      %v449 = vld [vmem:[%s210 + $0x664] sm:$0xff]
      %v450 = vld [vmem:[%s210 + $0x66c] sm:$0xff]
      %v451 = vld [vmem:[%s210 + $0x674] sm:$0xff]
      %v452 = vld [vmem:[%s210 + $0x67c] sm:$0xf]
      %v453 = vld [vmem:[%s215] sm:$0xf]
      %v454 = vld [vmem:[%s215 + $0x4] sm:$0xf]
      %v455 = vld [vmem:[%s215 + $0x8] sm:$0xf]
      %v456 = vld [vmem:[%s215 + $0xc] sm:$0xf]
      %v457 = vld [vmem:[%s215 + $0x10] sm:$0xf]
      %v458 = vld [vmem:[%s215 + $0x14] sm:$0xf]
      %v459 = vld [vmem:[%s215 + $0x18] sm:$0xf]
      %v460 = vld [vmem:[%s215 + $0x1c] sm:$0xf]
      %v461 = vld [vmem:[%s215 + $0x20] sm:$0xf]
      %v462 = vld [vmem:[%s215 + $0x24] sm:$0xf]
      %v463 = vld [vmem:[%s215 + $0x28] sm:$0xf]
      %v464 = vld [vmem:[%s215 + $0x2c] sm:$0xf]
      %v465 = vld [vmem:[%s215 + $0x30] sm:$0xf]
      %v466 = vld [vmem:[%s215 + $0x34] sm:$0xf]
      %v467 = vld [vmem:[%s215 + $0x38] sm:$0xf]
      %v468 = vld [vmem:[%s215 + $0x3c] sm:$0xf]
      %v469 = vld [vmem:[%s215 + $0x40] sm:$0xf]
      %v470 = vld [vmem:[%s215 + $0x44] sm:$0xf]
      %v471 = vld [vmem:[%s215 + $0x48] sm:$0xf]
      %v472 = vld [vmem:[%s215 + $0x4c] sm:$0xf]
      %v473 = vld [vmem:[%s215 + $0x50] sm:$0xf]
      %v474 = vld [vmem:[%s215 + $0x54] sm:$0xf]
      %v475 = vld [vmem:[%s215 + $0x58] sm:$0xf]
      %v476 = vld [vmem:[%s215 + $0x5c] sm:$0xf]
      %v477 = vld [vmem:[%s215 + $0x60] sm:$0xf]
      %v478 = vld [vmem:[%s215 + $0x64] sm:$0xf]
      %v479 = vld [vmem:[%s215 + $0x68] sm:$0xf]
      %v480 = vld [vmem:[%s215 + $0x6c] sm:$0xf]
      %v481 = vld [vmem:[%s215 + $0x70] sm:$0xf]
      %v482 = vld [vmem:[%s215 + $0x74] sm:$0xf]
      %v483 = vld [vmem:[%s215 + $0x78] sm:$0xf]
      %v484 = vld [vmem:[%s215 + $0x7c] sm:$0xf]
      %v485 = vld [vmem:[%s215 + $0x80] sm:$0xf]
      %v486 = vld [vmem:[%s215 + $0x84] sm:$0xf]
      %v487 = vld [vmem:[%s215 + $0x88] sm:$0xf]
      %v488 = vld [vmem:[%s215 + $0x8c] sm:$0xf]
      %v489 = vld [vmem:[%s215 + $0x90] sm:$0xf]
      %v490 = vld [vmem:[%s215 + $0x94] sm:$0xf]
      %v491 = vld [vmem:[%s215 + $0x98] sm:$0xf]
      %v492 = vld [vmem:[%s215 + $0x9c] sm:$0xf]
      %v493 = vld [vmem:[%s215 + $0xa0] sm:$0xf]
      %v494 = vld [vmem:[%s215 + $0xa4] sm:$0xf]
      %v495 = vld [vmem:[%s215 + $0xa8] sm:$0xf]
      %v496 = vld [vmem:[%s215 + $0xac] sm:$0xf]
      %v497 = vld [vmem:[%s215 + $0xb0] sm:$0xf]
      %v498 = vld [vmem:[%s215 + $0xb4] sm:$0xf]
      %v499 = vld [vmem:[%s215 + $0xb8] sm:$0xf]
      %v500 = vld [vmem:[%s215 + $0xbc] sm:$0xf]
      %v501 = vld [vmem:[%s215 + $0xc0] sm:$0xf]
      %v502 = vld [vmem:[%s215 + $0xc4] sm:$0xf]
      %v503 = vld [vmem:[%s215 + $0xc8] sm:$0xf]
      %v504 = vld [vmem:[%s215 + $0xcc] sm:$0xf]
      %v505 = vld [vmem:[%s215 + $0xd0] sm:$0xf]
      %v506 = vld [vmem:[%s215 + $0xd4] sm:$0xf]
      %v507 = vld [vmem:[%s215 + $0xd8] sm:$0xf]
      %v508 = vld [vmem:[%s215 + $0xdc] sm:$0xf]
      %v509 = vld [vmem:[%s215 + $0xe0] sm:$0xf]
      %v510 = vld [vmem:[%s215 + $0xe4] sm:$0xf]
      %v511 = vld [vmem:[%s215 + $0xe8] sm:$0xf]
      %v512 = vld [vmem:[%s215 + $0xec] sm:$0xf]
      %v513 = vld [vmem:[%s215 + $0xf0] sm:$0xf]
      %v514 = vld [vmem:[%s215 + $0xf4] sm:$0xf]
      %v515 = vld [vmem:[%s215 + $0xf8] sm:$0xf]
      %v516 = vld [vmem:[%s215 + $0xfc] sm:$0xf]
      %v517 = vld [vmem:[%s215 + $0x100] sm:$0xf]
      %v518 = vld [vmem:[%s215 + $0x104] sm:$0xf]
      %v519 = vld [vmem:[%s215 + $0x108] sm:$0xf]
      %v520 = vld [vmem:[%s215 + $0x10c] sm:$0xf]
      %v521 = vld [vmem:[%s215 + $0x110] sm:$0xf]
      %v522 = vld [vmem:[%s215 + $0x114] sm:$0xf]
      %v523 = vld [vmem:[%s215 + $0x118] sm:$0xf]
      %v524 = vld [vmem:[%s215 + $0x11c] sm:$0xf]
      %v525 = vld [vmem:[%s215 + $0x120] sm:$0xf]
      %v526 = vld [vmem:[%s215 + $0x124] sm:$0xf]
      %v527 = vld [vmem:[%s215 + $0x128] sm:$0xf]
      %v528 = vld [vmem:[%s215 + $0x12c] sm:$0xf]
      %v529 = vld [vmem:[%s215 + $0x130] sm:$0xf]
      %v530 = vld [vmem:[%s215 + $0x134] sm:$0xf]
      %v531 = vld [vmem:[%s215 + $0x138] sm:$0xf]
      %v532 = vld [vmem:[%s215 + $0x13c] sm:$0xf]
      %v533 = vld [vmem:[%s215 + $0x140] sm:$0xf]
      %v534 = vld [vmem:[%s215 + $0x144] sm:$0xf]
      %v535 = vld [vmem:[%s215 + $0x148] sm:$0xf]
      %v536 = vld [vmem:[%s215 + $0x14c] sm:$0xf]
      %v537 = vld [vmem:[%s215 + $0x150] sm:$0xf]
      %v538 = vld [vmem:[%s215 + $0x154] sm:$0xf]
      %v539 = vld [vmem:[%s215 + $0x158] sm:$0xf]
      %v540 = vld [vmem:[%s215 + $0x15c] sm:$0xf]
      %v541 = vld [vmem:[%s215 + $0x160] sm:$0xf]
      %v542 = vld [vmem:[%s215 + $0x164] sm:$0xf]
      %v543 = vld [vmem:[%s215 + $0x168] sm:$0xf]
      %v544 = vld [vmem:[%s215 + $0x16c] sm:$0xf]
      %v545 = vld [vmem:[%s215 + $0x170] sm:$0xf]
      %v546 = vld [vmem:[%s215 + $0x174] sm:$0xf]
      %v547 = vld [vmem:[%s215 + $0x178] sm:$0xf]
      %v548 = vld [vmem:[%s215 + $0x17c] sm:$0xf]
      %v549 = vld [vmem:[%s215 + $0x180] sm:$0xf]
      %v550 = vld [vmem:[%s215 + $0x184] sm:$0xf]
      %v551 = vld [vmem:[%s215 + $0x188] sm:$0xf]
      %v552 = vld [vmem:[%s215 + $0x18c] sm:$0xf]
      %v553 = vld [vmem:[%s215 + $0x190] sm:$0xf]
      %v554 = vld [vmem:[%s215 + $0x194] sm:$0xf]
      %v555 = vld [vmem:[%s215 + $0x198] sm:$0xf]
      %v556 = vld [vmem:[%s215 + $0x19c] sm:$0xf]
      %v557 = vld [vmem:[%s215 + $0x1a0] sm:$0xf]
      %v558 = vld [vmem:[%s215 + $0x1a4] sm:$0xf]
      %v559 = vld [vmem:[%s215 + $0x1a8] sm:$0xf]
      %v560 = vld [vmem:[%s215 + $0x1ac] sm:$0xf]
      %v561 = vld [vmem:[%s215 + $0x1b0] sm:$0xf]
      %v562 = vld [vmem:[%s215 + $0x1b4] sm:$0xf]
      %v563 = vld [vmem:[%s215 + $0x1b8] sm:$0xf]
      %v564 = vld [vmem:[%s215 + $0x1bc] sm:$0xf]
      %v565 = vld [vmem:[%s215 + $0x1c0] sm:$0xf]
      %v566 = vld [vmem:[%s215 + $0x1c4] sm:$0xf]
      %v567 = vld [vmem:[%s215 + $0x1c8] sm:$0xf]
      %v568 = vld [vmem:[%s215 + $0x1cc] sm:$0xf]
      %v569 = vld [vmem:[%s215 + $0x1d0] sm:$0xf]
      %v570 = vld [vmem:[%s215 + $0x1d4] sm:$0xf]
      %v571 = vld [vmem:[%s215 + $0x1d8] sm:$0xf]
      %v572 = vld [vmem:[%s215 + $0x1dc] sm:$0xf]
      %v573 = vld [vmem:[%s215 + $0x1e0] sm:$0xf]
      %v574 = vld [vmem:[%s215 + $0x1e4] sm:$0xf]
      %v575 = vld [vmem:[%s215 + $0x1e8] sm:$0xf]
      %v576 = vld [vmem:[%s215 + $0x1ec] sm:$0xf]
      %v577 = vld [vmem:[%s215 + $0x1f0] sm:$0xf]
      %v578 = vld [vmem:[%s215 + $0x1f4] sm:$0xf]
      %v579 = vld [vmem:[%s215 + $0x1f8] sm:$0xf]
      %v580 = vld [vmem:[%s215 + $0x1fc] sm:$0xf]
      %v581 = vld [vmem:[%s215 + $0x200] sm:$0xf]
      %v582 = vld [vmem:[%s215 + $0x204] sm:$0xf]
      %v583 = vld [vmem:[%s215 + $0x208] sm:$0xf]
      %v584 = vld [vmem:[%s215 + $0x20c] sm:$0xf]
      %v585 = vld [vmem:[%s215 + $0x210] sm:$0xf]
      %v586 = vld [vmem:[%s215 + $0x214] sm:$0xf]
      %v587 = vld [vmem:[%s215 + $0x218] sm:$0xf]
      %v588 = vld [vmem:[%s215 + $0x21c] sm:$0xf]
      %v589 = vld [vmem:[%s215 + $0x220] sm:$0xf]
      %v590 = vld [vmem:[%s215 + $0x224] sm:$0xf]
      %v591 = vld [vmem:[%s215 + $0x228] sm:$0xf]
      %v592 = vld [vmem:[%s215 + $0x22c] sm:$0xf]
      %v593 = vld [vmem:[%s215 + $0x230] sm:$0xf]
      %v594 = vld [vmem:[%s215 + $0x234] sm:$0xf]
      %v595 = vld [vmem:[%s215 + $0x238] sm:$0xf]
      %v596 = vld [vmem:[%s215 + $0x23c] sm:$0xf]
      %v597 = vld [vmem:[%s215 + $0x240] sm:$0xf]
      %v598 = vld [vmem:[%s215 + $0x244] sm:$0xf]
      %v599 = vld [vmem:[%s215 + $0x248] sm:$0xf]
      %v600 = vld [vmem:[%s215 + $0x24c] sm:$0xf]
      %v601 = vld [vmem:[%s215 + $0x250] sm:$0xf]
      %v602 = vld [vmem:[%s215 + $0x254] sm:$0xf]
      %v603 = vld [vmem:[%s215 + $0x258] sm:$0xf]
      %v604 = vld [vmem:[%s215 + $0x25c] sm:$0xf]
      %v605 = vld [vmem:[%s215 + $0x260] sm:$0xf]
      %v606 = vld [vmem:[%s215 + $0x264] sm:$0xf]
      %v607 = vld [vmem:[%s215 + $0x268] sm:$0xf]
      %v608 = vld [vmem:[%s215 + $0x26c] sm:$0xf]
      %v609 = vld [vmem:[%s215 + $0x270] sm:$0xf]
      %v610 = vld [vmem:[%s215 + $0x274] sm:$0xf]
      %v611 = vld [vmem:[%s215 + $0x278] sm:$0xf]
      %v612 = vld [vmem:[%s215 + $0x27c] sm:$0xf]
      %v613 = vld [vmem:[%s215 + $0x280] sm:$0xf]
      %v614 = vld [vmem:[%s215 + $0x284] sm:$0xf]
      %v615 = vld [vmem:[%s215 + $0x288] sm:$0xf]
      %v616 = vld [vmem:[%s215 + $0x28c] sm:$0xf]
      %v617 = vld [vmem:[%s215 + $0x290] sm:$0xf]
      %v618 = vld [vmem:[%s215 + $0x294] sm:$0xf]
      %v619 = vld [vmem:[%s215 + $0x298] sm:$0xf]
      %v620 = vld [vmem:[%s215 + $0x29c] sm:$0xf]
      %v621 = vld [vmem:[%s215 + $0x2a0] sm:$0xf]
      %v622 = vld [vmem:[%s215 + $0x2a4] sm:$0xf]
      %v623 = vld [vmem:[%s215 + $0x2a8] sm:$0xf]
      %v624 = vld [vmem:[%s215 + $0x2ac] sm:$0xf]
      %v625 = vld [vmem:[%s215 + $0x2b0] sm:$0xf]
      %v626 = vld [vmem:[%s215 + $0x2b4] sm:$0xf]
      %v627 = vld [vmem:[%s215 + $0x2b8] sm:$0xf]
      %v628 = vld [vmem:[%s215 + $0x2bc] sm:$0xf]
      %v629 = vld [vmem:[%s215 + $0x2c0] sm:$0xf]
      %v630 = vld [vmem:[%s215 + $0x2c4] sm:$0xf]
      %v631 = vld [vmem:[%s215 + $0x2c8] sm:$0xf]
      %v632 = vld [vmem:[%s215 + $0x2cc] sm:$0xf]
      %v633 = vld [vmem:[%s215 + $0x2d0] sm:$0xf]
      %v634 = vld [vmem:[%s215 + $0x2d4] sm:$0xf]
      %v635 = vld [vmem:[%s215 + $0x2d8] sm:$0xf]
      %v636 = vld [vmem:[%s215 + $0x2dc] sm:$0xf]
      %v637 = vld [vmem:[%s215 + $0x2e0] sm:$0xf]
      %v638 = vld [vmem:[%s215 + $0x2e4] sm:$0xf]
      %v639 = vld [vmem:[%s215 + $0x2e8] sm:$0xf]
      %v640 = vld [vmem:[%s215 + $0x2ec] sm:$0xf]
      %v641 = vld [vmem:[%s215 + $0x2f0] sm:$0xf]
      %v642 = vld [vmem:[%s215 + $0x2f4] sm:$0xf]
      %v643 = vld [vmem:[%s215 + $0x2f8] sm:$0xf]
      %v644 = vld [vmem:[%s215 + $0x2fc] sm:$0xf]
      %v645 = vld [vmem:[%s215 + $0x300] sm:$0xf]
      %v646 = vld [vmem:[%s215 + $0x304] sm:$0xf]
      %v647 = vld [vmem:[%s215 + $0x308] sm:$0xf]
      %v648 = vld [vmem:[%s215 + $0x30c] sm:$0xf]
      %v649 = vld [vmem:[%s215 + $0x310] sm:$0xf]
      %v650 = vld [vmem:[%s215 + $0x314] sm:$0xf]
      %v651 = vld [vmem:[%s215 + $0x318] sm:$0xf]
      %v652 = vld [vmem:[%s215 + $0x31c] sm:$0xf]
      %v653 = vld [vmem:[%s218] sm:$0x1]
      %v655 = vperm.slane %v653, 0
      %v881 = vunpack.c.l.b16 %v229
      %v882 = vunpack.c.h.b16 %v229
      %v883 = vunpack.c.l.b16 %v230
      %v884 = vunpack.c.h.b16 %v230
      %v885 = vunpack.c.l.b16 %v231
      %v886 = vunpack.c.h.b16 %v231
      %v887 = vunpack.c.l.b16 %v232
      %v888 = vunpack.c.h.b16 %v232
      %v889 = vunpack.c.l.b16 %v233
      %v890 = vunpack.c.h.b16 %v233
      %v891 = vunpack.c.l.b16 %v234
      %v892 = vunpack.c.h.b16 %v234
      %v893 = vunpack.c.l.b16 %v235
      %v894 = vunpack.c.l.b16 %v236
      %v895 = vunpack.c.h.b16 %v236
      %v896 = vunpack.c.l.b16 %v237
      %v897 = vunpack.c.h.b16 %v237
      %v898 = vunpack.c.l.b16 %v238
      %v899 = vunpack.c.h.b16 %v238
      %v900 = vunpack.c.l.b16 %v239
      %v901 = vunpack.c.h.b16 %v239
      %v902 = vunpack.c.l.b16 %v240
      %v903 = vunpack.c.h.b16 %v240
      %v904 = vunpack.c.l.b16 %v241
      %v905 = vunpack.c.h.b16 %v241
      %v906 = vunpack.c.l.b16 %v242
      %v907 = vunpack.c.l.b16 %v243
      %v908 = vunpack.c.h.b16 %v243
      %v909 = vunpack.c.l.b16 %v244
      %v910 = vunpack.c.h.b16 %v244
      %v911 = vunpack.c.l.b16 %v245
      %v912 = vunpack.c.h.b16 %v245
      %v913 = vunpack.c.l.b16 %v246
      %v914 = vunpack.c.h.b16 %v246
      %v915 = vunpack.c.l.b16 %v247
      %v916 = vunpack.c.h.b16 %v247
      %v917 = vunpack.c.l.b16 %v248
      %v918 = vunpack.c.h.b16 %v248
      %v919 = vunpack.c.l.b16 %v249
      %v920 = vunpack.c.l.b16 %v250
      %v921 = vunpack.c.h.b16 %v250
      %v922 = vunpack.c.l.b16 %v251
      %v923 = vunpack.c.h.b16 %v251
      %v924 = vunpack.c.l.b16 %v252
      %v925 = vunpack.c.h.b16 %v252
      %v926 = vunpack.c.l.b16 %v253
      %v927 = vunpack.c.h.b16 %v253
      %v928 = vunpack.c.l.b16 %v254
      %v929 = vunpack.c.h.b16 %v254
      %v930 = vunpack.c.l.b16 %v255
      %v931 = vunpack.c.h.b16 %v255
      %v932 = vunpack.c.l.b16 %v256
      %v933 = vunpack.c.l.b16 %v257
      %v934 = vunpack.c.h.b16 %v257
      %v935 = vunpack.c.l.b16 %v258
      %v936 = vunpack.c.h.b16 %v258
      %v937 = vunpack.c.l.b16 %v259
      %v938 = vunpack.c.h.b16 %v259
      %v939 = vunpack.c.l.b16 %v260
      %v940 = vunpack.c.h.b16 %v260
      %v941 = vunpack.c.l.b16 %v261
      %v942 = vunpack.c.h.b16 %v261
      %v943 = vunpack.c.l.b16 %v262
      %v944 = vunpack.c.h.b16 %v262
      %v945 = vunpack.c.l.b16 %v263
      %v946 = vunpack.c.l.b16 %v264
      %v947 = vunpack.c.h.b16 %v264
      %v948 = vunpack.c.l.b16 %v265
      %v949 = vunpack.c.h.b16 %v265
      %v950 = vunpack.c.l.b16 %v266
      %v951 = vunpack.c.h.b16 %v266
      %v952 = vunpack.c.l.b16 %v267
      %v953 = vunpack.c.h.b16 %v267
      %v954 = vunpack.c.l.b16 %v268
      %v955 = vunpack.c.h.b16 %v268
      %v956 = vunpack.c.l.b16 %v269
      %v957 = vunpack.c.h.b16 %v269
      %v958 = vunpack.c.l.b16 %v270
      %v959 = vunpack.c.l.b16 %v271
      %v960 = vunpack.c.h.b16 %v271
      %v961 = vunpack.c.l.b16 %v272
      %v962 = vunpack.c.h.b16 %v272
      %v963 = vunpack.c.l.b16 %v273
      %v964 = vunpack.c.h.b16 %v273
      %v965 = vunpack.c.l.b16 %v274
      %v966 = vunpack.c.h.b16 %v274
      %v967 = vunpack.c.l.b16 %v275
      %v968 = vunpack.c.h.b16 %v275
      %v969 = vunpack.c.l.b16 %v276
      %v970 = vunpack.c.h.b16 %v276
      %v971 = vunpack.c.l.b16 %v277
      %v972 = vunpack.c.l.b16 %v278
      %v973 = vunpack.c.h.b16 %v278
      %v974 = vunpack.c.l.b16 %v279
      %v975 = vunpack.c.h.b16 %v279
      %v976 = vunpack.c.l.b16 %v280
      %v977 = vunpack.c.h.b16 %v280
      %v978 = vunpack.c.l.b16 %v281
      %v979 = vunpack.c.h.b16 %v281
      %v980 = vunpack.c.l.b16 %v282
      %v981 = vunpack.c.h.b16 %v282
      %v982 = vunpack.c.l.b16 %v283
      %v983 = vunpack.c.h.b16 %v283
      %v984 = vunpack.c.l.b16 %v284
      %v985 = vunpack.c.l.b16 %v285
      %v986 = vunpack.c.h.b16 %v285
      %v987 = vunpack.c.l.b16 %v286
      %v988 = vunpack.c.h.b16 %v286
      %v989 = vunpack.c.l.b16 %v287
      %v990 = vunpack.c.h.b16 %v287
      %v991 = vunpack.c.l.b16 %v288
      %v992 = vunpack.c.h.b16 %v288
      %v993 = vunpack.c.l.b16 %v289
      %v994 = vunpack.c.h.b16 %v289
      %v995 = vunpack.c.l.b16 %v290
      %v996 = vunpack.c.h.b16 %v290
      %v997 = vunpack.c.l.b16 %v291
      %v998 = vunpack.c.l.b16 %v292
      %v999 = vunpack.c.h.b16 %v292
      %v1000 = vunpack.c.l.b16 %v293
      %v1001 = vunpack.c.h.b16 %v293
      %v1002 = vunpack.c.l.b16 %v294
      %v1003 = vunpack.c.h.b16 %v294
      %v1004 = vunpack.c.l.b16 %v295
      %v1005 = vunpack.c.h.b16 %v295
      %v1006 = vunpack.c.l.b16 %v296
      %v1007 = vunpack.c.h.b16 %v296
      %v1008 = vunpack.c.l.b16 %v297
      %v1009 = vunpack.c.h.b16 %v297
      %v1010 = vunpack.c.l.b16 %v298
      %v1011 = vunpack.c.l.b16 %v299
      %v1012 = vunpack.c.h.b16 %v299
      %v1013 = vunpack.c.l.b16 %v300
      %v1014 = vunpack.c.h.b16 %v300
      %v1015 = vunpack.c.l.b16 %v301
      %v1016 = vunpack.c.h.b16 %v301
      %v1017 = vunpack.c.l.b16 %v302
      %v1018 = vunpack.c.h.b16 %v302
      %v1019 = vunpack.c.l.b16 %v303
      %v1020 = vunpack.c.h.b16 %v303
      %v1021 = vunpack.c.l.b16 %v304
      %v1022 = vunpack.c.h.b16 %v304
      %v1023 = vunpack.c.l.b16 %v305
      %v1024 = vunpack.c.l.b16 %v306
      %v1025 = vunpack.c.h.b16 %v306
      %v1026 = vunpack.c.l.b16 %v307
      %v1027 = vunpack.c.h.b16 %v307
      %v1028 = vunpack.c.l.b16 %v308
      %v1029 = vunpack.c.h.b16 %v308
      %v1030 = vunpack.c.l.b16 %v309
      %v1031 = vunpack.c.h.b16 %v309
      %v1032 = vunpack.c.l.b16 %v310
      %v1033 = vunpack.c.h.b16 %v310
      %v1034 = vunpack.c.l.b16 %v311
      %v1035 = vunpack.c.h.b16 %v311
      %v1036 = vunpack.c.l.b16 %v312
      %v1037 = vunpack.c.l.b16 %v313
      %v1038 = vunpack.c.h.b16 %v313
      %v1039 = vunpack.c.l.b16 %v314
      %v1040 = vunpack.c.h.b16 %v314
      %v1041 = vunpack.c.l.b16 %v315
      %v1042 = vunpack.c.h.b16 %v315
      %v1043 = vunpack.c.l.b16 %v316
      %v1044 = vunpack.c.h.b16 %v316
      %v1045 = vunpack.c.l.b16 %v317
      %v1046 = vunpack.c.h.b16 %v317
      %v1047 = vunpack.c.l.b16 %v318
      %v1048 = vunpack.c.h.b16 %v318
      %v1049 = vunpack.c.l.b16 %v319
      %v1050 = vunpack.c.l.b16 %v320
      %v1051 = vunpack.c.h.b16 %v320
      %v1052 = vunpack.c.l.b16 %v321
      %v1053 = vunpack.c.h.b16 %v321
      %v1054 = vunpack.c.l.b16 %v322
      %v1055 = vunpack.c.h.b16 %v322
      %v1056 = vunpack.c.l.b16 %v323
      %v1057 = vunpack.c.h.b16 %v323
      %v1058 = vunpack.c.l.b16 %v324
      %v1059 = vunpack.c.h.b16 %v324
      %v1060 = vunpack.c.l.b16 %v325
      %v1061 = vunpack.c.h.b16 %v325
      %v1062 = vunpack.c.l.b16 %v326
      %v1063 = vunpack.c.l.b16 %v327
      %v1064 = vunpack.c.h.b16 %v327
      %v1065 = vunpack.c.l.b16 %v328
      %v1066 = vunpack.c.h.b16 %v328
      %v1067 = vunpack.c.l.b16 %v329
      %v1068 = vunpack.c.h.b16 %v329
      %v1069 = vunpack.c.l.b16 %v330
      %v1070 = vunpack.c.h.b16 %v330
      %v1071 = vunpack.c.l.b16 %v331
      %v1072 = vunpack.c.h.b16 %v331
      %v1073 = vunpack.c.l.b16 %v332
      %v1074 = vunpack.c.h.b16 %v332
      %v1075 = vunpack.c.l.b16 %v333
      %v1076 = vunpack.c.l.b16 %v334
      %v1077 = vunpack.c.h.b16 %v334
      %v1078 = vunpack.c.l.b16 %v335
      %v1079 = vunpack.c.h.b16 %v335
      %v1080 = vunpack.c.l.b16 %v336
      %v1081 = vunpack.c.h.b16 %v336
      %v1082 = vunpack.c.l.b16 %v337
      %v1083 = vunpack.c.h.b16 %v337
      %v1084 = vunpack.c.l.b16 %v338
      %v1085 = vunpack.c.h.b16 %v338
      %v1086 = vunpack.c.l.b16 %v339
      %v1087 = vunpack.c.h.b16 %v339
      %v1088 = vunpack.c.l.b16 %v340
      %v1089 = vunpack.c.l.b16 %v341
      %v1090 = vunpack.c.h.b16 %v341
      %v1091 = vunpack.c.l.b16 %v342
      %v1092 = vunpack.c.h.b16 %v342
      %v1093 = vunpack.c.l.b16 %v343
      %v1094 = vunpack.c.h.b16 %v343
      %v1095 = vunpack.c.l.b16 %v344
      %v1096 = vunpack.c.h.b16 %v344
      %v1097 = vunpack.c.l.b16 %v345
      %v1098 = vunpack.c.h.b16 %v345
      %v1099 = vunpack.c.l.b16 %v346
      %v1100 = vunpack.c.h.b16 %v346
      %v1101 = vunpack.c.l.b16 %v347
      %v1102 = vunpack.c.l.b16 %v348
      %v1103 = vunpack.c.h.b16 %v348
      %v1104 = vunpack.c.l.b16 %v349
      %v1105 = vunpack.c.h.b16 %v349
      %v1106 = vunpack.c.l.b16 %v350
      %v1107 = vunpack.c.h.b16 %v350
      %v1108 = vunpack.c.l.b16 %v351
      %v1109 = vunpack.c.h.b16 %v351
      %v1110 = vunpack.c.l.b16 %v352
      %v1111 = vunpack.c.h.b16 %v352
      %v1112 = vunpack.c.l.b16 %v353
      %v1113 = vunpack.c.h.b16 %v353
      %v1114 = vunpack.c.l.b16 %v354
      %v1115 = vunpack.c.l.b16 %v355
      %v1116 = vunpack.c.h.b16 %v355
      %v1117 = vunpack.c.l.b16 %v356
      %v1118 = vunpack.c.h.b16 %v356
      %v1119 = vunpack.c.l.b16 %v357
      %v1120 = vunpack.c.h.b16 %v357
      %v1121 = vunpack.c.l.b16 %v358
      %v1122 = vunpack.c.h.b16 %v358
      %v1123 = vunpack.c.l.b16 %v359
      %v1124 = vunpack.c.h.b16 %v359
      %v1125 = vunpack.c.l.b16 %v360
      %v1126 = vunpack.c.h.b16 %v360
      %v1127 = vunpack.c.l.b16 %v361
      %v1128 = vunpack.c.l.b16 %v362
      %v1129 = vunpack.c.h.b16 %v362
      %v1130 = vunpack.c.l.b16 %v363
      %v1131 = vunpack.c.h.b16 %v363
      %v1132 = vunpack.c.l.b16 %v364
      %v1133 = vunpack.c.h.b16 %v364
      %v1134 = vunpack.c.l.b16 %v365
      %v1135 = vunpack.c.h.b16 %v365
      %v1136 = vunpack.c.l.b16 %v366
      %v1137 = vunpack.c.h.b16 %v366
      %v1138 = vunpack.c.l.b16 %v367
      %v1139 = vunpack.c.h.b16 %v367
      %v1140 = vunpack.c.l.b16 %v368
      %v1141 = vunpack.c.l.b16 %v369
      %v1142 = vunpack.c.h.b16 %v369
      %v1143 = vunpack.c.l.b16 %v370
      %v1144 = vunpack.c.h.b16 %v370
      %v1145 = vunpack.c.l.b16 %v371
      %v1146 = vunpack.c.h.b16 %v371
      %v1147 = vunpack.c.l.b16 %v372
      %v1148 = vunpack.c.h.b16 %v372
      %v1149 = vunpack.c.l.b16 %v373
      %v1150 = vunpack.c.h.b16 %v373
      %v1151 = vunpack.c.l.b16 %v374
      %v1152 = vunpack.c.h.b16 %v374
      %v1153 = vunpack.c.l.b16 %v375
      %v1154 = vunpack.c.l.b16 %v376
      %v1155 = vunpack.c.h.b16 %v376
      %v1156 = vunpack.c.l.b16 %v377
      %v1157 = vunpack.c.h.b16 %v377
      %v1158 = vunpack.c.l.b16 %v378
      %v1159 = vunpack.c.h.b16 %v378
      %v1160 = vunpack.c.l.b16 %v379
      %v1161 = vunpack.c.h.b16 %v379
      %v1162 = vunpack.c.l.b16 %v380
      %v1163 = vunpack.c.h.b16 %v380
      %v1164 = vunpack.c.l.b16 %v381
      %v1165 = vunpack.c.h.b16 %v381
      %v1166 = vunpack.c.l.b16 %v382
      %v1167 = vunpack.c.l.b16 %v383
      %v1168 = vunpack.c.h.b16 %v383
      %v1169 = vunpack.c.l.b16 %v384
      %v1170 = vunpack.c.h.b16 %v384
      %v1171 = vunpack.c.l.b16 %v385
      %v1172 = vunpack.c.h.b16 %v385
      %v1173 = vunpack.c.l.b16 %v386
      %v1174 = vunpack.c.h.b16 %v386
      %v1175 = vunpack.c.l.b16 %v387
      %v1176 = vunpack.c.h.b16 %v387
      %v1177 = vunpack.c.l.b16 %v388
      %v1178 = vunpack.c.h.b16 %v388
      %v1179 = vunpack.c.l.b16 %v389
      %v1180 = vunpack.c.l.b16 %v390
      %v1181 = vunpack.c.h.b16 %v390
      %v1182 = vunpack.c.l.b16 %v391
      %v1183 = vunpack.c.h.b16 %v391
      %v1184 = vunpack.c.l.b16 %v392
      %v1185 = vunpack.c.h.b16 %v392
      %v1186 = vunpack.c.l.b16 %v393
      %v1187 = vunpack.c.h.b16 %v393
      %v1188 = vunpack.c.l.b16 %v394
      %v1189 = vunpack.c.h.b16 %v394
      %v1190 = vunpack.c.l.b16 %v395
      %v1191 = vunpack.c.h.b16 %v395
      %v1192 = vunpack.c.l.b16 %v396
      %v1193 = vunpack.c.l.b16 %v397
      %v1194 = vunpack.c.h.b16 %v397
      %v1195 = vunpack.c.l.b16 %v398
      %v1196 = vunpack.c.h.b16 %v398
      %v1197 = vunpack.c.l.b16 %v399
      %v1198 = vunpack.c.h.b16 %v399
      %v1199 = vunpack.c.l.b16 %v400
      %v1200 = vunpack.c.h.b16 %v400
      %v1201 = vunpack.c.l.b16 %v401
      %v1202 = vunpack.c.h.b16 %v401
      %v1203 = vunpack.c.l.b16 %v402
      %v1204 = vunpack.c.h.b16 %v402
      %v1205 = vunpack.c.l.b16 %v403
      %v1206 = vunpack.c.l.b16 %v404
      %v1207 = vunpack.c.h.b16 %v404
      %v1208 = vunpack.c.l.b16 %v405
      %v1209 = vunpack.c.h.b16 %v405
      %v1210 = vunpack.c.l.b16 %v406
      %v1211 = vunpack.c.h.b16 %v406
      %v1212 = vunpack.c.l.b16 %v407
      %v1213 = vunpack.c.h.b16 %v407
      %v1214 = vunpack.c.l.b16 %v408
      %v1215 = vunpack.c.h.b16 %v408
      %v1216 = vunpack.c.l.b16 %v409
      %v1217 = vunpack.c.h.b16 %v409
      %v1218 = vunpack.c.l.b16 %v410
      %v1219 = vunpack.c.l.b16 %v411
      %v1220 = vunpack.c.h.b16 %v411
      %v1221 = vunpack.c.l.b16 %v412
      %v1222 = vunpack.c.h.b16 %v412
      %v1223 = vunpack.c.l.b16 %v413
      %v1224 = vunpack.c.h.b16 %v413
      %v1225 = vunpack.c.l.b16 %v414
      %v1226 = vunpack.c.h.b16 %v414
      %v1227 = vunpack.c.l.b16 %v415
      %v1228 = vunpack.c.h.b16 %v415
      %v1229 = vunpack.c.l.b16 %v416
      %v1230 = vunpack.c.h.b16 %v416
      %v1231 = vunpack.c.l.b16 %v417
      %v1232 = vunpack.c.l.b16 %v418
      %v1233 = vunpack.c.h.b16 %v418
      %v1234 = vunpack.c.l.b16 %v419
      %v1235 = vunpack.c.h.b16 %v419
      %v1236 = vunpack.c.l.b16 %v420
      %v1237 = vunpack.c.h.b16 %v420
      %v1238 = vunpack.c.l.b16 %v421
      %v1239 = vunpack.c.h.b16 %v421
      %v1240 = vunpack.c.l.b16 %v422
      %v1241 = vunpack.c.h.b16 %v422
      %v1242 = vunpack.c.l.b16 %v423
      %v1243 = vunpack.c.h.b16 %v423
      %v1244 = vunpack.c.l.b16 %v424
      %v1245 = vunpack.c.l.b16 %v425
      %v1246 = vunpack.c.h.b16 %v425
      %v1247 = vunpack.c.l.b16 %v426
      %v1248 = vunpack.c.h.b16 %v426
      %v1249 = vunpack.c.l.b16 %v427
      %v1250 = vunpack.c.h.b16 %v427
      %v1251 = vunpack.c.l.b16 %v428
      %v1252 = vunpack.c.h.b16 %v428
      %v1253 = vunpack.c.l.b16 %v429
      %v1254 = vunpack.c.h.b16 %v429
      %v1255 = vunpack.c.l.b16 %v430
      %v1256 = vunpack.c.h.b16 %v430
      %v1257 = vunpack.c.l.b16 %v431
      %v1258 = vunpack.c.l.b16 %v432
      %v1259 = vunpack.c.h.b16 %v432
      %v1260 = vunpack.c.l.b16 %v433
      %v1261 = vunpack.c.h.b16 %v433
      %v1262 = vunpack.c.l.b16 %v434
      %v1263 = vunpack.c.h.b16 %v434
      %v1264 = vunpack.c.l.b16 %v435
      %v1265 = vunpack.c.h.b16 %v435
      %v1266 = vunpack.c.l.b16 %v436
      %v1267 = vunpack.c.h.b16 %v436
      %v1268 = vunpack.c.l.b16 %v437
      %v1269 = vunpack.c.h.b16 %v437
      %v1270 = vunpack.c.l.b16 %v438
      %v1271 = vunpack.c.l.b16 %v439
      %v1272 = vunpack.c.h.b16 %v439
      %v1273 = vunpack.c.l.b16 %v440
      %v1274 = vunpack.c.h.b16 %v440
      %v1275 = vunpack.c.l.b16 %v441
      %v1276 = vunpack.c.h.b16 %v441
      %v1277 = vunpack.c.l.b16 %v442
      %v1278 = vunpack.c.h.b16 %v442
      %v1279 = vunpack.c.l.b16 %v443
      %v1280 = vunpack.c.h.b16 %v443
      %v1281 = vunpack.c.l.b16 %v444
      %v1282 = vunpack.c.h.b16 %v444
      %v1283 = vunpack.c.l.b16 %v445
      %v1284 = vunpack.c.l.b16 %v446
      %v1285 = vunpack.c.h.b16 %v446
      %v1286 = vunpack.c.l.b16 %v447
      %v1287 = vunpack.c.h.b16 %v447
      %v1288 = vunpack.c.l.b16 %v448
      %v1289 = vunpack.c.h.b16 %v448
      %v1290 = vunpack.c.l.b16 %v449
      %v1291 = vunpack.c.h.b16 %v449
      %v1292 = vunpack.c.l.b16 %v450
      %v1293 = vunpack.c.h.b16 %v450
      %v1294 = vunpack.c.l.b16 %v451
      %v1295 = vunpack.c.h.b16 %v451
      %v1296 = vunpack.c.l.b16 %v452
      %v1297 = vpack.c.b16 %v894, %v881
      %v1298 = vpack.c.b16 %v895, %v882
      %v1299 = vpack.c.b16 %v896, %v883
      %v1300 = vpack.c.b16 %v897, %v884
      %v1301 = vpack.c.b16 %v898, %v885
      %v1302 = vpack.c.b16 %v899, %v886
      %v1303 = vpack.c.b16 %v900, %v887
      %v1304 = vpack.c.b16 %v901, %v888
      %v1305 = vpack.c.b16 %v902, %v889
      %v1306 = vpack.c.b16 %v903, %v890
      %v1307 = vpack.c.b16 %v904, %v891
      %v1308 = vpack.c.b16 %v905, %v892
      %v1309 = vpack.c.b16 %v906, %v893
      %v1310 = vpack.c.b16 %v920, %v907
      %v1311 = vpack.c.b16 %v921, %v908
      %v1312 = vpack.c.b16 %v922, %v909
      %v1313 = vpack.c.b16 %v923, %v910
      %v1314 = vpack.c.b16 %v924, %v911
      %v1315 = vpack.c.b16 %v925, %v912
      %v1316 = vpack.c.b16 %v926, %v913
      %v1317 = vpack.c.b16 %v927, %v914
      %v1318 = vpack.c.b16 %v928, %v915
      %v1319 = vpack.c.b16 %v929, %v916
      %v1320 = vpack.c.b16 %v930, %v917
      %v1321 = vpack.c.b16 %v931, %v918
      %v1322 = vpack.c.b16 %v932, %v919
      %v1323 = vpack.c.b16 %v946, %v933
      %v1324 = vpack.c.b16 %v947, %v934
      %v1325 = vpack.c.b16 %v948, %v935
      %v1326 = vpack.c.b16 %v949, %v936
      %v1327 = vpack.c.b16 %v950, %v937
      %v1328 = vpack.c.b16 %v951, %v938
      %v1329 = vpack.c.b16 %v952, %v939
      %v1330 = vpack.c.b16 %v953, %v940
      %v1331 = vpack.c.b16 %v954, %v941
      %v1332 = vpack.c.b16 %v955, %v942
      %v1333 = vpack.c.b16 %v956, %v943
      %v1334 = vpack.c.b16 %v957, %v944
      %v1335 = vpack.c.b16 %v958, %v945
      %v1336 = vpack.c.b16 %v972, %v959
      %v1337 = vpack.c.b16 %v973, %v960
      %v1338 = vpack.c.b16 %v974, %v961
      %v1339 = vpack.c.b16 %v975, %v962
      %v1340 = vpack.c.b16 %v976, %v963
      %v1341 = vpack.c.b16 %v977, %v964
      %v1342 = vpack.c.b16 %v978, %v965
      %v1343 = vpack.c.b16 %v979, %v966
      %v1344 = vpack.c.b16 %v980, %v967
      %v1345 = vpack.c.b16 %v981, %v968
      %v1346 = vpack.c.b16 %v982, %v969
      %v1347 = vpack.c.b16 %v983, %v970
      %v1348 = vpack.c.b16 %v984, %v971
      %v1349 = vpack.c.b16 %v998, %v985
      %v1350 = vpack.c.b16 %v999, %v986
      %v1351 = vpack.c.b16 %v1000, %v987
      %v1352 = vpack.c.b16 %v1001, %v988
      %v1353 = vpack.c.b16 %v1002, %v989
      %v1354 = vpack.c.b16 %v1003, %v990
      %v1355 = vpack.c.b16 %v1004, %v991
      %v1356 = vpack.c.b16 %v1005, %v992
      %v1357 = vpack.c.b16 %v1006, %v993
      %v1358 = vpack.c.b16 %v1007, %v994
      %v1359 = vpack.c.b16 %v1008, %v995
      %v1360 = vpack.c.b16 %v1009, %v996
      %v1361 = vpack.c.b16 %v1010, %v997
      %v1362 = vpack.c.b16 %v1024, %v1011
      %v1363 = vpack.c.b16 %v1025, %v1012
      %v1364 = vpack.c.b16 %v1026, %v1013
      %v1365 = vpack.c.b16 %v1027, %v1014
      %v1366 = vpack.c.b16 %v1028, %v1015
      %v1367 = vpack.c.b16 %v1029, %v1016
      %v1368 = vpack.c.b16 %v1030, %v1017
      %v1369 = vpack.c.b16 %v1031, %v1018
      %v1370 = vpack.c.b16 %v1032, %v1019
      %v1371 = vpack.c.b16 %v1033, %v1020
      %v1372 = vpack.c.b16 %v1034, %v1021
      %v1373 = vpack.c.b16 %v1035, %v1022
      %v1374 = vpack.c.b16 %v1036, %v1023
      %v1375 = vpack.c.b16 %v1050, %v1037
      %v1376 = vpack.c.b16 %v1051, %v1038
      %v1377 = vpack.c.b16 %v1052, %v1039
      %v1378 = vpack.c.b16 %v1053, %v1040
      %v1379 = vpack.c.b16 %v1054, %v1041
      %v1380 = vpack.c.b16 %v1055, %v1042
      %v1381 = vpack.c.b16 %v1056, %v1043
      %v1382 = vpack.c.b16 %v1057, %v1044
      %v1383 = vpack.c.b16 %v1058, %v1045
      %v1384 = vpack.c.b16 %v1059, %v1046
      %v1385 = vpack.c.b16 %v1060, %v1047
      %v1386 = vpack.c.b16 %v1061, %v1048
      %v1387 = vpack.c.b16 %v1062, %v1049
      %v1388 = vpack.c.b16 %v1076, %v1063
      %v1389 = vpack.c.b16 %v1077, %v1064
      %v1390 = vpack.c.b16 %v1078, %v1065
      %v1391 = vpack.c.b16 %v1079, %v1066
      %v1392 = vpack.c.b16 %v1080, %v1067
      %v1393 = vpack.c.b16 %v1081, %v1068
      %v1394 = vpack.c.b16 %v1082, %v1069
      %v1395 = vpack.c.b16 %v1083, %v1070
      %v1396 = vpack.c.b16 %v1084, %v1071
      %v1397 = vpack.c.b16 %v1085, %v1072
      %v1398 = vpack.c.b16 %v1086, %v1073
      %v1399 = vpack.c.b16 %v1087, %v1074
      %v1400 = vpack.c.b16 %v1088, %v1075
      %v1401 = vpack.c.b16 %v1102, %v1089
      %v1402 = vpack.c.b16 %v1103, %v1090
      %v1403 = vpack.c.b16 %v1104, %v1091
      %v1404 = vpack.c.b16 %v1105, %v1092
      %v1405 = vpack.c.b16 %v1106, %v1093
      %v1406 = vpack.c.b16 %v1107, %v1094
      %v1407 = vpack.c.b16 %v1108, %v1095
      %v1408 = vpack.c.b16 %v1109, %v1096
      %v1409 = vpack.c.b16 %v1110, %v1097
      %v1410 = vpack.c.b16 %v1111, %v1098
      %v1411 = vpack.c.b16 %v1112, %v1099
      %v1412 = vpack.c.b16 %v1113, %v1100
      %v1413 = vpack.c.b16 %v1114, %v1101
      %v1414 = vpack.c.b16 %v1128, %v1115
      %v1415 = vpack.c.b16 %v1129, %v1116
      %v1416 = vpack.c.b16 %v1130, %v1117
      %v1417 = vpack.c.b16 %v1131, %v1118
      %v1418 = vpack.c.b16 %v1132, %v1119
      %v1419 = vpack.c.b16 %v1133, %v1120
      %v1420 = vpack.c.b16 %v1134, %v1121
      %v1421 = vpack.c.b16 %v1135, %v1122
      %v1422 = vpack.c.b16 %v1136, %v1123
      %v1423 = vpack.c.b16 %v1137, %v1124
      %v1424 = vpack.c.b16 %v1138, %v1125
      %v1425 = vpack.c.b16 %v1139, %v1126
      %v1426 = vpack.c.b16 %v1140, %v1127
      %v1427 = vpack.c.b16 %v1154, %v1141
      %v1428 = vpack.c.b16 %v1155, %v1142
      %v1429 = vpack.c.b16 %v1156, %v1143
      %v1430 = vpack.c.b16 %v1157, %v1144
      %v1431 = vpack.c.b16 %v1158, %v1145
      %v1432 = vpack.c.b16 %v1159, %v1146
      %v1433 = vpack.c.b16 %v1160, %v1147
      %v1434 = vpack.c.b16 %v1161, %v1148
      %v1435 = vpack.c.b16 %v1162, %v1149
      %v1436 = vpack.c.b16 %v1163, %v1150
      %v1437 = vpack.c.b16 %v1164, %v1151
      %v1438 = vpack.c.b16 %v1165, %v1152
      %v1439 = vpack.c.b16 %v1166, %v1153
      %v1440 = vpack.c.b16 %v1180, %v1167
      %v1441 = vpack.c.b16 %v1181, %v1168
      %v1442 = vpack.c.b16 %v1182, %v1169
      %v1443 = vpack.c.b16 %v1183, %v1170
      %v1444 = vpack.c.b16 %v1184, %v1171
      %v1445 = vpack.c.b16 %v1185, %v1172
      %v1446 = vpack.c.b16 %v1186, %v1173
      %v1447 = vpack.c.b16 %v1187, %v1174
      %v1448 = vpack.c.b16 %v1188, %v1175
      %v1449 = vpack.c.b16 %v1189, %v1176
      %v1450 = vpack.c.b16 %v1190, %v1177
      %v1451 = vpack.c.b16 %v1191, %v1178
      %v1452 = vpack.c.b16 %v1192, %v1179
      %v1453 = vpack.c.b16 %v1206, %v1193
      %v1454 = vpack.c.b16 %v1207, %v1194
      %v1455 = vpack.c.b16 %v1208, %v1195
      %v1456 = vpack.c.b16 %v1209, %v1196
      %v1457 = vpack.c.b16 %v1210, %v1197
      %v1458 = vpack.c.b16 %v1211, %v1198
      %v1459 = vpack.c.b16 %v1212, %v1199
      %v1460 = vpack.c.b16 %v1213, %v1200
      %v1461 = vpack.c.b16 %v1214, %v1201
      %v1462 = vpack.c.b16 %v1215, %v1202
      %v1463 = vpack.c.b16 %v1216, %v1203
      %v1464 = vpack.c.b16 %v1217, %v1204
      %v1465 = vpack.c.b16 %v1218, %v1205
      %v1466 = vpack.c.b16 %v1232, %v1219
      %v1467 = vpack.c.b16 %v1233, %v1220
      %v1468 = vpack.c.b16 %v1234, %v1221
      %v1469 = vpack.c.b16 %v1235, %v1222
      %v1470 = vpack.c.b16 %v1236, %v1223
      %v1471 = vpack.c.b16 %v1237, %v1224
      %v1472 = vpack.c.b16 %v1238, %v1225
      %v1473 = vpack.c.b16 %v1239, %v1226
      %v1474 = vpack.c.b16 %v1240, %v1227
      %v1475 = vpack.c.b16 %v1241, %v1228
      %v1476 = vpack.c.b16 %v1242, %v1229
      %v1477 = vpack.c.b16 %v1243, %v1230
      %v1478 = vpack.c.b16 %v1244, %v1231
      %v1479 = vpack.c.b16 %v1258, %v1245
      %v1480 = vpack.c.b16 %v1259, %v1246
      %v1481 = vpack.c.b16 %v1260, %v1247
      %v1482 = vpack.c.b16 %v1261, %v1248
      %v1483 = vpack.c.b16 %v1262, %v1249
      %v1484 = vpack.c.b16 %v1263, %v1250
      %v1485 = vpack.c.b16 %v1264, %v1251
      %v1486 = vpack.c.b16 %v1265, %v1252
      %v1487 = vpack.c.b16 %v1266, %v1253
      %v1488 = vpack.c.b16 %v1267, %v1254
      %v1489 = vpack.c.b16 %v1268, %v1255
      %v1490 = vpack.c.b16 %v1269, %v1256
      %v1491 = vpack.c.b16 %v1270, %v1257
      %v1492 = vpack.c.b16 %v1284, %v1271
      %v1493 = vpack.c.b16 %v1285, %v1272
      %v1494 = vpack.c.b16 %v1286, %v1273
      %v1495 = vpack.c.b16 %v1287, %v1274
      %v1496 = vpack.c.b16 %v1288, %v1275
      %v1497 = vpack.c.b16 %v1289, %v1276
      %v1498 = vpack.c.b16 %v1290, %v1277
      %v1499 = vpack.c.b16 %v1291, %v1278
      %v1500 = vpack.c.b16 %v1292, %v1279
      %v1501 = vpack.c.b16 %v1293, %v1280
      %v1502 = vpack.c.b16 %v1294, %v1281
      %v1503 = vpack.c.b16 %v1295, %v1282
      %v1504 = vpack.c.b16 %v1296, %v1283
      %v1897 = vunpack.c.l.b16 %v453
      %v1898 = vunpack.c.l.b16 %v454
      %v1899 = vunpack.c.l.b16 %v455
      %v1900 = vunpack.c.l.b16 %v456
      %v1901 = vunpack.c.l.b16 %v457
      %v1902 = vunpack.c.l.b16 %v458
      %v1903 = vunpack.c.l.b16 %v459
      %v1904 = vunpack.c.l.b16 %v460
      %v1905 = vunpack.c.l.b16 %v461
      %v1906 = vunpack.c.l.b16 %v462
      %v1907 = vunpack.c.l.b16 %v463
      %v1908 = vunpack.c.l.b16 %v464
      %v1909 = vunpack.c.l.b16 %v465
      %v1910 = vunpack.c.l.b16 %v466
      %v1911 = vunpack.c.l.b16 %v467
      %v1912 = vunpack.c.l.b16 %v468
      %v1913 = vunpack.c.l.b16 %v469
      %v1914 = vunpack.c.l.b16 %v470
      %v1915 = vunpack.c.l.b16 %v471
      %v1916 = vunpack.c.l.b16 %v472
      %v1917 = vunpack.c.l.b16 %v473
      %v1918 = vunpack.c.l.b16 %v474
      %v1919 = vunpack.c.l.b16 %v475
      %v1920 = vunpack.c.l.b16 %v476
      %v1921 = vunpack.c.l.b16 %v477
      %v1922 = vunpack.c.l.b16 %v478
      %v1923 = vunpack.c.l.b16 %v479
      %v1924 = vunpack.c.l.b16 %v480
      %v1925 = vunpack.c.l.b16 %v481
      %v1926 = vunpack.c.l.b16 %v482
      %v1927 = vunpack.c.l.b16 %v483
      %v1928 = vunpack.c.l.b16 %v484
      %v1929 = vunpack.c.l.b16 %v485
      %v1930 = vunpack.c.l.b16 %v486
      %v1931 = vunpack.c.l.b16 %v487
      %v1932 = vunpack.c.l.b16 %v488
      %v1933 = vunpack.c.l.b16 %v489
      %v1934 = vunpack.c.l.b16 %v490
      %v1935 = vunpack.c.l.b16 %v491
      %v1936 = vunpack.c.l.b16 %v492
      %v1937 = vunpack.c.l.b16 %v493
      %v1938 = vunpack.c.l.b16 %v494
      %v1939 = vunpack.c.l.b16 %v495
      %v1940 = vunpack.c.l.b16 %v496
      %v1941 = vunpack.c.l.b16 %v497
      %v1942 = vunpack.c.l.b16 %v498
      %v1943 = vunpack.c.l.b16 %v499
      %v1944 = vunpack.c.l.b16 %v500
      %v1945 = vunpack.c.l.b16 %v501
      %v1946 = vunpack.c.l.b16 %v502
      %v1947 = vunpack.c.l.b16 %v503
      %v1948 = vunpack.c.l.b16 %v504
      %v1949 = vunpack.c.l.b16 %v505
      %v1950 = vunpack.c.l.b16 %v506
      %v1951 = vunpack.c.l.b16 %v507
      %v1952 = vunpack.c.l.b16 %v508
      %v1953 = vunpack.c.l.b16 %v509
      %v1954 = vunpack.c.l.b16 %v510
      %v1955 = vunpack.c.l.b16 %v511
      %v1956 = vunpack.c.l.b16 %v512
      %v1957 = vunpack.c.l.b16 %v513
      %v1958 = vunpack.c.l.b16 %v514
      %v1959 = vunpack.c.l.b16 %v515
      %v1960 = vunpack.c.l.b16 %v516
      %v1961 = vunpack.c.l.b16 %v517
      %v1962 = vunpack.c.l.b16 %v518
      %v1963 = vunpack.c.l.b16 %v519
      %v1964 = vunpack.c.l.b16 %v520
      %v1965 = vunpack.c.l.b16 %v521
      %v1966 = vunpack.c.l.b16 %v522
      %v1967 = vunpack.c.l.b16 %v523
      %v1968 = vunpack.c.l.b16 %v524
      %v1969 = vunpack.c.l.b16 %v525
      %v1970 = vunpack.c.l.b16 %v526
      %v1971 = vunpack.c.l.b16 %v527
      %v1972 = vunpack.c.l.b16 %v528
      %v1973 = vunpack.c.l.b16 %v529
      %v1974 = vunpack.c.l.b16 %v530
      %v1975 = vunpack.c.l.b16 %v531
      %v1976 = vunpack.c.l.b16 %v532
      %v1977 = vunpack.c.l.b16 %v533
      %v1978 = vunpack.c.l.b16 %v534
      %v1979 = vunpack.c.l.b16 %v535
      %v1980 = vunpack.c.l.b16 %v536
      %v1981 = vunpack.c.l.b16 %v537
      %v1982 = vunpack.c.l.b16 %v538
      %v1983 = vunpack.c.l.b16 %v539
      %v1984 = vunpack.c.l.b16 %v540
      %v1985 = vunpack.c.l.b16 %v541
      %v1986 = vunpack.c.l.b16 %v542
      %v1987 = vunpack.c.l.b16 %v543
      %v1988 = vunpack.c.l.b16 %v544
      %v1989 = vunpack.c.l.b16 %v545
      %v1990 = vunpack.c.l.b16 %v546
      %v1991 = vunpack.c.l.b16 %v547
      %v1992 = vunpack.c.l.b16 %v548
      %v1993 = vunpack.c.l.b16 %v549
      %v1994 = vunpack.c.l.b16 %v550
      %v1995 = vunpack.c.l.b16 %v551
      %v1996 = vunpack.c.l.b16 %v552
      %v1997 = vunpack.c.l.b16 %v553
      %v1998 = vunpack.c.l.b16 %v554
      %v1999 = vunpack.c.l.b16 %v555
      %v2000 = vunpack.c.l.b16 %v556
      %v2001 = vunpack.c.l.b16 %v557
      %v2002 = vunpack.c.l.b16 %v558
      %v2003 = vunpack.c.l.b16 %v559
      %v2004 = vunpack.c.l.b16 %v560
      %v2005 = vunpack.c.l.b16 %v561
      %v2006 = vunpack.c.l.b16 %v562
      %v2007 = vunpack.c.l.b16 %v563
      %v2008 = vunpack.c.l.b16 %v564
      %v2009 = vunpack.c.l.b16 %v565
      %v2010 = vunpack.c.l.b16 %v566
      %v2011 = vunpack.c.l.b16 %v567
      %v2012 = vunpack.c.l.b16 %v568
      %v2013 = vunpack.c.l.b16 %v569
      %v2014 = vunpack.c.l.b16 %v570
      %v2015 = vunpack.c.l.b16 %v571
      %v2016 = vunpack.c.l.b16 %v572
      %v2017 = vunpack.c.l.b16 %v573
      %v2018 = vunpack.c.l.b16 %v574
      %v2019 = vunpack.c.l.b16 %v575
      %v2020 = vunpack.c.l.b16 %v576
      %v2021 = vunpack.c.l.b16 %v577
      %v2022 = vunpack.c.l.b16 %v578
      %v2023 = vunpack.c.l.b16 %v579
      %v2024 = vunpack.c.l.b16 %v580
      %v2025 = vunpack.c.l.b16 %v581
      %v2026 = vunpack.c.l.b16 %v582
      %v2027 = vunpack.c.l.b16 %v583
      %v2028 = vunpack.c.l.b16 %v584
      %v2029 = vunpack.c.l.b16 %v585
      %v2030 = vunpack.c.l.b16 %v586
      %v2031 = vunpack.c.l.b16 %v587
      %v2032 = vunpack.c.l.b16 %v588
      %v2033 = vunpack.c.l.b16 %v589
      %v2034 = vunpack.c.l.b16 %v590
      %v2035 = vunpack.c.l.b16 %v591
      %v2036 = vunpack.c.l.b16 %v592
      %v2037 = vunpack.c.l.b16 %v593
      %v2038 = vunpack.c.l.b16 %v594
      %v2039 = vunpack.c.l.b16 %v595
      %v2040 = vunpack.c.l.b16 %v596
      %v2041 = vunpack.c.l.b16 %v597
      %v2042 = vunpack.c.l.b16 %v598
      %v2043 = vunpack.c.l.b16 %v599
      %v2044 = vunpack.c.l.b16 %v600
      %v2045 = vunpack.c.l.b16 %v601
      %v2046 = vunpack.c.l.b16 %v602
      %v2047 = vunpack.c.l.b16 %v603
      %v2048 = vunpack.c.l.b16 %v604
      %v2049 = vunpack.c.l.b16 %v605
      %v2050 = vunpack.c.l.b16 %v606
      %v2051 = vunpack.c.l.b16 %v607
      %v2052 = vunpack.c.l.b16 %v608
      %v2053 = vunpack.c.l.b16 %v609
      %v2054 = vunpack.c.l.b16 %v610
      %v2055 = vunpack.c.l.b16 %v611
      %v2056 = vunpack.c.l.b16 %v612
      %v2057 = vunpack.c.l.b16 %v613
      %v2058 = vunpack.c.l.b16 %v614
      %v2059 = vunpack.c.l.b16 %v615
      %v2060 = vunpack.c.l.b16 %v616
      %v2061 = vunpack.c.l.b16 %v617
      %v2062 = vunpack.c.l.b16 %v618
      %v2063 = vunpack.c.l.b16 %v619
      %v2064 = vunpack.c.l.b16 %v620
      %v2065 = vunpack.c.l.b16 %v621
      %v2066 = vunpack.c.l.b16 %v622
      %v2067 = vunpack.c.l.b16 %v623
      %v2068 = vunpack.c.l.b16 %v624
      %v2069 = vunpack.c.l.b16 %v625
      %v2070 = vunpack.c.l.b16 %v626
      %v2071 = vunpack.c.l.b16 %v627
      %v2072 = vunpack.c.l.b16 %v628
      %v2073 = vunpack.c.l.b16 %v629
      %v2074 = vunpack.c.l.b16 %v630
      %v2075 = vunpack.c.l.b16 %v631
      %v2076 = vunpack.c.l.b16 %v632
      %v2077 = vunpack.c.l.b16 %v633
      %v2078 = vunpack.c.l.b16 %v634
      %v2079 = vunpack.c.l.b16 %v635
      %v2080 = vunpack.c.l.b16 %v636
      %v2081 = vunpack.c.l.b16 %v637
      %v2082 = vunpack.c.l.b16 %v638
      %v2083 = vunpack.c.l.b16 %v639
      %v2084 = vunpack.c.l.b16 %v640
      %v2085 = vunpack.c.l.b16 %v641
      %v2086 = vunpack.c.l.b16 %v642
      %v2087 = vunpack.c.l.b16 %v643
      %v2088 = vunpack.c.l.b16 %v644
      %v2089 = vunpack.c.l.b16 %v645
      %v2090 = vunpack.c.l.b16 %v646
      %v2091 = vunpack.c.l.b16 %v647
      %v2092 = vunpack.c.l.b16 %v648
      %v2093 = vunpack.c.l.b16 %v649
      %v2094 = vunpack.c.l.b16 %v650
      %v2095 = vunpack.c.l.b16 %v651
      %v2096 = vunpack.c.l.b16 %v652
      %v2097 = vpack.c.b16 %v1898, %v1897
      %v2098 = vpack.c.b16 %v1900, %v1899
      %v2099 = vpack.c.b16 %v1902, %v1901
      %v2100 = vpack.c.b16 %v1904, %v1903
      %v2101 = vpack.c.b16 %v1906, %v1905
      %v2102 = vpack.c.b16 %v1908, %v1907
      %v2103 = vpack.c.b16 %v1910, %v1909
      %v2104 = vpack.c.b16 %v1912, %v1911
      %v2105 = vpack.c.b16 %v1914, %v1913
      %v2106 = vpack.c.b16 %v1916, %v1915
      %v2107 = vpack.c.b16 %v1918, %v1917
      %v2108 = vpack.c.b16 %v1920, %v1919
      %v2109 = vpack.c.b16 %v1922, %v1921
      %v2110 = vpack.c.b16 %v1924, %v1923
      %v2111 = vpack.c.b16 %v1926, %v1925
      %v2112 = vpack.c.b16 %v1928, %v1927
      %v2113 = vpack.c.b16 %v1930, %v1929
      %v2114 = vpack.c.b16 %v1932, %v1931
      %v2115 = vpack.c.b16 %v1934, %v1933
      %v2116 = vpack.c.b16 %v1936, %v1935
      %v2117 = vpack.c.b16 %v1938, %v1937
      %v2118 = vpack.c.b16 %v1940, %v1939
      %v2119 = vpack.c.b16 %v1942, %v1941
      %v2120 = vpack.c.b16 %v1944, %v1943
      %v2121 = vpack.c.b16 %v1946, %v1945
      %v2122 = vpack.c.b16 %v1948, %v1947
      %v2123 = vpack.c.b16 %v1950, %v1949
      %v2124 = vpack.c.b16 %v1952, %v1951
      %v2125 = vpack.c.b16 %v1954, %v1953
      %v2126 = vpack.c.b16 %v1956, %v1955
      %v2127 = vpack.c.b16 %v1958, %v1957
      %v2128 = vpack.c.b16 %v1960, %v1959
      %v2129 = vpack.c.b16 %v1962, %v1961
      %v2130 = vpack.c.b16 %v1964, %v1963
      %v2131 = vpack.c.b16 %v1966, %v1965
      %v2132 = vpack.c.b16 %v1968, %v1967
      %v2133 = vpack.c.b16 %v1970, %v1969
      %v2134 = vpack.c.b16 %v1972, %v1971
      %v2135 = vpack.c.b16 %v1974, %v1973
      %v2136 = vpack.c.b16 %v1976, %v1975
      %v2137 = vpack.c.b16 %v1978, %v1977
      %v2138 = vpack.c.b16 %v1980, %v1979
      %v2139 = vpack.c.b16 %v1982, %v1981
      %v2140 = vpack.c.b16 %v1984, %v1983
      %v2141 = vpack.c.b16 %v1986, %v1985
      %v2142 = vpack.c.b16 %v1988, %v1987
      %v2143 = vpack.c.b16 %v1990, %v1989
      %v2144 = vpack.c.b16 %v1992, %v1991
      %v2145 = vpack.c.b16 %v1994, %v1993
      %v2146 = vpack.c.b16 %v1996, %v1995
      %v2147 = vpack.c.b16 %v1998, %v1997
      %v2148 = vpack.c.b16 %v2000, %v1999
      %v2149 = vpack.c.b16 %v2002, %v2001
      %v2150 = vpack.c.b16 %v2004, %v2003
      %v2151 = vpack.c.b16 %v2006, %v2005
      %v2152 = vpack.c.b16 %v2008, %v2007
      %v2153 = vpack.c.b16 %v2010, %v2009
      %v2154 = vpack.c.b16 %v2012, %v2011
      %v2155 = vpack.c.b16 %v2014, %v2013
      %v2156 = vpack.c.b16 %v2016, %v2015
      %v2157 = vpack.c.b16 %v2018, %v2017
      %v2158 = vpack.c.b16 %v2020, %v2019
      %v2159 = vpack.c.b16 %v2022, %v2021
      %v2160 = vpack.c.b16 %v2024, %v2023
      %v2161 = vpack.c.b16 %v2026, %v2025
      %v2162 = vpack.c.b16 %v2028, %v2027
      %v2163 = vpack.c.b16 %v2030, %v2029
      %v2164 = vpack.c.b16 %v2032, %v2031
      %v2165 = vpack.c.b16 %v2034, %v2033
      %v2166 = vpack.c.b16 %v2036, %v2035
      %v2167 = vpack.c.b16 %v2038, %v2037
      %v2168 = vpack.c.b16 %v2040, %v2039
      %v2169 = vpack.c.b16 %v2042, %v2041
      %v2170 = vpack.c.b16 %v2044, %v2043
      %v2171 = vpack.c.b16 %v2046, %v2045
      %v2172 = vpack.c.b16 %v2048, %v2047
      %v2173 = vpack.c.b16 %v2050, %v2049
      %v2174 = vpack.c.b16 %v2052, %v2051
      %v2175 = vpack.c.b16 %v2054, %v2053
      %v2176 = vpack.c.b16 %v2056, %v2055
      %v2177 = vpack.c.b16 %v2058, %v2057
      %v2178 = vpack.c.b16 %v2060, %v2059
      %v2179 = vpack.c.b16 %v2062, %v2061
      %v2180 = vpack.c.b16 %v2064, %v2063
      %v2181 = vpack.c.b16 %v2066, %v2065
      %v2182 = vpack.c.b16 %v2068, %v2067
      %v2183 = vpack.c.b16 %v2070, %v2069
      %v2184 = vpack.c.b16 %v2072, %v2071
      %v2185 = vpack.c.b16 %v2074, %v2073
      %v2186 = vpack.c.b16 %v2076, %v2075
      %v2187 = vpack.c.b16 %v2078, %v2077
      %v2188 = vpack.c.b16 %v2080, %v2079
      %v2189 = vpack.c.b16 %v2082, %v2081
      %v2190 = vpack.c.b16 %v2084, %v2083
      %v2191 = vpack.c.b16 %v2086, %v2085
      %v2192 = vpack.c.b16 %v2088, %v2087
      %v2193 = vpack.c.b16 %v2090, %v2089
      %v2194 = vpack.c.b16 %v2092, %v2091
      %v2195 = vpack.c.b16 %v2094, %v2093
      %v2196 = vpack.c.b16 %v2096, %v2095
      %vm2297 = vcmask 523264
      %v2299 = vsel %vm2297, %v1309, 0
      %v2302 = vsel %vm2297, %v1322, 0
      %v2305 = vsel %vm2297, %v1335, 0
      %v2308 = vsel %vm2297, %v1348, 0
      %v2311 = vsel %vm2297, %v1361, 0
      %v2314 = vsel %vm2297, %v1374, 0
      %v2317 = vsel %vm2297, %v1387, 0
      %v2320 = vsel %vm2297, %v1400, 0
      %v2323 = vsel %vm2297, %v1413, 0
      %v2326 = vsel %vm2297, %v1426, 0
      %v2329 = vsel %vm2297, %v1439, 0
      %v2332 = vsel %vm2297, %v1452, 0
      %v2335 = vsel %vm2297, %v1465, 0
      %v2338 = vsel %vm2297, %v1478, 0
      %v2341 = vsel %vm2297, %v1491, 0
      %v2344 = vsel %vm2297, %v1504, 0
      %2346 = vmatpush.bf16.msra.mxu0 %v2104
      %2347 = vmatpush.bf16.msra.mxu0 %v2103
      %2348 = vmatpush.bf16.msra.mxu0 %v2102
      %2349 = vmatpush.bf16.msra.mxu0 %v2101
      %2350 = vmatpush.bf16.msra.mxu0 %v2100
      %2351 = vmatpush.bf16.msra.mxu0 %v2099
      %2352 = vmatpush.bf16.msra.mxu0 %v2098
      %2353 = vmatpush.bf16.msra.mxu0 %v2097
      %2354 = vmatmul.bf16.gmra.mxu0 %v1297
      %v2355 = vpop.f32.mrf.mxu0
      %v2356 = vadd.f32 %v655, %v2355
      %v2357 = vpop.f32.mrf.mxu0
      %v2358 = vadd.f32 %v655, %v2357
      %2359 = vmatmul.bf16.gmra.mxu0 %v1310
      %v2360 = vpop.f32.mrf.mxu0
      %v2361 = vadd.f32 %v655, %v2360
      %v2362 = vpop.f32.mrf.mxu0
      %v2363 = vadd.f32 %v655, %v2362
      %2364 = vmatmul.bf16.gmra.mxu0 %v1323
      %v2365 = vpop.f32.mrf.mxu0
      %v2366 = vadd.f32 %v655, %v2365
      %v2367 = vpop.f32.mrf.mxu0
      %v2368 = vadd.f32 %v655, %v2367
      %2369 = vmatmul.bf16.gmra.mxu0 %v1336
      %v2370 = vpop.f32.mrf.mxu0
      %v2371 = vadd.f32 %v655, %v2370
      %v2372 = vpop.f32.mrf.mxu0
      %v2373 = vadd.f32 %v655, %v2372
      %2374 = vmatmul.bf16.gmra.mxu0 %v1349
      %v2375 = vpop.f32.mrf.mxu0
      %v2376 = vadd.f32 %v655, %v2375
      %v2377 = vpop.f32.mrf.mxu0
      %v2378 = vadd.f32 %v655, %v2377
      %2379 = vmatmul.bf16.gmra.mxu0 %v1362
      %v2380 = vpop.f32.mrf.mxu0
      %v2381 = vadd.f32 %v655, %v2380
      %v2382 = vpop.f32.mrf.mxu0
      %v2383 = vadd.f32 %v655, %v2382
      %2384 = vmatmul.bf16.gmra.mxu0 %v1375
      %v2385 = vpop.f32.mrf.mxu0
      %v2386 = vadd.f32 %v655, %v2385
      %v2387 = vpop.f32.mrf.mxu0
      %v2388 = vadd.f32 %v655, %v2387
      %2389 = vmatmul.bf16.gmra.mxu0 %v1388
      %v2390 = vpop.f32.mrf.mxu0
      %v2391 = vadd.f32 %v655, %v2390
      %v2392 = vpop.f32.mrf.mxu0
      %v2393 = vadd.f32 %v655, %v2392
      %2394 = vmatmul.bf16.gmra.mxu0 %v1401
      %v2395 = vpop.f32.mrf.mxu0
      %v2396 = vadd.f32 %v655, %v2395
      %v2397 = vpop.f32.mrf.mxu0
      %v2398 = vadd.f32 %v655, %v2397
      %2399 = vmatmul.bf16.gmra.mxu0 %v1414
      %v2400 = vpop.f32.mrf.mxu0
      %v2401 = vadd.f32 %v655, %v2400
      %v2402 = vpop.f32.mrf.mxu0
      %v2403 = vadd.f32 %v655, %v2402
      %2404 = vmatmul.bf16.gmra.mxu0 %v1427
      %v2405 = vpop.f32.mrf.mxu0
      %v2406 = vadd.f32 %v655, %v2405
      %v2407 = vpop.f32.mrf.mxu0
      %v2408 = vadd.f32 %v655, %v2407
      %2409 = vmatmul.bf16.gmra.mxu0 %v1440
      %v2410 = vpop.f32.mrf.mxu0
      %v2411 = vadd.f32 %v655, %v2410
      %v2412 = vpop.f32.mrf.mxu0
      %v2413 = vadd.f32 %v655, %v2412
      %2414 = vmatmul.bf16.gmra.mxu0 %v1453
      %v2415 = vpop.f32.mrf.mxu0
      %v2416 = vadd.f32 %v655, %v2415
      %v2417 = vpop.f32.mrf.mxu0
      %v2418 = vadd.f32 %v655, %v2417
      %2419 = vmatmul.bf16.gmra.mxu0 %v1466
      %v2420 = vpop.f32.mrf.mxu0
      %v2421 = vadd.f32 %v655, %v2420
      %v2422 = vpop.f32.mrf.mxu0
      %v2423 = vadd.f32 %v655, %v2422
      %2424 = vmatmul.bf16.gmra.mxu0 %v1479
      %v2425 = vpop.f32.mrf.mxu0
      %v2426 = vadd.f32 %v655, %v2425
      %v2427 = vpop.f32.mrf.mxu0
      %v2428 = vadd.f32 %v655, %v2427
      %2429 = vmatmul.bf16.gmra.mxu0 %v1492
      %v2430 = vpop.f32.mrf.mxu0
      %v2431 = vadd.f32 %v655, %v2430
      %v2432 = vpop.f32.mrf.mxu0
      %v2433 = vadd.f32 %v655, %v2432
      %2434 = vdwg.mxu0
      %2435 = vmatpush.bf16.msra.mxu0 %v2112
      %2436 = vmatpush.bf16.msra.mxu0 %v2111
      %2437 = vmatpush.bf16.msra.mxu0 %v2110
      %2438 = vmatpush.bf16.msra.mxu0 %v2109
      %2439 = vmatpush.bf16.msra.mxu0 %v2108
      %2440 = vmatpush.bf16.msra.mxu0 %v2107
      %2441 = vmatpush.bf16.msra.mxu0 %v2106
      %2442 = vmatpush.bf16.msra.mxu0 %v2105
      %2443 = vmatmul.bf16.gmra.mxu0 %v1298
      %v2444 = vpop.f32.mrf.mxu0
      %v2445 = vadd.f32 %v2356, %v2444
      %v2446 = vpop.f32.mrf.mxu0
      %v2447 = vadd.f32 %v2358, %v2446
      %2448 = vmatmul.bf16.gmra.mxu0 %v1311
      %v2449 = vpop.f32.mrf.mxu0
      %v2450 = vadd.f32 %v2361, %v2449
      %v2451 = vpop.f32.mrf.mxu0
      %v2452 = vadd.f32 %v2363, %v2451
      %2453 = vmatmul.bf16.gmra.mxu0 %v1324
      %v2454 = vpop.f32.mrf.mxu0
      %v2455 = vadd.f32 %v2366, %v2454
      %v2456 = vpop.f32.mrf.mxu0
      %v2457 = vadd.f32 %v2368, %v2456
      %2458 = vmatmul.bf16.gmra.mxu0 %v1337
      %v2459 = vpop.f32.mrf.mxu0
      %v2460 = vadd.f32 %v2371, %v2459
      %v2461 = vpop.f32.mrf.mxu0
      %v2462 = vadd.f32 %v2373, %v2461
      %2463 = vmatmul.bf16.gmra.mxu0 %v1350
      %v2464 = vpop.f32.mrf.mxu0
      %v2465 = vadd.f32 %v2376, %v2464
      %v2466 = vpop.f32.mrf.mxu0
      %v2467 = vadd.f32 %v2378, %v2466
      %2468 = vmatmul.bf16.gmra.mxu0 %v1363
      %v2469 = vpop.f32.mrf.mxu0
      %v2470 = vadd.f32 %v2381, %v2469
      %v2471 = vpop.f32.mrf.mxu0
      %v2472 = vadd.f32 %v2383, %v2471
      %2473 = vmatmul.bf16.gmra.mxu0 %v1376
      %v2474 = vpop.f32.mrf.mxu0
      %v2475 = vadd.f32 %v2386, %v2474
      %v2476 = vpop.f32.mrf.mxu0
      %v2477 = vadd.f32 %v2388, %v2476
      %2478 = vmatmul.bf16.gmra.mxu0 %v1389
      %v2479 = vpop.f32.mrf.mxu0
      %v2480 = vadd.f32 %v2391, %v2479
      %v2481 = vpop.f32.mrf.mxu0
      %v2482 = vadd.f32 %v2393, %v2481
      %2483 = vmatmul.bf16.gmra.mxu0 %v1402
      %v2484 = vpop.f32.mrf.mxu0
      %v2485 = vadd.f32 %v2396, %v2484
      %v2486 = vpop.f32.mrf.mxu0
      %v2487 = vadd.f32 %v2398, %v2486
      %2488 = vmatmul.bf16.gmra.mxu0 %v1415
      %v2489 = vpop.f32.mrf.mxu0
      %v2490 = vadd.f32 %v2401, %v2489
      %v2491 = vpop.f32.mrf.mxu0
      %v2492 = vadd.f32 %v2403, %v2491
      %2493 = vmatmul.bf16.gmra.mxu0 %v1428
      %v2494 = vpop.f32.mrf.mxu0
      %v2495 = vadd.f32 %v2406, %v2494
      %v2496 = vpop.f32.mrf.mxu0
      %v2497 = vadd.f32 %v2408, %v2496
      %2498 = vmatmul.bf16.gmra.mxu0 %v1441
      %v2499 = vpop.f32.mrf.mxu0
      %v2500 = vadd.f32 %v2411, %v2499
      %v2501 = vpop.f32.mrf.mxu0
      %v2502 = vadd.f32 %v2413, %v2501
      %2503 = vmatmul.bf16.gmra.mxu0 %v1454
      %v2504 = vpop.f32.mrf.mxu0
      %v2505 = vadd.f32 %v2416, %v2504
      %v2506 = vpop.f32.mrf.mxu0
      %v2507 = vadd.f32 %v2418, %v2506
      %2508 = vmatmul.bf16.gmra.mxu0 %v1467
      %v2509 = vpop.f32.mrf.mxu0
      %v2510 = vadd.f32 %v2421, %v2509
      %v2511 = vpop.f32.mrf.mxu0
      %v2512 = vadd.f32 %v2423, %v2511
      %2513 = vmatmul.bf16.gmra.mxu0 %v1480
      %v2514 = vpop.f32.mrf.mxu0
      %v2515 = vadd.f32 %v2426, %v2514
      %v2516 = vpop.f32.mrf.mxu0
      %v2517 = vadd.f32 %v2428, %v2516
      %2518 = vmatmul.bf16.gmra.mxu0 %v1493
      %v2519 = vpop.f32.mrf.mxu0
      %v2520 = vadd.f32 %v2431, %v2519
      %v2521 = vpop.f32.mrf.mxu0
      %v2522 = vadd.f32 %v2433, %v2521
      %2523 = vdwg.mxu0
      %2524 = vmatpush.bf16.msra.mxu0 %v2120
      %2525 = vmatpush.bf16.msra.mxu0 %v2119
      %2526 = vmatpush.bf16.msra.mxu0 %v2118
      %2527 = vmatpush.bf16.msra.mxu0 %v2117
      %2528 = vmatpush.bf16.msra.mxu0 %v2116
      %2529 = vmatpush.bf16.msra.mxu0 %v2115
      %2530 = vmatpush.bf16.msra.mxu0 %v2114
      %2531 = vmatpush.bf16.msra.mxu0 %v2113
      %2532 = vmatmul.bf16.gmra.mxu0 %v1299
      %v2533 = vpop.f32.mrf.mxu0
      %v2534 = vadd.f32 %v2445, %v2533
      %v2535 = vpop.f32.mrf.mxu0
      %v2536 = vadd.f32 %v2447, %v2535
      %2537 = vmatmul.bf16.gmra.mxu0 %v1312
      %v2538 = vpop.f32.mrf.mxu0
      %v2539 = vadd.f32 %v2450, %v2538
      %v2540 = vpop.f32.mrf.mxu0
      %v2541 = vadd.f32 %v2452, %v2540
      %2542 = vmatmul.bf16.gmra.mxu0 %v1325
      %v2543 = vpop.f32.mrf.mxu0
      %v2544 = vadd.f32 %v2455, %v2543
      %v2545 = vpop.f32.mrf.mxu0
      %v2546 = vadd.f32 %v2457, %v2545
      %2547 = vmatmul.bf16.gmra.mxu0 %v1338
      %v2548 = vpop.f32.mrf.mxu0
      %v2549 = vadd.f32 %v2460, %v2548
      %v2550 = vpop.f32.mrf.mxu0
      %v2551 = vadd.f32 %v2462, %v2550
      %2552 = vmatmul.bf16.gmra.mxu0 %v1351
      %v2553 = vpop.f32.mrf.mxu0
      %v2554 = vadd.f32 %v2465, %v2553
      %v2555 = vpop.f32.mrf.mxu0
      %v2556 = vadd.f32 %v2467, %v2555
      %2557 = vmatmul.bf16.gmra.mxu0 %v1364
      %v2558 = vpop.f32.mrf.mxu0
      %v2559 = vadd.f32 %v2470, %v2558
      %v2560 = vpop.f32.mrf.mxu0
      %v2561 = vadd.f32 %v2472, %v2560
      %2562 = vmatmul.bf16.gmra.mxu0 %v1377
      %v2563 = vpop.f32.mrf.mxu0
      %v2564 = vadd.f32 %v2475, %v2563
      %v2565 = vpop.f32.mrf.mxu0
      %v2566 = vadd.f32 %v2477, %v2565
      %2567 = vmatmul.bf16.gmra.mxu0 %v1390
      %v2568 = vpop.f32.mrf.mxu0
      %v2569 = vadd.f32 %v2480, %v2568
      %v2570 = vpop.f32.mrf.mxu0
      %v2571 = vadd.f32 %v2482, %v2570
      %2572 = vmatmul.bf16.gmra.mxu0 %v1403
      %v2573 = vpop.f32.mrf.mxu0
      %v2574 = vadd.f32 %v2485, %v2573
      %v2575 = vpop.f32.mrf.mxu0
      %v2576 = vadd.f32 %v2487, %v2575
      %2577 = vmatmul.bf16.gmra.mxu0 %v1416
      %v2578 = vpop.f32.mrf.mxu0
      %v2579 = vadd.f32 %v2490, %v2578
      %v2580 = vpop.f32.mrf.mxu0
      %v2581 = vadd.f32 %v2492, %v2580
      %2582 = vmatmul.bf16.gmra.mxu0 %v1429
      %v2583 = vpop.f32.mrf.mxu0
      %v2584 = vadd.f32 %v2495, %v2583
      %v2585 = vpop.f32.mrf.mxu0
      %v2586 = vadd.f32 %v2497, %v2585
      %2587 = vmatmul.bf16.gmra.mxu0 %v1442
      %v2588 = vpop.f32.mrf.mxu0
      %v2589 = vadd.f32 %v2500, %v2588
      %v2590 = vpop.f32.mrf.mxu0
      %v2591 = vadd.f32 %v2502, %v2590
      %2592 = vmatmul.bf16.gmra.mxu0 %v1455
      %v2593 = vpop.f32.mrf.mxu0
      %v2594 = vadd.f32 %v2505, %v2593
      %v2595 = vpop.f32.mrf.mxu0
      %v2596 = vadd.f32 %v2507, %v2595
      %2597 = vmatmul.bf16.gmra.mxu0 %v1468
      %v2598 = vpop.f32.mrf.mxu0
      %v2599 = vadd.f32 %v2510, %v2598
      %v2600 = vpop.f32.mrf.mxu0
      %v2601 = vadd.f32 %v2512, %v2600
      %2602 = vmatmul.bf16.gmra.mxu0 %v1481
      %v2603 = vpop.f32.mrf.mxu0
      %v2604 = vadd.f32 %v2515, %v2603
      %v2605 = vpop.f32.mrf.mxu0
      %v2606 = vadd.f32 %v2517, %v2605
      %2607 = vmatmul.bf16.gmra.mxu0 %v1494
      %v2608 = vpop.f32.mrf.mxu0
      %v2609 = vadd.f32 %v2520, %v2608
      %v2610 = vpop.f32.mrf.mxu0
      %v2611 = vadd.f32 %v2522, %v2610
      %2612 = vdwg.mxu0
      %2613 = vmatpush.bf16.msra.mxu0 %v2128
      %2614 = vmatpush.bf16.msra.mxu0 %v2127
      %2615 = vmatpush.bf16.msra.mxu0 %v2126
      %2616 = vmatpush.bf16.msra.mxu0 %v2125
      %2617 = vmatpush.bf16.msra.mxu0 %v2124
      %2618 = vmatpush.bf16.msra.mxu0 %v2123
      %2619 = vmatpush.bf16.msra.mxu0 %v2122
      %2620 = vmatpush.bf16.msra.mxu0 %v2121
      %2621 = vmatmul.bf16.gmra.mxu0 %v1300
      %v2622 = vpop.f32.mrf.mxu0
      %v2623 = vadd.f32 %v2534, %v2622
      %v2624 = vpop.f32.mrf.mxu0
      %v2625 = vadd.f32 %v2536, %v2624
      %2626 = vmatmul.bf16.gmra.mxu0 %v1313
      %v2627 = vpop.f32.mrf.mxu0
      %v2628 = vadd.f32 %v2539, %v2627
      %v2629 = vpop.f32.mrf.mxu0
      %v2630 = vadd.f32 %v2541, %v2629
      %2631 = vmatmul.bf16.gmra.mxu0 %v1326
      %v2632 = vpop.f32.mrf.mxu0
      %v2633 = vadd.f32 %v2544, %v2632
      %v2634 = vpop.f32.mrf.mxu0
      %v2635 = vadd.f32 %v2546, %v2634
      %2636 = vmatmul.bf16.gmra.mxu0 %v1339
      %v2637 = vpop.f32.mrf.mxu0
      %v2638 = vadd.f32 %v2549, %v2637
      %v2639 = vpop.f32.mrf.mxu0
      %v2640 = vadd.f32 %v2551, %v2639
      %2641 = vmatmul.bf16.gmra.mxu0 %v1352
      %v2642 = vpop.f32.mrf.mxu0
      %v2643 = vadd.f32 %v2554, %v2642
      %v2644 = vpop.f32.mrf.mxu0
      %v2645 = vadd.f32 %v2556, %v2644
      %2646 = vmatmul.bf16.gmra.mxu0 %v1365
      %v2647 = vpop.f32.mrf.mxu0
      %v2648 = vadd.f32 %v2559, %v2647
      %v2649 = vpop.f32.mrf.mxu0
      %v2650 = vadd.f32 %v2561, %v2649
      %2651 = vmatmul.bf16.gmra.mxu0 %v1378
      %v2652 = vpop.f32.mrf.mxu0
      %v2653 = vadd.f32 %v2564, %v2652
      %v2654 = vpop.f32.mrf.mxu0
      %v2655 = vadd.f32 %v2566, %v2654
      %2656 = vmatmul.bf16.gmra.mxu0 %v1391
      %v2657 = vpop.f32.mrf.mxu0
      %v2658 = vadd.f32 %v2569, %v2657
      %v2659 = vpop.f32.mrf.mxu0
      %v2660 = vadd.f32 %v2571, %v2659
      %2661 = vmatmul.bf16.gmra.mxu0 %v1404
      %v2662 = vpop.f32.mrf.mxu0
      %v2663 = vadd.f32 %v2574, %v2662
      %v2664 = vpop.f32.mrf.mxu0
      %v2665 = vadd.f32 %v2576, %v2664
      %2666 = vmatmul.bf16.gmra.mxu0 %v1417
      %v2667 = vpop.f32.mrf.mxu0
      %v2668 = vadd.f32 %v2579, %v2667
      %v2669 = vpop.f32.mrf.mxu0
      %v2670 = vadd.f32 %v2581, %v2669
      %2671 = vmatmul.bf16.gmra.mxu0 %v1430
      %v2672 = vpop.f32.mrf.mxu0
      %v2673 = vadd.f32 %v2584, %v2672
      %v2674 = vpop.f32.mrf.mxu0
      %v2675 = vadd.f32 %v2586, %v2674
      %2676 = vmatmul.bf16.gmra.mxu0 %v1443
      %v2677 = vpop.f32.mrf.mxu0
      %v2678 = vadd.f32 %v2589, %v2677
      %v2679 = vpop.f32.mrf.mxu0
      %v2680 = vadd.f32 %v2591, %v2679
      %2681 = vmatmul.bf16.gmra.mxu0 %v1456
      %v2682 = vpop.f32.mrf.mxu0
      %v2683 = vadd.f32 %v2594, %v2682
      %v2684 = vpop.f32.mrf.mxu0
      %v2685 = vadd.f32 %v2596, %v2684
      %2686 = vmatmul.bf16.gmra.mxu0 %v1469
      %v2687 = vpop.f32.mrf.mxu0
      %v2688 = vadd.f32 %v2599, %v2687
      %v2689 = vpop.f32.mrf.mxu0
      %v2690 = vadd.f32 %v2601, %v2689
      %2691 = vmatmul.bf16.gmra.mxu0 %v1482
      %v2692 = vpop.f32.mrf.mxu0
      %v2693 = vadd.f32 %v2604, %v2692
      %v2694 = vpop.f32.mrf.mxu0
      %v2695 = vadd.f32 %v2606, %v2694
      %2696 = vmatmul.bf16.gmra.mxu0 %v1495
      %v2697 = vpop.f32.mrf.mxu0
      %v2698 = vadd.f32 %v2609, %v2697
      %v2699 = vpop.f32.mrf.mxu0
      %v2700 = vadd.f32 %v2611, %v2699
      %2701 = vdwg.mxu0
      %2702 = vmatpush.bf16.msra.mxu0 %v2136
      %2703 = vmatpush.bf16.msra.mxu0 %v2135
      %2704 = vmatpush.bf16.msra.mxu0 %v2134
      %2705 = vmatpush.bf16.msra.mxu0 %v2133
      %2706 = vmatpush.bf16.msra.mxu0 %v2132
      %2707 = vmatpush.bf16.msra.mxu0 %v2131
      %2708 = vmatpush.bf16.msra.mxu0 %v2130
      %2709 = vmatpush.bf16.msra.mxu0 %v2129
      %2710 = vmatmul.bf16.gmra.mxu0 %v1301
      %v2711 = vpop.f32.mrf.mxu0
      %v2712 = vadd.f32 %v2623, %v2711
      %v2713 = vpop.f32.mrf.mxu0
      %v2714 = vadd.f32 %v2625, %v2713
      %2715 = vmatmul.bf16.gmra.mxu0 %v1314
      %v2716 = vpop.f32.mrf.mxu0
      %v2717 = vadd.f32 %v2628, %v2716
      %v2718 = vpop.f32.mrf.mxu0
      %v2719 = vadd.f32 %v2630, %v2718
      %2720 = vmatmul.bf16.gmra.mxu0 %v1327
      %v2721 = vpop.f32.mrf.mxu0
      %v2722 = vadd.f32 %v2633, %v2721
      %v2723 = vpop.f32.mrf.mxu0
      %v2724 = vadd.f32 %v2635, %v2723
      %2725 = vmatmul.bf16.gmra.mxu0 %v1340
      %v2726 = vpop.f32.mrf.mxu0
      %v2727 = vadd.f32 %v2638, %v2726
      %v2728 = vpop.f32.mrf.mxu0
      %v2729 = vadd.f32 %v2640, %v2728
      %2730 = vmatmul.bf16.gmra.mxu0 %v1353
      %v2731 = vpop.f32.mrf.mxu0
      %v2732 = vadd.f32 %v2643, %v2731
      %v2733 = vpop.f32.mrf.mxu0
      %v2734 = vadd.f32 %v2645, %v2733
      %2735 = vmatmul.bf16.gmra.mxu0 %v1366
      %v2736 = vpop.f32.mrf.mxu0
      %v2737 = vadd.f32 %v2648, %v2736
      %v2738 = vpop.f32.mrf.mxu0
      %v2739 = vadd.f32 %v2650, %v2738
      %2740 = vmatmul.bf16.gmra.mxu0 %v1379
      %v2741 = vpop.f32.mrf.mxu0
      %v2742 = vadd.f32 %v2653, %v2741
      %v2743 = vpop.f32.mrf.mxu0
      %v2744 = vadd.f32 %v2655, %v2743
      %2745 = vmatmul.bf16.gmra.mxu0 %v1392
      %v2746 = vpop.f32.mrf.mxu0
      %v2747 = vadd.f32 %v2658, %v2746
      %v2748 = vpop.f32.mrf.mxu0
      %v2749 = vadd.f32 %v2660, %v2748
      %2750 = vmatmul.bf16.gmra.mxu0 %v1405
      %v2751 = vpop.f32.mrf.mxu0
      %v2752 = vadd.f32 %v2663, %v2751
      %v2753 = vpop.f32.mrf.mxu0
      %v2754 = vadd.f32 %v2665, %v2753
      %2755 = vmatmul.bf16.gmra.mxu0 %v1418
      %v2756 = vpop.f32.mrf.mxu0
      %v2757 = vadd.f32 %v2668, %v2756
      %v2758 = vpop.f32.mrf.mxu0
      %v2759 = vadd.f32 %v2670, %v2758
      %2760 = vmatmul.bf16.gmra.mxu0 %v1431
      %v2761 = vpop.f32.mrf.mxu0
      %v2762 = vadd.f32 %v2673, %v2761
      %v2763 = vpop.f32.mrf.mxu0
      %v2764 = vadd.f32 %v2675, %v2763
      %2765 = vmatmul.bf16.gmra.mxu0 %v1444
      %v2766 = vpop.f32.mrf.mxu0
      %v2767 = vadd.f32 %v2678, %v2766
      %v2768 = vpop.f32.mrf.mxu0
      %v2769 = vadd.f32 %v2680, %v2768
      %2770 = vmatmul.bf16.gmra.mxu0 %v1457
      %v2771 = vpop.f32.mrf.mxu0
      %v2772 = vadd.f32 %v2683, %v2771
      %v2773 = vpop.f32.mrf.mxu0
      %v2774 = vadd.f32 %v2685, %v2773
      %2775 = vmatmul.bf16.gmra.mxu0 %v1470
      %v2776 = vpop.f32.mrf.mxu0
      %v2777 = vadd.f32 %v2688, %v2776
      %v2778 = vpop.f32.mrf.mxu0
      %v2779 = vadd.f32 %v2690, %v2778
      %2780 = vmatmul.bf16.gmra.mxu0 %v1483
      %v2781 = vpop.f32.mrf.mxu0
      %v2782 = vadd.f32 %v2693, %v2781
      %v2783 = vpop.f32.mrf.mxu0
      %v2784 = vadd.f32 %v2695, %v2783
      %2785 = vmatmul.bf16.gmra.mxu0 %v1496
      %v2786 = vpop.f32.mrf.mxu0
      %v2787 = vadd.f32 %v2698, %v2786
      %v2788 = vpop.f32.mrf.mxu0
      %v2789 = vadd.f32 %v2700, %v2788
      %2790 = vdwg.mxu0
      %2791 = vmatpush.bf16.msra.mxu0 %v2144
      %2792 = vmatpush.bf16.msra.mxu0 %v2143
      %2793 = vmatpush.bf16.msra.mxu0 %v2142
      %2794 = vmatpush.bf16.msra.mxu0 %v2141
      %2795 = vmatpush.bf16.msra.mxu0 %v2140
      %2796 = vmatpush.bf16.msra.mxu0 %v2139
      %2797 = vmatpush.bf16.msra.mxu0 %v2138
      %2798 = vmatpush.bf16.msra.mxu0 %v2137
      %2799 = vmatmul.bf16.gmra.mxu0 %v1302
      %v2800 = vpop.f32.mrf.mxu0
      %v2801 = vadd.f32 %v2712, %v2800
      %v2802 = vpop.f32.mrf.mxu0
      %v2803 = vadd.f32 %v2714, %v2802
      %2804 = vmatmul.bf16.gmra.mxu0 %v1315
      %v2805 = vpop.f32.mrf.mxu0
      %v2806 = vadd.f32 %v2717, %v2805
      %v2807 = vpop.f32.mrf.mxu0
      %v2808 = vadd.f32 %v2719, %v2807
      %2809 = vmatmul.bf16.gmra.mxu0 %v1328
      %v2810 = vpop.f32.mrf.mxu0
      %v2811 = vadd.f32 %v2722, %v2810
      %v2812 = vpop.f32.mrf.mxu0
      %v2813 = vadd.f32 %v2724, %v2812
      %2814 = vmatmul.bf16.gmra.mxu0 %v1341
      %v2815 = vpop.f32.mrf.mxu0
      %v2816 = vadd.f32 %v2727, %v2815
      %v2817 = vpop.f32.mrf.mxu0
      %v2818 = vadd.f32 %v2729, %v2817
      %2819 = vmatmul.bf16.gmra.mxu0 %v1354
      %v2820 = vpop.f32.mrf.mxu0
      %v2821 = vadd.f32 %v2732, %v2820
      %v2822 = vpop.f32.mrf.mxu0
      %v2823 = vadd.f32 %v2734, %v2822
      %2824 = vmatmul.bf16.gmra.mxu0 %v1367
      %v2825 = vpop.f32.mrf.mxu0
      %v2826 = vadd.f32 %v2737, %v2825
      %v2827 = vpop.f32.mrf.mxu0
      %v2828 = vadd.f32 %v2739, %v2827
      %2829 = vmatmul.bf16.gmra.mxu0 %v1380
      %v2830 = vpop.f32.mrf.mxu0
      %v2831 = vadd.f32 %v2742, %v2830
      %v2832 = vpop.f32.mrf.mxu0
      %v2833 = vadd.f32 %v2744, %v2832
      %2834 = vmatmul.bf16.gmra.mxu0 %v1393
      %v2835 = vpop.f32.mrf.mxu0
      %v2836 = vadd.f32 %v2747, %v2835
      %v2837 = vpop.f32.mrf.mxu0
      %v2838 = vadd.f32 %v2749, %v2837
      %2839 = vmatmul.bf16.gmra.mxu0 %v1406
      %v2840 = vpop.f32.mrf.mxu0
      %v2841 = vadd.f32 %v2752, %v2840
      %v2842 = vpop.f32.mrf.mxu0
      %v2843 = vadd.f32 %v2754, %v2842
      %2844 = vmatmul.bf16.gmra.mxu0 %v1419
      %v2845 = vpop.f32.mrf.mxu0
      %v2846 = vadd.f32 %v2757, %v2845
      %v2847 = vpop.f32.mrf.mxu0
      %v2848 = vadd.f32 %v2759, %v2847
      %2849 = vmatmul.bf16.gmra.mxu0 %v1432
      %v2850 = vpop.f32.mrf.mxu0
      %v2851 = vadd.f32 %v2762, %v2850
      %v2852 = vpop.f32.mrf.mxu0
      %v2853 = vadd.f32 %v2764, %v2852
      %2854 = vmatmul.bf16.gmra.mxu0 %v1445
      %v2855 = vpop.f32.mrf.mxu0
      %v2856 = vadd.f32 %v2767, %v2855
      %v2857 = vpop.f32.mrf.mxu0
      %v2858 = vadd.f32 %v2769, %v2857
      %2859 = vmatmul.bf16.gmra.mxu0 %v1458
      %v2860 = vpop.f32.mrf.mxu0
      %v2861 = vadd.f32 %v2772, %v2860
      %v2862 = vpop.f32.mrf.mxu0
      %v2863 = vadd.f32 %v2774, %v2862
      %2864 = vmatmul.bf16.gmra.mxu0 %v1471
      %v2865 = vpop.f32.mrf.mxu0
      %v2866 = vadd.f32 %v2777, %v2865
      %v2867 = vpop.f32.mrf.mxu0
      %v2868 = vadd.f32 %v2779, %v2867
      %2869 = vmatmul.bf16.gmra.mxu0 %v1484
      %v2870 = vpop.f32.mrf.mxu0
      %v2871 = vadd.f32 %v2782, %v2870
      %v2872 = vpop.f32.mrf.mxu0
      %v2873 = vadd.f32 %v2784, %v2872
      %2874 = vmatmul.bf16.gmra.mxu0 %v1497
      %v2875 = vpop.f32.mrf.mxu0
      %v2876 = vadd.f32 %v2787, %v2875
      %v2877 = vpop.f32.mrf.mxu0
      %v2878 = vadd.f32 %v2789, %v2877
      %2879 = vdwg.mxu0
      %2880 = vmatpush.bf16.msra.mxu0 %v2152
      %2881 = vmatpush.bf16.msra.mxu0 %v2151
      %2882 = vmatpush.bf16.msra.mxu0 %v2150
      %2883 = vmatpush.bf16.msra.mxu0 %v2149
      %2884 = vmatpush.bf16.msra.mxu0 %v2148
      %2885 = vmatpush.bf16.msra.mxu0 %v2147
      %2886 = vmatpush.bf16.msra.mxu0 %v2146
      %2887 = vmatpush.bf16.msra.mxu0 %v2145
      %2888 = vmatmul.bf16.gmra.mxu0 %v1303
      %v2889 = vpop.f32.mrf.mxu0
      %v2890 = vadd.f32 %v2801, %v2889
      %v2891 = vpop.f32.mrf.mxu0
      %v2892 = vadd.f32 %v2803, %v2891
      %2893 = vmatmul.bf16.gmra.mxu0 %v1316
      %v2894 = vpop.f32.mrf.mxu0
      %v2895 = vadd.f32 %v2806, %v2894
      %v2896 = vpop.f32.mrf.mxu0
      %v2897 = vadd.f32 %v2808, %v2896
      %2898 = vmatmul.bf16.gmra.mxu0 %v1329
      %v2899 = vpop.f32.mrf.mxu0
      %v2900 = vadd.f32 %v2811, %v2899
      %v2901 = vpop.f32.mrf.mxu0
      %v2902 = vadd.f32 %v2813, %v2901
      %2903 = vmatmul.bf16.gmra.mxu0 %v1342
      %v2904 = vpop.f32.mrf.mxu0
      %v2905 = vadd.f32 %v2816, %v2904
      %v2906 = vpop.f32.mrf.mxu0
      %v2907 = vadd.f32 %v2818, %v2906
      %2908 = vmatmul.bf16.gmra.mxu0 %v1355
      %v2909 = vpop.f32.mrf.mxu0
      %v2910 = vadd.f32 %v2821, %v2909
      %v2911 = vpop.f32.mrf.mxu0
      %v2912 = vadd.f32 %v2823, %v2911
      %2913 = vmatmul.bf16.gmra.mxu0 %v1368
      %v2914 = vpop.f32.mrf.mxu0
      %v2915 = vadd.f32 %v2826, %v2914
      %v2916 = vpop.f32.mrf.mxu0
      %v2917 = vadd.f32 %v2828, %v2916
      %2918 = vmatmul.bf16.gmra.mxu0 %v1381
      %v2919 = vpop.f32.mrf.mxu0
      %v2920 = vadd.f32 %v2831, %v2919
      %v2921 = vpop.f32.mrf.mxu0
      %v2922 = vadd.f32 %v2833, %v2921
      %2923 = vmatmul.bf16.gmra.mxu0 %v1394
      %v2924 = vpop.f32.mrf.mxu0
      %v2925 = vadd.f32 %v2836, %v2924
      %v2926 = vpop.f32.mrf.mxu0
      %v2927 = vadd.f32 %v2838, %v2926
      %2928 = vmatmul.bf16.gmra.mxu0 %v1407
      %v2929 = vpop.f32.mrf.mxu0
      %v2930 = vadd.f32 %v2841, %v2929
      %v2931 = vpop.f32.mrf.mxu0
      %v2932 = vadd.f32 %v2843, %v2931
      %2933 = vmatmul.bf16.gmra.mxu0 %v1420
      %v2934 = vpop.f32.mrf.mxu0
      %v2935 = vadd.f32 %v2846, %v2934
      %v2936 = vpop.f32.mrf.mxu0
      %v2937 = vadd.f32 %v2848, %v2936
      %2938 = vmatmul.bf16.gmra.mxu0 %v1433
      %v2939 = vpop.f32.mrf.mxu0
      %v2940 = vadd.f32 %v2851, %v2939
      %v2941 = vpop.f32.mrf.mxu0
      %v2942 = vadd.f32 %v2853, %v2941
      %2943 = vmatmul.bf16.gmra.mxu0 %v1446
      %v2944 = vpop.f32.mrf.mxu0
      %v2945 = vadd.f32 %v2856, %v2944
      %v2946 = vpop.f32.mrf.mxu0
      %v2947 = vadd.f32 %v2858, %v2946
      %2948 = vmatmul.bf16.gmra.mxu0 %v1459
      %v2949 = vpop.f32.mrf.mxu0
      %v2950 = vadd.f32 %v2861, %v2949
      %v2951 = vpop.f32.mrf.mxu0
      %v2952 = vadd.f32 %v2863, %v2951
      %2953 = vmatmul.bf16.gmra.mxu0 %v1472
      %v2954 = vpop.f32.mrf.mxu0
      %v2955 = vadd.f32 %v2866, %v2954
      %v2956 = vpop.f32.mrf.mxu0
      %v2957 = vadd.f32 %v2868, %v2956
      %2958 = vmatmul.bf16.gmra.mxu0 %v1485
      %v2959 = vpop.f32.mrf.mxu0
      %v2960 = vadd.f32 %v2871, %v2959
      %v2961 = vpop.f32.mrf.mxu0
      %v2962 = vadd.f32 %v2873, %v2961
      %2963 = vmatmul.bf16.gmra.mxu0 %v1498
      %v2964 = vpop.f32.mrf.mxu0
      %v2965 = vadd.f32 %v2876, %v2964
      %v2966 = vpop.f32.mrf.mxu0
      %v2967 = vadd.f32 %v2878, %v2966
      %2968 = vdwg.mxu0
      %2969 = vmatpush.bf16.msra.mxu0 %v2160
      %2970 = vmatpush.bf16.msra.mxu0 %v2159
      %2971 = vmatpush.bf16.msra.mxu0 %v2158
      %2972 = vmatpush.bf16.msra.mxu0 %v2157
      %2973 = vmatpush.bf16.msra.mxu0 %v2156
      %2974 = vmatpush.bf16.msra.mxu0 %v2155
      %2975 = vmatpush.bf16.msra.mxu0 %v2154
      %2976 = vmatpush.bf16.msra.mxu0 %v2153
      %2977 = vmatmul.bf16.gmra.mxu0 %v1304
      %v2978 = vpop.f32.mrf.mxu0
      %v2979 = vadd.f32 %v2890, %v2978
      %v2980 = vpop.f32.mrf.mxu0
      %v2981 = vadd.f32 %v2892, %v2980
      %2982 = vmatmul.bf16.gmra.mxu0 %v1317
      %v2983 = vpop.f32.mrf.mxu0
      %v2984 = vadd.f32 %v2895, %v2983
      %v2985 = vpop.f32.mrf.mxu0
      %v2986 = vadd.f32 %v2897, %v2985
      %2987 = vmatmul.bf16.gmra.mxu0 %v1330
      %v2988 = vpop.f32.mrf.mxu0
      %v2989 = vadd.f32 %v2900, %v2988
      %v2990 = vpop.f32.mrf.mxu0
      %v2991 = vadd.f32 %v2902, %v2990
      %2992 = vmatmul.bf16.gmra.mxu0 %v1343
      %v2993 = vpop.f32.mrf.mxu0
      %v2994 = vadd.f32 %v2905, %v2993
      %v2995 = vpop.f32.mrf.mxu0
      %v2996 = vadd.f32 %v2907, %v2995
      %2997 = vmatmul.bf16.gmra.mxu0 %v1356
      %v2998 = vpop.f32.mrf.mxu0
      %v2999 = vadd.f32 %v2910, %v2998
      %v3000 = vpop.f32.mrf.mxu0
      %v3001 = vadd.f32 %v2912, %v3000
      %3002 = vmatmul.bf16.gmra.mxu0 %v1369
      %v3003 = vpop.f32.mrf.mxu0
      %v3004 = vadd.f32 %v2915, %v3003
      %v3005 = vpop.f32.mrf.mxu0
      %v3006 = vadd.f32 %v2917, %v3005
      %3007 = vmatmul.bf16.gmra.mxu0 %v1382
      %v3008 = vpop.f32.mrf.mxu0
      %v3009 = vadd.f32 %v2920, %v3008
      %v3010 = vpop.f32.mrf.mxu0
      %v3011 = vadd.f32 %v2922, %v3010
      %3012 = vmatmul.bf16.gmra.mxu0 %v1395
      %v3013 = vpop.f32.mrf.mxu0
      %v3014 = vadd.f32 %v2925, %v3013
      %v3015 = vpop.f32.mrf.mxu0
      %v3016 = vadd.f32 %v2927, %v3015
      %3017 = vmatmul.bf16.gmra.mxu0 %v1408
      %v3018 = vpop.f32.mrf.mxu0
      %v3019 = vadd.f32 %v2930, %v3018
      %v3020 = vpop.f32.mrf.mxu0
      %v3021 = vadd.f32 %v2932, %v3020
      %3022 = vmatmul.bf16.gmra.mxu0 %v1421
      %v3023 = vpop.f32.mrf.mxu0
      %v3024 = vadd.f32 %v2935, %v3023
      %v3025 = vpop.f32.mrf.mxu0
      %v3026 = vadd.f32 %v2937, %v3025
      %3027 = vmatmul.bf16.gmra.mxu0 %v1434
      %v3028 = vpop.f32.mrf.mxu0
      %v3029 = vadd.f32 %v2940, %v3028
      %v3030 = vpop.f32.mrf.mxu0
      %v3031 = vadd.f32 %v2942, %v3030
      %3032 = vmatmul.bf16.gmra.mxu0 %v1447
      %v3033 = vpop.f32.mrf.mxu0
      %v3034 = vadd.f32 %v2945, %v3033
      %v3035 = vpop.f32.mrf.mxu0
      %v3036 = vadd.f32 %v2947, %v3035
      %3037 = vmatmul.bf16.gmra.mxu0 %v1460
      %v3038 = vpop.f32.mrf.mxu0
      %v3039 = vadd.f32 %v2950, %v3038
      %v3040 = vpop.f32.mrf.mxu0
      %v3041 = vadd.f32 %v2952, %v3040
      %3042 = vmatmul.bf16.gmra.mxu0 %v1473
      %v3043 = vpop.f32.mrf.mxu0
      %v3044 = vadd.f32 %v2955, %v3043
      %v3045 = vpop.f32.mrf.mxu0
      %v3046 = vadd.f32 %v2957, %v3045
      %3047 = vmatmul.bf16.gmra.mxu0 %v1486
      %v3048 = vpop.f32.mrf.mxu0
      %v3049 = vadd.f32 %v2960, %v3048
      %v3050 = vpop.f32.mrf.mxu0
      %v3051 = vadd.f32 %v2962, %v3050
      %3052 = vmatmul.bf16.gmra.mxu0 %v1499
      %v3053 = vpop.f32.mrf.mxu0
      %v3054 = vadd.f32 %v2965, %v3053
      %v3055 = vpop.f32.mrf.mxu0
      %v3056 = vadd.f32 %v2967, %v3055
      %3057 = vdwg.mxu0
      %3058 = vmatpush.bf16.msra.mxu0 %v2168
      %3059 = vmatpush.bf16.msra.mxu0 %v2167
      %3060 = vmatpush.bf16.msra.mxu0 %v2166
      %3061 = vmatpush.bf16.msra.mxu0 %v2165
      %3062 = vmatpush.bf16.msra.mxu0 %v2164
      %3063 = vmatpush.bf16.msra.mxu0 %v2163
      %3064 = vmatpush.bf16.msra.mxu0 %v2162
      %3065 = vmatpush.bf16.msra.mxu0 %v2161
      %3066 = vmatmul.bf16.gmra.mxu0 %v1305
      %v3067 = vpop.f32.mrf.mxu0
      %v3068 = vadd.f32 %v2979, %v3067
      %v3069 = vpop.f32.mrf.mxu0
      %v3070 = vadd.f32 %v2981, %v3069
      %3071 = vmatmul.bf16.gmra.mxu0 %v1318
      %v3072 = vpop.f32.mrf.mxu0
      %v3073 = vadd.f32 %v2984, %v3072
      %v3074 = vpop.f32.mrf.mxu0
      %v3075 = vadd.f32 %v2986, %v3074
      %3076 = vmatmul.bf16.gmra.mxu0 %v1331
      %v3077 = vpop.f32.mrf.mxu0
      %v3078 = vadd.f32 %v2989, %v3077
      %v3079 = vpop.f32.mrf.mxu0
      %v3080 = vadd.f32 %v2991, %v3079
      %3081 = vmatmul.bf16.gmra.mxu0 %v1344
      %v3082 = vpop.f32.mrf.mxu0
      %v3083 = vadd.f32 %v2994, %v3082
      %v3084 = vpop.f32.mrf.mxu0
      %v3085 = vadd.f32 %v2996, %v3084
      %3086 = vmatmul.bf16.gmra.mxu0 %v1357
      %v3087 = vpop.f32.mrf.mxu0
      %v3088 = vadd.f32 %v2999, %v3087
      %v3089 = vpop.f32.mrf.mxu0
      %v3090 = vadd.f32 %v3001, %v3089
      %3091 = vmatmul.bf16.gmra.mxu0 %v1370
      %v3092 = vpop.f32.mrf.mxu0
      %v3093 = vadd.f32 %v3004, %v3092
      %v3094 = vpop.f32.mrf.mxu0
      %v3095 = vadd.f32 %v3006, %v3094
      %3096 = vmatmul.bf16.gmra.mxu0 %v1383
      %v3097 = vpop.f32.mrf.mxu0
      %v3098 = vadd.f32 %v3009, %v3097
      %v3099 = vpop.f32.mrf.mxu0
      %v3100 = vadd.f32 %v3011, %v3099
      %3101 = vmatmul.bf16.gmra.mxu0 %v1396
      %v3102 = vpop.f32.mrf.mxu0
      %v3103 = vadd.f32 %v3014, %v3102
      %v3104 = vpop.f32.mrf.mxu0
      %v3105 = vadd.f32 %v3016, %v3104
      %3106 = vmatmul.bf16.gmra.mxu0 %v1409
      %v3107 = vpop.f32.mrf.mxu0
      %v3108 = vadd.f32 %v3019, %v3107
      %v3109 = vpop.f32.mrf.mxu0
      %v3110 = vadd.f32 %v3021, %v3109
      %3111 = vmatmul.bf16.gmra.mxu0 %v1422
      %v3112 = vpop.f32.mrf.mxu0
      %v3113 = vadd.f32 %v3024, %v3112
      %v3114 = vpop.f32.mrf.mxu0
      %v3115 = vadd.f32 %v3026, %v3114
      %3116 = vmatmul.bf16.gmra.mxu0 %v1435
      %v3117 = vpop.f32.mrf.mxu0
      %v3118 = vadd.f32 %v3029, %v3117
      %v3119 = vpop.f32.mrf.mxu0
      %v3120 = vadd.f32 %v3031, %v3119
      %3121 = vmatmul.bf16.gmra.mxu0 %v1448
      %v3122 = vpop.f32.mrf.mxu0
      %v3123 = vadd.f32 %v3034, %v3122
      %v3124 = vpop.f32.mrf.mxu0
      %v3125 = vadd.f32 %v3036, %v3124
      %3126 = vmatmul.bf16.gmra.mxu0 %v1461
      %v3127 = vpop.f32.mrf.mxu0
      %v3128 = vadd.f32 %v3039, %v3127
      %v3129 = vpop.f32.mrf.mxu0
      %v3130 = vadd.f32 %v3041, %v3129
      %3131 = vmatmul.bf16.gmra.mxu0 %v1474
      %v3132 = vpop.f32.mrf.mxu0
      %v3133 = vadd.f32 %v3044, %v3132
      %v3134 = vpop.f32.mrf.mxu0
      %v3135 = vadd.f32 %v3046, %v3134
      %3136 = vmatmul.bf16.gmra.mxu0 %v1487
      %v3137 = vpop.f32.mrf.mxu0
      %v3138 = vadd.f32 %v3049, %v3137
      %v3139 = vpop.f32.mrf.mxu0
      %v3140 = vadd.f32 %v3051, %v3139
      %3141 = vmatmul.bf16.gmra.mxu0 %v1500
      %v3142 = vpop.f32.mrf.mxu0
      %v3143 = vadd.f32 %v3054, %v3142
      %v3144 = vpop.f32.mrf.mxu0
      %v3145 = vadd.f32 %v3056, %v3144
      %3146 = vdwg.mxu0
      %3147 = vmatpush.bf16.msra.mxu0 %v2176
      %3148 = vmatpush.bf16.msra.mxu0 %v2175
      %3149 = vmatpush.bf16.msra.mxu0 %v2174
      %3150 = vmatpush.bf16.msra.mxu0 %v2173
      %3151 = vmatpush.bf16.msra.mxu0 %v2172
      %3152 = vmatpush.bf16.msra.mxu0 %v2171
      %3153 = vmatpush.bf16.msra.mxu0 %v2170
      %3154 = vmatpush.bf16.msra.mxu0 %v2169
      %3155 = vmatmul.bf16.gmra.mxu0 %v1306
      %v3156 = vpop.f32.mrf.mxu0
      %v3157 = vadd.f32 %v3068, %v3156
      %v3158 = vpop.f32.mrf.mxu0
      %v3159 = vadd.f32 %v3070, %v3158
      %3160 = vmatmul.bf16.gmra.mxu0 %v1319
      %v3161 = vpop.f32.mrf.mxu0
      %v3162 = vadd.f32 %v3073, %v3161
      %v3163 = vpop.f32.mrf.mxu0
      %v3164 = vadd.f32 %v3075, %v3163
      %3165 = vmatmul.bf16.gmra.mxu0 %v1332
      %v3166 = vpop.f32.mrf.mxu0
      %v3167 = vadd.f32 %v3078, %v3166
      %v3168 = vpop.f32.mrf.mxu0
      %v3169 = vadd.f32 %v3080, %v3168
      %3170 = vmatmul.bf16.gmra.mxu0 %v1345
      %v3171 = vpop.f32.mrf.mxu0
      %v3172 = vadd.f32 %v3083, %v3171
      %v3173 = vpop.f32.mrf.mxu0
      %v3174 = vadd.f32 %v3085, %v3173
      %3175 = vmatmul.bf16.gmra.mxu0 %v1358
      %v3176 = vpop.f32.mrf.mxu0
      %v3177 = vadd.f32 %v3088, %v3176
      %v3178 = vpop.f32.mrf.mxu0
      %v3179 = vadd.f32 %v3090, %v3178
      %3180 = vmatmul.bf16.gmra.mxu0 %v1371
      %v3181 = vpop.f32.mrf.mxu0
      %v3182 = vadd.f32 %v3093, %v3181
      %v3183 = vpop.f32.mrf.mxu0
      %v3184 = vadd.f32 %v3095, %v3183
      %3185 = vmatmul.bf16.gmra.mxu0 %v1384
      %v3186 = vpop.f32.mrf.mxu0
      %v3187 = vadd.f32 %v3098, %v3186
      %v3188 = vpop.f32.mrf.mxu0
      %v3189 = vadd.f32 %v3100, %v3188
      %3190 = vmatmul.bf16.gmra.mxu0 %v1397
      %v3191 = vpop.f32.mrf.mxu0
      %v3192 = vadd.f32 %v3103, %v3191
      %v3193 = vpop.f32.mrf.mxu0
      %v3194 = vadd.f32 %v3105, %v3193
      %3195 = vmatmul.bf16.gmra.mxu0 %v1410
      %v3196 = vpop.f32.mrf.mxu0
      %v3197 = vadd.f32 %v3108, %v3196
      %v3198 = vpop.f32.mrf.mxu0
      %v3199 = vadd.f32 %v3110, %v3198
      %3200 = vmatmul.bf16.gmra.mxu0 %v1423
      %v3201 = vpop.f32.mrf.mxu0
      %v3202 = vadd.f32 %v3113, %v3201
      %v3203 = vpop.f32.mrf.mxu0
      %v3204 = vadd.f32 %v3115, %v3203
      %3205 = vmatmul.bf16.gmra.mxu0 %v1436
      %v3206 = vpop.f32.mrf.mxu0
      %v3207 = vadd.f32 %v3118, %v3206
      %v3208 = vpop.f32.mrf.mxu0
      %v3209 = vadd.f32 %v3120, %v3208
      %3210 = vmatmul.bf16.gmra.mxu0 %v1449
      %v3211 = vpop.f32.mrf.mxu0
      %v3212 = vadd.f32 %v3123, %v3211
      %v3213 = vpop.f32.mrf.mxu0
      %v3214 = vadd.f32 %v3125, %v3213
      %3215 = vmatmul.bf16.gmra.mxu0 %v1462
      %v3216 = vpop.f32.mrf.mxu0
      %v3217 = vadd.f32 %v3128, %v3216
      %v3218 = vpop.f32.mrf.mxu0
      %v3219 = vadd.f32 %v3130, %v3218
      %3220 = vmatmul.bf16.gmra.mxu0 %v1475
      %v3221 = vpop.f32.mrf.mxu0
      %v3222 = vadd.f32 %v3133, %v3221
      %v3223 = vpop.f32.mrf.mxu0
      %v3224 = vadd.f32 %v3135, %v3223
      %3225 = vmatmul.bf16.gmra.mxu0 %v1488
      %v3226 = vpop.f32.mrf.mxu0
      %v3227 = vadd.f32 %v3138, %v3226
      %v3228 = vpop.f32.mrf.mxu0
      %v3229 = vadd.f32 %v3140, %v3228
      %3230 = vmatmul.bf16.gmra.mxu0 %v1501
      %v3231 = vpop.f32.mrf.mxu0
      %v3232 = vadd.f32 %v3143, %v3231
      %v3233 = vpop.f32.mrf.mxu0
      %v3234 = vadd.f32 %v3145, %v3233
      %3235 = vdwg.mxu0
      %3236 = vmatpush.bf16.msra.mxu0 %v2184
      %3237 = vmatpush.bf16.msra.mxu0 %v2183
      %3238 = vmatpush.bf16.msra.mxu0 %v2182
      %3239 = vmatpush.bf16.msra.mxu0 %v2181
      %3240 = vmatpush.bf16.msra.mxu0 %v2180
      %3241 = vmatpush.bf16.msra.mxu0 %v2179
      %3242 = vmatpush.bf16.msra.mxu0 %v2178
      %3243 = vmatpush.bf16.msra.mxu0 %v2177
      %3244 = vmatmul.bf16.gmra.mxu0 %v1307
      %v3245 = vpop.f32.mrf.mxu0
      %v3246 = vadd.f32 %v3157, %v3245
      %v3247 = vpop.f32.mrf.mxu0
      %v3248 = vadd.f32 %v3159, %v3247
      %3249 = vmatmul.bf16.gmra.mxu0 %v1320
      %v3250 = vpop.f32.mrf.mxu0
      %v3251 = vadd.f32 %v3162, %v3250
      %v3252 = vpop.f32.mrf.mxu0
      %v3253 = vadd.f32 %v3164, %v3252
      %3254 = vmatmul.bf16.gmra.mxu0 %v1333
      %v3255 = vpop.f32.mrf.mxu0
      %v3256 = vadd.f32 %v3167, %v3255
      %v3257 = vpop.f32.mrf.mxu0
      %v3258 = vadd.f32 %v3169, %v3257
      %3259 = vmatmul.bf16.gmra.mxu0 %v1346
      %v3260 = vpop.f32.mrf.mxu0
      %v3261 = vadd.f32 %v3172, %v3260
      %v3262 = vpop.f32.mrf.mxu0
      %v3263 = vadd.f32 %v3174, %v3262
      %3264 = vmatmul.bf16.gmra.mxu0 %v1359
      %v3265 = vpop.f32.mrf.mxu0
      %v3266 = vadd.f32 %v3177, %v3265
      %v3267 = vpop.f32.mrf.mxu0
      %v3268 = vadd.f32 %v3179, %v3267
      %3269 = vmatmul.bf16.gmra.mxu0 %v1372
      %v3270 = vpop.f32.mrf.mxu0
      %v3271 = vadd.f32 %v3182, %v3270
      %v3272 = vpop.f32.mrf.mxu0
      %v3273 = vadd.f32 %v3184, %v3272
      %3274 = vmatmul.bf16.gmra.mxu0 %v1385
      %v3275 = vpop.f32.mrf.mxu0
      %v3276 = vadd.f32 %v3187, %v3275
      %v3277 = vpop.f32.mrf.mxu0
      %v3278 = vadd.f32 %v3189, %v3277
      %3279 = vmatmul.bf16.gmra.mxu0 %v1398
      %v3280 = vpop.f32.mrf.mxu0
      %v3281 = vadd.f32 %v3192, %v3280
      %v3282 = vpop.f32.mrf.mxu0
      %v3283 = vadd.f32 %v3194, %v3282
      %3284 = vmatmul.bf16.gmra.mxu0 %v1411
      %v3285 = vpop.f32.mrf.mxu0
      %v3286 = vadd.f32 %v3197, %v3285
      %v3287 = vpop.f32.mrf.mxu0
      %v3288 = vadd.f32 %v3199, %v3287
      %3289 = vmatmul.bf16.gmra.mxu0 %v1424
      %v3290 = vpop.f32.mrf.mxu0
      %v3291 = vadd.f32 %v3202, %v3290
      %v3292 = vpop.f32.mrf.mxu0
      %v3293 = vadd.f32 %v3204, %v3292
      %3294 = vmatmul.bf16.gmra.mxu0 %v1437
      %v3295 = vpop.f32.mrf.mxu0
      %v3296 = vadd.f32 %v3207, %v3295
      %v3297 = vpop.f32.mrf.mxu0
      %v3298 = vadd.f32 %v3209, %v3297
      %3299 = vmatmul.bf16.gmra.mxu0 %v1450
      %v3300 = vpop.f32.mrf.mxu0
      %v3301 = vadd.f32 %v3212, %v3300
      %v3302 = vpop.f32.mrf.mxu0
      %v3303 = vadd.f32 %v3214, %v3302
      %3304 = vmatmul.bf16.gmra.mxu0 %v1463
      %v3305 = vpop.f32.mrf.mxu0
      %v3306 = vadd.f32 %v3217, %v3305
      %v3307 = vpop.f32.mrf.mxu0
      %v3308 = vadd.f32 %v3219, %v3307
      %3309 = vmatmul.bf16.gmra.mxu0 %v1476
      %v3310 = vpop.f32.mrf.mxu0
      %v3311 = vadd.f32 %v3222, %v3310
      %v3312 = vpop.f32.mrf.mxu0
      %v3313 = vadd.f32 %v3224, %v3312
      %3314 = vmatmul.bf16.gmra.mxu0 %v1489
      %v3315 = vpop.f32.mrf.mxu0
      %v3316 = vadd.f32 %v3227, %v3315
      %v3317 = vpop.f32.mrf.mxu0
      %v3318 = vadd.f32 %v3229, %v3317
      %3319 = vmatmul.bf16.gmra.mxu0 %v1502
      %v3320 = vpop.f32.mrf.mxu0
      %v3321 = vadd.f32 %v3232, %v3320
      %v3322 = vpop.f32.mrf.mxu0
      %v3323 = vadd.f32 %v3234, %v3322
      %3324 = vdwg.mxu0
      %3325 = vmatpush.bf16.msra.mxu0 %v2192
      %3326 = vmatpush.bf16.msra.mxu0 %v2191
      %3327 = vmatpush.bf16.msra.mxu0 %v2190
      %3328 = vmatpush.bf16.msra.mxu0 %v2189
      %3329 = vmatpush.bf16.msra.mxu0 %v2188
      %3330 = vmatpush.bf16.msra.mxu0 %v2187
      %3331 = vmatpush.bf16.msra.mxu0 %v2186
      %3332 = vmatpush.bf16.msra.mxu0 %v2185
      %3333 = vmatmul.bf16.gmra.mxu0 %v1308
      %v3334 = vpop.f32.mrf.mxu0
      %v3335 = vadd.f32 %v3246, %v3334
      %v3336 = vpop.f32.mrf.mxu0
      %v3337 = vadd.f32 %v3248, %v3336
      %3338 = vmatmul.bf16.gmra.mxu0 %v1321
      %v3339 = vpop.f32.mrf.mxu0
      %v3340 = vadd.f32 %v3251, %v3339
      %v3341 = vpop.f32.mrf.mxu0
      %v3342 = vadd.f32 %v3253, %v3341
      %3343 = vmatmul.bf16.gmra.mxu0 %v1334
      %v3344 = vpop.f32.mrf.mxu0
      %v3345 = vadd.f32 %v3256, %v3344
      %v3346 = vpop.f32.mrf.mxu0
      %v3347 = vadd.f32 %v3258, %v3346
      %3348 = vmatmul.bf16.gmra.mxu0 %v1347
      %v3349 = vpop.f32.mrf.mxu0
      %v3350 = vadd.f32 %v3261, %v3349
      %v3351 = vpop.f32.mrf.mxu0
      %v3352 = vadd.f32 %v3263, %v3351
      %3353 = vmatmul.bf16.gmra.mxu0 %v1360
      %v3354 = vpop.f32.mrf.mxu0
      %v3355 = vadd.f32 %v3266, %v3354
      %v3356 = vpop.f32.mrf.mxu0
      %v3357 = vadd.f32 %v3268, %v3356
      %3358 = vmatmul.bf16.gmra.mxu0 %v1373
      %v3359 = vpop.f32.mrf.mxu0
      %v3360 = vadd.f32 %v3271, %v3359
      %v3361 = vpop.f32.mrf.mxu0
      %v3362 = vadd.f32 %v3273, %v3361
      %3363 = vmatmul.bf16.gmra.mxu0 %v1386
      %v3364 = vpop.f32.mrf.mxu0
      %v3365 = vadd.f32 %v3276, %v3364
      %v3366 = vpop.f32.mrf.mxu0
      %v3367 = vadd.f32 %v3278, %v3366
      %3368 = vmatmul.bf16.gmra.mxu0 %v1399
      %v3369 = vpop.f32.mrf.mxu0
      %v3370 = vadd.f32 %v3281, %v3369
      %v3371 = vpop.f32.mrf.mxu0
      %v3372 = vadd.f32 %v3283, %v3371
      %3373 = vmatmul.bf16.gmra.mxu0 %v1412
      %v3374 = vpop.f32.mrf.mxu0
      %v3375 = vadd.f32 %v3286, %v3374
      %v3376 = vpop.f32.mrf.mxu0
      %v3377 = vadd.f32 %v3288, %v3376
      %3378 = vmatmul.bf16.gmra.mxu0 %v1425
      %v3379 = vpop.f32.mrf.mxu0
      %v3380 = vadd.f32 %v3291, %v3379
      %v3381 = vpop.f32.mrf.mxu0
      %v3382 = vadd.f32 %v3293, %v3381
      %3383 = vmatmul.bf16.gmra.mxu0 %v1438
      %v3384 = vpop.f32.mrf.mxu0
      %v3385 = vadd.f32 %v3296, %v3384
      %v3386 = vpop.f32.mrf.mxu0
      %v3387 = vadd.f32 %v3298, %v3386
      %3388 = vmatmul.bf16.gmra.mxu0 %v1451
      %v3389 = vpop.f32.mrf.mxu0
      %v3390 = vadd.f32 %v3301, %v3389
      %v3391 = vpop.f32.mrf.mxu0
      %v3392 = vadd.f32 %v3303, %v3391
      %3393 = vmatmul.bf16.gmra.mxu0 %v1464
      %v3394 = vpop.f32.mrf.mxu0
      %v3395 = vadd.f32 %v3306, %v3394
      %v3396 = vpop.f32.mrf.mxu0
      %v3397 = vadd.f32 %v3308, %v3396
      %3398 = vmatmul.bf16.gmra.mxu0 %v1477
      %v3399 = vpop.f32.mrf.mxu0
      %v3400 = vadd.f32 %v3311, %v3399
      %v3401 = vpop.f32.mrf.mxu0
      %v3402 = vadd.f32 %v3313, %v3401
      %3403 = vmatmul.bf16.gmra.mxu0 %v1490
      %v3404 = vpop.f32.mrf.mxu0
      %v3405 = vadd.f32 %v3316, %v3404
      %v3406 = vpop.f32.mrf.mxu0
      %v3407 = vadd.f32 %v3318, %v3406
      %3408 = vmatmul.bf16.gmra.mxu0 %v1503
      %v3409 = vpop.f32.mrf.mxu0
      %v3410 = vadd.f32 %v3321, %v3409
      %v3411 = vpop.f32.mrf.mxu0
      %v3412 = vadd.f32 %v3323, %v3411
      %3413 = vdwg.mxu0
      %3414 = vmatpush.bf16.msra.mxu0 0
      %3415 = vmatpush.bf16.msra.mxu0 0
      %3416 = vmatpush.bf16.msra.mxu0 0
      %3417 = vmatpush.bf16.msra.mxu0 0
      %3418 = vmatpush.bf16.msra.mxu0 %v2196
      %3419 = vmatpush.bf16.msra.mxu0 %v2195
      %3420 = vmatpush.bf16.msra.mxu0 %v2194
      %3421 = vmatpush.bf16.msra.mxu0 %v2193
      %3422 = vmatmul.bf16.gmra.mxu0 %v2299
      %v3423 = vpop.f32.mrf.mxu0
      %v3424 = vadd.f32 %v3335, %v3423
      %v3425 = vpop.f32.mrf.mxu0
      %v3426 = vadd.f32 %v3337, %v3425
      %3427 = vmatmul.bf16.gmra.mxu0 %v2302
      %v3428 = vpop.f32.mrf.mxu0
      %v3429 = vadd.f32 %v3340, %v3428
      %v3430 = vpop.f32.mrf.mxu0
      %v3431 = vadd.f32 %v3342, %v3430
      %3432 = vmatmul.bf16.gmra.mxu0 %v2305
      %v3433 = vpop.f32.mrf.mxu0
      %v3434 = vadd.f32 %v3345, %v3433
      %v3435 = vpop.f32.mrf.mxu0
      %v3436 = vadd.f32 %v3347, %v3435
      %3437 = vmatmul.bf16.gmra.mxu0 %v2308
      %v3438 = vpop.f32.mrf.mxu0
      %v3439 = vadd.f32 %v3350, %v3438
      %v3440 = vpop.f32.mrf.mxu0
      %v3441 = vadd.f32 %v3352, %v3440
      %3442 = vmatmul.bf16.gmra.mxu0 %v2311
      %v3443 = vpop.f32.mrf.mxu0
      %v3444 = vadd.f32 %v3355, %v3443
      %v3445 = vpop.f32.mrf.mxu0
      %v3446 = vadd.f32 %v3357, %v3445
      %3447 = vmatmul.bf16.gmra.mxu0 %v2314
      %v3448 = vpop.f32.mrf.mxu0
      %v3449 = vadd.f32 %v3360, %v3448
      %v3450 = vpop.f32.mrf.mxu0
      %v3451 = vadd.f32 %v3362, %v3450
      %3452 = vmatmul.bf16.gmra.mxu0 %v2317
      %v3453 = vpop.f32.mrf.mxu0
      %v3454 = vadd.f32 %v3365, %v3453
      %v3455 = vpop.f32.mrf.mxu0
      %v3456 = vadd.f32 %v3367, %v3455
      %3457 = vmatmul.bf16.gmra.mxu0 %v2320
      %v3458 = vpop.f32.mrf.mxu0
      %v3459 = vadd.f32 %v3370, %v3458
      %v3460 = vpop.f32.mrf.mxu0
      %v3461 = vadd.f32 %v3372, %v3460
      %3462 = vmatmul.bf16.gmra.mxu0 %v2323
      %v3463 = vpop.f32.mrf.mxu0
      %v3464 = vadd.f32 %v3375, %v3463
      %v3465 = vpop.f32.mrf.mxu0
      %v3466 = vadd.f32 %v3377, %v3465
      %3467 = vmatmul.bf16.gmra.mxu0 %v2326
      %v3468 = vpop.f32.mrf.mxu0
      %v3469 = vadd.f32 %v3380, %v3468
      %v3470 = vpop.f32.mrf.mxu0
      %v3471 = vadd.f32 %v3382, %v3470
      %3472 = vmatmul.bf16.gmra.mxu0 %v2329
      %v3473 = vpop.f32.mrf.mxu0
      %v3474 = vadd.f32 %v3385, %v3473
      %v3475 = vpop.f32.mrf.mxu0
      %v3476 = vadd.f32 %v3387, %v3475
      %3477 = vmatmul.bf16.gmra.mxu0 %v2332
      %v3478 = vpop.f32.mrf.mxu0
      %v3479 = vadd.f32 %v3390, %v3478
      %v3480 = vpop.f32.mrf.mxu0
      %v3481 = vadd.f32 %v3392, %v3480
      %3482 = vmatmul.bf16.gmra.mxu0 %v2335
      %v3483 = vpop.f32.mrf.mxu0
      %v3484 = vadd.f32 %v3395, %v3483
      %v3485 = vpop.f32.mrf.mxu0
      %v3486 = vadd.f32 %v3397, %v3485
      %3487 = vmatmul.bf16.gmra.mxu0 %v2338
      %v3488 = vpop.f32.mrf.mxu0
      %v3489 = vadd.f32 %v3400, %v3488
      %v3490 = vpop.f32.mrf.mxu0
      %v3491 = vadd.f32 %v3402, %v3490
      %3492 = vmatmul.bf16.gmra.mxu0 %v2341
      %v3493 = vpop.f32.mrf.mxu0
      %v3494 = vadd.f32 %v3405, %v3493
      %v3495 = vpop.f32.mrf.mxu0
      %v3496 = vadd.f32 %v3407, %v3495
      %3497 = vmatmul.bf16.gmra.mxu0 %v2344
      %v3498 = vpop.f32.mrf.mxu0
      %v3499 = vadd.f32 %v3410, %v3498
      %v3500 = vpop.f32.mrf.mxu0
      %v3501 = vadd.f32 %v3412, %v3500
      %3502 = vdwg.mxu0
      %v3503 = vmax.f32 %v3424, 0.0
      %v3504 = vmax.f32 %v3426, 0.0
      %v3505 = vmax.f32 %v3429, 0.0
      %v3506 = vmax.f32 %v3431, 0.0
      %v3507 = vmax.f32 %v3434, 0.0
      %v3508 = vmax.f32 %v3436, 0.0
      %v3509 = vmax.f32 %v3439, 0.0
      %v3510 = vmax.f32 %v3441, 0.0
      %v3511 = vmax.f32 %v3444, 0.0
      %v3512 = vmax.f32 %v3446, 0.0
      %v3513 = vmax.f32 %v3449, 0.0
      %v3514 = vmax.f32 %v3451, 0.0
      %v3515 = vmax.f32 %v3454, 0.0
      %v3516 = vmax.f32 %v3456, 0.0
      %v3517 = vmax.f32 %v3459, 0.0
      %v3518 = vmax.f32 %v3461, 0.0
      %v3519 = vmax.f32 %v3464, 0.0
      %v3520 = vmax.f32 %v3466, 0.0
      %v3521 = vmax.f32 %v3469, 0.0
      %v3522 = vmax.f32 %v3471, 0.0
      %v3523 = vmax.f32 %v3474, 0.0
      %v3524 = vmax.f32 %v3476, 0.0
      %v3525 = vmax.f32 %v3479, 0.0
      %v3526 = vmax.f32 %v3481, 0.0
      %v3527 = vmax.f32 %v3484, 0.0
      %v3528 = vmax.f32 %v3486, 0.0
      %v3529 = vmax.f32 %v3489, 0.0
      %v3530 = vmax.f32 %v3491, 0.0
      %v3531 = vmax.f32 %v3494, 0.0
      %v3532 = vmax.f32 %v3496, 0.0
      %v3533 = vmax.f32 %v3499, 0.0
      %v3534 = vmax.f32 %v3501, 0.0
      %v3535 = vpack.c.bf16 %v3503, %v3503
      %v3536 = vpack.c.bf16 %v3504, %v3504
      %v3537 = vpack.c.bf16 %v3505, %v3505
      %v3538 = vpack.c.bf16 %v3506, %v3506
      %v3539 = vpack.c.bf16 %v3507, %v3507
      %v3540 = vpack.c.bf16 %v3508, %v3508
      %v3541 = vpack.c.bf16 %v3509, %v3509
      %v3542 = vpack.c.bf16 %v3510, %v3510
      %v3543 = vpack.c.bf16 %v3511, %v3511
      %v3544 = vpack.c.bf16 %v3512, %v3512
      %v3545 = vpack.c.bf16 %v3513, %v3513
      %v3546 = vpack.c.bf16 %v3514, %v3514
      %v3547 = vpack.c.bf16 %v3515, %v3515
      %v3548 = vpack.c.bf16 %v3516, %v3516
      %v3549 = vpack.c.bf16 %v3517, %v3517
      %v3550 = vpack.c.bf16 %v3518, %v3518
      %v3551 = vpack.c.bf16 %v3519, %v3519
      %v3552 = vpack.c.bf16 %v3520, %v3520
      %v3553 = vpack.c.bf16 %v3521, %v3521
      %v3554 = vpack.c.bf16 %v3522, %v3522
      %v3555 = vpack.c.bf16 %v3523, %v3523
      %v3556 = vpack.c.bf16 %v3524, %v3524
      %v3557 = vpack.c.bf16 %v3525, %v3525
      %v3558 = vpack.c.bf16 %v3526, %v3526
      %v3559 = vpack.c.bf16 %v3527, %v3527
      %v3560 = vpack.c.bf16 %v3528, %v3528
      %v3561 = vpack.c.bf16 %v3529, %v3529
      %v3562 = vpack.c.bf16 %v3530, %v3530
      %v3563 = vpack.c.bf16 %v3531, %v3531
      %v3564 = vpack.c.bf16 %v3532, %v3532
      %v3565 = vpack.c.bf16 %v3533, %v3533
      %v3566 = vpack.c.bf16 %v3534, %v3534
      %3567 = vst [vmem:[%s226] sm:$0xf] %v3535
      %3568 = vst [vmem:[%s226 + $0x4] sm:$0xf] %v3536
      %3569 = vst [vmem:[%s226 + $0x8] sm:$0xf] %v3537
      %3570 = vst [vmem:[%s226 + $0xc] sm:$0xf] %v3538
      %3571 = vst [vmem:[%s226 + $0x10] sm:$0xf] %v3539
      %3572 = vst [vmem:[%s226 + $0x14] sm:$0xf] %v3540
      %3573 = vst [vmem:[%s226 + $0x18] sm:$0xf] %v3541
      %3574 = vst [vmem:[%s226 + $0x1c] sm:$0xf] %v3542
      %3575 = vst [vmem:[%s226 + $0x20] sm:$0xf] %v3543
      %3576 = vst [vmem:[%s226 + $0x24] sm:$0xf] %v3544
      %3577 = vst [vmem:[%s226 + $0x28] sm:$0xf] %v3545
      %3578 = vst [vmem:[%s226 + $0x2c] sm:$0xf] %v3546
      %3579 = vst [vmem:[%s226 + $0x30] sm:$0xf] %v3547
      %3580 = vst [vmem:[%s226 + $0x34] sm:$0xf] %v3548
      %3581 = vst [vmem:[%s226 + $0x38] sm:$0xf] %v3549
      %3582 = vst [vmem:[%s226 + $0x3c] sm:$0xf] %v3550
      %3583 = vst [vmem:[%s226 + $0x40] sm:$0xf] %v3551
      %3584 = vst [vmem:[%s226 + $0x44] sm:$0xf] %v3552
      %3585 = vst [vmem:[%s226 + $0x48] sm:$0xf] %v3553
      %3586 = vst [vmem:[%s226 + $0x4c] sm:$0xf] %v3554
      %3587 = vst [vmem:[%s226 + $0x50] sm:$0xf] %v3555
      %3588 = vst [vmem:[%s226 + $0x54] sm:$0xf] %v3556
      %3589 = vst [vmem:[%s226 + $0x58] sm:$0xf] %v3557
      %3590 = vst [vmem:[%s226 + $0x5c] sm:$0xf] %v3558
      %3591 = vst [vmem:[%s226 + $0x60] sm:$0xf] %v3559
      %3592 = vst [vmem:[%s226 + $0x64] sm:$0xf] %v3560
      %3593 = vst [vmem:[%s226 + $0x68] sm:$0xf] %v3561
      %3594 = vst [vmem:[%s226 + $0x6c] sm:$0xf] %v3562
      %3595 = vst [vmem:[%s226 + $0x70] sm:$0xf] %v3563
      %3596 = vst [vmem:[%s226 + $0x74] sm:$0xf] %v3564
      %3597 = vst [vmem:[%s226 + $0x78] sm:$0xf] %v3565
      %3598 = vst [vmem:[%s226 + $0x7c] sm:$0xf] %v3566
      %s3599 = smul.u32 32, %s18
      %p3600 = scmp.lt.s32.totalorder %s3599, 63
      %s3601 = scalar_select %p3600, %s3599, 63
      %p3602 = scmp.lt.s32.totalorder %s19, 0
      %s3603 = scalar_select %p3602, %s19, 0
      %s3604 = sadd.s32 %s3603, %s3601
      %s3605 = smul.addr %s3604, 4
      %s3606 = scalar_lea.vmem %s3, %s3605
      // Predicated region
      $region33: #{reseau_neurone_forward.8} parent=31 // pred_check
        %p3607 = pneg %p124
      $region34: #{reseau_neurone_forward.8} parent=31 // pred_check_branch
        %3609 = sbr.rel (%p3607) target = $region36
      $region35: #{reseau_neurone_forward.8} parent=31 // pred_region
        %s3610 = smul.u32 32, %s18
      $region36: #{reseau_neurone_forward.8} parent=31 // pred_fallthru
        _
    $region32: #{reseau_neurone_forward.8} parent=5 // pred_fallthru
      _
    %p3611 = scmp.le.s32.totalorder 2, %s9
    // Predicated region
    $region37: #{reseau_neurone_forward.8} parent=5 // pred_check
      %p3612 = pneg %p3611
    $region38: #{reseau_neurone_forward.8} parent=5 // pred_check_branch
      %3614 = sbr.rel (%p3612) target = $region40
    $region39: #{reseau_neurone_forward.8} parent=5 // pred_region
      %s3615 = ssub.s32 %s9, 2
      // Predicated region
      $region41: #{reseau_neurone_forward.8} parent=39 // pred_check
        %p3616 = pneg %p130
      $region42: #{reseau_neurone_forward.8} parent=39 // pred_check_branch
        %3618 = sbr.rel (%p3616) target = $region44
      $region43: #{reseau_neurone_forward.8} parent=39 // pred_region
        %s3619 = smul.u32 32, %s20
        %p3620 = scmp.lt.s32.totalorder %s3619, 63
        %s3621 = scalar_select %p3620, %s3619, 63
        %p3622 = scmp.lt.s32.totalorder %s21, 0
        %s3623 = scalar_select %p3622, %s21, 0
        %s3624 = sadd.s32 %s3623, %s3621
        %s3625 = smul.addr %s3624, 4
        %s3626 = scalar_lea.vmem %s3, %s3625
      $region44: #{reseau_neurone_forward.8} parent=39 // pred_fallthru
        _
    $region40: #{reseau_neurone_forward.8} parent=5 // pred_fallthru
      _
  $region6: #{reseau_neurone_forward.8} parent=0 // loop_footer
    %s13 = sadd.s32 1, %s9
  $region7: #{reseau_neurone_forward.8} parent=0 // loop_footer_branch
    %8 = sbr.rel target = $region3
  $region8: #{reseau_neurone_forward.8} parent=0 // loop_exit
    _

// kernel: reseau_neurone_forward.9
$region0: #{reseau_neurone_forward.9}
  #allocation0 [shape = 'u32[]', space=smem, size = 0x4, offset = 0x4, fixed_abs, tag = 'smem constant byte address 0x4 - core index']
  #allocation1 [shape = 'u32[72,128]{1,0:T(1,128)}', space=vmem, size = 0x9000, scoped, tag = 'internal scratch']
  #allocation2 [shape = 'f32[8,128]{1,0:T(8,128)}', space=vmem, size = 0x1000, scoped, tag = 'scratch operand']
  %s0 = inlined_call_operand.vmem [shape: bf16[8,16384], index: 0, kind: input, shape index: {}]
  %s1 = inlined_call_operand.vmem [shape: bf16[16384,128], index: 1, kind: input, shape index: {}]
  %s2 = inlined_call_operand.vmem [shape: f32[1,128], index: 2, kind: input, shape index: {}]
  %s3 = inlined_call_operand.vmem [shape: f32[128,128], index: 3, kind: input, shape index: {}]
  %s4 = inlined_call_operand.vmem [shape: f32[1,128], index: 4, kind: input, shape index: {}]
  %s5 = inlined_call_operand.vmem [shape: f32[8,128], index: 5, kind: output, shape index: {}]
  %s6 = sld [smem:[#allocation0]]
  $region61: #{reseau_neurone_forward.9} parent=0
    _
  %s8 = ssub.s32 1, %s6
  %s9 = scalar_select 0, %s8, %s6
  loop: start=0, step=1, limit=6
  $region2: #{reseau_neurone_forward.9} parent=0 // loop_pre_header
    _
  $region3: #{reseau_neurone_forward.9} parent=0 // loop_header
    %s11 = sphi 0, %s15
    %p12 = scmp.ge.s32.totalorder %s11, 6
    %s21 = sphi 0, %s23
    %s24 = sphi 0, %s21
    %s25 = sphi 0, %s24
    %s41 = sphi 0, %s25
    %s47 = sphi 0, %s49
    %s50 = sphi 0, %s47
    %s51 = sphi 0, %s50
    %s67 = sphi 0, %s51
    %s71 = sphi 0, %s71
    %s73 = sphi 0, %s71
    %s74 = sphi 0, %s73
    %s88 = sphi 0, %s74
    %s92 = sphi 0, %s92
    %s94 = sphi 0, %s92
    %s95 = sphi 0, %s94
    %s109 = sphi 0, %s95
    %s113 = sphi 0, %s113
    %s115 = sphi 0, %s113
    %s116 = sphi 0, %s115
    %s130 = sphi 0, %s116
    %s134 = sphi 0, %s134
    %s136 = sphi 0, %s134
    %s137 = sphi 0, %s136
    %s151 = sphi 0, %s137
  $region4: #{reseau_neurone_forward.9} parent=0 // loop_header_branch
    %14 = sbr.rel (%p12) target = $region8
  $region5: #{reseau_neurone_forward.9} parent=0 // loop_body
    %s16 = ssub.s32 %s11, 1
    %s17 = ssub.s32 %s11, 2
    %s18 = sadd.s32 %s11, 1
    %s19 = ssub.s32 %s11, %s18
    %p20 = scmp.eq.s32.totalorder %s19, 0
    %s22 = sadd.s32 %s21, 1
    %s23 = scalar_select %p20, %s21, %s22
    %p26 = pneg %p20
    %p27 = scmp.eq.s32.totalorder %s11, 3
    %p28 = por %p26, %p27
    %p29 = scmp.ne.s32.totalorder %s21, %s24
    %p30 = scmp.eq.s32.totalorder %s11, 0
    %p31 = por %p29, %p30
    %p32 = scmp.ne.s32.totalorder %s21, %s24
    %p33 = scmp.eq.s32.totalorder %s16, 3
    %p34 = por %p32, %p33
    %p35 = scmp.ne.s32.totalorder %s24, %s25
    %p36 = scmp.eq.s32.totalorder %s16, 0
    %p37 = por %p35, %p36
    %p38 = scmp.ne.s32.totalorder %s24, %s25
    %p39 = scmp.eq.s32.totalorder %s17, 3
    %p40 = por %p38, %p39
    %p42 = scmp.ne.s32.totalorder %s25, %s41
    %p43 = scmp.eq.s32.totalorder %s17, 0
    %p44 = por %p42, %p43
    %s45 = ssub.s32 %s11, %s18
    %p46 = scmp.eq.s32.totalorder %s45, 0
    %s48 = sadd.s32 %s47, 1
    %s49 = scalar_select %p46, %s47, %s48
    %p52 = pneg %p46
    %p53 = scmp.eq.s32.totalorder %s11, 3
    %p54 = por %p52, %p53
    %p55 = scmp.ne.s32.totalorder %s47, %s50
    %p56 = scmp.eq.s32.totalorder %s11, 0
    %p57 = por %p55, %p56
    %p58 = scmp.ne.s32.totalorder %s47, %s50
    %p59 = scmp.eq.s32.totalorder %s16, 3
    %p60 = por %p58, %p59
    %p61 = scmp.ne.s32.totalorder %s50, %s51
    %p62 = scmp.eq.s32.totalorder %s16, 0
    %p63 = por %p61, %p62
    %p64 = scmp.ne.s32.totalorder %s50, %s51
    %p65 = scmp.eq.s32.totalorder %s17, 3
    %p66 = por %p64, %p65
    %p68 = scmp.ne.s32.totalorder %s51, %s67
    %p69 = scmp.eq.s32.totalorder %s17, 0
    %p70 = por %p68, %p69
    %s72 = sadd.s32 %s71, 1
    %p75 = scmp.eq.s32.totalorder %s11, 3
    %p76 = scmp.ne.s32.totalorder %s71, %s73
    %p77 = scmp.eq.s32.totalorder %s11, 0
    %p78 = por %p76, %p77
    %p79 = scmp.ne.s32.totalorder %s71, %s73
    %p80 = scmp.eq.s32.totalorder %s16, 3
    %p81 = por %p79, %p80
    %p82 = scmp.ne.s32.totalorder %s73, %s74
    %p83 = scmp.eq.s32.totalorder %s16, 0
    %p84 = por %p82, %p83
    %p85 = scmp.ne.s32.totalorder %s73, %s74
    %p86 = scmp.eq.s32.totalorder %s17, 3
    %p87 = por %p85, %p86
    %p89 = scmp.ne.s32.totalorder %s74, %s88
    %p90 = scmp.eq.s32.totalorder %s17, 0
    %p91 = por %p89, %p90
    %s93 = sadd.s32 %s92, 1
    %p96 = scmp.eq.s32.totalorder %s11, 3
    %p97 = scmp.ne.s32.totalorder %s92, %s94
    %p98 = scmp.eq.s32.totalorder %s11, 0
    %p99 = por %p97, %p98
    %p100 = scmp.ne.s32.totalorder %s92, %s94
    %p101 = scmp.eq.s32.totalorder %s16, 3
    %p102 = por %p100, %p101
    %p103 = scmp.ne.s32.totalorder %s94, %s95
    %p104 = scmp.eq.s32.totalorder %s16, 0
    %p105 = por %p103, %p104
    %p106 = scmp.ne.s32.totalorder %s94, %s95
    %p107 = scmp.eq.s32.totalorder %s17, 3
    %p108 = por %p106, %p107
    %p110 = scmp.ne.s32.totalorder %s95, %s109
    %p111 = scmp.eq.s32.totalorder %s17, 0
    %p112 = por %p110, %p111
    %s114 = sadd.s32 %s113, 1
    %p117 = scmp.eq.s32.totalorder %s11, 3
    %p118 = scmp.ne.s32.totalorder %s113, %s115
    %p119 = scmp.eq.s32.totalorder %s11, 0
    %p120 = por %p118, %p119
    %p121 = scmp.ne.s32.totalorder %s113, %s115
    %p122 = scmp.eq.s32.totalorder %s16, 3
    %p123 = por %p121, %p122
    %p124 = scmp.ne.s32.totalorder %s115, %s116
    %p125 = scmp.eq.s32.totalorder %s16, 0
    %p126 = por %p124, %p125
    %p127 = scmp.ne.s32.totalorder %s115, %s116
    %p128 = scmp.eq.s32.totalorder %s17, 3
    %p129 = por %p127, %p128
    %p131 = scmp.ne.s32.totalorder %s116, %s130
    %p132 = scmp.eq.s32.totalorder %s17, 0
    %p133 = por %p131, %p132
    %s135 = sadd.s32 %s134, 1
    %p138 = scmp.eq.s32.totalorder %s11, 3
    %p139 = scmp.ne.s32.totalorder %s134, %s136
    %p140 = scmp.eq.s32.totalorder %s11, 0
    %p141 = por %p139, %p140
    %p142 = scmp.ne.s32.totalorder %s134, %s136
    %p143 = scmp.eq.s32.totalorder %s16, 3
    %p144 = por %p142, %p143
    %p145 = scmp.ne.s32.totalorder %s136, %s137
    %p146 = scmp.eq.s32.totalorder %s16, 0
    %p147 = por %p145, %p146
    %p148 = scmp.ne.s32.totalorder %s136, %s137
    %p149 = scmp.eq.s32.totalorder %s17, 3
    %p150 = por %p148, %p149
    %p152 = scmp.ne.s32.totalorder %s137, %s151
    %p153 = scmp.eq.s32.totalorder %s17, 0
    %p154 = por %p152, %p153
    %p155 = scmp.le.s32.totalorder 1, %s11
    %p156 = scmp.lt.s32.totalorder %s11, 5
    %p157 = pnand %p155, %p156
    %p158 = pneg %p157
    // Predicated region
    $region9: #{reseau_neurone_forward.9} parent=5 // pred_check
      _
    $region10: #{reseau_neurone_forward.9} parent=5 // pred_check_branch
      %160 = sbr.rel (%p157) target = $region12
    $region11: #{reseau_neurone_forward.9} parent=5 // pred_region
      %s161 = ssub.s32 %s11, 1
      // Predicated region
      $region13: #{reseau_neurone_forward.9} parent=11 // pred_check
        %p162 = pneg %p84
      $region14: #{reseau_neurone_forward.9} parent=11 // pred_check_branch
        %164 = sbr.rel (%p162) target = $region16
      $region15: #{reseau_neurone_forward.9} parent=11 // pred_region
        _
      $region16: #{reseau_neurone_forward.9} parent=11 // pred_fallthru
        _
      // Predicated region
      $region17: #{reseau_neurone_forward.9} parent=11 // pred_check
        %p165 = pneg %p105
      $region18: #{reseau_neurone_forward.9} parent=11 // pred_check_branch
        %167 = sbr.rel (%p165) target = $region20
      $region19: #{reseau_neurone_forward.9} parent=11 // pred_region
        _
      $region20: #{reseau_neurone_forward.9} parent=11 // pred_fallthru
        _
      // Predicated region
      $region21: #{reseau_neurone_forward.9} parent=11 // pred_check
        %p168 = pneg %p126
      $region22: #{reseau_neurone_forward.9} parent=11 // pred_check_branch
        %170 = sbr.rel (%p168) target = $region24
      $region23: #{reseau_neurone_forward.9} parent=11 // pred_region
        _
      $region24: #{reseau_neurone_forward.9} parent=11 // pred_fallthru
        _
    $region12: #{reseau_neurone_forward.9} parent=5 // pred_fallthru
      _
    %p171 = scmp.lt.s32.totalorder %s11, 4
    // Predicated region
    $region25: #{reseau_neurone_forward.9} parent=5 // pred_check
      %p172 = pneg %p171
    $region26: #{reseau_neurone_forward.9} parent=5 // pred_check_branch
      %174 = sbr.rel (%p172) target = $region28
    $region27: #{reseau_neurone_forward.9} parent=5 // pred_region
      // Predicated region
      $region29: #{reseau_neurone_forward.9} parent=27 // pred_check
        %p175 = pneg %p31
      $region30: #{reseau_neurone_forward.9} parent=27 // pred_check_branch
        %177 = sbr.rel (%p175) target = $region32
      $region31: #{reseau_neurone_forward.9} parent=27 // pred_region
        %s178 = smul.u32 32, %s11
        %p179 = scmp.lt.s32.totalorder %s178, 127
        %s180 = scalar_select %p179, %s178, 127
        %s181 = smul.addr %s180, 4
        %s182 = scalar_lea.vmem %s0, %s181
        %s183 = smul.u32 32, %s11
      $region32: #{reseau_neurone_forward.9} parent=27 // pred_fallthru
        _
      // Predicated region
      $region33: #{reseau_neurone_forward.9} parent=27 // pred_check
        %p184 = pneg %p57
      $region34: #{reseau_neurone_forward.9} parent=27 // pred_check_branch
        %186 = sbr.rel (%p184) target = $region36
      $region35: #{reseau_neurone_forward.9} parent=27 // pred_region
        %s187 = smul.u32 512, %s11
        %p188 = scmp.lt.s32.totalorder %s187, 2047
        %s189 = scalar_select %p188, %s187, 2047
        %s190 = smul.addr %s189, 4
        %s191 = scalar_lea.vmem %s1, %s190
        %s192 = smul.u32 512, %s11
      $region36: #{reseau_neurone_forward.9} parent=27 // pred_fallthru
        _
    $region28: #{reseau_neurone_forward.9} parent=5 // pred_fallthru
      _
    %p193 = scmp.le.s32.totalorder 1, %s11
    %p194 = scmp.lt.s32.totalorder %s11, 5
    %p195 = pnand %p193, %p194
    %p196 = pneg %p195
    // Predicated region
    $region37: #{reseau_neurone_forward.9} parent=5 // pred_check
      _
    $region38: #{reseau_neurone_forward.9} parent=5 // pred_check_branch
      %198 = sbr.rel (%p195) target = $region40
    $region39: #{reseau_neurone_forward.9} parent=5 // pred_region
      %s199 = ssub.s32 %s11, 1
      %s200 = smul.u32 32, %s16
      %p201 = scmp.lt.s32.totalorder %s200, 127
      %s202 = scalar_select %p201, %s200, 127
      %s203 = smul.addr %s202, 4
      %s204 = scalar_lea.vmem %s0, %s203
      %p205 = pneg %p37
      %p206 = pneg %p34
      %s207 = smul.u32 512, %s16
      %p208 = scmp.lt.s32.totalorder %s207, 2047
      %s209 = scalar_select %p208, %s207, 2047
      %s210 = smul.addr %s209, 4
      %s211 = scalar_lea.vmem %s1, %s210
      %p212 = pneg %p63
      %p213 = pneg %p60
      %p214 = pneg %p84
      %p215 = pneg %p81
      %p216 = pneg %p105
      %p217 = pneg %p102
      %p218 = pneg %p126
      %p219 = pneg %p123
      %p220 = pneg %p147
      %p221 = pneg %p144
      %s222 = smul.u32 32, %s16
      %p223 = scmp.lt.s32.totalorder %s222, 127
      %s224 = scalar_select %p223, %s222, 127
      %s225 = smul.addr %s224, 4
      %s226 = scalar_lea.vmem %s0, %s225
      %s227 = smul.u32 32, %s16
      %s228 = smul.u32 512, %s16
      %p229 = scmp.lt.s32.totalorder %s228, 2047
      %s230 = scalar_select %p229, %s228, 2047
      %s231 = smul.addr %s230, 4
      %s232 = scalar_lea.vmem %s1, %s231
      %s233 = smul.u32 512, %s16
      %p234 = scmp.eq.s32.totalorder %s16, 0
      // Predicated region
      $region41: #{reseau_neurone_forward.9} parent=39 // pred_check
        %p235 = pneg %p234
      $region42: #{reseau_neurone_forward.9} parent=39 // pred_check_branch
        %237 = sbr.rel (%p235) target = $region44
      $region43: #{reseau_neurone_forward.9} parent=39 // pred_region
        %238 = vst [vmem:[#allocation2] sm:$0xff] 0.0
      $region44: #{reseau_neurone_forward.9} parent=39 // pred_fallthru
        _
      %v239 = vld [vmem:[#allocation2] sm:$0xff]
      %v240 = vld [vmem:[%s226] sm:$0xff]
      %v241 = vld [vmem:[%s226 + $0x8] sm:$0xff]
      %v242 = vld [vmem:[%s226 + $0x10] sm:$0xff]
      %v243 = vld [vmem:[%s226 + $0x18] sm:$0xff]
      %v244 = vld [vmem:[%s226 + $0x20] sm:$0xff]
      %v245 = vld [vmem:[%s226 + $0x28] sm:$0xff]
      %v246 = vld [vmem:[%s226 + $0x30] sm:$0xff]
      %v247 = vld [vmem:[%s226 + $0x38] sm:$0xff]
      %v248 = vld [vmem:[%s226 + $0x40] sm:$0xff]
      %v249 = vld [vmem:[%s226 + $0x48] sm:$0xff]
      %v250 = vld [vmem:[%s226 + $0x50] sm:$0xff]
      %v251 = vld [vmem:[%s226 + $0x58] sm:$0xff]
      %v252 = vld [vmem:[%s226 + $0x60] sm:$0xff]
      %v253 = vld [vmem:[%s226 + $0x68] sm:$0xff]
      %v254 = vld [vmem:[%s226 + $0x70] sm:$0xff]
      %v255 = vld [vmem:[%s226 + $0x78] sm:$0xff]
      %v256 = vld [vmem:[%s232] sm:$0xf]
      %v257 = vld [vmem:[%s232 + $0x4] sm:$0xf]
      %v258 = vld [vmem:[%s232 + $0x8] sm:$0xf]
      %v259 = vld [vmem:[%s232 + $0xc] sm:$0xf]
      %v260 = vld [vmem:[%s232 + $0x10] sm:$0xf]
      %v261 = vld [vmem:[%s232 + $0x14] sm:$0xf]
      %v262 = vld [vmem:[%s232 + $0x18] sm:$0xf]
      %v263 = vld [vmem:[%s232 + $0x1c] sm:$0xf]
      %v264 = vld [vmem:[%s232 + $0x20] sm:$0xf]
      %v265 = vld [vmem:[%s232 + $0x24] sm:$0xf]
      %v266 = vld [vmem:[%s232 + $0x28] sm:$0xf]
      %v267 = vld [vmem:[%s232 + $0x2c] sm:$0xf]
      %v268 = vld [vmem:[%s232 + $0x30] sm:$0xf]
      %v269 = vld [vmem:[%s232 + $0x34] sm:$0xf]
      %v270 = vld [vmem:[%s232 + $0x38] sm:$0xf]
      %v271 = vld [vmem:[%s232 + $0x3c] sm:$0xf]
      %v272 = vld [vmem:[%s232 + $0x40] sm:$0xf]
      %v273 = vld [vmem:[%s232 + $0x44] sm:$0xf]
      %v274 = vld [vmem:[%s232 + $0x48] sm:$0xf]
      %v275 = vld [vmem:[%s232 + $0x4c] sm:$0xf]
      %v276 = vld [vmem:[%s232 + $0x50] sm:$0xf]
      %v277 = vld [vmem:[%s232 + $0x54] sm:$0xf]
      %v278 = vld [vmem:[%s232 + $0x58] sm:$0xf]
      %v279 = vld [vmem:[%s232 + $0x5c] sm:$0xf]
      %v280 = vld [vmem:[%s232 + $0x60] sm:$0xf]
      %v281 = vld [vmem:[%s232 + $0x64] sm:$0xf]
      %v282 = vld [vmem:[%s232 + $0x68] sm:$0xf]
      %v283 = vld [vmem:[%s232 + $0x6c] sm:$0xf]
      %v284 = vld [vmem:[%s232 + $0x70] sm:$0xf]
      %v285 = vld [vmem:[%s232 + $0x74] sm:$0xf]
      %v286 = vld [vmem:[%s232 + $0x78] sm:$0xf]
      %v287 = vld [vmem:[%s232 + $0x7c] sm:$0xf]
      %v288 = vld [vmem:[%s232 + $0x80] sm:$0xf]
      %v289 = vld [vmem:[%s232 + $0x84] sm:$0xf]
      %v290 = vld [vmem:[%s232 + $0x88] sm:$0xf]
      %v291 = vld [vmem:[%s232 + $0x8c] sm:$0xf]
      %v292 = vld [vmem:[%s232 + $0x90] sm:$0xf]
      %v293 = vld [vmem:[%s232 + $0x94] sm:$0xf]
      %v294 = vld [vmem:[%s232 + $0x98] sm:$0xf]
      %v295 = vld [vmem:[%s232 + $0x9c] sm:$0xf]
      %v296 = vld [vmem:[%s232 + $0xa0] sm:$0xf]
      %v297 = vld [vmem:[%s232 + $0xa4] sm:$0xf]
      %v298 = vld [vmem:[%s232 + $0xa8] sm:$0xf]
      %v299 = vld [vmem:[%s232 + $0xac] sm:$0xf]
      %v300 = vld [vmem:[%s232 + $0xb0] sm:$0xf]
      %v301 = vld [vmem:[%s232 + $0xb4] sm:$0xf]
      %v302 = vld [vmem:[%s232 + $0xb8] sm:$0xf]
      %v303 = vld [vmem:[%s232 + $0xbc] sm:$0xf]
      %v304 = vld [vmem:[%s232 + $0xc0] sm:$0xf]
      %v305 = vld [vmem:[%s232 + $0xc4] sm:$0xf]
      %v306 = vld [vmem:[%s232 + $0xc8] sm:$0xf]
      %v307 = vld [vmem:[%s232 + $0xcc] sm:$0xf]
      %v308 = vld [vmem:[%s232 + $0xd0] sm:$0xf]
      %v309 = vld [vmem:[%s232 + $0xd4] sm:$0xf]
      %v310 = vld [vmem:[%s232 + $0xd8] sm:$0xf]
      %v311 = vld [vmem:[%s232 + $0xdc] sm:$0xf]
      %v312 = vld [vmem:[%s232 + $0xe0] sm:$0xf]
      %v313 = vld [vmem:[%s232 + $0xe4] sm:$0xf]
      %v314 = vld [vmem:[%s232 + $0xe8] sm:$0xf]
      %v315 = vld [vmem:[%s232 + $0xec] sm:$0xf]
      %v316 = vld [vmem:[%s232 + $0xf0] sm:$0xf]
      %v317 = vld [vmem:[%s232 + $0xf4] sm:$0xf]
      %v318 = vld [vmem:[%s232 + $0xf8] sm:$0xf]
      %v319 = vld [vmem:[%s232 + $0xfc] sm:$0xf]
      %v320 = vld [vmem:[%s232 + $0x100] sm:$0xf]
      %v321 = vld [vmem:[%s232 + $0x104] sm:$0xf]
      %v322 = vld [vmem:[%s232 + $0x108] sm:$0xf]
      %v323 = vld [vmem:[%s232 + $0x10c] sm:$0xf]
      %v324 = vld [vmem:[%s232 + $0x110] sm:$0xf]
      %v325 = vld [vmem:[%s232 + $0x114] sm:$0xf]
      %v326 = vld [vmem:[%s232 + $0x118] sm:$0xf]
      %v327 = vld [vmem:[%s232 + $0x11c] sm:$0xf]
      %v328 = vld [vmem:[%s232 + $0x120] sm:$0xf]
      %v329 = vld [vmem:[%s232 + $0x124] sm:$0xf]
      %v330 = vld [vmem:[%s232 + $0x128] sm:$0xf]
      %v331 = vld [vmem:[%s232 + $0x12c] sm:$0xf]
      %v332 = vld [vmem:[%s232 + $0x130] sm:$0xf]
      %v333 = vld [vmem:[%s232 + $0x134] sm:$0xf]
      %v334 = vld [vmem:[%s232 + $0x138] sm:$0xf]
      %v335 = vld [vmem:[%s232 + $0x13c] sm:$0xf]
      %v336 = vld [vmem:[%s232 + $0x140] sm:$0xf]
      %v337 = vld [vmem:[%s232 + $0x144] sm:$0xf]
      %v338 = vld [vmem:[%s232 + $0x148] sm:$0xf]
      %v339 = vld [vmem:[%s232 + $0x14c] sm:$0xf]
      %v340 = vld [vmem:[%s232 + $0x150] sm:$0xf]
      %v341 = vld [vmem:[%s232 + $0x154] sm:$0xf]
      %v342 = vld [vmem:[%s232 + $0x158] sm:$0xf]
      %v343 = vld [vmem:[%s232 + $0x15c] sm:$0xf]
      %v344 = vld [vmem:[%s232 + $0x160] sm:$0xf]
      %v345 = vld [vmem:[%s232 + $0x164] sm:$0xf]
      %v346 = vld [vmem:[%s232 + $0x168] sm:$0xf]
      %v347 = vld [vmem:[%s232 + $0x16c] sm:$0xf]
      %v348 = vld [vmem:[%s232 + $0x170] sm:$0xf]
      %v349 = vld [vmem:[%s232 + $0x174] sm:$0xf]
      %v350 = vld [vmem:[%s232 + $0x178] sm:$0xf]
      %v351 = vld [vmem:[%s232 + $0x17c] sm:$0xf]
      %v352 = vld [vmem:[%s232 + $0x180] sm:$0xf]
      %v353 = vld [vmem:[%s232 + $0x184] sm:$0xf]
      %v354 = vld [vmem:[%s232 + $0x188] sm:$0xf]
      %v355 = vld [vmem:[%s232 + $0x18c] sm:$0xf]
      %v356 = vld [vmem:[%s232 + $0x190] sm:$0xf]
      %v357 = vld [vmem:[%s232 + $0x194] sm:$0xf]
      %v358 = vld [vmem:[%s232 + $0x198] sm:$0xf]
      %v359 = vld [vmem:[%s232 + $0x19c] sm:$0xf]
      %v360 = vld [vmem:[%s232 + $0x1a0] sm:$0xf]
      %v361 = vld [vmem:[%s232 + $0x1a4] sm:$0xf]
      %v362 = vld [vmem:[%s232 + $0x1a8] sm:$0xf]
      %v363 = vld [vmem:[%s232 + $0x1ac] sm:$0xf]
      %v364 = vld [vmem:[%s232 + $0x1b0] sm:$0xf]
      %v365 = vld [vmem:[%s232 + $0x1b4] sm:$0xf]
      %v366 = vld [vmem:[%s232 + $0x1b8] sm:$0xf]
      %v367 = vld [vmem:[%s232 + $0x1bc] sm:$0xf]
      %v368 = vld [vmem:[%s232 + $0x1c0] sm:$0xf]
      %v369 = vld [vmem:[%s232 + $0x1c4] sm:$0xf]
      %v370 = vld [vmem:[%s232 + $0x1c8] sm:$0xf]
      %v371 = vld [vmem:[%s232 + $0x1cc] sm:$0xf]
      %v372 = vld [vmem:[%s232 + $0x1d0] sm:$0xf]
      %v373 = vld [vmem:[%s232 + $0x1d4] sm:$0xf]
      %v374 = vld [vmem:[%s232 + $0x1d8] sm:$0xf]
      %v375 = vld [vmem:[%s232 + $0x1dc] sm:$0xf]
      %v376 = vld [vmem:[%s232 + $0x1e0] sm:$0xf]
      %v377 = vld [vmem:[%s232 + $0x1e4] sm:$0xf]
      %v378 = vld [vmem:[%s232 + $0x1e8] sm:$0xf]
      %v379 = vld [vmem:[%s232 + $0x1ec] sm:$0xf]
      %v380 = vld [vmem:[%s232 + $0x1f0] sm:$0xf]
      %v381 = vld [vmem:[%s232 + $0x1f4] sm:$0xf]
      %v382 = vld [vmem:[%s232 + $0x1f8] sm:$0xf]
      %v383 = vld [vmem:[%s232 + $0x1fc] sm:$0xf]
      %v384 = vld [vmem:[%s232 + $0x200] sm:$0xf]
      %v385 = vld [vmem:[%s232 + $0x204] sm:$0xf]
      %v386 = vld [vmem:[%s232 + $0x208] sm:$0xf]
      %v387 = vld [vmem:[%s232 + $0x20c] sm:$0xf]
      %v388 = vld [vmem:[%s232 + $0x210] sm:$0xf]
      %v389 = vld [vmem:[%s232 + $0x214] sm:$0xf]
      %v390 = vld [vmem:[%s232 + $0x218] sm:$0xf]
      %v391 = vld [vmem:[%s232 + $0x21c] sm:$0xf]
      %v392 = vld [vmem:[%s232 + $0x220] sm:$0xf]
      %v393 = vld [vmem:[%s232 + $0x224] sm:$0xf]
      %v394 = vld [vmem:[%s232 + $0x228] sm:$0xf]
      %v395 = vld [vmem:[%s232 + $0x22c] sm:$0xf]
      %v396 = vld [vmem:[%s232 + $0x230] sm:$0xf]
      %v397 = vld [vmem:[%s232 + $0x234] sm:$0xf]
      %v398 = vld [vmem:[%s232 + $0x238] sm:$0xf]
      %v399 = vld [vmem:[%s232 + $0x23c] sm:$0xf]
      %v400 = vld [vmem:[%s232 + $0x240] sm:$0xf]
      %v401 = vld [vmem:[%s232 + $0x244] sm:$0xf]
      %v402 = vld [vmem:[%s232 + $0x248] sm:$0xf]
      %v403 = vld [vmem:[%s232 + $0x24c] sm:$0xf]
      %v404 = vld [vmem:[%s232 + $0x250] sm:$0xf]
      %v405 = vld [vmem:[%s232 + $0x254] sm:$0xf]
      %v406 = vld [vmem:[%s232 + $0x258] sm:$0xf]
      %v407 = vld [vmem:[%s232 + $0x25c] sm:$0xf]
      %v408 = vld [vmem:[%s232 + $0x260] sm:$0xf]
      %v409 = vld [vmem:[%s232 + $0x264] sm:$0xf]
      %v410 = vld [vmem:[%s232 + $0x268] sm:$0xf]
      %v411 = vld [vmem:[%s232 + $0x26c] sm:$0xf]
      %v412 = vld [vmem:[%s232 + $0x270] sm:$0xf]
      %v413 = vld [vmem:[%s232 + $0x274] sm:$0xf]
      %v414 = vld [vmem:[%s232 + $0x278] sm:$0xf]
      %v415 = vld [vmem:[%s232 + $0x27c] sm:$0xf]
      %v416 = vld [vmem:[%s232 + $0x280] sm:$0xf]
      %v417 = vld [vmem:[%s232 + $0x284] sm:$0xf]
      %v418 = vld [vmem:[%s232 + $0x288] sm:$0xf]
      %v419 = vld [vmem:[%s232 + $0x28c] sm:$0xf]
      %v420 = vld [vmem:[%s232 + $0x290] sm:$0xf]
      %v421 = vld [vmem:[%s232 + $0x294] sm:$0xf]
      %v422 = vld [vmem:[%s232 + $0x298] sm:$0xf]
      %v423 = vld [vmem:[%s232 + $0x29c] sm:$0xf]
      %v424 = vld [vmem:[%s232 + $0x2a0] sm:$0xf]
      %v425 = vld [vmem:[%s232 + $0x2a4] sm:$0xf]
      %v426 = vld [vmem:[%s232 + $0x2a8] sm:$0xf]
      %v427 = vld [vmem:[%s232 + $0x2ac] sm:$0xf]
      %v428 = vld [vmem:[%s232 + $0x2b0] sm:$0xf]
      %v429 = vld [vmem:[%s232 + $0x2b4] sm:$0xf]
      %v430 = vld [vmem:[%s232 + $0x2b8] sm:$0xf]
      %v431 = vld [vmem:[%s232 + $0x2bc] sm:$0xf]
      %v432 = vld [vmem:[%s232 + $0x2c0] sm:$0xf]
      %v433 = vld [vmem:[%s232 + $0x2c4] sm:$0xf]
      %v434 = vld [vmem:[%s232 + $0x2c8] sm:$0xf]
      %v435 = vld [vmem:[%s232 + $0x2cc] sm:$0xf]
      %v436 = vld [vmem:[%s232 + $0x2d0] sm:$0xf]
      %v437 = vld [vmem:[%s232 + $0x2d4] sm:$0xf]
      %v438 = vld [vmem:[%s232 + $0x2d8] sm:$0xf]
      %v439 = vld [vmem:[%s232 + $0x2dc] sm:$0xf]
      %v440 = vld [vmem:[%s232 + $0x2e0] sm:$0xf]
      %v441 = vld [vmem:[%s232 + $0x2e4] sm:$0xf]
      %v442 = vld [vmem:[%s232 + $0x2e8] sm:$0xf]
      %v443 = vld [vmem:[%s232 + $0x2ec] sm:$0xf]
      %v444 = vld [vmem:[%s232 + $0x2f0] sm:$0xf]
      %v445 = vld [vmem:[%s232 + $0x2f4] sm:$0xf]
      %v446 = vld [vmem:[%s232 + $0x2f8] sm:$0xf]
      %v447 = vld [vmem:[%s232 + $0x2fc] sm:$0xf]
      %v448 = vld [vmem:[%s232 + $0x300] sm:$0xf]
      %v449 = vld [vmem:[%s232 + $0x304] sm:$0xf]
      %v450 = vld [vmem:[%s232 + $0x308] sm:$0xf]
      %v451 = vld [vmem:[%s232 + $0x30c] sm:$0xf]
      %v452 = vld [vmem:[%s232 + $0x310] sm:$0xf]
      %v453 = vld [vmem:[%s232 + $0x314] sm:$0xf]
      %v454 = vld [vmem:[%s232 + $0x318] sm:$0xf]
      %v455 = vld [vmem:[%s232 + $0x31c] sm:$0xf]
      %v456 = vld [vmem:[%s232 + $0x320] sm:$0xf]
      %v457 = vld [vmem:[%s232 + $0x324] sm:$0xf]
      %v458 = vld [vmem:[%s232 + $0x328] sm:$0xf]
      %v459 = vld [vmem:[%s232 + $0x32c] sm:$0xf]
      %v460 = vld [vmem:[%s232 + $0x330] sm:$0xf]
      %v461 = vld [vmem:[%s232 + $0x334] sm:$0xf]
      %v462 = vld [vmem:[%s232 + $0x338] sm:$0xf]
      %v463 = vld [vmem:[%s232 + $0x33c] sm:$0xf]
      %v464 = vld [vmem:[%s232 + $0x340] sm:$0xf]
      %v465 = vld [vmem:[%s232 + $0x344] sm:$0xf]
      %v466 = vld [vmem:[%s232 + $0x348] sm:$0xf]
      %v467 = vld [vmem:[%s232 + $0x34c] sm:$0xf]
      %v468 = vld [vmem:[%s232 + $0x350] sm:$0xf]
      %v469 = vld [vmem:[%s232 + $0x354] sm:$0xf]
      %v470 = vld [vmem:[%s232 + $0x358] sm:$0xf]
      %v471 = vld [vmem:[%s232 + $0x35c] sm:$0xf]
      %v472 = vld [vmem:[%s232 + $0x360] sm:$0xf]
      %v473 = vld [vmem:[%s232 + $0x364] sm:$0xf]
      %v474 = vld [vmem:[%s232 + $0x368] sm:$0xf]
      %v475 = vld [vmem:[%s232 + $0x36c] sm:$0xf]
      %v476 = vld [vmem:[%s232 + $0x370] sm:$0xf]
      %v477 = vld [vmem:[%s232 + $0x374] sm:$0xf]
      %v478 = vld [vmem:[%s232 + $0x378] sm:$0xf]
      %v479 = vld [vmem:[%s232 + $0x37c] sm:$0xf]
      %v480 = vld [vmem:[%s232 + $0x380] sm:$0xf]
      %v481 = vld [vmem:[%s232 + $0x384] sm:$0xf]
      %v482 = vld [vmem:[%s232 + $0x388] sm:$0xf]
      %v483 = vld [vmem:[%s232 + $0x38c] sm:$0xf]
      %v484 = vld [vmem:[%s232 + $0x390] sm:$0xf]
      %v485 = vld [vmem:[%s232 + $0x394] sm:$0xf]
      %v486 = vld [vmem:[%s232 + $0x398] sm:$0xf]
      %v487 = vld [vmem:[%s232 + $0x39c] sm:$0xf]
      %v488 = vld [vmem:[%s232 + $0x3a0] sm:$0xf]
      %v489 = vld [vmem:[%s232 + $0x3a4] sm:$0xf]
      %v490 = vld [vmem:[%s232 + $0x3a8] sm:$0xf]
      %v491 = vld [vmem:[%s232 + $0x3ac] sm:$0xf]
      %v492 = vld [vmem:[%s232 + $0x3b0] sm:$0xf]
      %v493 = vld [vmem:[%s232 + $0x3b4] sm:$0xf]
      %v494 = vld [vmem:[%s232 + $0x3b8] sm:$0xf]
      %v495 = vld [vmem:[%s232 + $0x3bc] sm:$0xf]
      %v496 = vld [vmem:[%s232 + $0x3c0] sm:$0xf]
      %v497 = vld [vmem:[%s232 + $0x3c4] sm:$0xf]
      %v498 = vld [vmem:[%s232 + $0x3c8] sm:$0xf]
      %v499 = vld [vmem:[%s232 + $0x3cc] sm:$0xf]
      %v500 = vld [vmem:[%s232 + $0x3d0] sm:$0xf]
      %v501 = vld [vmem:[%s232 + $0x3d4] sm:$0xf]
      %v502 = vld [vmem:[%s232 + $0x3d8] sm:$0xf]
      %v503 = vld [vmem:[%s232 + $0x3dc] sm:$0xf]
      %v504 = vld [vmem:[%s232 + $0x3e0] sm:$0xf]
      %v505 = vld [vmem:[%s232 + $0x3e4] sm:$0xf]
      %v506 = vld [vmem:[%s232 + $0x3e8] sm:$0xf]
      %v507 = vld [vmem:[%s232 + $0x3ec] sm:$0xf]
      %v508 = vld [vmem:[%s232 + $0x3f0] sm:$0xf]
      %v509 = vld [vmem:[%s232 + $0x3f4] sm:$0xf]
      %v510 = vld [vmem:[%s232 + $0x3f8] sm:$0xf]
      %v511 = vld [vmem:[%s232 + $0x3fc] sm:$0xf]
      %v512 = vld [vmem:[%s232 + $0x400] sm:$0xf]
      %v513 = vld [vmem:[%s232 + $0x404] sm:$0xf]
      %v514 = vld [vmem:[%s232 + $0x408] sm:$0xf]
      %v515 = vld [vmem:[%s232 + $0x40c] sm:$0xf]
      %v516 = vld [vmem:[%s232 + $0x410] sm:$0xf]
      %v517 = vld [vmem:[%s232 + $0x414] sm:$0xf]
      %v518 = vld [vmem:[%s232 + $0x418] sm:$0xf]
      %v519 = vld [vmem:[%s232 + $0x41c] sm:$0xf]
      %v520 = vld [vmem:[%s232 + $0x420] sm:$0xf]
      %v521 = vld [vmem:[%s232 + $0x424] sm:$0xf]
      %v522 = vld [vmem:[%s232 + $0x428] sm:$0xf]
      %v523 = vld [vmem:[%s232 + $0x42c] sm:$0xf]
      %v524 = vld [vmem:[%s232 + $0x430] sm:$0xf]
      %v525 = vld [vmem:[%s232 + $0x434] sm:$0xf]
      %v526 = vld [vmem:[%s232 + $0x438] sm:$0xf]
      %v527 = vld [vmem:[%s232 + $0x43c] sm:$0xf]
      %v528 = vld [vmem:[%s232 + $0x440] sm:$0xf]
      %v529 = vld [vmem:[%s232 + $0x444] sm:$0xf]
      %v530 = vld [vmem:[%s232 + $0x448] sm:$0xf]
      %v531 = vld [vmem:[%s232 + $0x44c] sm:$0xf]
      %v532 = vld [vmem:[%s232 + $0x450] sm:$0xf]
      %v533 = vld [vmem:[%s232 + $0x454] sm:$0xf]
      %v534 = vld [vmem:[%s232 + $0x458] sm:$0xf]
      %v535 = vld [vmem:[%s232 + $0x45c] sm:$0xf]
      %v536 = vld [vmem:[%s232 + $0x460] sm:$0xf]
      %v537 = vld [vmem:[%s232 + $0x464] sm:$0xf]
      %v538 = vld [vmem:[%s232 + $0x468] sm:$0xf]
      %v539 = vld [vmem:[%s232 + $0x46c] sm:$0xf]
      %v540 = vld [vmem:[%s232 + $0x470] sm:$0xf]
      %v541 = vld [vmem:[%s232 + $0x474] sm:$0xf]
      %v542 = vld [vmem:[%s232 + $0x478] sm:$0xf]
      %v543 = vld [vmem:[%s232 + $0x47c] sm:$0xf]
      %v544 = vld [vmem:[%s232 + $0x480] sm:$0xf]
      %v545 = vld [vmem:[%s232 + $0x484] sm:$0xf]
      %v546 = vld [vmem:[%s232 + $0x488] sm:$0xf]
      %v547 = vld [vmem:[%s232 + $0x48c] sm:$0xf]
      %v548 = vld [vmem:[%s232 + $0x490] sm:$0xf]
      %v549 = vld [vmem:[%s232 + $0x494] sm:$0xf]
      %v550 = vld [vmem:[%s232 + $0x498] sm:$0xf]
      %v551 = vld [vmem:[%s232 + $0x49c] sm:$0xf]
      %v552 = vld [vmem:[%s232 + $0x4a0] sm:$0xf]
      %v553 = vld [vmem:[%s232 + $0x4a4] sm:$0xf]
      %v554 = vld [vmem:[%s232 + $0x4a8] sm:$0xf]
      %v555 = vld [vmem:[%s232 + $0x4ac] sm:$0xf]
      %v556 = vld [vmem:[%s232 + $0x4b0] sm:$0xf]
      %v557 = vld [vmem:[%s232 + $0x4b4] sm:$0xf]
      %v558 = vld [vmem:[%s232 + $0x4b8] sm:$0xf]
      %v559 = vld [vmem:[%s232 + $0x4bc] sm:$0xf]
      %v560 = vld [vmem:[%s232 + $0x4c0] sm:$0xf]
      %v561 = vld [vmem:[%s232 + $0x4c4] sm:$0xf]
      %v562 = vld [vmem:[%s232 + $0x4c8] sm:$0xf]
      %v563 = vld [vmem:[%s232 + $0x4cc] sm:$0xf]
      %v564 = vld [vmem:[%s232 + $0x4d0] sm:$0xf]
      %v565 = vld [vmem:[%s232 + $0x4d4] sm:$0xf]
      %v566 = vld [vmem:[%s232 + $0x4d8] sm:$0xf]
      %v567 = vld [vmem:[%s232 + $0x4dc] sm:$0xf]
      %v568 = vld [vmem:[%s232 + $0x4e0] sm:$0xf]
      %v569 = vld [vmem:[%s232 + $0x4e4] sm:$0xf]
      %v570 = vld [vmem:[%s232 + $0x4e8] sm:$0xf]
      %v571 = vld [vmem:[%s232 + $0x4ec] sm:$0xf]
      %v572 = vld [vmem:[%s232 + $0x4f0] sm:$0xf]
      %v573 = vld [vmem:[%s232 + $0x4f4] sm:$0xf]
      %v574 = vld [vmem:[%s232 + $0x4f8] sm:$0xf]
      %v575 = vld [vmem:[%s232 + $0x4fc] sm:$0xf]
      %v576 = vld [vmem:[%s232 + $0x500] sm:$0xf]
      %v577 = vld [vmem:[%s232 + $0x504] sm:$0xf]
      %v578 = vld [vmem:[%s232 + $0x508] sm:$0xf]
      %v579 = vld [vmem:[%s232 + $0x50c] sm:$0xf]
      %v580 = vld [vmem:[%s232 + $0x510] sm:$0xf]
      %v581 = vld [vmem:[%s232 + $0x514] sm:$0xf]
      %v582 = vld [vmem:[%s232 + $0x518] sm:$0xf]
      %v583 = vld [vmem:[%s232 + $0x51c] sm:$0xf]
      %v584 = vld [vmem:[%s232 + $0x520] sm:$0xf]
      %v585 = vld [vmem:[%s232 + $0x524] sm:$0xf]
      %v586 = vld [vmem:[%s232 + $0x528] sm:$0xf]
      %v587 = vld [vmem:[%s232 + $0x52c] sm:$0xf]
      %v588 = vld [vmem:[%s232 + $0x530] sm:$0xf]
      %v589 = vld [vmem:[%s232 + $0x534] sm:$0xf]
      %v590 = vld [vmem:[%s232 + $0x538] sm:$0xf]
      %v591 = vld [vmem:[%s232 + $0x53c] sm:$0xf]
      %v592 = vld [vmem:[%s232 + $0x540] sm:$0xf]
      %v593 = vld [vmem:[%s232 + $0x544] sm:$0xf]
      %v594 = vld [vmem:[%s232 + $0x548] sm:$0xf]
      %v595 = vld [vmem:[%s232 + $0x54c] sm:$0xf]
      %v596 = vld [vmem:[%s232 + $0x550] sm:$0xf]
      %v597 = vld [vmem:[%s232 + $0x554] sm:$0xf]
      %v598 = vld [vmem:[%s232 + $0x558] sm:$0xf]
      %v599 = vld [vmem:[%s232 + $0x55c] sm:$0xf]
      %v600 = vld [vmem:[%s232 + $0x560] sm:$0xf]
      %v601 = vld [vmem:[%s232 + $0x564] sm:$0xf]
      %v602 = vld [vmem:[%s232 + $0x568] sm:$0xf]
      %v603 = vld [vmem:[%s232 + $0x56c] sm:$0xf]
      %v604 = vld [vmem:[%s232 + $0x570] sm:$0xf]
      %v605 = vld [vmem:[%s232 + $0x574] sm:$0xf]
      %v606 = vld [vmem:[%s232 + $0x578] sm:$0xf]
      %v607 = vld [vmem:[%s232 + $0x57c] sm:$0xf]
      %v608 = vld [vmem:[%s232 + $0x580] sm:$0xf]
      %v609 = vld [vmem:[%s232 + $0x584] sm:$0xf]
      %v610 = vld [vmem:[%s232 + $0x588] sm:$0xf]
      %v611 = vld [vmem:[%s232 + $0x58c] sm:$0xf]
      %v612 = vld [vmem:[%s232 + $0x590] sm:$0xf]
      %v613 = vld [vmem:[%s232 + $0x594] sm:$0xf]
      %v614 = vld [vmem:[%s232 + $0x598] sm:$0xf]
      %v615 = vld [vmem:[%s232 + $0x59c] sm:$0xf]
      %v616 = vld [vmem:[%s232 + $0x5a0] sm:$0xf]
      %v617 = vld [vmem:[%s232 + $0x5a4] sm:$0xf]
      %v618 = vld [vmem:[%s232 + $0x5a8] sm:$0xf]
      %v619 = vld [vmem:[%s232 + $0x5ac] sm:$0xf]
      %v620 = vld [vmem:[%s232 + $0x5b0] sm:$0xf]
      %v621 = vld [vmem:[%s232 + $0x5b4] sm:$0xf]
      %v622 = vld [vmem:[%s232 + $0x5b8] sm:$0xf]
      %v623 = vld [vmem:[%s232 + $0x5bc] sm:$0xf]
      %v624 = vld [vmem:[%s232 + $0x5c0] sm:$0xf]
      %v625 = vld [vmem:[%s232 + $0x5c4] sm:$0xf]
      %v626 = vld [vmem:[%s232 + $0x5c8] sm:$0xf]
      %v627 = vld [vmem:[%s232 + $0x5cc] sm:$0xf]
      %v628 = vld [vmem:[%s232 + $0x5d0] sm:$0xf]
      %v629 = vld [vmem:[%s232 + $0x5d4] sm:$0xf]
      %v630 = vld [vmem:[%s232 + $0x5d8] sm:$0xf]
      %v631 = vld [vmem:[%s232 + $0x5dc] sm:$0xf]
      %v632 = vld [vmem:[%s232 + $0x5e0] sm:$0xf]
      %v633 = vld [vmem:[%s232 + $0x5e4] sm:$0xf]
      %v634 = vld [vmem:[%s232 + $0x5e8] sm:$0xf]
      %v635 = vld [vmem:[%s232 + $0x5ec] sm:$0xf]
      %v636 = vld [vmem:[%s232 + $0x5f0] sm:$0xf]
      %v637 = vld [vmem:[%s232 + $0x5f4] sm:$0xf]
      %v638 = vld [vmem:[%s232 + $0x5f8] sm:$0xf]
      %v639 = vld [vmem:[%s232 + $0x5fc] sm:$0xf]
      %v640 = vld [vmem:[%s232 + $0x600] sm:$0xf]
      %v641 = vld [vmem:[%s232 + $0x604] sm:$0xf]
      %v642 = vld [vmem:[%s232 + $0x608] sm:$0xf]
      %v643 = vld [vmem:[%s232 + $0x60c] sm:$0xf]
      %v644 = vld [vmem:[%s232 + $0x610] sm:$0xf]
      %v645 = vld [vmem:[%s232 + $0x614] sm:$0xf]
      %v646 = vld [vmem:[%s232 + $0x618] sm:$0xf]
      %v647 = vld [vmem:[%s232 + $0x61c] sm:$0xf]
      %v648 = vld [vmem:[%s232 + $0x620] sm:$0xf]
      %v649 = vld [vmem:[%s232 + $0x624] sm:$0xf]
      %v650 = vld [vmem:[%s232 + $0x628] sm:$0xf]
      %v651 = vld [vmem:[%s232 + $0x62c] sm:$0xf]
      %v652 = vld [vmem:[%s232 + $0x630] sm:$0xf]
      %v653 = vld [vmem:[%s232 + $0x634] sm:$0xf]
      %v654 = vld [vmem:[%s232 + $0x638] sm:$0xf]
      %v655 = vld [vmem:[%s232 + $0x63c] sm:$0xf]
      %v656 = vld [vmem:[%s232 + $0x640] sm:$0xf]
      %v657 = vld [vmem:[%s232 + $0x644] sm:$0xf]
      %v658 = vld [vmem:[%s232 + $0x648] sm:$0xf]
      %v659 = vld [vmem:[%s232 + $0x64c] sm:$0xf]
      %v660 = vld [vmem:[%s232 + $0x650] sm:$0xf]
      %v661 = vld [vmem:[%s232 + $0x654] sm:$0xf]
      %v662 = vld [vmem:[%s232 + $0x658] sm:$0xf]
      %v663 = vld [vmem:[%s232 + $0x65c] sm:$0xf]
      %v664 = vld [vmem:[%s232 + $0x660] sm:$0xf]
      %v665 = vld [vmem:[%s232 + $0x664] sm:$0xf]
      %v666 = vld [vmem:[%s232 + $0x668] sm:$0xf]
      %v667 = vld [vmem:[%s232 + $0x66c] sm:$0xf]
      %v668 = vld [vmem:[%s232 + $0x670] sm:$0xf]
      %v669 = vld [vmem:[%s232 + $0x674] sm:$0xf]
      %v670 = vld [vmem:[%s232 + $0x678] sm:$0xf]
      %v671 = vld [vmem:[%s232 + $0x67c] sm:$0xf]
      %v672 = vld [vmem:[%s232 + $0x680] sm:$0xf]
      %v673 = vld [vmem:[%s232 + $0x684] sm:$0xf]
      %v674 = vld [vmem:[%s232 + $0x688] sm:$0xf]
      %v675 = vld [vmem:[%s232 + $0x68c] sm:$0xf]
      %v676 = vld [vmem:[%s232 + $0x690] sm:$0xf]
      %v677 = vld [vmem:[%s232 + $0x694] sm:$0xf]
      %v678 = vld [vmem:[%s232 + $0x698] sm:$0xf]
      %v679 = vld [vmem:[%s232 + $0x69c] sm:$0xf]
      %v680 = vld [vmem:[%s232 + $0x6a0] sm:$0xf]
      %v681 = vld [vmem:[%s232 + $0x6a4] sm:$0xf]
      %v682 = vld [vmem:[%s232 + $0x6a8] sm:$0xf]
      %v683 = vld [vmem:[%s232 + $0x6ac] sm:$0xf]
      %v684 = vld [vmem:[%s232 + $0x6b0] sm:$0xf]
      %v685 = vld [vmem:[%s232 + $0x6b4] sm:$0xf]
      %v686 = vld [vmem:[%s232 + $0x6b8] sm:$0xf]
      %v687 = vld [vmem:[%s232 + $0x6bc] sm:$0xf]
      %v688 = vld [vmem:[%s232 + $0x6c0] sm:$0xf]
      %v689 = vld [vmem:[%s232 + $0x6c4] sm:$0xf]
      %v690 = vld [vmem:[%s232 + $0x6c8] sm:$0xf]
      %v691 = vld [vmem:[%s232 + $0x6cc] sm:$0xf]
      %v692 = vld [vmem:[%s232 + $0x6d0] sm:$0xf]
      %v693 = vld [vmem:[%s232 + $0x6d4] sm:$0xf]
      %v694 = vld [vmem:[%s232 + $0x6d8] sm:$0xf]
      %v695 = vld [vmem:[%s232 + $0x6dc] sm:$0xf]
      %v696 = vld [vmem:[%s232 + $0x6e0] sm:$0xf]
      %v697 = vld [vmem:[%s232 + $0x6e4] sm:$0xf]
      %v698 = vld [vmem:[%s232 + $0x6e8] sm:$0xf]
      %v699 = vld [vmem:[%s232 + $0x6ec] sm:$0xf]
      %v700 = vld [vmem:[%s232 + $0x6f0] sm:$0xf]
      %v701 = vld [vmem:[%s232 + $0x6f4] sm:$0xf]
      %v702 = vld [vmem:[%s232 + $0x6f8] sm:$0xf]
      %v703 = vld [vmem:[%s232 + $0x6fc] sm:$0xf]
      %v704 = vld [vmem:[%s232 + $0x700] sm:$0xf]
      %v705 = vld [vmem:[%s232 + $0x704] sm:$0xf]
      %v706 = vld [vmem:[%s232 + $0x708] sm:$0xf]
      %v707 = vld [vmem:[%s232 + $0x70c] sm:$0xf]
      %v708 = vld [vmem:[%s232 + $0x710] sm:$0xf]
      %v709 = vld [vmem:[%s232 + $0x714] sm:$0xf]
      %v710 = vld [vmem:[%s232 + $0x718] sm:$0xf]
      %v711 = vld [vmem:[%s232 + $0x71c] sm:$0xf]
      %v712 = vld [vmem:[%s232 + $0x720] sm:$0xf]
      %v713 = vld [vmem:[%s232 + $0x724] sm:$0xf]
      %v714 = vld [vmem:[%s232 + $0x728] sm:$0xf]
      %v715 = vld [vmem:[%s232 + $0x72c] sm:$0xf]
      %v716 = vld [vmem:[%s232 + $0x730] sm:$0xf]
      %v717 = vld [vmem:[%s232 + $0x734] sm:$0xf]
      %v718 = vld [vmem:[%s232 + $0x738] sm:$0xf]
      %v719 = vld [vmem:[%s232 + $0x73c] sm:$0xf]
      %v720 = vld [vmem:[%s232 + $0x740] sm:$0xf]
      %v721 = vld [vmem:[%s232 + $0x744] sm:$0xf]
      %v722 = vld [vmem:[%s232 + $0x748] sm:$0xf]
      %v723 = vld [vmem:[%s232 + $0x74c] sm:$0xf]
      %v724 = vld [vmem:[%s232 + $0x750] sm:$0xf]
      %v725 = vld [vmem:[%s232 + $0x754] sm:$0xf]
      %v726 = vld [vmem:[%s232 + $0x758] sm:$0xf]
      %v727 = vld [vmem:[%s232 + $0x75c] sm:$0xf]
      %v728 = vld [vmem:[%s232 + $0x760] sm:$0xf]
      %v729 = vld [vmem:[%s232 + $0x764] sm:$0xf]
      %v730 = vld [vmem:[%s232 + $0x768] sm:$0xf]
      %v731 = vld [vmem:[%s232 + $0x76c] sm:$0xf]
      %v732 = vld [vmem:[%s232 + $0x770] sm:$0xf]
      %v733 = vld [vmem:[%s232 + $0x774] sm:$0xf]
      %v734 = vld [vmem:[%s232 + $0x778] sm:$0xf]
      %v735 = vld [vmem:[%s232 + $0x77c] sm:$0xf]
      %v736 = vld [vmem:[%s232 + $0x780] sm:$0xf]
      %v737 = vld [vmem:[%s232 + $0x784] sm:$0xf]
      %v738 = vld [vmem:[%s232 + $0x788] sm:$0xf]
      %v739 = vld [vmem:[%s232 + $0x78c] sm:$0xf]
      %v740 = vld [vmem:[%s232 + $0x790] sm:$0xf]
      %v741 = vld [vmem:[%s232 + $0x794] sm:$0xf]
      %v742 = vld [vmem:[%s232 + $0x798] sm:$0xf]
      %v743 = vld [vmem:[%s232 + $0x79c] sm:$0xf]
      %v744 = vld [vmem:[%s232 + $0x7a0] sm:$0xf]
      %v745 = vld [vmem:[%s232 + $0x7a4] sm:$0xf]
      %v746 = vld [vmem:[%s232 + $0x7a8] sm:$0xf]
      %v747 = vld [vmem:[%s232 + $0x7ac] sm:$0xf]
      %v748 = vld [vmem:[%s232 + $0x7b0] sm:$0xf]
      %v749 = vld [vmem:[%s232 + $0x7b4] sm:$0xf]
      %v750 = vld [vmem:[%s232 + $0x7b8] sm:$0xf]
      %v751 = vld [vmem:[%s232 + $0x7bc] sm:$0xf]
      %v752 = vld [vmem:[%s232 + $0x7c0] sm:$0xf]
      %v753 = vld [vmem:[%s232 + $0x7c4] sm:$0xf]
      %v754 = vld [vmem:[%s232 + $0x7c8] sm:$0xf]
      %v755 = vld [vmem:[%s232 + $0x7cc] sm:$0xf]
      %v756 = vld [vmem:[%s232 + $0x7d0] sm:$0xf]
      %v757 = vld [vmem:[%s232 + $0x7d4] sm:$0xf]
      %v758 = vld [vmem:[%s232 + $0x7d8] sm:$0xf]
      %v759 = vld [vmem:[%s232 + $0x7dc] sm:$0xf]
      %v760 = vld [vmem:[%s232 + $0x7e0] sm:$0xf]
      %v761 = vld [vmem:[%s232 + $0x7e4] sm:$0xf]
      %v762 = vld [vmem:[%s232 + $0x7e8] sm:$0xf]
      %v763 = vld [vmem:[%s232 + $0x7ec] sm:$0xf]
      %v764 = vld [vmem:[%s232 + $0x7f0] sm:$0xf]
      %v765 = vld [vmem:[%s232 + $0x7f4] sm:$0xf]
      %v766 = vld [vmem:[%s232 + $0x7f8] sm:$0xf]
      %v767 = vld [vmem:[%s232 + $0x7fc] sm:$0xf]
      %v784 = vunpack.c.l.b16 %v240
      %v785 = vunpack.c.h.b16 %v240
      %v786 = vunpack.c.l.b16 %v241
      %v787 = vunpack.c.h.b16 %v241
      %v788 = vunpack.c.l.b16 %v242
      %v789 = vunpack.c.h.b16 %v242
      %v790 = vunpack.c.l.b16 %v243
      %v791 = vunpack.c.h.b16 %v243
      %v792 = vunpack.c.l.b16 %v244
      %v793 = vunpack.c.h.b16 %v244
      %v794 = vunpack.c.l.b16 %v245
      %v795 = vunpack.c.h.b16 %v245
      %v796 = vunpack.c.l.b16 %v246
      %v797 = vunpack.c.h.b16 %v246
      %v798 = vunpack.c.l.b16 %v247
      %v799 = vunpack.c.h.b16 %v247
      %v800 = vunpack.c.l.b16 %v248
      %v801 = vunpack.c.h.b16 %v248
      %v802 = vunpack.c.l.b16 %v249
      %v803 = vunpack.c.h.b16 %v249
      %v804 = vunpack.c.l.b16 %v250
      %v805 = vunpack.c.h.b16 %v250
      %v806 = vunpack.c.l.b16 %v251
      %v807 = vunpack.c.h.b16 %v251
      %v808 = vunpack.c.l.b16 %v252
      %v809 = vunpack.c.h.b16 %v252
      %v810 = vunpack.c.l.b16 %v253
      %v811 = vunpack.c.h.b16 %v253
      %v812 = vunpack.c.l.b16 %v254
      %v813 = vunpack.c.h.b16 %v254
      %v814 = vunpack.c.l.b16 %v255
      %v815 = vunpack.c.h.b16 %v255
      %v816 = vpack.c.b16 %v784, %v784
      %v817 = vpack.c.b16 %v785, %v785
      %v818 = vpack.c.b16 %v786, %v786
      %v819 = vpack.c.b16 %v787, %v787
      %v820 = vpack.c.b16 %v788, %v788
      %v821 = vpack.c.b16 %v789, %v789
      %v822 = vpack.c.b16 %v790, %v790
      %v823 = vpack.c.b16 %v791, %v791
      %v824 = vpack.c.b16 %v792, %v792
      %v825 = vpack.c.b16 %v793, %v793
      %v826 = vpack.c.b16 %v794, %v794
      %v827 = vpack.c.b16 %v795, %v795
      %v828 = vpack.c.b16 %v796, %v796
      %v829 = vpack.c.b16 %v797, %v797
      %v830 = vpack.c.b16 %v798, %v798
      %v831 = vpack.c.b16 %v799, %v799
      %v832 = vpack.c.b16 %v800, %v800
      %v833 = vpack.c.b16 %v801, %v801
      %v834 = vpack.c.b16 %v802, %v802
      %v835 = vpack.c.b16 %v803, %v803
      %v836 = vpack.c.b16 %v804, %v804
      %v837 = vpack.c.b16 %v805, %v805
      %v838 = vpack.c.b16 %v806, %v806
      %v839 = vpack.c.b16 %v807, %v807
      %v840 = vpack.c.b16 %v808, %v808
      %v841 = vpack.c.b16 %v809, %v809
      %v842 = vpack.c.b16 %v810, %v810
      %v843 = vpack.c.b16 %v811, %v811
      %v844 = vpack.c.b16 %v812, %v812
      %v845 = vpack.c.b16 %v813, %v813
      %v846 = vpack.c.b16 %v814, %v814
      %v847 = vpack.c.b16 %v815, %v815
      %v1392 = vunpack.c.l.b16 %v256
      %v1393 = vunpack.c.l.b16 %v257
      %v1394 = vunpack.c.l.b16 %v258
      %v1395 = vunpack.c.l.b16 %v259
      %v1396 = vunpack.c.l.b16 %v260
      %v1397 = vunpack.c.l.b16 %v261
      %v1398 = vunpack.c.l.b16 %v262
      %v1399 = vunpack.c.l.b16 %v263
      %v1400 = vunpack.c.l.b16 %v264
      %v1401 = vunpack.c.l.b16 %v265
      %v1402 = vunpack.c.l.b16 %v266
      %v1403 = vunpack.c.l.b16 %v267
      %v1404 = vunpack.c.l.b16 %v268
      %v1405 = vunpack.c.l.b16 %v269
      %v1406 = vunpack.c.l.b16 %v270
      %v1407 = vunpack.c.l.b16 %v271
      %v1408 = vunpack.c.l.b16 %v272
      %v1409 = vunpack.c.l.b16 %v273
      %v1410 = vunpack.c.l.b16 %v274
      %v1411 = vunpack.c.l.b16 %v275
      %v1412 = vunpack.c.l.b16 %v276
      %v1413 = vunpack.c.l.b16 %v277
      %v1414 = vunpack.c.l.b16 %v278
      %v1415 = vunpack.c.l.b16 %v279
      %v1416 = vunpack.c.l.b16 %v280
      %v1417 = vunpack.c.l.b16 %v281
      %v1418 = vunpack.c.l.b16 %v282
      %v1419 = vunpack.c.l.b16 %v283
      %v1420 = vunpack.c.l.b16 %v284
      %v1421 = vunpack.c.l.b16 %v285
      %v1422 = vunpack.c.l.b16 %v286
      %v1423 = vunpack.c.l.b16 %v287
      %v1424 = vunpack.c.l.b16 %v288
      %v1425 = vunpack.c.l.b16 %v289
      %v1426 = vunpack.c.l.b16 %v290
      %v1427 = vunpack.c.l.b16 %v291
      %v1428 = vunpack.c.l.b16 %v292
      %v1429 = vunpack.c.l.b16 %v293
      %v1430 = vunpack.c.l.b16 %v294
      %v1431 = vunpack.c.l.b16 %v295
      %v1432 = vunpack.c.l.b16 %v296
      %v1433 = vunpack.c.l.b16 %v297
      %v1434 = vunpack.c.l.b16 %v298
      %v1435 = vunpack.c.l.b16 %v299
      %v1436 = vunpack.c.l.b16 %v300
      %v1437 = vunpack.c.l.b16 %v301
      %v1438 = vunpack.c.l.b16 %v302
      %v1439 = vunpack.c.l.b16 %v303
      %v1440 = vunpack.c.l.b16 %v304
      %v1441 = vunpack.c.l.b16 %v305
      %v1442 = vunpack.c.l.b16 %v306
      %v1443 = vunpack.c.l.b16 %v307
      %v1444 = vunpack.c.l.b16 %v308
      %v1445 = vunpack.c.l.b16 %v309
      %v1446 = vunpack.c.l.b16 %v310
      %v1447 = vunpack.c.l.b16 %v311
      %v1448 = vunpack.c.l.b16 %v312
      %v1449 = vunpack.c.l.b16 %v313
      %v1450 = vunpack.c.l.b16 %v314
      %v1451 = vunpack.c.l.b16 %v315
      %v1452 = vunpack.c.l.b16 %v316
      %v1453 = vunpack.c.l.b16 %v317
      %v1454 = vunpack.c.l.b16 %v318
      %v1455 = vunpack.c.l.b16 %v319
      %v1456 = vunpack.c.l.b16 %v320
      %v1457 = vunpack.c.l.b16 %v321
      %v1458 = vunpack.c.l.b16 %v322
      %v1459 = vunpack.c.l.b16 %v323
      %v1460 = vunpack.c.l.b16 %v324
      %v1461 = vunpack.c.l.b16 %v325
      %v1462 = vunpack.c.l.b16 %v326
      %v1463 = vunpack.c.l.b16 %v327
      %v1464 = vunpack.c.l.b16 %v328
      %v1465 = vunpack.c.l.b16 %v329
      %v1466 = vunpack.c.l.b16 %v330
      %v1467 = vunpack.c.l.b16 %v331
      %v1468 = vunpack.c.l.b16 %v332
      %v1469 = vunpack.c.l.b16 %v333
      %v1470 = vunpack.c.l.b16 %v334
      %v1471 = vunpack.c.l.b16 %v335
      %v1472 = vunpack.c.l.b16 %v336
      %v1473 = vunpack.c.l.b16 %v337
      %v1474 = vunpack.c.l.b16 %v338
      %v1475 = vunpack.c.l.b16 %v339
      %v1476 = vunpack.c.l.b16 %v340
      %v1477 = vunpack.c.l.b16 %v341
      %v1478 = vunpack.c.l.b16 %v342
      %v1479 = vunpack.c.l.b16 %v343
      %v1480 = vunpack.c.l.b16 %v344
      %v1481 = vunpack.c.l.b16 %v345
      %v1482 = vunpack.c.l.b16 %v346
      %v1483 = vunpack.c.l.b16 %v347
      %v1484 = vunpack.c.l.b16 %v348
      %v1485 = vunpack.c.l.b16 %v349
      %v1486 = vunpack.c.l.b16 %v350
      %v1487 = vunpack.c.l.b16 %v351
      %v1488 = vunpack.c.l.b16 %v352
      %v1489 = vunpack.c.l.b16 %v353
      %v1490 = vunpack.c.l.b16 %v354
      %v1491 = vunpack.c.l.b16 %v355
      %v1492 = vunpack.c.l.b16 %v356
      %v1493 = vunpack.c.l.b16 %v357
      %v1494 = vunpack.c.l.b16 %v358
      %v1495 = vunpack.c.l.b16 %v359
      %v1496 = vunpack.c.l.b16 %v360
      %v1497 = vunpack.c.l.b16 %v361
      %v1498 = vunpack.c.l.b16 %v362
      %v1499 = vunpack.c.l.b16 %v363
      %v1500 = vunpack.c.l.b16 %v364
      %v1501 = vunpack.c.l.b16 %v365
      %v1502 = vunpack.c.l.b16 %v366
      %v1503 = vunpack.c.l.b16 %v367
      %v1504 = vunpack.c.l.b16 %v368
      %v1505 = vunpack.c.l.b16 %v369
      %v1506 = vunpack.c.l.b16 %v370
      %v1507 = vunpack.c.l.b16 %v371
      %v1508 = vunpack.c.l.b16 %v372
      %v1509 = vunpack.c.l.b16 %v373
      %v1510 = vunpack.c.l.b16 %v374
      %v1511 = vunpack.c.l.b16 %v375
      %v1512 = vunpack.c.l.b16 %v376
      %v1513 = vunpack.c.l.b16 %v377
      %v1514 = vunpack.c.l.b16 %v378
      %v1515 = vunpack.c.l.b16 %v379
      %v1516 = vunpack.c.l.b16 %v380
      %v1517 = vunpack.c.l.b16 %v381
      %v1518 = vunpack.c.l.b16 %v382
      %v1519 = vunpack.c.l.b16 %v383
      %v1520 = vunpack.c.l.b16 %v384
      %v1521 = vunpack.c.l.b16 %v385
      %v1522 = vunpack.c.l.b16 %v386
      %v1523 = vunpack.c.l.b16 %v387
      %v1524 = vunpack.c.l.b16 %v388
      %v1525 = vunpack.c.l.b16 %v389
      %v1526 = vunpack.c.l.b16 %v390
      %v1527 = vunpack.c.l.b16 %v391
      %v1528 = vunpack.c.l.b16 %v392
      %v1529 = vunpack.c.l.b16 %v393
      %v1530 = vunpack.c.l.b16 %v394
      %v1531 = vunpack.c.l.b16 %v395
      %v1532 = vunpack.c.l.b16 %v396
      %v1533 = vunpack.c.l.b16 %v397
      %v1534 = vunpack.c.l.b16 %v398
      %v1535 = vunpack.c.l.b16 %v399
      %v1536 = vunpack.c.l.b16 %v400
      %v1537 = vunpack.c.l.b16 %v401
      %v1538 = vunpack.c.l.b16 %v402
      %v1539 = vunpack.c.l.b16 %v403
      %v1540 = vunpack.c.l.b16 %v404
      %v1541 = vunpack.c.l.b16 %v405
      %v1542 = vunpack.c.l.b16 %v406
      %v1543 = vunpack.c.l.b16 %v407
      %v1544 = vunpack.c.l.b16 %v408
      %v1545 = vunpack.c.l.b16 %v409
      %v1546 = vunpack.c.l.b16 %v410
      %v1547 = vunpack.c.l.b16 %v411
      %v1548 = vunpack.c.l.b16 %v412
      %v1549 = vunpack.c.l.b16 %v413
      %v1550 = vunpack.c.l.b16 %v414
      %v1551 = vunpack.c.l.b16 %v415
      %v1552 = vunpack.c.l.b16 %v416
      %v1553 = vunpack.c.l.b16 %v417
      %v1554 = vunpack.c.l.b16 %v418
      %v1555 = vunpack.c.l.b16 %v419
      %v1556 = vunpack.c.l.b16 %v420
      %v1557 = vunpack.c.l.b16 %v421
      %v1558 = vunpack.c.l.b16 %v422
      %v1559 = vunpack.c.l.b16 %v423
      %v1560 = vunpack.c.l.b16 %v424
      %v1561 = vunpack.c.l.b16 %v425
      %v1562 = vunpack.c.l.b16 %v426
      %v1563 = vunpack.c.l.b16 %v427
      %v1564 = vunpack.c.l.b16 %v428
      %v1565 = vunpack.c.l.b16 %v429
      %v1566 = vunpack.c.l.b16 %v430
      %v1567 = vunpack.c.l.b16 %v431
      %v1568 = vunpack.c.l.b16 %v432
      %v1569 = vunpack.c.l.b16 %v433
      %v1570 = vunpack.c.l.b16 %v434
      %v1571 = vunpack.c.l.b16 %v435
      %v1572 = vunpack.c.l.b16 %v436
      %v1573 = vunpack.c.l.b16 %v437
      %v1574 = vunpack.c.l.b16 %v438
      %v1575 = vunpack.c.l.b16 %v439
      %v1576 = vunpack.c.l.b16 %v440
      %v1577 = vunpack.c.l.b16 %v441
      %v1578 = vunpack.c.l.b16 %v442
      %v1579 = vunpack.c.l.b16 %v443
      %v1580 = vunpack.c.l.b16 %v444
      %v1581 = vunpack.c.l.b16 %v445
      %v1582 = vunpack.c.l.b16 %v446
      %v1583 = vunpack.c.l.b16 %v447
      %v1584 = vunpack.c.l.b16 %v448
      %v1585 = vunpack.c.l.b16 %v449
      %v1586 = vunpack.c.l.b16 %v450
      %v1587 = vunpack.c.l.b16 %v451
      %v1588 = vunpack.c.l.b16 %v452
      %v1589 = vunpack.c.l.b16 %v453
      %v1590 = vunpack.c.l.b16 %v454
      %v1591 = vunpack.c.l.b16 %v455
      %v1592 = vunpack.c.l.b16 %v456
      %v1593 = vunpack.c.l.b16 %v457
      %v1594 = vunpack.c.l.b16 %v458
      %v1595 = vunpack.c.l.b16 %v459
      %v1596 = vunpack.c.l.b16 %v460
      %v1597 = vunpack.c.l.b16 %v461
      %v1598 = vunpack.c.l.b16 %v462
      %v1599 = vunpack.c.l.b16 %v463
      %v1600 = vunpack.c.l.b16 %v464
      %v1601 = vunpack.c.l.b16 %v465
      %v1602 = vunpack.c.l.b16 %v466
      %v1603 = vunpack.c.l.b16 %v467
      %v1604 = vunpack.c.l.b16 %v468
      %v1605 = vunpack.c.l.b16 %v469
      %v1606 = vunpack.c.l.b16 %v470
      %v1607 = vunpack.c.l.b16 %v471
      %v1608 = vunpack.c.l.b16 %v472
      %v1609 = vunpack.c.l.b16 %v473
      %v1610 = vunpack.c.l.b16 %v474
      %v1611 = vunpack.c.l.b16 %v475
      %v1612 = vunpack.c.l.b16 %v476
      %v1613 = vunpack.c.l.b16 %v477
      %v1614 = vunpack.c.l.b16 %v478
      %v1615 = vunpack.c.l.b16 %v479
      %v1616 = vunpack.c.l.b16 %v480
      %v1617 = vunpack.c.l.b16 %v481
      %v1618 = vunpack.c.l.b16 %v482
      %v1619 = vunpack.c.l.b16 %v483
      %v1620 = vunpack.c.l.b16 %v484
      %v1621 = vunpack.c.l.b16 %v485
      %v1622 = vunpack.c.l.b16 %v486
      %v1623 = vunpack.c.l.b16 %v487
      %v1624 = vunpack.c.l.b16 %v488
      %v1625 = vunpack.c.l.b16 %v489
      %v1626 = vunpack.c.l.b16 %v490
      %v1627 = vunpack.c.l.b16 %v491
      %v1628 = vunpack.c.l.b16 %v492
      %v1629 = vunpack.c.l.b16 %v493
      %v1630 = vunpack.c.l.b16 %v494
      %v1631 = vunpack.c.l.b16 %v495
      %v1632 = vunpack.c.l.b16 %v496
      %v1633 = vunpack.c.l.b16 %v497
      %v1634 = vunpack.c.l.b16 %v498
      %v1635 = vunpack.c.l.b16 %v499
      %v1636 = vunpack.c.l.b16 %v500
      %v1637 = vunpack.c.l.b16 %v501
      %v1638 = vunpack.c.l.b16 %v502
      %v1639 = vunpack.c.l.b16 %v503
      %v1640 = vunpack.c.l.b16 %v504
      %v1641 = vunpack.c.l.b16 %v505
      %v1642 = vunpack.c.l.b16 %v506
      %v1643 = vunpack.c.l.b16 %v507
      %v1644 = vunpack.c.l.b16 %v508
      %v1645 = vunpack.c.l.b16 %v509
      %v1646 = vunpack.c.l.b16 %v510
      %v1647 = vunpack.c.l.b16 %v511
      %v1648 = vunpack.c.l.b16 %v512
      %v1649 = vunpack.c.l.b16 %v513
      %v1650 = vunpack.c.l.b16 %v514
      %v1651 = vunpack.c.l.b16 %v515
      %v1652 = vunpack.c.l.b16 %v516
      %v1653 = vunpack.c.l.b16 %v517
      %v1654 = vunpack.c.l.b16 %v518
      %v1655 = vunpack.c.l.b16 %v519
      %v1656 = vunpack.c.l.b16 %v520
      %v1657 = vunpack.c.l.b16 %v521
      %v1658 = vunpack.c.l.b16 %v522
      %v1659 = vunpack.c.l.b16 %v523
      %v1660 = vunpack.c.l.b16 %v524
      %v1661 = vunpack.c.l.b16 %v525
      %v1662 = vunpack.c.l.b16 %v526
      %v1663 = vunpack.c.l.b16 %v527
      %v1664 = vunpack.c.l.b16 %v528
      %v1665 = vunpack.c.l.b16 %v529
      %v1666 = vunpack.c.l.b16 %v530
      %v1667 = vunpack.c.l.b16 %v531
      %v1668 = vunpack.c.l.b16 %v532
      %v1669 = vunpack.c.l.b16 %v533
      %v1670 = vunpack.c.l.b16 %v534
      %v1671 = vunpack.c.l.b16 %v535
      %v1672 = vunpack.c.l.b16 %v536
      %v1673 = vunpack.c.l.b16 %v537
      %v1674 = vunpack.c.l.b16 %v538
      %v1675 = vunpack.c.l.b16 %v539
      %v1676 = vunpack.c.l.b16 %v540
      %v1677 = vunpack.c.l.b16 %v541
      %v1678 = vunpack.c.l.b16 %v542
      %v1679 = vunpack.c.l.b16 %v543
      %v1680 = vunpack.c.l.b16 %v544
      %v1681 = vunpack.c.l.b16 %v545
      %v1682 = vunpack.c.l.b16 %v546
      %v1683 = vunpack.c.l.b16 %v547
      %v1684 = vunpack.c.l.b16 %v548
      %v1685 = vunpack.c.l.b16 %v549
      %v1686 = vunpack.c.l.b16 %v550
      %v1687 = vunpack.c.l.b16 %v551
      %v1688 = vunpack.c.l.b16 %v552
      %v1689 = vunpack.c.l.b16 %v553
      %v1690 = vunpack.c.l.b16 %v554
      %v1691 = vunpack.c.l.b16 %v555
      %v1692 = vunpack.c.l.b16 %v556
      %v1693 = vunpack.c.l.b16 %v557
      %v1694 = vunpack.c.l.b16 %v558
      %v1695 = vunpack.c.l.b16 %v559
      %v1696 = vunpack.c.l.b16 %v560
      %v1697 = vunpack.c.l.b16 %v561
      %v1698 = vunpack.c.l.b16 %v562
      %v1699 = vunpack.c.l.b16 %v563
      %v1700 = vunpack.c.l.b16 %v564
      %v1701 = vunpack.c.l.b16 %v565
      %v1702 = vunpack.c.l.b16 %v566
      %v1703 = vunpack.c.l.b16 %v567
      %v1704 = vunpack.c.l.b16 %v568
      %v1705 = vunpack.c.l.b16 %v569
      %v1706 = vunpack.c.l.b16 %v570
      %v1707 = vunpack.c.l.b16 %v571
      %v1708 = vunpack.c.l.b16 %v572
      %v1709 = vunpack.c.l.b16 %v573
      %v1710 = vunpack.c.l.b16 %v574
      %v1711 = vunpack.c.l.b16 %v575
      %v1712 = vunpack.c.l.b16 %v576
      %v1713 = vunpack.c.l.b16 %v577
      %v1714 = vunpack.c.l.b16 %v578
      %v1715 = vunpack.c.l.b16 %v579
      %v1716 = vunpack.c.l.b16 %v580
      %v1717 = vunpack.c.l.b16 %v581
      %v1718 = vunpack.c.l.b16 %v582
      %v1719 = vunpack.c.l.b16 %v583
      %v1720 = vunpack.c.l.b16 %v584
      %v1721 = vunpack.c.l.b16 %v585
      %v1722 = vunpack.c.l.b16 %v586
      %v1723 = vunpack.c.l.b16 %v587
      %v1724 = vunpack.c.l.b16 %v588
      %v1725 = vunpack.c.l.b16 %v589
      %v1726 = vunpack.c.l.b16 %v590
      %v1727 = vunpack.c.l.b16 %v591
      %v1728 = vunpack.c.l.b16 %v592
      %v1729 = vunpack.c.l.b16 %v593
      %v1730 = vunpack.c.l.b16 %v594
      %v1731 = vunpack.c.l.b16 %v595
      %v1732 = vunpack.c.l.b16 %v596
      %v1733 = vunpack.c.l.b16 %v597
      %v1734 = vunpack.c.l.b16 %v598
      %v1735 = vunpack.c.l.b16 %v599
      %v1736 = vunpack.c.l.b16 %v600
      %v1737 = vunpack.c.l.b16 %v601
      %v1738 = vunpack.c.l.b16 %v602
      %v1739 = vunpack.c.l.b16 %v603
      %v1740 = vunpack.c.l.b16 %v604
      %v1741 = vunpack.c.l.b16 %v605
      %v1742 = vunpack.c.l.b16 %v606
      %v1743 = vunpack.c.l.b16 %v607
      %v1744 = vunpack.c.l.b16 %v608
      %v1745 = vunpack.c.l.b16 %v609
      %v1746 = vunpack.c.l.b16 %v610
      %v1747 = vunpack.c.l.b16 %v611
      %v1748 = vunpack.c.l.b16 %v612
      %v1749 = vunpack.c.l.b16 %v613
      %v1750 = vunpack.c.l.b16 %v614
      %v1751 = vunpack.c.l.b16 %v615
      %v1752 = vunpack.c.l.b16 %v616
      %v1753 = vunpack.c.l.b16 %v617
      %v1754 = vunpack.c.l.b16 %v618
      %v1755 = vunpack.c.l.b16 %v619
      %v1756 = vunpack.c.l.b16 %v620
      %v1757 = vunpack.c.l.b16 %v621
      %v1758 = vunpack.c.l.b16 %v622
      %v1759 = vunpack.c.l.b16 %v623
      %v1760 = vunpack.c.l.b16 %v624
      %v1761 = vunpack.c.l.b16 %v625
      %v1762 = vunpack.c.l.b16 %v626
      %v1763 = vunpack.c.l.b16 %v627
      %v1764 = vunpack.c.l.b16 %v628
      %v1765 = vunpack.c.l.b16 %v629
      %v1766 = vunpack.c.l.b16 %v630
      %v1767 = vunpack.c.l.b16 %v631
      %v1768 = vunpack.c.l.b16 %v632
      %v1769 = vunpack.c.l.b16 %v633
      %v1770 = vunpack.c.l.b16 %v634
      %v1771 = vunpack.c.l.b16 %v635
      %v1772 = vunpack.c.l.b16 %v636
      %v1773 = vunpack.c.l.b16 %v637
      %v1774 = vunpack.c.l.b16 %v638
      %v1775 = vunpack.c.l.b16 %v639
      %v1776 = vunpack.c.l.b16 %v640
      %v1777 = vunpack.c.l.b16 %v641
      %v1778 = vunpack.c.l.b16 %v642
      %v1779 = vunpack.c.l.b16 %v643
      %v1780 = vunpack.c.l.b16 %v644
      %v1781 = vunpack.c.l.b16 %v645
      %v1782 = vunpack.c.l.b16 %v646
      %v1783 = vunpack.c.l.b16 %v647
      %v1784 = vunpack.c.l.b16 %v648
      %v1785 = vunpack.c.l.b16 %v649
      %v1786 = vunpack.c.l.b16 %v650
      %v1787 = vunpack.c.l.b16 %v651
      %v1788 = vunpack.c.l.b16 %v652
      %v1789 = vunpack.c.l.b16 %v653
      %v1790 = vunpack.c.l.b16 %v654
      %v1791 = vunpack.c.l.b16 %v655
      %v1792 = vunpack.c.l.b16 %v656
      %v1793 = vunpack.c.l.b16 %v657
      %v1794 = vunpack.c.l.b16 %v658
      %v1795 = vunpack.c.l.b16 %v659
      %v1796 = vunpack.c.l.b16 %v660
      %v1797 = vunpack.c.l.b16 %v661
      %v1798 = vunpack.c.l.b16 %v662
      %v1799 = vunpack.c.l.b16 %v663
      %v1800 = vunpack.c.l.b16 %v664
      %v1801 = vunpack.c.l.b16 %v665
      %v1802 = vunpack.c.l.b16 %v666
      %v1803 = vunpack.c.l.b16 %v667
      %v1804 = vunpack.c.l.b16 %v668
      %v1805 = vunpack.c.l.b16 %v669
      %v1806 = vunpack.c.l.b16 %v670
      %v1807 = vunpack.c.l.b16 %v671
      %v1808 = vunpack.c.l.b16 %v672
      %v1809 = vunpack.c.l.b16 %v673
      %v1810 = vunpack.c.l.b16 %v674
      %v1811 = vunpack.c.l.b16 %v675
      %v1812 = vunpack.c.l.b16 %v676
      %v1813 = vunpack.c.l.b16 %v677
      %v1814 = vunpack.c.l.b16 %v678
      %v1815 = vunpack.c.l.b16 %v679
      %v1816 = vunpack.c.l.b16 %v680
      %v1817 = vunpack.c.l.b16 %v681
      %v1818 = vunpack.c.l.b16 %v682
      %v1819 = vunpack.c.l.b16 %v683
      %v1820 = vunpack.c.l.b16 %v684
      %v1821 = vunpack.c.l.b16 %v685
      %v1822 = vunpack.c.l.b16 %v686
      %v1823 = vunpack.c.l.b16 %v687
      %v1824 = vunpack.c.l.b16 %v688
      %v1825 = vunpack.c.l.b16 %v689
      %v1826 = vunpack.c.l.b16 %v690
      %v1827 = vunpack.c.l.b16 %v691
      %v1828 = vunpack.c.l.b16 %v692
      %v1829 = vunpack.c.l.b16 %v693
      %v1830 = vunpack.c.l.b16 %v694
      %v1831 = vunpack.c.l.b16 %v695
      %v1832 = vunpack.c.l.b16 %v696
      %v1833 = vunpack.c.l.b16 %v697
      %v1834 = vunpack.c.l.b16 %v698
      %v1835 = vunpack.c.l.b16 %v699
      %v1836 = vunpack.c.l.b16 %v700
      %v1837 = vunpack.c.l.b16 %v701
      %v1838 = vunpack.c.l.b16 %v702
      %v1839 = vunpack.c.l.b16 %v703
      %v1840 = vunpack.c.l.b16 %v704
      %v1841 = vunpack.c.l.b16 %v705
      %v1842 = vunpack.c.l.b16 %v706
      %v1843 = vunpack.c.l.b16 %v707
      %v1844 = vunpack.c.l.b16 %v708
      %v1845 = vunpack.c.l.b16 %v709
      %v1846 = vunpack.c.l.b16 %v710
      %v1847 = vunpack.c.l.b16 %v711
      %v1848 = vunpack.c.l.b16 %v712
      %v1849 = vunpack.c.l.b16 %v713
      %v1850 = vunpack.c.l.b16 %v714
      %v1851 = vunpack.c.l.b16 %v715
      %v1852 = vunpack.c.l.b16 %v716
      %v1853 = vunpack.c.l.b16 %v717
      %v1854 = vunpack.c.l.b16 %v718
      %v1855 = vunpack.c.l.b16 %v719
      %v1856 = vunpack.c.l.b16 %v720
      %v1857 = vunpack.c.l.b16 %v721
      %v1858 = vunpack.c.l.b16 %v722
      %v1859 = vunpack.c.l.b16 %v723
      %v1860 = vunpack.c.l.b16 %v724
      %v1861 = vunpack.c.l.b16 %v725
      %v1862 = vunpack.c.l.b16 %v726
      %v1863 = vunpack.c.l.b16 %v727
      %v1864 = vunpack.c.l.b16 %v728
      %v1865 = vunpack.c.l.b16 %v729
      %v1866 = vunpack.c.l.b16 %v730
      %v1867 = vunpack.c.l.b16 %v731
      %v1868 = vunpack.c.l.b16 %v732
      %v1869 = vunpack.c.l.b16 %v733
      %v1870 = vunpack.c.l.b16 %v734
      %v1871 = vunpack.c.l.b16 %v735
      %v1872 = vunpack.c.l.b16 %v736
      %v1873 = vunpack.c.l.b16 %v737
      %v1874 = vunpack.c.l.b16 %v738
      %v1875 = vunpack.c.l.b16 %v739
      %v1876 = vunpack.c.l.b16 %v740
      %v1877 = vunpack.c.l.b16 %v741
      %v1878 = vunpack.c.l.b16 %v742
      %v1879 = vunpack.c.l.b16 %v743
      %v1880 = vunpack.c.l.b16 %v744
      %v1881 = vunpack.c.l.b16 %v745
      %v1882 = vunpack.c.l.b16 %v746
      %v1883 = vunpack.c.l.b16 %v747
      %v1884 = vunpack.c.l.b16 %v748
      %v1885 = vunpack.c.l.b16 %v749
      %v1886 = vunpack.c.l.b16 %v750
      %v1887 = vunpack.c.l.b16 %v751
      %v1888 = vunpack.c.l.b16 %v752
      %v1889 = vunpack.c.l.b16 %v753
      %v1890 = vunpack.c.l.b16 %v754
      %v1891 = vunpack.c.l.b16 %v755
      %v1892 = vunpack.c.l.b16 %v756
      %v1893 = vunpack.c.l.b16 %v757
      %v1894 = vunpack.c.l.b16 %v758
      %v1895 = vunpack.c.l.b16 %v759
      %v1896 = vunpack.c.l.b16 %v760
      %v1897 = vunpack.c.l.b16 %v761
      %v1898 = vunpack.c.l.b16 %v762
      %v1899 = vunpack.c.l.b16 %v763
      %v1900 = vunpack.c.l.b16 %v764
      %v1901 = vunpack.c.l.b16 %v765
      %v1902 = vunpack.c.l.b16 %v766
      %v1903 = vunpack.c.l.b16 %v767
      %v1904 = vpack.c.b16 %v1393, %v1392
      %v1905 = vpack.c.b16 %v1395, %v1394
      %v1906 = vpack.c.b16 %v1397, %v1396
      %v1907 = vpack.c.b16 %v1399, %v1398
      %v1908 = vpack.c.b16 %v1401, %v1400
      %v1909 = vpack.c.b16 %v1403, %v1402
      %v1910 = vpack.c.b16 %v1405, %v1404
      %v1911 = vpack.c.b16 %v1407, %v1406
      %v1912 = vpack.c.b16 %v1409, %v1408
      %v1913 = vpack.c.b16 %v1411, %v1410
      %v1914 = vpack.c.b16 %v1413, %v1412
      %v1915 = vpack.c.b16 %v1415, %v1414
      %v1916 = vpack.c.b16 %v1417, %v1416
      %v1917 = vpack.c.b16 %v1419, %v1418
      %v1918 = vpack.c.b16 %v1421, %v1420
      %v1919 = vpack.c.b16 %v1423, %v1422
      %v1920 = vpack.c.b16 %v1425, %v1424
      %v1921 = vpack.c.b16 %v1427, %v1426
      %v1922 = vpack.c.b16 %v1429, %v1428
      %v1923 = vpack.c.b16 %v1431, %v1430
      %v1924 = vpack.c.b16 %v1433, %v1432
      %v1925 = vpack.c.b16 %v1435, %v1434
      %v1926 = vpack.c.b16 %v1437, %v1436
      %v1927 = vpack.c.b16 %v1439, %v1438
      %v1928 = vpack.c.b16 %v1441, %v1440
      %v1929 = vpack.c.b16 %v1443, %v1442
      %v1930 = vpack.c.b16 %v1445, %v1444
      %v1931 = vpack.c.b16 %v1447, %v1446
      %v1932 = vpack.c.b16 %v1449, %v1448
      %v1933 = vpack.c.b16 %v1451, %v1450
      %v1934 = vpack.c.b16 %v1453, %v1452
      %v1935 = vpack.c.b16 %v1455, %v1454
      %v1936 = vpack.c.b16 %v1457, %v1456
      %v1937 = vpack.c.b16 %v1459, %v1458
      %v1938 = vpack.c.b16 %v1461, %v1460
      %v1939 = vpack.c.b16 %v1463, %v1462
      %v1940 = vpack.c.b16 %v1465, %v1464
      %v1941 = vpack.c.b16 %v1467, %v1466
      %v1942 = vpack.c.b16 %v1469, %v1468
      %v1943 = vpack.c.b16 %v1471, %v1470
      %v1944 = vpack.c.b16 %v1473, %v1472
      %v1945 = vpack.c.b16 %v1475, %v1474
      %v1946 = vpack.c.b16 %v1477, %v1476
      %v1947 = vpack.c.b16 %v1479, %v1478
      %v1948 = vpack.c.b16 %v1481, %v1480
      %v1949 = vpack.c.b16 %v1483, %v1482
      %v1950 = vpack.c.b16 %v1485, %v1484
      %v1951 = vpack.c.b16 %v1487, %v1486
      %v1952 = vpack.c.b16 %v1489, %v1488
      %v1953 = vpack.c.b16 %v1491, %v1490
      %v1954 = vpack.c.b16 %v1493, %v1492
      %v1955 = vpack.c.b16 %v1495, %v1494
      %v1956 = vpack.c.b16 %v1497, %v1496
      %v1957 = vpack.c.b16 %v1499, %v1498
      %v1958 = vpack.c.b16 %v1501, %v1500
      %v1959 = vpack.c.b16 %v1503, %v1502
      %v1960 = vpack.c.b16 %v1505, %v1504
      %v1961 = vpack.c.b16 %v1507, %v1506
      %v1962 = vpack.c.b16 %v1509, %v1508
      %v1963 = vpack.c.b16 %v1511, %v1510
      %v1964 = vpack.c.b16 %v1513, %v1512
      %v1965 = vpack.c.b16 %v1515, %v1514
      %v1966 = vpack.c.b16 %v1517, %v1516
      %v1967 = vpack.c.b16 %v1519, %v1518
      %v1968 = vpack.c.b16 %v1521, %v1520
      %v1969 = vpack.c.b16 %v1523, %v1522
      %v1970 = vpack.c.b16 %v1525, %v1524
      %v1971 = vpack.c.b16 %v1527, %v1526
      %v1972 = vpack.c.b16 %v1529, %v1528
      %v1973 = vpack.c.b16 %v1531, %v1530
      %v1974 = vpack.c.b16 %v1533, %v1532
      %v1975 = vpack.c.b16 %v1535, %v1534
      %v1976 = vpack.c.b16 %v1537, %v1536
      %v1977 = vpack.c.b16 %v1539, %v1538
      %v1978 = vpack.c.b16 %v1541, %v1540
      %v1979 = vpack.c.b16 %v1543, %v1542
      %v1980 = vpack.c.b16 %v1545, %v1544
      %v1981 = vpack.c.b16 %v1547, %v1546
      %v1982 = vpack.c.b16 %v1549, %v1548
      %v1983 = vpack.c.b16 %v1551, %v1550
      %v1984 = vpack.c.b16 %v1553, %v1552
      %v1985 = vpack.c.b16 %v1555, %v1554
      %v1986 = vpack.c.b16 %v1557, %v1556
      %v1987 = vpack.c.b16 %v1559, %v1558
      %v1988 = vpack.c.b16 %v1561, %v1560
      %v1989 = vpack.c.b16 %v1563, %v1562
      %v1990 = vpack.c.b16 %v1565, %v1564
      %v1991 = vpack.c.b16 %v1567, %v1566
      %v1992 = vpack.c.b16 %v1569, %v1568
      %v1993 = vpack.c.b16 %v1571, %v1570
      %v1994 = vpack.c.b16 %v1573, %v1572
      %v1995 = vpack.c.b16 %v1575, %v1574
      %v1996 = vpack.c.b16 %v1577, %v1576
      %v1997 = vpack.c.b16 %v1579, %v1578
      %v1998 = vpack.c.b16 %v1581, %v1580
      %v1999 = vpack.c.b16 %v1583, %v1582
      %v2000 = vpack.c.b16 %v1585, %v1584
      %v2001 = vpack.c.b16 %v1587, %v1586
      %v2002 = vpack.c.b16 %v1589, %v1588
      %v2003 = vpack.c.b16 %v1591, %v1590
      %v2004 = vpack.c.b16 %v1593, %v1592
      %v2005 = vpack.c.b16 %v1595, %v1594
      %v2006 = vpack.c.b16 %v1597, %v1596
      %v2007 = vpack.c.b16 %v1599, %v1598
      %v2008 = vpack.c.b16 %v1601, %v1600
      %v2009 = vpack.c.b16 %v1603, %v1602
      %v2010 = vpack.c.b16 %v1605, %v1604
      %v2011 = vpack.c.b16 %v1607, %v1606
      %v2012 = vpack.c.b16 %v1609, %v1608
      %v2013 = vpack.c.b16 %v1611, %v1610
      %v2014 = vpack.c.b16 %v1613, %v1612
      %v2015 = vpack.c.b16 %v1615, %v1614
      %v2016 = vpack.c.b16 %v1617, %v1616
      %v2017 = vpack.c.b16 %v1619, %v1618
      %v2018 = vpack.c.b16 %v1621, %v1620
      %v2019 = vpack.c.b16 %v1623, %v1622
      %v2020 = vpack.c.b16 %v1625, %v1624
      %v2021 = vpack.c.b16 %v1627, %v1626
      %v2022 = vpack.c.b16 %v1629, %v1628
      %v2023 = vpack.c.b16 %v1631, %v1630
      %v2024 = vpack.c.b16 %v1633, %v1632
      %v2025 = vpack.c.b16 %v1635, %v1634
      %v2026 = vpack.c.b16 %v1637, %v1636
      %v2027 = vpack.c.b16 %v1639, %v1638
      %v2028 = vpack.c.b16 %v1641, %v1640
      %v2029 = vpack.c.b16 %v1643, %v1642
      %v2030 = vpack.c.b16 %v1645, %v1644
      %v2031 = vpack.c.b16 %v1647, %v1646
      %v2032 = vpack.c.b16 %v1649, %v1648
      %v2033 = vpack.c.b16 %v1651, %v1650
      %v2034 = vpack.c.b16 %v1653, %v1652
      %v2035 = vpack.c.b16 %v1655, %v1654
      %v2036 = vpack.c.b16 %v1657, %v1656
      %v2037 = vpack.c.b16 %v1659, %v1658
      %v2038 = vpack.c.b16 %v1661, %v1660
      %v2039 = vpack.c.b16 %v1663, %v1662
      %v2040 = vpack.c.b16 %v1665, %v1664
      %v2041 = vpack.c.b16 %v1667, %v1666
      %v2042 = vpack.c.b16 %v1669, %v1668
      %v2043 = vpack.c.b16 %v1671, %v1670
      %v2044 = vpack.c.b16 %v1673, %v1672
      %v2045 = vpack.c.b16 %v1675, %v1674
      %v2046 = vpack.c.b16 %v1677, %v1676
      %v2047 = vpack.c.b16 %v1679, %v1678
      %v2048 = vpack.c.b16 %v1681, %v1680
      %v2049 = vpack.c.b16 %v1683, %v1682
      %v2050 = vpack.c.b16 %v1685, %v1684
      %v2051 = vpack.c.b16 %v1687, %v1686
      %v2052 = vpack.c.b16 %v1689, %v1688
      %v2053 = vpack.c.b16 %v1691, %v1690
      %v2054 = vpack.c.b16 %v1693, %v1692
      %v2055 = vpack.c.b16 %v1695, %v1694
      %v2056 = vpack.c.b16 %v1697, %v1696
      %v2057 = vpack.c.b16 %v1699, %v1698
      %v2058 = vpack.c.b16 %v1701, %v1700
      %v2059 = vpack.c.b16 %v1703, %v1702
      %v2060 = vpack.c.b16 %v1705, %v1704
      %v2061 = vpack.c.b16 %v1707, %v1706
      %v2062 = vpack.c.b16 %v1709, %v1708
      %v2063 = vpack.c.b16 %v1711, %v1710
      %v2064 = vpack.c.b16 %v1713, %v1712
      %v2065 = vpack.c.b16 %v1715, %v1714
      %v2066 = vpack.c.b16 %v1717, %v1716
      %v2067 = vpack.c.b16 %v1719, %v1718
      %v2068 = vpack.c.b16 %v1721, %v1720
      %v2069 = vpack.c.b16 %v1723, %v1722
      %v2070 = vpack.c.b16 %v1725, %v1724
      %v2071 = vpack.c.b16 %v1727, %v1726
      %v2072 = vpack.c.b16 %v1729, %v1728
      %v2073 = vpack.c.b16 %v1731, %v1730
      %v2074 = vpack.c.b16 %v1733, %v1732
      %v2075 = vpack.c.b16 %v1735, %v1734
      %v2076 = vpack.c.b16 %v1737, %v1736
      %v2077 = vpack.c.b16 %v1739, %v1738
      %v2078 = vpack.c.b16 %v1741, %v1740
      %v2079 = vpack.c.b16 %v1743, %v1742
      %v2080 = vpack.c.b16 %v1745, %v1744
      %v2081 = vpack.c.b16 %v1747, %v1746
      %v2082 = vpack.c.b16 %v1749, %v1748
      %v2083 = vpack.c.b16 %v1751, %v1750
      %v2084 = vpack.c.b16 %v1753, %v1752
      %v2085 = vpack.c.b16 %v1755, %v1754
      %v2086 = vpack.c.b16 %v1757, %v1756
      %v2087 = vpack.c.b16 %v1759, %v1758
      %v2088 = vpack.c.b16 %v1761, %v1760
      %v2089 = vpack.c.b16 %v1763, %v1762
      %v2090 = vpack.c.b16 %v1765, %v1764
      %v2091 = vpack.c.b16 %v1767, %v1766
      %v2092 = vpack.c.b16 %v1769, %v1768
      %v2093 = vpack.c.b16 %v1771, %v1770
      %v2094 = vpack.c.b16 %v1773, %v1772
      %v2095 = vpack.c.b16 %v1775, %v1774
      %v2096 = vpack.c.b16 %v1777, %v1776
      %v2097 = vpack.c.b16 %v1779, %v1778
      %v2098 = vpack.c.b16 %v1781, %v1780
      %v2099 = vpack.c.b16 %v1783, %v1782
      %v2100 = vpack.c.b16 %v1785, %v1784
      %v2101 = vpack.c.b16 %v1787, %v1786
      %v2102 = vpack.c.b16 %v1789, %v1788
      %v2103 = vpack.c.b16 %v1791, %v1790
      %v2104 = vpack.c.b16 %v1793, %v1792
      %v2105 = vpack.c.b16 %v1795, %v1794
      %v2106 = vpack.c.b16 %v1797, %v1796
      %v2107 = vpack.c.b16 %v1799, %v1798
      %v2108 = vpack.c.b16 %v1801, %v1800
      %v2109 = vpack.c.b16 %v1803, %v1802
      %v2110 = vpack.c.b16 %v1805, %v1804
      %v2111 = vpack.c.b16 %v1807, %v1806
      %v2112 = vpack.c.b16 %v1809, %v1808
      %v2113 = vpack.c.b16 %v1811, %v1810
      %v2114 = vpack.c.b16 %v1813, %v1812
      %v2115 = vpack.c.b16 %v1815, %v1814
      %v2116 = vpack.c.b16 %v1817, %v1816
      %v2117 = vpack.c.b16 %v1819, %v1818
      %v2118 = vpack.c.b16 %v1821, %v1820
      %v2119 = vpack.c.b16 %v1823, %v1822
      %v2120 = vpack.c.b16 %v1825, %v1824
      %v2121 = vpack.c.b16 %v1827, %v1826
      %v2122 = vpack.c.b16 %v1829, %v1828
      %v2123 = vpack.c.b16 %v1831, %v1830
      %v2124 = vpack.c.b16 %v1833, %v1832
      %v2125 = vpack.c.b16 %v1835, %v1834
      %v2126 = vpack.c.b16 %v1837, %v1836
      %v2127 = vpack.c.b16 %v1839, %v1838
      %v2128 = vpack.c.b16 %v1841, %v1840
      %v2129 = vpack.c.b16 %v1843, %v1842
      %v2130 = vpack.c.b16 %v1845, %v1844
      %v2131 = vpack.c.b16 %v1847, %v1846
      %v2132 = vpack.c.b16 %v1849, %v1848
      %v2133 = vpack.c.b16 %v1851, %v1850
      %v2134 = vpack.c.b16 %v1853, %v1852
      %v2135 = vpack.c.b16 %v1855, %v1854
      %v2136 = vpack.c.b16 %v1857, %v1856
      %v2137 = vpack.c.b16 %v1859, %v1858
      %v2138 = vpack.c.b16 %v1861, %v1860
      %v2139 = vpack.c.b16 %v1863, %v1862
      %v2140 = vpack.c.b16 %v1865, %v1864
      %v2141 = vpack.c.b16 %v1867, %v1866
      %v2142 = vpack.c.b16 %v1869, %v1868
      %v2143 = vpack.c.b16 %v1871, %v1870
      %v2144 = vpack.c.b16 %v1873, %v1872
      %v2145 = vpack.c.b16 %v1875, %v1874
      %v2146 = vpack.c.b16 %v1877, %v1876
      %v2147 = vpack.c.b16 %v1879, %v1878
      %v2148 = vpack.c.b16 %v1881, %v1880
      %v2149 = vpack.c.b16 %v1883, %v1882
      %v2150 = vpack.c.b16 %v1885, %v1884
      %v2151 = vpack.c.b16 %v1887, %v1886
      %v2152 = vpack.c.b16 %v1889, %v1888
      %v2153 = vpack.c.b16 %v1891, %v1890
      %v2154 = vpack.c.b16 %v1893, %v1892
      %v2155 = vpack.c.b16 %v1895, %v1894
      %v2156 = vpack.c.b16 %v1897, %v1896
      %v2157 = vpack.c.b16 %v1899, %v1898
      %v2158 = vpack.c.b16 %v1901, %v1900
      %v2159 = vpack.c.b16 %v1903, %v1902
      %2416 = vmatpush.bf16.msra.mxu0 %v1911
      %2417 = vmatpush.bf16.msra.mxu0 %v1910
      %2418 = vmatpush.bf16.msra.mxu0 %v1909
      %2419 = vmatpush.bf16.msra.mxu0 %v1908
      %2420 = vmatpush.bf16.msra.mxu0 %v1907
      %2421 = vmatpush.bf16.msra.mxu0 %v1906
      %2422 = vmatpush.bf16.msra.mxu0 %v1905
      %2423 = vmatpush.bf16.msra.mxu0 %v1904
      %2424 = vmatmul.bf16.gmra.mxu0 %v816
      %v2425 = vpop.f32.mrf.mxu0
      %v2426 = vadd.f32 0.0, %v2425
      %v2427 = vpop.f32.mrf.mxu0
      %2428 = vdwg.mxu0
      %2429 = vmatpush.bf16.msra.mxu0 %v1919
      %2430 = vmatpush.bf16.msra.mxu0 %v1918
      %2431 = vmatpush.bf16.msra.mxu0 %v1917
      %2432 = vmatpush.bf16.msra.mxu0 %v1916
      %2433 = vmatpush.bf16.msra.mxu0 %v1915
      %2434 = vmatpush.bf16.msra.mxu0 %v1914
      %2435 = vmatpush.bf16.msra.mxu0 %v1913
      %2436 = vmatpush.bf16.msra.mxu0 %v1912
      %2437 = vmatmul.bf16.gmra.mxu0 %v817
      %v2438 = vpop.f32.mrf.mxu0
      %v2439 = vadd.f32 %v2426, %v2438
      %v2440 = vpop.f32.mrf.mxu0
      %2441 = vdwg.mxu0
      %2442 = vmatpush.bf16.msra.mxu0 %v1927
      %2443 = vmatpush.bf16.msra.mxu0 %v1926
      %2444 = vmatpush.bf16.msra.mxu0 %v1925
      %2445 = vmatpush.bf16.msra.mxu0 %v1924
      %2446 = vmatpush.bf16.msra.mxu0 %v1923
      %2447 = vmatpush.bf16.msra.mxu0 %v1922
      %2448 = vmatpush.bf16.msra.mxu0 %v1921
      %2449 = vmatpush.bf16.msra.mxu0 %v1920
      %2450 = vmatmul.bf16.gmra.mxu0 %v818
      %v2451 = vpop.f32.mrf.mxu0
      %v2452 = vadd.f32 %v2439, %v2451
      %v2453 = vpop.f32.mrf.mxu0
      %2454 = vdwg.mxu0
      %2455 = vmatpush.bf16.msra.mxu0 %v1935
      %2456 = vmatpush.bf16.msra.mxu0 %v1934
      %2457 = vmatpush.bf16.msra.mxu0 %v1933
      %2458 = vmatpush.bf16.msra.mxu0 %v1932
      %2459 = vmatpush.bf16.msra.mxu0 %v1931
      %2460 = vmatpush.bf16.msra.mxu0 %v1930
      %2461 = vmatpush.bf16.msra.mxu0 %v1929
      %2462 = vmatpush.bf16.msra.mxu0 %v1928
      %2463 = vmatmul.bf16.gmra.mxu0 %v819
      %v2464 = vpop.f32.mrf.mxu0
      %v2465 = vadd.f32 %v2452, %v2464
      %v2466 = vpop.f32.mrf.mxu0
      %2467 = vdwg.mxu0
      %2468 = vmatpush.bf16.msra.mxu0 %v1943
      %2469 = vmatpush.bf16.msra.mxu0 %v1942
      %2470 = vmatpush.bf16.msra.mxu0 %v1941
      %2471 = vmatpush.bf16.msra.mxu0 %v1940
      %2472 = vmatpush.bf16.msra.mxu0 %v1939
      %2473 = vmatpush.bf16.msra.mxu0 %v1938
      %2474 = vmatpush.bf16.msra.mxu0 %v1937
      %2475 = vmatpush.bf16.msra.mxu0 %v1936
      %2476 = vmatmul.bf16.gmra.mxu0 %v820
      %v2477 = vpop.f32.mrf.mxu0
      %v2478 = vadd.f32 %v2465, %v2477
      %v2479 = vpop.f32.mrf.mxu0
      %2480 = vdwg.mxu0
      %2481 = vmatpush.bf16.msra.mxu0 %v1951
      %2482 = vmatpush.bf16.msra.mxu0 %v1950
      %2483 = vmatpush.bf16.msra.mxu0 %v1949
      %2484 = vmatpush.bf16.msra.mxu0 %v1948
      %2485 = vmatpush.bf16.msra.mxu0 %v1947
      %2486 = vmatpush.bf16.msra.mxu0 %v1946
      %2487 = vmatpush.bf16.msra.mxu0 %v1945
      %2488 = vmatpush.bf16.msra.mxu0 %v1944
      %2489 = vmatmul.bf16.gmra.mxu0 %v821
      %v2490 = vpop.f32.mrf.mxu0
      %v2491 = vadd.f32 %v2478, %v2490
      %v2492 = vpop.f32.mrf.mxu0
      %2493 = vdwg.mxu0
      %2494 = vmatpush.bf16.msra.mxu0 %v1959
      %2495 = vmatpush.bf16.msra.mxu0 %v1958
      %2496 = vmatpush.bf16.msra.mxu0 %v1957
      %2497 = vmatpush.bf16.msra.mxu0 %v1956
      %2498 = vmatpush.bf16.msra.mxu0 %v1955
      %2499 = vmatpush.bf16.msra.mxu0 %v1954
      %2500 = vmatpush.bf16.msra.mxu0 %v1953
      %2501 = vmatpush.bf16.msra.mxu0 %v1952
      %2502 = vmatmul.bf16.gmra.mxu0 %v822
      %v2503 = vpop.f32.mrf.mxu0
      %v2504 = vadd.f32 %v2491, %v2503
      %v2505 = vpop.f32.mrf.mxu0
      %2506 = vdwg.mxu0
      %2507 = vmatpush.bf16.msra.mxu0 %v1967
      %2508 = vmatpush.bf16.msra.mxu0 %v1966
      %2509 = vmatpush.bf16.msra.mxu0 %v1965
      %2510 = vmatpush.bf16.msra.mxu0 %v1964
      %2511 = vmatpush.bf16.msra.mxu0 %v1963
      %2512 = vmatpush.bf16.msra.mxu0 %v1962
      %2513 = vmatpush.bf16.msra.mxu0 %v1961
      %2514 = vmatpush.bf16.msra.mxu0 %v1960
      %2515 = vmatmul.bf16.gmra.mxu0 %v823
      %v2516 = vpop.f32.mrf.mxu0
      %v2517 = vadd.f32 %v2504, %v2516
      %v2518 = vpop.f32.mrf.mxu0
      %2519 = vdwg.mxu0
      %2520 = vmatpush.bf16.msra.mxu0 %v1975
      %2521 = vmatpush.bf16.msra.mxu0 %v1974
      %2522 = vmatpush.bf16.msra.mxu0 %v1973
      %2523 = vmatpush.bf16.msra.mxu0 %v1972
      %2524 = vmatpush.bf16.msra.mxu0 %v1971
      %2525 = vmatpush.bf16.msra.mxu0 %v1970
      %2526 = vmatpush.bf16.msra.mxu0 %v1969
      %2527 = vmatpush.bf16.msra.mxu0 %v1968
      %2528 = vmatmul.bf16.gmra.mxu0 %v824
      %v2529 = vpop.f32.mrf.mxu0
      %v2530 = vadd.f32 %v2517, %v2529
      %v2531 = vpop.f32.mrf.mxu0
      %2532 = vdwg.mxu0
      %2533 = vmatpush.bf16.msra.mxu0 %v1983
      %2534 = vmatpush.bf16.msra.mxu0 %v1982
      %2535 = vmatpush.bf16.msra.mxu0 %v1981
      %2536 = vmatpush.bf16.msra.mxu0 %v1980
      %2537 = vmatpush.bf16.msra.mxu0 %v1979
      %2538 = vmatpush.bf16.msra.mxu0 %v1978
      %2539 = vmatpush.bf16.msra.mxu0 %v1977
      %2540 = vmatpush.bf16.msra.mxu0 %v1976
      %2541 = vmatmul.bf16.gmra.mxu0 %v825
      %v2542 = vpop.f32.mrf.mxu0
      %v2543 = vadd.f32 %v2530, %v2542
      %v2544 = vpop.f32.mrf.mxu0
      %2545 = vdwg.mxu0
      %2546 = vmatpush.bf16.msra.mxu0 %v1991
      %2547 = vmatpush.bf16.msra.mxu0 %v1990
      %2548 = vmatpush.bf16.msra.mxu0 %v1989
      %2549 = vmatpush.bf16.msra.mxu0 %v1988
      %2550 = vmatpush.bf16.msra.mxu0 %v1987
      %2551 = vmatpush.bf16.msra.mxu0 %v1986
      %2552 = vmatpush.bf16.msra.mxu0 %v1985
      %2553 = vmatpush.bf16.msra.mxu0 %v1984
      %2554 = vmatmul.bf16.gmra.mxu0 %v826
      %v2555 = vpop.f32.mrf.mxu0
      %v2556 = vadd.f32 %v2543, %v2555
      %v2557 = vpop.f32.mrf.mxu0
      %2558 = vdwg.mxu0
      %2559 = vmatpush.bf16.msra.mxu0 %v1999
      %2560 = vmatpush.bf16.msra.mxu0 %v1998
      %2561 = vmatpush.bf16.msra.mxu0 %v1997
      %2562 = vmatpush.bf16.msra.mxu0 %v1996
      %2563 = vmatpush.bf16.msra.mxu0 %v1995
      %2564 = vmatpush.bf16.msra.mxu0 %v1994
      %2565 = vmatpush.bf16.msra.mxu0 %v1993
      %2566 = vmatpush.bf16.msra.mxu0 %v1992
      %2567 = vmatmul.bf16.gmra.mxu0 %v827
      %v2568 = vpop.f32.mrf.mxu0
      %v2569 = vadd.f32 %v2556, %v2568
      %v2570 = vpop.f32.mrf.mxu0
      %2571 = vdwg.mxu0
      %2572 = vmatpush.bf16.msra.mxu0 %v2007
      %2573 = vmatpush.bf16.msra.mxu0 %v2006
      %2574 = vmatpush.bf16.msra.mxu0 %v2005
      %2575 = vmatpush.bf16.msra.mxu0 %v2004
      %2576 = vmatpush.bf16.msra.mxu0 %v2003
      %2577 = vmatpush.bf16.msra.mxu0 %v2002
      %2578 = vmatpush.bf16.msra.mxu0 %v2001
      %2579 = vmatpush.bf16.msra.mxu0 %v2000
      %2580 = vmatmul.bf16.gmra.mxu0 %v828
      %v2581 = vpop.f32.mrf.mxu0
      %v2582 = vadd.f32 %v2569, %v2581
      %v2583 = vpop.f32.mrf.mxu0
      %2584 = vdwg.mxu0
      %2585 = vmatpush.bf16.msra.mxu0 %v2015
      %2586 = vmatpush.bf16.msra.mxu0 %v2014
      %2587 = vmatpush.bf16.msra.mxu0 %v2013
      %2588 = vmatpush.bf16.msra.mxu0 %v2012
      %2589 = vmatpush.bf16.msra.mxu0 %v2011
      %2590 = vmatpush.bf16.msra.mxu0 %v2010
      %2591 = vmatpush.bf16.msra.mxu0 %v2009
      %2592 = vmatpush.bf16.msra.mxu0 %v2008
      %2593 = vmatmul.bf16.gmra.mxu0 %v829
      %v2594 = vpop.f32.mrf.mxu0
      %v2595 = vadd.f32 %v2582, %v2594
      %v2596 = vpop.f32.mrf.mxu0
      %2597 = vdwg.mxu0
      %2598 = vmatpush.bf16.msra.mxu0 %v2023
      %2599 = vmatpush.bf16.msra.mxu0 %v2022
      %2600 = vmatpush.bf16.msra.mxu0 %v2021
      %2601 = vmatpush.bf16.msra.mxu0 %v2020
      %2602 = vmatpush.bf16.msra.mxu0 %v2019
      %2603 = vmatpush.bf16.msra.mxu0 %v2018
      %2604 = vmatpush.bf16.msra.mxu0 %v2017
      %2605 = vmatpush.bf16.msra.mxu0 %v2016
      %2606 = vmatmul.bf16.gmra.mxu0 %v830
      %v2607 = vpop.f32.mrf.mxu0
      %v2608 = vadd.f32 %v2595, %v2607
      %v2609 = vpop.f32.mrf.mxu0
      %2610 = vdwg.mxu0
      %2611 = vmatpush.bf16.msra.mxu0 %v2031
      %2612 = vmatpush.bf16.msra.mxu0 %v2030
      %2613 = vmatpush.bf16.msra.mxu0 %v2029
      %2614 = vmatpush.bf16.msra.mxu0 %v2028
      %2615 = vmatpush.bf16.msra.mxu0 %v2027
      %2616 = vmatpush.bf16.msra.mxu0 %v2026
      %2617 = vmatpush.bf16.msra.mxu0 %v2025
      %2618 = vmatpush.bf16.msra.mxu0 %v2024
      %2619 = vmatmul.bf16.gmra.mxu0 %v831
      %v2620 = vpop.f32.mrf.mxu0
      %v2621 = vadd.f32 %v2608, %v2620
      %v2622 = vpop.f32.mrf.mxu0
      %2623 = vdwg.mxu0
      %2624 = vmatpush.bf16.msra.mxu0 %v2039
      %2625 = vmatpush.bf16.msra.mxu0 %v2038
      %2626 = vmatpush.bf16.msra.mxu0 %v2037
      %2627 = vmatpush.bf16.msra.mxu0 %v2036
      %2628 = vmatpush.bf16.msra.mxu0 %v2035
      %2629 = vmatpush.bf16.msra.mxu0 %v2034
      %2630 = vmatpush.bf16.msra.mxu0 %v2033
      %2631 = vmatpush.bf16.msra.mxu0 %v2032
      %2632 = vmatmul.bf16.gmra.mxu0 %v832
      %v2633 = vpop.f32.mrf.mxu0
      %v2634 = vadd.f32 %v2621, %v2633
      %v2635 = vpop.f32.mrf.mxu0
      %2636 = vdwg.mxu0
      %2637 = vmatpush.bf16.msra.mxu0 %v2047
      %2638 = vmatpush.bf16.msra.mxu0 %v2046
      %2639 = vmatpush.bf16.msra.mxu0 %v2045
      %2640 = vmatpush.bf16.msra.mxu0 %v2044
      %2641 = vmatpush.bf16.msra.mxu0 %v2043
      %2642 = vmatpush.bf16.msra.mxu0 %v2042
      %2643 = vmatpush.bf16.msra.mxu0 %v2041
      %2644 = vmatpush.bf16.msra.mxu0 %v2040
      %2645 = vmatmul.bf16.gmra.mxu0 %v833
      %v2646 = vpop.f32.mrf.mxu0
      %v2647 = vadd.f32 %v2634, %v2646
      %v2648 = vpop.f32.mrf.mxu0
      %2649 = vdwg.mxu0
      %2650 = vmatpush.bf16.msra.mxu0 %v2055
      %2651 = vmatpush.bf16.msra.mxu0 %v2054
      %2652 = vmatpush.bf16.msra.mxu0 %v2053
      %2653 = vmatpush.bf16.msra.mxu0 %v2052
      %2654 = vmatpush.bf16.msra.mxu0 %v2051
      %2655 = vmatpush.bf16.msra.mxu0 %v2050
      %2656 = vmatpush.bf16.msra.mxu0 %v2049
      %2657 = vmatpush.bf16.msra.mxu0 %v2048
      %2658 = vmatmul.bf16.gmra.mxu0 %v834
      %v2659 = vpop.f32.mrf.mxu0
      %v2660 = vadd.f32 %v2647, %v2659
      %v2661 = vpop.f32.mrf.mxu0
      %2662 = vdwg.mxu0
      %2663 = vmatpush.bf16.msra.mxu0 %v2063
      %2664 = vmatpush.bf16.msra.mxu0 %v2062
      %2665 = vmatpush.bf16.msra.mxu0 %v2061
      %2666 = vmatpush.bf16.msra.mxu0 %v2060
      %2667 = vmatpush.bf16.msra.mxu0 %v2059
      %2668 = vmatpush.bf16.msra.mxu0 %v2058
      %2669 = vmatpush.bf16.msra.mxu0 %v2057
      %2670 = vmatpush.bf16.msra.mxu0 %v2056
      %2671 = vmatmul.bf16.gmra.mxu0 %v835
      %v2672 = vpop.f32.mrf.mxu0
      %v2673 = vadd.f32 %v2660, %v2672
      %v2674 = vpop.f32.mrf.mxu0
      %2675 = vdwg.mxu0
      %2676 = vmatpush.bf16.msra.mxu0 %v2071
      %2677 = vmatpush.bf16.msra.mxu0 %v2070
      %2678 = vmatpush.bf16.msra.mxu0 %v2069
      %2679 = vmatpush.bf16.msra.mxu0 %v2068
      %2680 = vmatpush.bf16.msra.mxu0 %v2067
      %2681 = vmatpush.bf16.msra.mxu0 %v2066
      %2682 = vmatpush.bf16.msra.mxu0 %v2065
      %2683 = vmatpush.bf16.msra.mxu0 %v2064
      %2684 = vmatmul.bf16.gmra.mxu0 %v836
      %v2685 = vpop.f32.mrf.mxu0
      %v2686 = vadd.f32 %v2673, %v2685
      %v2687 = vpop.f32.mrf.mxu0
      %2688 = vdwg.mxu0
      %2689 = vmatpush.bf16.msra.mxu0 %v2079
      %2690 = vmatpush.bf16.msra.mxu0 %v2078
      %2691 = vmatpush.bf16.msra.mxu0 %v2077
      %2692 = vmatpush.bf16.msra.mxu0 %v2076
      %2693 = vmatpush.bf16.msra.mxu0 %v2075
      %2694 = vmatpush.bf16.msra.mxu0 %v2074
      %2695 = vmatpush.bf16.msra.mxu0 %v2073
      %2696 = vmatpush.bf16.msra.mxu0 %v2072
      %2697 = vmatmul.bf16.gmra.mxu0 %v837
      %v2698 = vpop.f32.mrf.mxu0
      %v2699 = vadd.f32 %v2686, %v2698
      %v2700 = vpop.f32.mrf.mxu0
      %2701 = vdwg.mxu0
      %2702 = vmatpush.bf16.msra.mxu0 %v2087
      %2703 = vmatpush.bf16.msra.mxu0 %v2086
      %2704 = vmatpush.bf16.msra.mxu0 %v2085
      %2705 = vmatpush.bf16.msra.mxu0 %v2084
      %2706 = vmatpush.bf16.msra.mxu0 %v2083
      %2707 = vmatpush.bf16.msra.mxu0 %v2082
      %2708 = vmatpush.bf16.msra.mxu0 %v2081
      %2709 = vmatpush.bf16.msra.mxu0 %v2080
      %2710 = vmatmul.bf16.gmra.mxu0 %v838
      %v2711 = vpop.f32.mrf.mxu0
      %v2712 = vadd.f32 %v2699, %v2711
      %v2713 = vpop.f32.mrf.mxu0
      %2714 = vdwg.mxu0
      %2715 = vmatpush.bf16.msra.mxu0 %v2095
      %2716 = vmatpush.bf16.msra.mxu0 %v2094
      %2717 = vmatpush.bf16.msra.mxu0 %v2093
      %2718 = vmatpush.bf16.msra.mxu0 %v2092
      %2719 = vmatpush.bf16.msra.mxu0 %v2091
      %2720 = vmatpush.bf16.msra.mxu0 %v2090
      %2721 = vmatpush.bf16.msra.mxu0 %v2089
      %2722 = vmatpush.bf16.msra.mxu0 %v2088
      %2723 = vmatmul.bf16.gmra.mxu0 %v839
      %v2724 = vpop.f32.mrf.mxu0
      %v2725 = vadd.f32 %v2712, %v2724
      %v2726 = vpop.f32.mrf.mxu0
      %2727 = vdwg.mxu0
      %2728 = vmatpush.bf16.msra.mxu0 %v2103
      %2729 = vmatpush.bf16.msra.mxu0 %v2102
      %2730 = vmatpush.bf16.msra.mxu0 %v2101
      %2731 = vmatpush.bf16.msra.mxu0 %v2100
      %2732 = vmatpush.bf16.msra.mxu0 %v2099
      %2733 = vmatpush.bf16.msra.mxu0 %v2098
      %2734 = vmatpush.bf16.msra.mxu0 %v2097
      %2735 = vmatpush.bf16.msra.mxu0 %v2096
      %2736 = vmatmul.bf16.gmra.mxu0 %v840
      %v2737 = vpop.f32.mrf.mxu0
      %v2738 = vadd.f32 %v2725, %v2737
      %v2739 = vpop.f32.mrf.mxu0
      %2740 = vdwg.mxu0
      %2741 = vmatpush.bf16.msra.mxu0 %v2111
      %2742 = vmatpush.bf16.msra.mxu0 %v2110
      %2743 = vmatpush.bf16.msra.mxu0 %v2109
      %2744 = vmatpush.bf16.msra.mxu0 %v2108
      %2745 = vmatpush.bf16.msra.mxu0 %v2107
      %2746 = vmatpush.bf16.msra.mxu0 %v2106
      %2747 = vmatpush.bf16.msra.mxu0 %v2105
      %2748 = vmatpush.bf16.msra.mxu0 %v2104
      %2749 = vmatmul.bf16.gmra.mxu0 %v841
      %v2750 = vpop.f32.mrf.mxu0
      %v2751 = vadd.f32 %v2738, %v2750
      %v2752 = vpop.f32.mrf.mxu0
      %2753 = vdwg.mxu0
      %2754 = vmatpush.bf16.msra.mxu0 %v2119
      %2755 = vmatpush.bf16.msra.mxu0 %v2118
      %2756 = vmatpush.bf16.msra.mxu0 %v2117
      %2757 = vmatpush.bf16.msra.mxu0 %v2116
      %2758 = vmatpush.bf16.msra.mxu0 %v2115
      %2759 = vmatpush.bf16.msra.mxu0 %v2114
      %2760 = vmatpush.bf16.msra.mxu0 %v2113
      %2761 = vmatpush.bf16.msra.mxu0 %v2112
      %2762 = vmatmul.bf16.gmra.mxu0 %v842
      %v2763 = vpop.f32.mrf.mxu0
      %v2764 = vadd.f32 %v2751, %v2763
      %v2765 = vpop.f32.mrf.mxu0
      %2766 = vdwg.mxu0
      %2767 = vmatpush.bf16.msra.mxu0 %v2127
      %2768 = vmatpush.bf16.msra.mxu0 %v2126
      %2769 = vmatpush.bf16.msra.mxu0 %v2125
      %2770 = vmatpush.bf16.msra.mxu0 %v2124
      %2771 = vmatpush.bf16.msra.mxu0 %v2123
      %2772 = vmatpush.bf16.msra.mxu0 %v2122
      %2773 = vmatpush.bf16.msra.mxu0 %v2121
      %2774 = vmatpush.bf16.msra.mxu0 %v2120
      %2775 = vmatmul.bf16.gmra.mxu0 %v843
      %v2776 = vpop.f32.mrf.mxu0
      %v2777 = vadd.f32 %v2764, %v2776
      %v2778 = vpop.f32.mrf.mxu0
      %2779 = vdwg.mxu0
      %2780 = vmatpush.bf16.msra.mxu0 %v2135
      %2781 = vmatpush.bf16.msra.mxu0 %v2134
      %2782 = vmatpush.bf16.msra.mxu0 %v2133
      %2783 = vmatpush.bf16.msra.mxu0 %v2132
      %2784 = vmatpush.bf16.msra.mxu0 %v2131
      %2785 = vmatpush.bf16.msra.mxu0 %v2130
      %2786 = vmatpush.bf16.msra.mxu0 %v2129
      %2787 = vmatpush.bf16.msra.mxu0 %v2128
      %2788 = vmatmul.bf16.gmra.mxu0 %v844
      %v2789 = vpop.f32.mrf.mxu0
      %v2790 = vadd.f32 %v2777, %v2789
      %v2791 = vpop.f32.mrf.mxu0
      %2792 = vdwg.mxu0
      %2793 = vmatpush.bf16.msra.mxu0 %v2143
      %2794 = vmatpush.bf16.msra.mxu0 %v2142
      %2795 = vmatpush.bf16.msra.mxu0 %v2141
      %2796 = vmatpush.bf16.msra.mxu0 %v2140
      %2797 = vmatpush.bf16.msra.mxu0 %v2139
      %2798 = vmatpush.bf16.msra.mxu0 %v2138
      %2799 = vmatpush.bf16.msra.mxu0 %v2137
      %2800 = vmatpush.bf16.msra.mxu0 %v2136
      %2801 = vmatmul.bf16.gmra.mxu0 %v845
      %v2802 = vpop.f32.mrf.mxu0
      %v2803 = vadd.f32 %v2790, %v2802
      %v2804 = vpop.f32.mrf.mxu0
      %2805 = vdwg.mxu0
      %2806 = vmatpush.bf16.msra.mxu0 %v2151
      %2807 = vmatpush.bf16.msra.mxu0 %v2150
      %2808 = vmatpush.bf16.msra.mxu0 %v2149
      %2809 = vmatpush.bf16.msra.mxu0 %v2148
      %2810 = vmatpush.bf16.msra.mxu0 %v2147
      %2811 = vmatpush.bf16.msra.mxu0 %v2146
      %2812 = vmatpush.bf16.msra.mxu0 %v2145
      %2813 = vmatpush.bf16.msra.mxu0 %v2144
      %2814 = vmatmul.bf16.gmra.mxu0 %v846
      %v2815 = vpop.f32.mrf.mxu0
      %v2816 = vadd.f32 %v2803, %v2815
      %v2817 = vpop.f32.mrf.mxu0
      %2818 = vdwg.mxu0
      %2819 = vmatpush.bf16.msra.mxu0 %v2159
      %2820 = vmatpush.bf16.msra.mxu0 %v2158
      %2821 = vmatpush.bf16.msra.mxu0 %v2157
      %2822 = vmatpush.bf16.msra.mxu0 %v2156
      %2823 = vmatpush.bf16.msra.mxu0 %v2155
      %2824 = vmatpush.bf16.msra.mxu0 %v2154
      %2825 = vmatpush.bf16.msra.mxu0 %v2153
      %2826 = vmatpush.bf16.msra.mxu0 %v2152
      %2827 = vmatmul.bf16.gmra.mxu0 %v847
      %v2828 = vpop.f32.mrf.mxu0
      %v2829 = vadd.f32 %v2816, %v2828
      %v2830 = vpop.f32.mrf.mxu0
      %2831 = vdwg.mxu0
      %v2832 = vadd.f32 %v239, %v2829
      %2833 = vst [vmem:[#allocation2] sm:$0xff] %v2832
      %p2834 = scmp.eq.s32.totalorder %s16, 3
      // Predicated region
      $region45: #{reseau_neurone_forward.9} parent=39 // pred_check
        %p2835 = pneg %p2834
      $region46: #{reseau_neurone_forward.9} parent=39 // pred_check_branch
        %2837 = sbr.rel (%p2835) target = $region48
      $region47: #{reseau_neurone_forward.9} parent=39 // pred_region
        %v2838 = vld [vmem:[#allocation2] sm:$0xff]
        %v2839 = vld [vmem:[%s2] sm:$0x1]
        %v2841 = vperm.slane %v2839, 0
        %v2843 = vadd.f32 %v2838, %v2841
        %v2844 = vmax.f32 %v2843, 0.0
        %v2845 = vld [vmem:[%s3] sm:$0xff]
        %v2846 = vld [vmem:[%s3 + $0x8] sm:$0xff]
        %v2847 = vld [vmem:[%s3 + $0x10] sm:$0xff]
        %v2848 = vld [vmem:[%s3 + $0x18] sm:$0xff]
        %v2849 = vld [vmem:[%s3 + $0x20] sm:$0xff]
        %v2850 = vld [vmem:[%s3 + $0x28] sm:$0xff]
        %v2851 = vld [vmem:[%s3 + $0x30] sm:$0xff]
        %v2852 = vld [vmem:[%s3 + $0x38] sm:$0xff]
        %v2853 = vld [vmem:[%s3 + $0x40] sm:$0xff]
        %v2854 = vld [vmem:[%s3 + $0x48] sm:$0xff]
        %v2855 = vld [vmem:[%s3 + $0x50] sm:$0xff]
        %v2856 = vld [vmem:[%s3 + $0x58] sm:$0xff]
        %v2857 = vld [vmem:[%s3 + $0x60] sm:$0xff]
        %v2858 = vld [vmem:[%s3 + $0x68] sm:$0xff]
        %v2859 = vld [vmem:[%s3 + $0x70] sm:$0xff]
        %v2860 = vld [vmem:[%s3 + $0x78] sm:$0xff]
        %v2861 = vld [vmem:[%s4] sm:$0x1]
        %v2863 = vperm.slane %v2861, 0
        %2865 = vmatpush.msra.mxu0 %v2860
        %2866 = vmatpush.msra.mxu0 %v2859
        %2867 = vmatpush.msra.mxu0 %v2858
        %2868 = vmatpush.msra.mxu0 %v2857
        %2869 = vmatpush.msra.mxu0 %v2856
        %2870 = vmatpush.msra.mxu0 %v2855
        %2871 = vmatpush.msra.mxu0 %v2854
        %2872 = vmatpush.msra.mxu0 %v2853
        %2873 = vmatpush.msra.mxu0 %v2852
        %2874 = vmatpush.msra.mxu0 %v2851
        %2875 = vmatpush.msra.mxu0 %v2850
        %2876 = vmatpush.msra.mxu0 %v2849
        %2877 = vmatpush.msra.mxu0 %v2848
        %2878 = vmatpush.msra.mxu0 %v2847
        %2879 = vmatpush.msra.mxu0 %v2846
        %2880 = vmatpush.msra.mxu0 %v2845
        %2881 = vmatmul.f32.gmra.mxu0 %v2844
        %v2882 = vpop.f32.mrf.mxu0
        %v2883 = vadd.f32 %v2863, %v2882
        %2884 = vdwg.mxu0
        %2885 = vst [vmem:[%s5] sm:$0xff] %v2883
      $region48: #{reseau_neurone_forward.9} parent=39 // pred_fallthru
        _
      // Predicated region
      $region49: #{reseau_neurone_forward.9} parent=39 // pred_check
        %p2886 = pneg %p144
      $region50: #{reseau_neurone_forward.9} parent=39 // pred_check_branch
        %2888 = sbr.rel (%p2886) target = $region52
      $region51: #{reseau_neurone_forward.9} parent=39 // pred_region
        _
      $region52: #{reseau_neurone_forward.9} parent=39 // pred_fallthru
        _
      // Predicated region
      $region53: #{reseau_neurone_forward.9} parent=39 // pred_check
        %p2889 = pneg %p144
      $region54: #{reseau_neurone_forward.9} parent=39 // pred_check_branch
        %2891 = sbr.rel (%p2889) target = $region56
      $region55: #{reseau_neurone_forward.9} parent=39 // pred_region
        _
      $region56: #{reseau_neurone_forward.9} parent=39 // pred_fallthru
        _
    $region40: #{reseau_neurone_forward.9} parent=5 // pred_fallthru
      _
    %p2892 = scmp.le.s32.totalorder 2, %s11
    // Predicated region
    $region57: #{reseau_neurone_forward.9} parent=5 // pred_check
      %p2893 = pneg %p2892
    $region58: #{reseau_neurone_forward.9} parent=5 // pred_check_branch
      %2895 = sbr.rel (%p2893) target = $region60
    $region59: #{reseau_neurone_forward.9} parent=5 // pred_region
      %s2896 = ssub.s32 %s11, 2
    $region60: #{reseau_neurone_forward.9} parent=5 // pred_fallthru
      _
  $region6: #{reseau_neurone_forward.9} parent=0 // loop_footer
    %s15 = sadd.s32 1, %s11
  $region7: #{reseau_neurone_forward.9} parent=0 // loop_footer_branch
    %10 = sbr.rel target = $region3
  $region8: #{reseau_neurone_forward.9} parent=0 // loop_exit
    _

</llo_original>
